<compile_context>
chip_gen: v7x
topology: tpu7x:2x2x1
jax: 0.10.0
libtpu: 0.0.40
codegen_flags: <defaults>
</compile_context>

<pallas_src>
import functools

import jax
import jax.numpy as jnp
from jax.experimental import pallas as pl
from jax.experimental.pallas import tpu as pltpu


# Matmul input dtype: flip to jnp.bfloat16 on v6e/v7x for ~2x MXU throughput
# (accumulation stays float32 via preferred_element_type).  Kept float32 here
# to match the PyTorch module's float32 numerics.
MXU_INPUT_DTYPE = jnp.float32


# ----------------------------------------------------------------------------
# Fused conv3x3 (pad=1, stride=1) + bias + ReLU + maxpool 2x2 stride 2.
# One grid step per image.  The 9 conv taps are packed into a single
# (H*W, 9*Cin) im2col matrix in VMEM so the convolution is ONE deep MXU
# matmul instead of nine K=Cin matmuls.
# ----------------------------------------------------------------------------
def conv_relu_pool_kernel(x_ref, w_ref, b_ref, o_ref, xpad_ref, col_ref, *,
                          H, W, Cin, Cout):
    Ho, Wo = H // 2, W // 2

    # Zero-pad the input inside VMEM (no extra padded copy in HBM).
    xpad_ref[...] = jnp.zeros_like(xpad_ref)
    xpad_ref[1:H + 1, 1:W + 1, :] = x_ref[0]

    # im2col: tap (kh, kw) fills columns [t*Cin, (t+1)*Cin) of the patch matrix.
    for kh in range(3):
        for kw in range(3):
            t = kh * 3 + kw
            tap = xpad_ref[kh:kh + H, kw:kw + W, :]          # (H, W, Cin)
            col_ref[:, t * Cin:(t + 1) * Cin] = tap.reshape(H * W, Cin)

    # Single deep matmul (K = 9*Cin) + bias + ReLU.
    y = jnp.dot(col_ref[...].astype(MXU_INPUT_DTYPE),
                w_ref[...].astype(MXU_INPUT_DTYPE),
                preferred_element_type=jnp.float32)
    y = jnp.maximum(y + b_ref[...], 0.0)                     # (H*W, Cout)

    # Fused 2x2 / stride-2 max-pool: width pairs, then height pairs.
    y = y.reshape(H * Wo, 2, Cout)
    y = jnp.maximum(y[:, 0, :], y[:, 1, :])                  # (H*Wo, Cout)
    y = y.reshape(Ho, 2, Wo, Cout)
    y = jnp.maximum(y[:, 0, :, :], y[:, 1, :, :])            # (Ho, Wo, Cout)
    o_ref[0] = y.astype(o_ref.dtype)


def conv_relu_pool(x, w, b):
    # x: (N, H, W, Cin) NHWC; w: (3, 3, Cin, Cout) HWIO; b: (Cout,)
    N, H, W, Cin = x.shape
    Cout = w.shape[-1]
    Ho, Wo = H // 2, W // 2
    w2d = w.reshape(9 * Cin, Cout)
    kernel = functools.partial(conv_relu_pool_kernel,
                               H=H, W=W, Cin=Cin, Cout=Cout)
    return pl.pallas_call(
        kernel,
        out_shape=jax.ShapeDtypeStruct((N, Ho, Wo, Cout), x.dtype),
        grid=(N,),
        in_specs=[
            pl.BlockSpec((1, H, W, Cin), lambda n: (n, 0, 0, 0)),
            pl.BlockSpec((9 * Cin, Cout), lambda n: (0, 0)),
            pl.BlockSpec((1, Cout), lambda n: (0, 0)),
        ],
        out_specs=pl.BlockSpec((1, Ho, Wo, Cout), lambda n: (n, 0, 0, 0)),
        scratch_shapes=[
            pltpu.VMEM((H + 2, W + 2, Cin), jnp.float32),    # padded input
            pltpu.VMEM((H * W, 9 * Cin), jnp.float32),       # im2col matrix
        ],
        compiler_params=pltpu.CompilerParams(
            dimension_semantics=("parallel",)),  # batch -> both TCs on v7x
    )(x, w2d, b.reshape(1, Cout))


# ----------------------------------------------------------------------------
# Fused classifier: Linear -> ReLU -> (Dropout id) -> Linear -> ReLU ->
# (Dropout id) -> Linear, all in one pallas_call (weights resident in VMEM).
# ----------------------------------------------------------------------------
def classifier_kernel(x_ref, w1_ref, b1_ref, w2_ref, b2_ref, w3_ref, b3_ref,
                      o_ref):
    def dense(h, w_ref, b_ref):
        return jnp.dot(h.astype(MXU_INPUT_DTYPE),
                       w_ref[...].astype(MXU_INPUT_DTYPE),
                       preferred_element_type=jnp.float32) + b_ref[...]

    h = jnp.maximum(dense(x_ref[...], w1_ref, b1_ref), 0.0)
    # TODO(synk): nn.Dropout(p=0.5) is identity in eval mode; training-mode
    # dropout masks are not implemented.
    h = jnp.maximum(dense(h, w2_ref, b2_ref), 0.0)
    o_ref[...] = dense(h, w3_ref, b3_ref).astype(o_ref.dtype)


def classifier(x, fc_params):
    (w1, b1), (w2, b2), (w3, b3) = fc_params
    B = x.shape[0]
    num_classes = w3.shape[1]
    return pl.pallas_call(
        classifier_kernel,
        out_shape=jax.ShapeDtypeStruct((B, num_classes), x.dtype),
    )(x, w1, b1.reshape(1, -1), w2, b2.reshape(1, -1), w3, b3.reshape(1, -1))


# ----------------------------------------------------------------------------
# Parameter init (xavier_uniform + zero bias, as in VGG._initialize_weights).
# ----------------------------------------------------------------------------
def xavier_uniform(key, shape, fan_in, fan_out):
    bound = (6.0 / (fan_in + fan_out)) ** 0.5
    return jax.random.uniform(key, shape, jnp.float32, -bound, bound)


def init_params(key, cin, conv_channels, hidden, num_classes, flat_dim):
    params = {"conv": [], "fc": []}
    c_prev = cin
    for c in conv_channels:
        key, kw = jax.random.split(key)
        w = xavier_uniform(kw, (3, 3, c_prev, c), 9 * c_prev, 9 * c)  # HWIO
        params["conv"].append((w, jnp.zeros((c,), jnp.float32)))
        c_prev = c
    dims = [flat_dim, hidden, hidden, num_classes]
    for i in range(3):
        key, kw = jax.random.split(key)
        w = xavier_uniform(kw, (dims[i], dims[i + 1]), dims[i], dims[i + 1])
        params["fc"].append((w, jnp.zeros((dims[i + 1],), jnp.float32)))
    return params


# ----------------------------------------------------------------------------
# VGG.forward: features -> flatten(start_dim=1) -> classifier
# ----------------------------------------------------------------------------
def vgg_forward(params, x_nchw):
    N = x_nchw.shape[0]
    x = jnp.transpose(x_nchw, (0, 2, 3, 1))            # NCHW -> NHWC
    for (w, b) in params["conv"]:                       # features
        x = conv_relu_pool(x, w, b)
    # torch.flatten(x, start_dim=1) on the NCHW tensor:
    x = jnp.transpose(x, (0, 3, 1, 2)).reshape(N, -1)
    return classifier(x, params["fc"])                  # classifier


if __name__ == "__main__":
    key = jax.random.PRNGKey(0)

    # Small shapes consistent with the module's forward:
    N, Cin, H, W = 2, 3, 16, 16
    conv_channels = [32, 64, 128]     # 3 blocks: spatial 16 -> 8 -> 4 -> 2
    hidden = 128
    num_classes = 10
    flat_dim = conv_channels[-1] * (H // 8) * (W // 8)   # 128 * 2 * 2 = 512

    pkey, xkey = jax.random.split(key)
    params = init_params(pkey, Cin, conv_channels, hidden, num_classes,
                         flat_dim)
    x = jax.random.normal(xkey, (N, Cin, H, W), jnp.float32)

    out = jax.block_until_ready(jax.jit(vgg_forward)(params, x))
    assert out.shape == (N, num_classes) and out.dtype == jnp.float32
    print("KERNEL_OK")
</pallas_src>

<mosaic_0001>
module attributes {stable_mosaic.version = 11 : i64} {
  func.func @conv_relu_pool_kernel(%arg0: i32, %arg1: memref<1x16x16x3xf32, #tpu.memory_space<vmem>>, %arg2: memref<27x32xf32, #tpu.memory_space<vmem>>, %arg3: memref<1x32xf32, #tpu.memory_space<vmem>>, %arg4: memref<1x8x8x32xf32, #tpu.memory_space<vmem>>, %arg5: memref<18x18x3xf32, #tpu.memory_space<vmem>>, %arg6: memref<256x27xf32, #tpu.memory_space<vmem>>) attributes {dimension_semantics = [#tpu.dimension_semantics<parallel>], iteration_bounds = array<i64: 2>, scalar_prefetch = 0 : i64, scratch_operands = 2 : i64, tpu.core_type = #tpu.core_type<tc>, window_params = [{transform_indices = @transform_0, window_bounds = array<i64: 1, 16, 16, 3>}, {pipeline_mode = #tpu.pipeline_mode<synchronous>, transform_indices = @transform_1, window_bounds = array<i64: 27, 32>}, {pipeline_mode = #tpu.pipeline_mode<synchronous>, transform_indices = @transform_2, window_bounds = array<i64: 1, 32>}, {transform_indices = @transform_3, window_bounds = array<i64: 1, 8, 8, 32>}]} {
    %cst = arith.constant 0.000000e+00 : f32
    %0 = vector.broadcast %cst : f32 to vector<18x18x3xf32>
    %c0 = arith.constant 0 : index
    %c0_0 = arith.constant 0 : index
    %c0_1 = arith.constant 0 : index
    %1 = vector.load %arg5[%c0, %c0_0, %c0_1] : memref<18x18x3xf32, #tpu.memory_space<vmem>>, vector<18x18x3xf32>
    tpu.vector_store %arg5[%c0, %c0_0, %c0_1], %0 {strides = array<i32>} : memref<18x18x3xf32, #tpu.memory_space<vmem>>, vector<18x18x3xf32>,
    %c0_2 = arith.constant 0 : index
    %c0_3 = arith.constant 0 : index
    %c0_4 = arith.constant 0 : index
    %c0_5 = arith.constant 0 : index
    %2 = vector.load %arg1[%c0_2, %c0_3, %c0_4, %c0_5] : memref<1x16x16x3xf32, #tpu.memory_space<vmem>>, vector<1x16x16x3xf32>
    %3 = vector.shape_cast %2 : vector<1x16x16x3xf32> to vector<16x16x3xf32>
    %c1 = arith.constant 1 : index
    %c1_6 = arith.constant 1 : index
    %c0_7 = arith.constant 0 : index
    %4 = vector.load %arg5[%c1, %c1_6, %c0_7] : memref<18x18x3xf32, #tpu.memory_space<vmem>>, vector<16x16x3xf32>
    tpu.vector_store %arg5[%c1, %c1_6, %c0_7], %3 {strides = array<i32>} : memref<18x18x3xf32, #tpu.memory_space<vmem>>, vector<16x16x3xf32>,
    %c0_8 = arith.constant 0 : index
    %c0_9 = arith.constant 0 : index
    %c0_10 = arith.constant 0 : index
    %5 = vector.load %arg5[%c0_8, %c0_9, %c0_10] : memref<18x18x3xf32, #tpu.memory_space<vmem>>, vector<16x16x3xf32>
    %6 = vector.shape_cast %5 : vector<16x16x3xf32> to vector<256x3xf32>
    %c0_11 = arith.constant 0 : index
    %c0_12 = arith.constant 0 : index
    %7 = vector.load %arg6[%c0_11, %c0_12] : memref<256x27xf32, #tpu.memory_space<vmem>>, vector<256x3xf32>
    tpu.vector_store %arg6[%c0_11, %c0_12], %6 {strides = array<i32>} : memref<256x27xf32, #tpu.memory_space<vmem>>, vector<256x3xf32>,
    %c0_13 = arith.constant 0 : index
    %c1_14 = arith.constant 1 : index
    %c0_15 = arith.constant 0 : index
    %8 = vector.load %arg5[%c0_13, %c1_14, %c0_15] : memref<18x18x3xf32, #tpu.memory_space<vmem>>, vector<16x16x3xf32>
    %9 = vector.shape_cast %8 : vector<16x16x3xf32> to vector<256x3xf32>
    %c0_16 = arith.constant 0 : index
    %c3 = arith.constant 3 : index
    %10 = vector.load %arg6[%c0_16, %c3] : memref<256x27xf32, #tpu.memory_space<vmem>>, vector<256x3xf32>
    tpu.vector_store %arg6[%c0_16, %c3], %9 {strides = array<i32>} : memref<256x27xf32, #tpu.memory_space<vmem>>, vector<256x3xf32>,
    %c0_17 = arith.constant 0 : index
    %c2 = arith.constant 2 : index
    %c0_18 = arith.constant 0 : index
    %11 = vector.load %arg5[%c0_17, %c2, %c0_18] : memref<18x18x3xf32, #tpu.memory_space<vmem>>, vector<16x16x3xf32>
    %12 = vector.shape_cast %11 : vector<16x16x3xf32> to vector<256x3xf32>
    %c0_19 = arith.constant 0 : index
    %c6 = arith.constant 6 : index
    %13 = vector.load %arg6[%c0_19, %c6] : memref<256x27xf32, #tpu.memory_space<vmem>>, vector<256x3xf32>
    tpu.vector_store %arg6[%c0_19, %c6], %12 {strides = array<i32>} : memref<256x27xf32, #tpu.memory_space<vmem>>, vector<256x3xf32>,
    %c1_20 = arith.constant 1 : index
    %c0_21 = arith.constant 0 : index
    %c0_22 = arith.constant 0 : index
    %14 = vector.load %arg5[%c1_20, %c0_21, %c0_22] : memref<18x18x3xf32, #tpu.memory_space<vmem>>, vector<16x16x3xf32>
    %15 = vector.shape_cast %14 : vector<16x16x3xf32> to vector<256x3xf32>
    %c0_23 = arith.constant 0 : index
    %c9 = arith.constant 9 : index
    %16 = vector.load %arg6[%c0_23, %c9] : memref<256x27xf32, #tpu.memory_space<vmem>>, vector<256x3xf32>
    tpu.vector_store %arg6[%c0_23, %c9], %15 {strides = array<i32>} : memref<256x27xf32, #tpu.memory_space<vmem>>, vector<256x3xf32>,
    %c1_24 = arith.constant 1 : index
    %c1_25 = arith.constant 1 : index
    %c0_26 = arith.constant 0 : index
    %17 = vector.load %arg5[%c1_24, %c1_25, %c0_26] : memref<18x18x3xf32, #tpu.memory_space<vmem>>, vector<16x16x3xf32>
    %18 = vector.shape_cast %17 : vector<16x16x3xf32> to vector<256x3xf32>
    %c0_27 = arith.constant 0 : index
    %c12 = arith.constant 12 : index
    %19 = vector.load %arg6[%c0_27, %c12] : memref<256x27xf32, #tpu.memory_space<vmem>>, vector<256x3xf32>
    tpu.vector_store %arg6[%c0_27, %c12], %18 {strides = array<i32>} : memref<256x27xf32, #tpu.memory_space<vmem>>, vector<256x3xf32>,
    %c1_28 = arith.constant 1 : index
    %c2_29 = arith.constant 2 : index
    %c0_30 = arith.constant 0 : index
    %20 = vector.load %arg5[%c1_28, %c2_29, %c0_30] : memref<18x18x3xf32, #tpu.memory_space<vmem>>, vector<16x16x3xf32>
    %21 = vector.shape_cast %20 : vector<16x16x3xf32> to vector<256x3xf32>
    %c0_31 = arith.constant 0 : index
    %c15 = arith.constant 15 : index
    %22 = vector.load %arg6[%c0_31, %c15] : memref<256x27xf32, #tpu.memory_space<vmem>>, vector<256x3xf32>
    tpu.vector_store %arg6[%c0_31, %c15], %21 {strides = array<i32>} : memref<256x27xf32, #tpu.memory_space<vmem>>, vector<256x3xf32>,
    %c2_32 = arith.constant 2 : index
    %c0_33 = arith.constant 0 : index
    %c0_34 = arith.constant 0 : index
    %23 = vector.load %arg5[%c2_32, %c0_33, %c0_34] : memref<18x18x3xf32, #tpu.memory_space<vmem>>, vector<16x16x3xf32>
    %24 = vector.shape_cast %23 : vector<16x16x3xf32> to vector<256x3xf32>
    %c0_35 = arith.constant 0 : index
    %c18 = arith.constant 18 : index
    %25 = vector.load %arg6[%c0_35, %c18] : memref<256x27xf32, #tpu.memory_space<vmem>>, vector<256x3xf32>
    tpu.vector_store %arg6[%c0_35, %c18], %24 {strides = array<i32>} : memref<256x27xf32, #tpu.memory_space<vmem>>, vector<256x3xf32>,
    %c2_36 = arith.constant 2 : index
    %c1_37 = arith.constant 1 : index
    %c0_38 = arith.constant 0 : index
    %26 = vector.load %arg5[%c2_36, %c1_37, %c0_38] : memref<18x18x3xf32, #tpu.memory_space<vmem>>, vector<16x16x3xf32>
    %27 = vector.shape_cast %26 : vector<16x16x3xf32> to vector<256x3xf32>
    %c0_39 = arith.constant 0 : index
    %c21 = arith.constant 21 : index
    %28 = vector.load %arg6[%c0_39, %c21] : memref<256x27xf32, #tpu.memory_space<vmem>>, vector<256x3xf32>
    tpu.vector_store %arg6[%c0_39, %c21], %27 {strides = array<i32>} : memref<256x27xf32, #tpu.memory_space<vmem>>, vector<256x3xf32>,
    %c2_40 = arith.constant 2 : index
    %c2_41 = arith.constant 2 : index
    %c0_42 = arith.constant 0 : index
    %29 = vector.load %arg5[%c2_40, %c2_41, %c0_42] : memref<18x18x3xf32, #tpu.memory_space<vmem>>, vector<16x16x3xf32>
    %30 = vector.shape_cast %29 : vector<16x16x3xf32> to vector<256x3xf32>
    %c0_43 = arith.constant 0 : index
    %c24 = arith.constant 24 : index
    %31 = vector.load %arg6[%c0_43, %c24] : memref<256x27xf32, #tpu.memory_space<vmem>>, vector<256x3xf32>
    tpu.vector_store %arg6[%c0_43, %c24], %30 {strides = array<i32>} : memref<256x27xf32, #tpu.memory_space<vmem>>, vector<256x3xf32>,
    %c0_44 = arith.constant 0 : index
    %c0_45 = arith.constant 0 : index
    %32 = vector.load %arg6[%c0_44, %c0_45] : memref<256x27xf32, #tpu.memory_space<vmem>>, vector<256x27xf32>
    %c0_46 = arith.constant 0 : index
    %c0_47 = arith.constant 0 : index
    %33 = vector.load %arg2[%c0_46, %c0_47] : memref<27x32xf32, #tpu.memory_space<vmem>>, vector<27x32xf32>
    %cst_48 = arith.constant dense<0.000000e+00> : vector<256x32xf32>
    %34 = tpu.matmul %32, %33, %cst_48 {dimension_numbers = #tpu.dot_dimension_numbers<[1], [0], [0], [1], [0, 0, 1, 1], [], []>} : vector<256x27xf32>, vector<27x32xf32>, vector<256x32xf32> -> vector<256x32xf32>
    %c0_49 = arith.constant 0 : index
    %c0_50 = arith.constant 0 : index
    %35 = vector.load %arg3[%c0_49, %c0_50] : memref<1x32xf32, #tpu.memory_space<vmem>>, vector<1x32xf32>
    %36 = vector.broadcast %35 : vector<1x32xf32> to vector<256x32xf32>
    %37 = arith.addf %34, %36 : vector<256x32xf32>
    %cst_51 = arith.constant 0.000000e+00 : f32
    %38 = vector.broadcast %cst_51 : f32 to vector<256x32xf32>
    %39 = arith.maximumf %37, %38 : vector<256x32xf32>
    %40 = vector.shape_cast %39 : vector<256x32xf32> to vector<128x2x32xf32>
    %41 = vector.extract_strided_slice %40 {offsets = [0, 0, 0], sizes = [128, 1, 32], strides = [1, 1, 1]} : vector<128x2x32xf32> to vector<128x1x32xf32>
    %42 = vector.shape_cast %41 : vector<128x1x32xf32> to vector<128x32xf32>
    %43 = vector.extract_strided_slice %40 {offsets = [0, 1, 0], sizes = [128, 1, 32], strides = [1, 1, 1]} : vector<128x2x32xf32> to vector<128x1x32xf32>
    %44 = vector.shape_cast %43 : vector<128x1x32xf32> to vector<128x32xf32>
    %45 = arith.maximumf %42, %44 : vector<128x32xf32>
    %46 = vector.shape_cast %45 : vector<128x32xf32> to vector<8x2x8x32xf32>
    %47 = vector.extract_strided_slice %46 {offsets = [0, 0, 0, 0], sizes = [8, 1, 8, 32], strides = [1, 1, 1, 1]} : vector<8x2x8x32xf32> to vector<8x1x8x32xf32>
    %48 = vector.shape_cast %47 : vector<8x1x8x32xf32> to vector<8x8x32xf32>
    %49 = vector.extract_strided_slice %46 {offsets = [0, 1, 0, 0], sizes = [8, 1, 8, 32], strides = [1, 1, 1, 1]} : vector<8x2x8x32xf32> to vector<8x1x8x32xf32>
    %50 = vector.shape_cast %49 : vector<8x1x8x32xf32> to vector<8x8x32xf32>
    %51 = arith.maximumf %48, %50 : vector<8x8x32xf32>
    %c0_52 = arith.constant 0 : index
    %c0_53 = arith.constant 0 : index
    %c0_54 = arith.constant 0 : index
    %c0_55 = arith.constant 0 : index
    %52 = vector.load %arg4[%c0_52, %c0_53, %c0_54, %c0_55] : memref<1x8x8x32xf32, #tpu.memory_space<vmem>>, vector<1x8x8x32xf32>
    %53 = vector.shape_cast %52 : vector<1x8x8x32xf32> to vector<8x8x32xf32>
    %54 = vector.shape_cast %51 : vector<8x8x32xf32> to vector<1x8x8x32xf32>
    tpu.vector_store %arg4[%c0_52, %c0_53, %c0_54, %c0_55], %54 {strides = array<i32>} : memref<1x8x8x32xf32, #tpu.memory_space<vmem>>, vector<1x8x8x32xf32>,
    return
  }
  func.func @transform_0(%arg0: i32) -> (i32, i32, i32, i32) {
    %c0_i32 = arith.constant 0 : i32
    %c0_i32_0 = arith.constant 0 : i32
    %c0_i32_1 = arith.constant 0 : i32
    %c0_i32_2 = arith.constant 0 : i32
    return %arg0, %c0_i32, %c0_i32_0, %c0_i32_1 : i32, i32, i32, i32
  }
  func.func @transform_1(%arg0: i32) -> (i32, i32) {
    %c0_i32 = arith.constant 0 : i32
    %c0_i32_0 = arith.constant 0 : i32
    %c0_i32_1 = arith.constant 0 : i32
    return %c0_i32, %c0_i32_0 : i32, i32
  }
  func.func @transform_2(%arg0: i32) -> (i32, i32) {
    %c0_i32 = arith.constant 0 : i32
    %c0_i32_0 = arith.constant 0 : i32
    %c0_i32_1 = arith.constant 0 : i32
    return %c0_i32, %c0_i32_0 : i32, i32
  }
  func.func @transform_3(%arg0: i32) -> (i32, i32, i32, i32) {
    %c0_i32 = arith.constant 0 : i32
    %c0_i32_0 = arith.constant 0 : i32
    %c0_i32_1 = arith.constant 0 : i32
    %c0_i32_2 = arith.constant 0 : i32
    return %arg0, %c0_i32, %c0_i32_0, %c0_i32_1 : i32, i32, i32, i32
  }
}

module attributes {stable_mosaic.version = 11 : i64} {
  func.func @conv_relu_pool_kernel(%arg0: i32, %arg1: memref<1x8x8x32xf32, #tpu.memory_space<vmem>>, %arg2: memref<288x64xf32, #tpu.memory_space<vmem>>, %arg3: memref<1x64xf32, #tpu.memory_space<vmem>>, %arg4: memref<1x4x4x64xf32, #tpu.memory_space<vmem>>, %arg5: memref<10x10x32xf32, #tpu.memory_space<vmem>>, %arg6: memref<64x288xf32, #tpu.memory_space<vmem>>) attributes {dimension_semantics = [#tpu.dimension_semantics<parallel>], iteration_bounds = array<i64: 2>, scalar_prefetch = 0 : i64, scratch_operands = 2 : i64, tpu.core_type = #tpu.core_type<tc>, window_params = [{transform_indices = @transform_0, window_bounds = array<i64: 1, 8, 8, 32>}, {pipeline_mode = #tpu.pipeline_mode<synchronous>, transform_indices = @transform_1, window_bounds = array<i64: 288, 64>}, {pipeline_mode = #tpu.pipeline_mode<synchronous>, transform_indices = @transform_2, window_bounds = array<i64: 1, 64>}, {transform_indices = @transform_3, window_bounds = array<i64: 1, 4, 4, 64>}]} {
    %cst = arith.constant 0.000000e+00 : f32
    %0 = vector.broadcast %cst : f32 to vector<10x10x32xf32>
    %c0 = arith.constant 0 : index
    %c0_0 = arith.constant 0 : index
    %c0_1 = arith.constant 0 : index
    %1 = vector.load %arg5[%c0, %c0_0, %c0_1] : memref<10x10x32xf32, #tpu.memory_space<vmem>>, vector<10x10x32xf32>
    tpu.vector_store %arg5[%c0, %c0_0, %c0_1], %0 {strides = array<i32>} : memref<10x10x32xf32, #tpu.memory_space<vmem>>, vector<10x10x32xf32>,
    %c0_2 = arith.constant 0 : index
    %c0_3 = arith.constant 0 : index
    %c0_4 = arith.constant 0 : index
    %c0_5 = arith.constant 0 : index
    %2 = vector.load %arg1[%c0_2, %c0_3, %c0_4, %c0_5] : memref<1x8x8x32xf32, #tpu.memory_space<vmem>>, vector<1x8x8x32xf32>
    %3 = vector.shape_cast %2 : vector<1x8x8x32xf32> to vector<8x8x32xf32>
    %c1 = arith.constant 1 : index
    %c1_6 = arith.constant 1 : index
    %c0_7 = arith.constant 0 : index
    %4 = vector.load %arg5[%c1, %c1_6, %c0_7] : memref<10x10x32xf32, #tpu.memory_space<vmem>>, vector<8x8x32xf32>
    tpu.vector_store %arg5[%c1, %c1_6, %c0_7], %3 {strides = array<i32>} : memref<10x10x32xf32, #tpu.memory_space<vmem>>, vector<8x8x32xf32>,
    %c0_8 = arith.constant 0 : index
    %c0_9 = arith.constant 0 : index
    %c0_10 = arith.constant 0 : index
    %5 = vector.load %arg5[%c0_8, %c0_9, %c0_10] : memref<10x10x32xf32, #tpu.memory_space<vmem>>, vector<8x8x32xf32>
    %6 = vector.shape_cast %5 : vector<8x8x32xf32> to vector<64x32xf32>
    %c0_11 = arith.constant 0 : index
    %c0_12 = arith.constant 0 : index
    %7 = vector.load %arg6[%c0_11, %c0_12] : memref<64x288xf32, #tpu.memory_space<vmem>>, vector<64x32xf32>
    tpu.vector_store %arg6[%c0_11, %c0_12], %6 {strides = array<i32>} : memref<64x288xf32, #tpu.memory_space<vmem>>, vector<64x32xf32>,
    %c0_13 = arith.constant 0 : index
    %c1_14 = arith.constant 1 : index
    %c0_15 = arith.constant 0 : index
    %8 = vector.load %arg5[%c0_13, %c1_14, %c0_15] : memref<10x10x32xf32, #tpu.memory_space<vmem>>, vector<8x8x32xf32>
    %9 = vector.shape_cast %8 : vector<8x8x32xf32> to vector<64x32xf32>
    %c0_16 = arith.constant 0 : index
    %c32 = arith.constant 32 : index
    %10 = vector.load %arg6[%c0_16, %c32] : memref<64x288xf32, #tpu.memory_space<vmem>>, vector<64x32xf32>
    tpu.vector_store %arg6[%c0_16, %c32], %9 {strides = array<i32>} : memref<64x288xf32, #tpu.memory_space<vmem>>, vector<64x32xf32>,
    %c0_17 = arith.constant 0 : index
    %c2 = arith.constant 2 : index
    %c0_18 = arith.constant 0 : index
    %11 = vector.load %arg5[%c0_17, %c2, %c0_18] : memref<10x10x32xf32, #tpu.memory_space<vmem>>, vector<8x8x32xf32>
    %12 = vector.shape_cast %11 : vector<8x8x32xf32> to vector<64x32xf32>
    %c0_19 = arith.constant 0 : index
    %c64 = arith.constant 64 : index
    %13 = vector.load %arg6[%c0_19, %c64] : memref<64x288xf32, #tpu.memory_space<vmem>>, vector<64x32xf32>
    tpu.vector_store %arg6[%c0_19, %c64], %12 {strides = array<i32>} : memref<64x288xf32, #tpu.memory_space<vmem>>, vector<64x32xf32>,
    %c1_20 = arith.constant 1 : index
    %c0_21 = arith.constant 0 : index
    %c0_22 = arith.constant 0 : index
    %14 = vector.load %arg5[%c1_20, %c0_21, %c0_22] : memref<10x10x32xf32, #tpu.memory_space<vmem>>, vector<8x8x32xf32>
    %15 = vector.shape_cast %14 : vector<8x8x32xf32> to vector<64x32xf32>
    %c0_23 = arith.constant 0 : index
    %c96 = arith.constant 96 : index
    %16 = vector.load %arg6[%c0_23, %c96] : memref<64x288xf32, #tpu.memory_space<vmem>>, vector<64x32xf32>
    tpu.vector_store %arg6[%c0_23, %c96], %15 {strides = array<i32>} : memref<64x288xf32, #tpu.memory_space<vmem>>, vector<64x32xf32>,
    %c1_24 = arith.constant 1 : index
    %c1_25 = arith.constant 1 : index
    %c0_26 = arith.constant 0 : index
    %17 = vector.load %arg5[%c1_24, %c1_25, %c0_26] : memref<10x10x32xf32, #tpu.memory_space<vmem>>, vector<8x8x32xf32>
    %18 = vector.shape_cast %17 : vector<8x8x32xf32> to vector<64x32xf32>
    %c0_27 = arith.constant 0 : index
    %c128 = arith.constant 128 : index
    %19 = vector.load %arg6[%c0_27, %c128] : memref<64x288xf32, #tpu.memory_space<vmem>>, vector<64x32xf32>
    tpu.vector_store %arg6[%c0_27, %c128], %18 {strides = array<i32>} : memref<64x288xf32, #tpu.memory_space<vmem>>, vector<64x32xf32>,
    %c1_28 = arith.constant 1 : index
    %c2_29 = arith.constant 2 : index
    %c0_30 = arith.constant 0 : index
    %20 = vector.load %arg5[%c1_28, %c2_29, %c0_30] : memref<10x10x32xf32, #tpu.memory_space<vmem>>, vector<8x8x32xf32>
    %21 = vector.shape_cast %20 : vector<8x8x32xf32> to vector<64x32xf32>
    %c0_31 = arith.constant 0 : index
    %c160 = arith.constant 160 : index
    %22 = vector.load %arg6[%c0_31, %c160] : memref<64x288xf32, #tpu.memory_space<vmem>>, vector<64x32xf32>
    tpu.vector_store %arg6[%c0_31, %c160], %21 {strides = array<i32>} : memref<64x288xf32, #tpu.memory_space<vmem>>, vector<64x32xf32>,
    %c2_32 = arith.constant 2 : index
    %c0_33 = arith.constant 0 : index
    %c0_34 = arith.constant 0 : index
    %23 = vector.load %arg5[%c2_32, %c0_33, %c0_34] : memref<10x10x32xf32, #tpu.memory_space<vmem>>, vector<8x8x32xf32>
    %24 = vector.shape_cast %23 : vector<8x8x32xf32> to vector<64x32xf32>
    %c0_35 = arith.constant 0 : index
    %c192 = arith.constant 192 : index
    %25 = vector.load %arg6[%c0_35, %c192] : memref<64x288xf32, #tpu.memory_space<vmem>>, vector<64x32xf32>
    tpu.vector_store %arg6[%c0_35, %c192], %24 {strides = array<i32>} : memref<64x288xf32, #tpu.memory_space<vmem>>, vector<64x32xf32>,
    %c2_36 = arith.constant 2 : index
    %c1_37 = arith.constant 1 : index
    %c0_38 = arith.constant 0 : index
    %26 = vector.load %arg5[%c2_36, %c1_37, %c0_38] : memref<10x10x32xf32, #tpu.memory_space<vmem>>, vector<8x8x32xf32>
    %27 = vector.shape_cast %26 : vector<8x8x32xf32> to vector<64x32xf32>
    %c0_39 = arith.constant 0 : index
    %c224 = arith.constant 224 : index
    %28 = vector.load %arg6[%c0_39, %c224] : memref<64x288xf32, #tpu.memory_space<vmem>>, vector<64x32xf32>
    tpu.vector_store %arg6[%c0_39, %c224], %27 {strides = array<i32>} : memref<64x288xf32, #tpu.memory_space<vmem>>, vector<64x32xf32>,
    %c2_40 = arith.constant 2 : index
    %c2_41 = arith.constant 2 : index
    %c0_42 = arith.constant 0 : index
    %29 = vector.load %arg5[%c2_40, %c2_41, %c0_42] : memref<10x10x32xf32, #tpu.memory_space<vmem>>, vector<8x8x32xf32>
    %30 = vector.shape_cast %29 : vector<8x8x32xf32> to vector<64x32xf32>
    %c0_43 = arith.constant 0 : index
    %c256 = arith.constant 256 : index
    %31 = vector.load %arg6[%c0_43, %c256] : memref<64x288xf32, #tpu.memory_space<vmem>>, vector<64x32xf32>
    tpu.vector_store %arg6[%c0_43, %c256], %30 {strides = array<i32>} : memref<64x288xf32, #tpu.memory_space<vmem>>, vector<64x32xf32>,
    %c0_44 = arith.constant 0 : index
    %c0_45 = arith.constant 0 : index
    %32 = vector.load %arg6[%c0_44, %c0_45] : memref<64x288xf32, #tpu.memory_space<vmem>>, vector<64x288xf32>
    %c0_46 = arith.constant 0 : index
    %c0_47 = arith.constant 0 : index
    %33 = vector.load %arg2[%c0_46, %c0_47] : memref<288x64xf32, #tpu.memory_space<vmem>>, vector<288x64xf32>
    %cst_48 = arith.constant dense<0.000000e+00> : vector<64x64xf32>
    %34 = tpu.matmul %32, %33, %cst_48 {dimension_numbers = #tpu.dot_dimension_numbers<[1], [0], [0], [1], [0, 0, 1, 1], [], []>} : vector<64x288xf32>, vector<288x64xf32>, vector<64x64xf32> -> vector<64x64xf32>
    %c0_49 = arith.constant 0 : index
    %c0_50 = arith.constant 0 : index
    %35 = vector.load %arg3[%c0_49, %c0_50] : memref<1x64xf32, #tpu.memory_space<vmem>>, vector<1x64xf32>
    %36 = vector.broadcast %35 : vector<1x64xf32> to vector<64x64xf32>
    %37 = arith.addf %34, %36 : vector<64x64xf32>
    %cst_51 = arith.constant 0.000000e+00 : f32
    %38 = vector.broadcast %cst_51 : f32 to vector<64x64xf32>
    %39 = arith.maximumf %37, %38 : vector<64x64xf32>
    %40 = vector.shape_cast %39 : vector<64x64xf32> to vector<32x2x64xf32>
    %41 = vector.extract_strided_slice %40 {offsets = [0, 0, 0], sizes = [32, 1, 64], strides = [1, 1, 1]} : vector<32x2x64xf32> to vector<32x1x64xf32>
    %42 = vector.shape_cast %41 : vector<32x1x64xf32> to vector<32x64xf32>
    %43 = vector.extract_strided_slice %40 {offsets = [0, 1, 0], sizes = [32, 1, 64], strides = [1, 1, 1]} : vector<32x2x64xf32> to vector<32x1x64xf32>
    %44 = vector.shape_cast %43 : vector<32x1x64xf32> to vector<32x64xf32>
    %45 = arith.maximumf %42, %44 : vector<32x64xf32>
    %46 = vector.shape_cast %45 : vector<32x64xf32> to vector<4x2x4x64xf32>
    %47 = vector.extract_strided_slice %46 {offsets = [0, 0, 0, 0], sizes = [4, 1, 4, 64], strides = [1, 1, 1, 1]} : vector<4x2x4x64xf32> to vector<4x1x4x64xf32>
    %48 = vector.shape_cast %47 : vector<4x1x4x64xf32> to vector<4x4x64xf32>
    %49 = vector.extract_strided_slice %46 {offsets = [0, 1, 0, 0], sizes = [4, 1, 4, 64], strides = [1, 1, 1, 1]} : vector<4x2x4x64xf32> to vector<4x1x4x64xf32>
    %50 = vector.shape_cast %49 : vector<4x1x4x64xf32> to vector<4x4x64xf32>
    %51 = arith.maximumf %48, %50 : vector<4x4x64xf32>
    %c0_52 = arith.constant 0 : index
    %c0_53 = arith.constant 0 : index
    %c0_54 = arith.constant 0 : index
    %c0_55 = arith.constant 0 : index
    %52 = vector.load %arg4[%c0_52, %c0_53, %c0_54, %c0_55] : memref<1x4x4x64xf32, #tpu.memory_space<vmem>>, vector<1x4x4x64xf32>
    %53 = vector.shape_cast %52 : vector<1x4x4x64xf32> to vector<4x4x64xf32>
    %54 = vector.shape_cast %51 : vector<4x4x64xf32> to vector<1x4x4x64xf32>
    tpu.vector_store %arg4[%c0_52, %c0_53, %c0_54, %c0_55], %54 {strides = array<i32>} : memref<1x4x4x64xf32, #tpu.memory_space<vmem>>, vector<1x4x4x64xf32>,
    return
  }
  func.func @transform_0(%arg0: i32) -> (i32, i32, i32, i32) {
    %c0_i32 = arith.constant 0 : i32
    %c0_i32_0 = arith.constant 0 : i32
    %c0_i32_1 = arith.constant 0 : i32
    %c0_i32_2 = arith.constant 0 : i32
    return %arg0, %c0_i32, %c0_i32_0, %c0_i32_1 : i32, i32, i32, i32
  }
  func.func @transform_1(%arg0: i32) -> (i32, i32) {
    %c0_i32 = arith.constant 0 : i32
    %c0_i32_0 = arith.constant 0 : i32
    %c0_i32_1 = arith.constant 0 : i32
    return %c0_i32, %c0_i32_0 : i32, i32
  }
  func.func @transform_2(%arg0: i32) -> (i32, i32) {
    %c0_i32 = arith.constant 0 : i32
    %c0_i32_0 = arith.constant 0 : i32
    %c0_i32_1 = arith.constant 0 : i32
    return %c0_i32, %c0_i32_0 : i32, i32
  }
  func.func @transform_3(%arg0: i32) -> (i32, i32, i32, i32) {
    %c0_i32 = arith.constant 0 : i32
    %c0_i32_0 = arith.constant 0 : i32
    %c0_i32_1 = arith.constant 0 : i32
    %c0_i32_2 = arith.constant 0 : i32
    return %arg0, %c0_i32, %c0_i32_0, %c0_i32_1 : i32, i32, i32, i32
  }
}

module attributes {stable_mosaic.version = 11 : i64} {
  func.func @conv_relu_pool_kernel(%arg0: i32, %arg1: memref<1x4x4x64xf32, #tpu.memory_space<vmem>>, %arg2: memref<576x128xf32, #tpu.memory_space<vmem>>, %arg3: memref<1x128xf32, #tpu.memory_space<vmem>>, %arg4: memref<1x2x2x128xf32, #tpu.memory_space<vmem>>, %arg5: memref<6x6x64xf32, #tpu.memory_space<vmem>>, %arg6: memref<16x576xf32, #tpu.memory_space<vmem>>) attributes {dimension_semantics = [#tpu.dimension_semantics<parallel>], iteration_bounds = array<i64: 2>, scalar_prefetch = 0 : i64, scratch_operands = 2 : i64, tpu.core_type = #tpu.core_type<tc>, window_params = [{transform_indices = @transform_0, window_bounds = array<i64: 1, 4, 4, 64>}, {pipeline_mode = #tpu.pipeline_mode<synchronous>, transform_indices = @transform_1, window_bounds = array<i64: 576, 128>}, {pipeline_mode = #tpu.pipeline_mode<synchronous>, transform_indices = @transform_2, window_bounds = array<i64: 1, 128>}, {transform_indices = @transform_3, window_bounds = array<i64: 1, 2, 2, 128>}]} {
    %cst = arith.constant 0.000000e+00 : f32
    %0 = vector.broadcast %cst : f32 to vector<6x6x64xf32>
    %c0 = arith.constant 0 : index
    %c0_0 = arith.constant 0 : index
    %c0_1 = arith.constant 0 : index
    %1 = vector.load %arg5[%c0, %c0_0, %c0_1] : memref<6x6x64xf32, #tpu.memory_space<vmem>>, vector<6x6x64xf32>
    tpu.vector_store %arg5[%c0, %c0_0, %c0_1], %0 {strides = array<i32>} : memref<6x6x64xf32, #tpu.memory_space<vmem>>, vector<6x6x64xf32>,
    %c0_2 = arith.constant 0 : index
    %c0_3 = arith.constant 0 : index
    %c0_4 = arith.constant 0 : index
    %c0_5 = arith.constant 0 : index
    %2 = vector.load %arg1[%c0_2, %c0_3, %c0_4, %c0_5] : memref<1x4x4x64xf32, #tpu.memory_space<vmem>>, vector<1x4x4x64xf32>
    %3 = vector.shape_cast %2 : vector<1x4x4x64xf32> to vector<4x4x64xf32>
    %c1 = arith.constant 1 : index
    %c1_6 = arith.constant 1 : index
    %c0_7 = arith.constant 0 : index
    %4 = vector.load %arg5[%c1, %c1_6, %c0_7] : memref<6x6x64xf32, #tpu.memory_space<vmem>>, vector<4x4x64xf32>
    tpu.vector_store %arg5[%c1, %c1_6, %c0_7], %3 {strides = array<i32>} : memref<6x6x64xf32, #tpu.memory_space<vmem>>, vector<4x4x64xf32>,
    %c0_8 = arith.constant 0 : index
    %c0_9 = arith.constant 0 : index
    %c0_10 = arith.constant 0 : index
    %5 = vector.load %arg5[%c0_8, %c0_9, %c0_10] : memref<6x6x64xf32, #tpu.memory_space<vmem>>, vector<4x4x64xf32>
    %6 = vector.shape_cast %5 : vector<4x4x64xf32> to vector<16x64xf32>
    %c0_11 = arith.constant 0 : index
    %c0_12 = arith.constant 0 : index
    %7 = vector.load %arg6[%c0_11, %c0_12] : memref<16x576xf32, #tpu.memory_space<vmem>>, vector<16x64xf32>
    tpu.vector_store %arg6[%c0_11, %c0_12], %6 {strides = array<i32>} : memref<16x576xf32, #tpu.memory_space<vmem>>, vector<16x64xf32>,
    %c0_13 = arith.constant 0 : index
    %c1_14 = arith.constant 1 : index
    %c0_15 = arith.constant 0 : index
    %8 = vector.load %arg5[%c0_13, %c1_14, %c0_15] : memref<6x6x64xf32, #tpu.memory_space<vmem>>, vector<4x4x64xf32>
    %9 = vector.shape_cast %8 : vector<4x4x64xf32> to vector<16x64xf32>
    %c0_16 = arith.constant 0 : index
    %c64 = arith.constant 64 : index
    %10 = vector.load %arg6[%c0_16, %c64] : memref<16x576xf32, #tpu.memory_space<vmem>>, vector<16x64xf32>
    tpu.vector_store %arg6[%c0_16, %c64], %9 {strides = array<i32>} : memref<16x576xf32, #tpu.memory_space<vmem>>, vector<16x64xf32>,
    %c0_17 = arith.constant 0 : index
    %c2 = arith.constant 2 : index
    %c0_18 = arith.constant 0 : index
    %11 = vector.load %arg5[%c0_17, %c2, %c0_18] : memref<6x6x64xf32, #tpu.memory_space<vmem>>, vector<4x4x64xf32>
    %12 = vector.shape_cast %11 : vector<4x4x64xf32> to vector<16x64xf32>
    %c0_19 = arith.constant 0 : index
    %c128 = arith.constant 128 : index
    %13 = vector.load %arg6[%c0_19, %c128] : memref<16x576xf32, #tpu.memory_space<vmem>>, vector<16x64xf32>
    tpu.vector_store %arg6[%c0_19, %c128], %12 {strides = array<i32>} : memref<16x576xf32, #tpu.memory_space<vmem>>, vector<16x64xf32>,
    %c1_20 = arith.constant 1 : index
    %c0_21 = arith.constant 0 : index
    %c0_22 = arith.constant 0 : index
    %14 = vector.load %arg5[%c1_20, %c0_21, %c0_22] : memref<6x6x64xf32, #tpu.memory_space<vmem>>, vector<4x4x64xf32>
    %15 = vector.shape_cast %14 : vector<4x4x64xf32> to vector<16x64xf32>
    %c0_23 = arith.constant 0 : index
    %c192 = arith.constant 192 : index
    %16 = vector.load %arg6[%c0_23, %c192] : memref<16x576xf32, #tpu.memory_space<vmem>>, vector<16x64xf32>
    tpu.vector_store %arg6[%c0_23, %c192], %15 {strides = array<i32>} : memref<16x576xf32, #tpu.memory_space<vmem>>, vector<16x64xf32>,
    %c1_24 = arith.constant 1 : index
    %c1_25 = arith.constant 1 : index
    %c0_26 = arith.constant 0 : index
    %17 = vector.load %arg5[%c1_24, %c1_25, %c0_26] : memref<6x6x64xf32, #tpu.memory_space<vmem>>, vector<4x4x64xf32>
    %18 = vector.shape_cast %17 : vector<4x4x64xf32> to vector<16x64xf32>
    %c0_27 = arith.constant 0 : index
    %c256 = arith.constant 256 : index
    %19 = vector.load %arg6[%c0_27, %c256] : memref<16x576xf32, #tpu.memory_space<vmem>>, vector<16x64xf32>
    tpu.vector_store %arg6[%c0_27, %c256], %18 {strides = array<i32>} : memref<16x576xf32, #tpu.memory_space<vmem>>, vector<16x64xf32>,
    %c1_28 = arith.constant 1 : index
    %c2_29 = arith.constant 2 : index
    %c0_30 = arith.constant 0 : index
    %20 = vector.load %arg5[%c1_28, %c2_29, %c0_30] : memref<6x6x64xf32, #tpu.memory_space<vmem>>, vector<4x4x64xf32>
    %21 = vector.shape_cast %20 : vector<4x4x64xf32> to vector<16x64xf32>
    %c0_31 = arith.constant 0 : index
    %c320 = arith.constant 320 : index
    %22 = vector.load %arg6[%c0_31, %c320] : memref<16x576xf32, #tpu.memory_space<vmem>>, vector<16x64xf32>
    tpu.vector_store %arg6[%c0_31, %c320], %21 {strides = array<i32>} : memref<16x576xf32, #tpu.memory_space<vmem>>, vector<16x64xf32>,
    %c2_32 = arith.constant 2 : index
    %c0_33 = arith.constant 0 : index
    %c0_34 = arith.constant 0 : index
    %23 = vector.load %arg5[%c2_32, %c0_33, %c0_34] : memref<6x6x64xf32, #tpu.memory_space<vmem>>, vector<4x4x64xf32>
    %24 = vector.shape_cast %23 : vector<4x4x64xf32> to vector<16x64xf32>
    %c0_35 = arith.constant 0 : index
    %c384 = arith.constant 384 : index
    %25 = vector.load %arg6[%c0_35, %c384] : memref<16x576xf32, #tpu.memory_space<vmem>>, vector<16x64xf32>
    tpu.vector_store %arg6[%c0_35, %c384], %24 {strides = array<i32>} : memref<16x576xf32, #tpu.memory_space<vmem>>, vector<16x64xf32>,
    %c2_36 = arith.constant 2 : index
    %c1_37 = arith.constant 1 : index
    %c0_38 = arith.constant 0 : index
    %26 = vector.load %arg5[%c2_36, %c1_37, %c0_38] : memref<6x6x64xf32, #tpu.memory_space<vmem>>, vector<4x4x64xf32>
    %27 = vector.shape_cast %26 : vector<4x4x64xf32> to vector<16x64xf32>
    %c0_39 = arith.constant 0 : index
    %c448 = arith.constant 448 : index
    %28 = vector.load %arg6[%c0_39, %c448] : memref<16x576xf32, #tpu.memory_space<vmem>>, vector<16x64xf32>
    tpu.vector_store %arg6[%c0_39, %c448], %27 {strides = array<i32>} : memref<16x576xf32, #tpu.memory_space<vmem>>, vector<16x64xf32>,
    %c2_40 = arith.constant 2 : index
    %c2_41 = arith.constant 2 : index
    %c0_42 = arith.constant 0 : index
    %29 = vector.load %arg5[%c2_40, %c2_41, %c0_42] : memref<6x6x64xf32, #tpu.memory_space<vmem>>, vector<4x4x64xf32>
    %30 = vector.shape_cast %29 : vector<4x4x64xf32> to vector<16x64xf32>
    %c0_43 = arith.constant 0 : index
    %c512 = arith.constant 512 : index
    %31 = vector.load %arg6[%c0_43, %c512] : memref<16x576xf32, #tpu.memory_space<vmem>>, vector<16x64xf32>
    tpu.vector_store %arg6[%c0_43, %c512], %30 {strides = array<i32>} : memref<16x576xf32, #tpu.memory_space<vmem>>, vector<16x64xf32>,
    %c0_44 = arith.constant 0 : index
    %c0_45 = arith.constant 0 : index
    %32 = vector.load %arg6[%c0_44, %c0_45] : memref<16x576xf32, #tpu.memory_space<vmem>>, vector<16x576xf32>
    %c0_46 = arith.constant 0 : index
    %c0_47 = arith.constant 0 : index
    %33 = vector.load %arg2[%c0_46, %c0_47] : memref<576x128xf32, #tpu.memory_space<vmem>>, vector<576x128xf32>
    %cst_48 = arith.constant dense<0.000000e+00> : vector<16x128xf32>
    %34 = tpu.matmul %32, %33, %cst_48 {dimension_numbers = #tpu.dot_dimension_numbers<[1], [0], [0], [1], [0, 0, 1, 1], [], []>} : vector<16x576xf32>, vector<576x128xf32>, vector<16x128xf32> -> vector<16x128xf32>
    %c0_49 = arith.constant 0 : index
    %c0_50 = arith.constant 0 : index
    %35 = vector.load %arg3[%c0_49, %c0_50] : memref<1x128xf32, #tpu.memory_space<vmem>>, vector<1x128xf32>
    %36 = vector.broadcast %35 : vector<1x128xf32> to vector<16x128xf32>
    %37 = arith.addf %34, %36 : vector<16x128xf32>
    %cst_51 = arith.constant 0.000000e+00 : f32
    %38 = vector.broadcast %cst_51 : f32 to vector<16x128xf32>
    %39 = arith.maximumf %37, %38 : vector<16x128xf32>
    %40 = vector.shape_cast %39 : vector<16x128xf32> to vector<8x2x128xf32>
    %41 = vector.extract_strided_slice %40 {offsets = [0, 0, 0], sizes = [8, 1, 128], strides = [1, 1, 1]} : vector<8x2x128xf32> to vector<8x1x128xf32>
    %42 = vector.shape_cast %41 : vector<8x1x128xf32> to vector<8x128xf32>
    %43 = vector.extract_strided_slice %40 {offsets = [0, 1, 0], sizes = [8, 1, 128], strides = [1, 1, 1]} : vector<8x2x128xf32> to vector<8x1x128xf32>
    %44 = vector.shape_cast %43 : vector<8x1x128xf32> to vector<8x128xf32>
    %45 = arith.maximumf %42, %44 : vector<8x128xf32>
    %46 = vector.shape_cast %45 : vector<8x128xf32> to vector<2x2x2x128xf32>
    %47 = vector.extract_strided_slice %46 {offsets = [0, 0, 0, 0], sizes = [2, 1, 2, 128], strides = [1, 1, 1, 1]} : vector<2x2x2x128xf32> to vector<2x1x2x128xf32>
    %48 = vector.shape_cast %47 : vector<2x1x2x128xf32> to vector<2x2x128xf32>
    %49 = vector.extract_strided_slice %46 {offsets = [0, 1, 0, 0], sizes = [2, 1, 2, 128], strides = [1, 1, 1, 1]} : vector<2x2x2x128xf32> to vector<2x1x2x128xf32>
    %50 = vector.shape_cast %49 : vector<2x1x2x128xf32> to vector<2x2x128xf32>
    %51 = arith.maximumf %48, %50 : vector<2x2x128xf32>
    %c0_52 = arith.constant 0 : index
    %c0_53 = arith.constant 0 : index
    %c0_54 = arith.constant 0 : index
    %c0_55 = arith.constant 0 : index
    %52 = vector.load %arg4[%c0_52, %c0_53, %c0_54, %c0_55] : memref<1x2x2x128xf32, #tpu.memory_space<vmem>>, vector<1x2x2x128xf32>
    %53 = vector.shape_cast %52 : vector<1x2x2x128xf32> to vector<2x2x128xf32>
    %54 = vector.shape_cast %51 : vector<2x2x128xf32> to vector<1x2x2x128xf32>
    tpu.vector_store %arg4[%c0_52, %c0_53, %c0_54, %c0_55], %54 {strides = array<i32>} : memref<1x2x2x128xf32, #tpu.memory_space<vmem>>, vector<1x2x2x128xf32>,
    return
  }
  func.func @transform_0(%arg0: i32) -> (i32, i32, i32, i32) {
    %c0_i32 = arith.constant 0 : i32
    %c0_i32_0 = arith.constant 0 : i32
    %c0_i32_1 = arith.constant 0 : i32
    %c0_i32_2 = arith.constant 0 : i32
    return %arg0, %c0_i32, %c0_i32_0, %c0_i32_1 : i32, i32, i32, i32
  }
  func.func @transform_1(%arg0: i32) -> (i32, i32) {
    %c0_i32 = arith.constant 0 : i32
    %c0_i32_0 = arith.constant 0 : i32
    %c0_i32_1 = arith.constant 0 : i32
    return %c0_i32, %c0_i32_0 : i32, i32
  }
  func.func @transform_2(%arg0: i32) -> (i32, i32) {
    %c0_i32 = arith.constant 0 : i32
    %c0_i32_0 = arith.constant 0 : i32
    %c0_i32_1 = arith.constant 0 : i32
    return %c0_i32, %c0_i32_0 : i32, i32
  }
  func.func @transform_3(%arg0: i32) -> (i32, i32, i32, i32) {
    %c0_i32 = arith.constant 0 : i32
    %c0_i32_0 = arith.constant 0 : i32
    %c0_i32_1 = arith.constant 0 : i32
    %c0_i32_2 = arith.constant 0 : i32
    return %arg0, %c0_i32, %c0_i32_0, %c0_i32_1 : i32, i32, i32, i32
  }
}

module attributes {stable_mosaic.version = 11 : i64} {
  func.func @classifier_kernel(%arg0: memref<2x512xf32, #tpu.memory_space<vmem>>, %arg1: memref<512x128xf32, #tpu.memory_space<vmem>>, %arg2: memref<1x128xf32, #tpu.memory_space<vmem>>, %arg3: memref<128x128xf32, #tpu.memory_space<vmem>>, %arg4: memref<1x128xf32, #tpu.memory_space<vmem>>, %arg5: memref<128x10xf32, #tpu.memory_space<vmem>>, %arg6: memref<1x10xf32, #tpu.memory_space<vmem>>, %arg7: memref<2x10xf32, #tpu.memory_space<vmem>>) attributes {dimension_semantics = [], scalar_prefetch = 0 : i64, scratch_operands = 0 : i64, tpu.core_type = #tpu.core_type<tc>} {
    %c0 = arith.constant 0 : index
    %c0_0 = arith.constant 0 : index
    %0 = vector.load %arg0[%c0, %c0_0] : memref<2x512xf32, #tpu.memory_space<vmem>>, vector<2x512xf32>
    %c0_1 = arith.constant 0 : index
    %c0_2 = arith.constant 0 : index
    %1 = vector.load %arg1[%c0_1, %c0_2] : memref<512x128xf32, #tpu.memory_space<vmem>>, vector<512x128xf32>
    %cst = arith.constant dense<0.000000e+00> : vector<2x128xf32>
    %2 = tpu.matmul %0, %1, %cst {dimension_numbers = #tpu.dot_dimension_numbers<[1], [0], [0], [1], [0, 0, 1, 1], [], []>} : vector<2x512xf32>, vector<512x128xf32>, vector<2x128xf32> -> vector<2x128xf32>
    %c0_3 = arith.constant 0 : index
    %c0_4 = arith.constant 0 : index
    %3 = vector.load %arg2[%c0_3, %c0_4] : memref<1x128xf32, #tpu.memory_space<vmem>>, vector<1x128xf32>
    %4 = vector.broadcast %3 : vector<1x128xf32> to vector<2x128xf32>
    %5 = arith.addf %2, %4 : vector<2x128xf32>
    %cst_5 = arith.constant 0.000000e+00 : f32
    %6 = vector.broadcast %cst_5 : f32 to vector<2x128xf32>
    %7 = arith.maximumf %5, %6 : vector<2x128xf32>
    %c0_6 = arith.constant 0 : index
    %c0_7 = arith.constant 0 : index
    %8 = vector.load %arg3[%c0_6, %c0_7] : memref<128x128xf32, #tpu.memory_space<vmem>>, vector<128x128xf32>
    %cst_8 = arith.constant dense<0.000000e+00> : vector<2x128xf32>
    %9 = tpu.matmul %7, %8, %cst_8 {dimension_numbers = #tpu.dot_dimension_numbers<[1], [0], [0], [1], [0, 0, 1, 1], [], []>} : vector<2x128xf32>, vector<128x128xf32>, vector<2x128xf32> -> vector<2x128xf32>
    %c0_9 = arith.constant 0 : index
    %c0_10 = arith.constant 0 : index
    %10 = vector.load %arg4[%c0_9, %c0_10] : memref<1x128xf32, #tpu.memory_space<vmem>>, vector<1x128xf32>
    %11 = vector.broadcast %10 : vector<1x128xf32> to vector<2x128xf32>
    %12 = arith.addf %9, %11 : vector<2x128xf32>
    %cst_11 = arith.constant 0.000000e+00 : f32
    %13 = vector.broadcast %cst_11 : f32 to vector<2x128xf32>
    %14 = arith.maximumf %12, %13 : vector<2x128xf32>
    %c0_12 = arith.constant 0 : index
    %c0_13 = arith.constant 0 : index
    %15 = vector.load %arg5[%c0_12, %c0_13] : memref<128x10xf32, #tpu.memory_space<vmem>>, vector<128x10xf32>
    %cst_14 = arith.constant dense<0.000000e+00> : vector<2x10xf32>
    %16 = tpu.matmul %14, %15, %cst_14 {dimension_numbers = #tpu.dot_dimension_numbers<[1], [0], [0], [1], [0, 0, 1, 1], [], []>} : vector<2x128xf32>, vector<128x10xf32>, vector<2x10xf32> -> vector<2x10xf32>
    %c0_15 = arith.constant 0 : index
    %c0_16 = arith.constant 0 : index
    %17 = vector.load %arg6[%c0_15, %c0_16] : memref<1x10xf32, #tpu.memory_space<vmem>>, vector<1x10xf32>
    %18 = vector.broadcast %17 : vector<1x10xf32> to vector<2x10xf32>
    %19 = arith.addf %16, %18 : vector<2x10xf32>
    %c0_17 = arith.constant 0 : index
    %c0_18 = arith.constant 0 : index
    %20 = vector.load %arg7[%c0_17, %c0_18] : memref<2x10xf32, #tpu.memory_space<vmem>>, vector<2x10xf32>
    tpu.vector_store %arg7[%c0_17, %c0_18], %19 {strides = array<i32>} : memref<2x10xf32, #tpu.memory_space<vmem>>, vector<2x10xf32>,
    return
  }
}

</mosaic_0001>

<llo_original>
// kernel: vgg_forward.6
$region0: #{vgg_forward.6}
  #allocation0 [shape = 'u32[]', space=smem, size = 0x4, offset = 0x4, fixed_abs, tag = 'smem constant byte address 0x4 - core index']
  #allocation1 [shape = 'u32[144,128]{1,0:T(1,128)}', space=vmem, size = 0x12000, scoped, tag = 'internal scratch']
  #allocation2 [shape = 'f32[6,6,64]{2,1,0:T(8,128)}', space=vmem, size = 0x6000, scoped, tag = 'scratch operand']
  #allocation3 [shape = 'f32[16,576]{1,0:T(8,128)}', space=vmem, size = 0xa000, scoped, tag = 'scratch operand']
  %s0 = inlined_call_operand.vmem [shape: f32[2,4,4,64], index: 0, kind: input, shape index: {}]
  %s1 = inlined_call_operand.vmem [shape: f32[576,128], index: 1, kind: input, shape index: {}]
  %s2 = inlined_call_operand.vmem [shape: f32[1,128], index: 2, kind: input, shape index: {}]
  %s3 = inlined_call_operand.vmem [shape: f32[2,2,2,128], index: 3, kind: output, shape index: {}]
  %s4 = sld [smem:[#allocation0]]
  $region45: #{vgg_forward.6} parent=0
    _
  %s6 = ssub.s32 1, %s4
  %s7 = scalar_select 0, %s6, %s4
  loop: start=0, step=1, limit=4
  $region2: #{vgg_forward.6} parent=0 // loop_pre_header
    _
  $region3: #{vgg_forward.6} parent=0 // loop_header
    %s9 = sphi 0, %s13
    %p10 = scmp.ge.s32.totalorder %s9, 4
    %s19 = sphi 0, %s21
    %s22 = sphi 0, %s19
    %s23 = sphi 0, %s22
    %s39 = sphi 0, %s23
    %s43 = sphi 0, %s43
    %s45 = sphi 0, %s43
    %s46 = sphi 0, %s45
    %s60 = sphi 0, %s46
    %s64 = sphi 0, %s64
    %s66 = sphi 0, %s64
    %s67 = sphi 0, %s66
    %s81 = sphi 0, %s67
    %s87 = sphi 0, %s89
    %s90 = sphi 0, %s87
    %s91 = sphi 0, %s90
    %s107 = sphi 0, %s91
  $region4: #{vgg_forward.6} parent=0 // loop_header_branch
    %12 = sbr.rel (%p10) target = $region8
  $region5: #{vgg_forward.6} parent=0 // loop_body
    %s14 = ssub.s32 %s9, 1
    %s15 = ssub.s32 %s9, 2
    %s16 = sadd.s32 %s9, 1
    %s17 = ssub.s32 %s9, %s16
    %p18 = scmp.eq.s32.totalorder %s17, 0
    %s20 = sadd.s32 %s19, 1
    %s21 = scalar_select %p18, %s19, %s20
    %p24 = pneg %p18
    %p25 = scmp.eq.s32.totalorder %s9, 1
    %p26 = por %p24, %p25
    %p27 = scmp.ne.s32.totalorder %s19, %s22
    %p28 = scmp.eq.s32.totalorder %s9, 0
    %p29 = por %p27, %p28
    %p30 = scmp.ne.s32.totalorder %s19, %s22
    %p31 = scmp.eq.s32.totalorder %s14, 1
    %p32 = por %p30, %p31
    %p33 = scmp.ne.s32.totalorder %s22, %s23
    %p34 = scmp.eq.s32.totalorder %s14, 0
    %p35 = por %p33, %p34
    %p36 = scmp.ne.s32.totalorder %s22, %s23
    %p37 = scmp.eq.s32.totalorder %s15, 1
    %p38 = por %p36, %p37
    %p40 = scmp.ne.s32.totalorder %s23, %s39
    %p41 = scmp.eq.s32.totalorder %s15, 0
    %p42 = por %p40, %p41
    %s44 = sadd.s32 %s43, 1
    %p47 = scmp.eq.s32.totalorder %s9, 1
    %p48 = scmp.ne.s32.totalorder %s43, %s45
    %p49 = scmp.eq.s32.totalorder %s9, 0
    %p50 = por %p48, %p49
    %p51 = scmp.ne.s32.totalorder %s43, %s45
    %p52 = scmp.eq.s32.totalorder %s14, 1
    %p53 = por %p51, %p52
    %p54 = scmp.ne.s32.totalorder %s45, %s46
    %p55 = scmp.eq.s32.totalorder %s14, 0
    %p56 = por %p54, %p55
    %p57 = scmp.ne.s32.totalorder %s45, %s46
    %p58 = scmp.eq.s32.totalorder %s15, 1
    %p59 = por %p57, %p58
    %p61 = scmp.ne.s32.totalorder %s46, %s60
    %p62 = scmp.eq.s32.totalorder %s15, 0
    %p63 = por %p61, %p62
    %s65 = sadd.s32 %s64, 1
    %p68 = scmp.eq.s32.totalorder %s9, 1
    %p69 = scmp.ne.s32.totalorder %s64, %s66
    %p70 = scmp.eq.s32.totalorder %s9, 0
    %p71 = por %p69, %p70
    %p72 = scmp.ne.s32.totalorder %s64, %s66
    %p73 = scmp.eq.s32.totalorder %s14, 1
    %p74 = por %p72, %p73
    %p75 = scmp.ne.s32.totalorder %s66, %s67
    %p76 = scmp.eq.s32.totalorder %s14, 0
    %p77 = por %p75, %p76
    %p78 = scmp.ne.s32.totalorder %s66, %s67
    %p79 = scmp.eq.s32.totalorder %s15, 1
    %p80 = por %p78, %p79
    %p82 = scmp.ne.s32.totalorder %s67, %s81
    %p83 = scmp.eq.s32.totalorder %s15, 0
    %p84 = por %p82, %p83
    %s85 = ssub.s32 %s9, %s16
    %p86 = scmp.eq.s32.totalorder %s85, 0
    %s88 = sadd.s32 %s87, 1
    %s89 = scalar_select %p86, %s87, %s88
    %p92 = pneg %p86
    %p93 = scmp.eq.s32.totalorder %s9, 1
    %p94 = por %p92, %p93
    %p95 = scmp.ne.s32.totalorder %s87, %s90
    %p96 = scmp.eq.s32.totalorder %s9, 0
    %p97 = por %p95, %p96
    %p98 = scmp.ne.s32.totalorder %s87, %s90
    %p99 = scmp.eq.s32.totalorder %s14, 1
    %p100 = por %p98, %p99
    %p101 = scmp.ne.s32.totalorder %s90, %s91
    %p102 = scmp.eq.s32.totalorder %s14, 0
    %p103 = por %p101, %p102
    %p104 = scmp.ne.s32.totalorder %s90, %s91
    %p105 = scmp.eq.s32.totalorder %s15, 1
    %p106 = por %p104, %p105
    %p108 = scmp.ne.s32.totalorder %s91, %s107
    %p109 = scmp.eq.s32.totalorder %s15, 0
    %p110 = por %p108, %p109
    %p111 = scmp.le.s32.totalorder 1, %s9
    %p112 = scmp.lt.s32.totalorder %s9, 3
    %p113 = pnand %p111, %p112
    %p114 = pneg %p113
    // Predicated region
    $region9: #{vgg_forward.6} parent=5 // pred_check
      _
    $region10: #{vgg_forward.6} parent=5 // pred_check_branch
      %116 = sbr.rel (%p113) target = $region12
    $region11: #{vgg_forward.6} parent=5 // pred_region
      %s117 = ssub.s32 %s9, 1
      // Predicated region
      $region13: #{vgg_forward.6} parent=11 // pred_check
        %p118 = pneg %p56
      $region14: #{vgg_forward.6} parent=11 // pred_check_branch
        %120 = sbr.rel (%p118) target = $region16
      $region15: #{vgg_forward.6} parent=11 // pred_region
        _
      $region16: #{vgg_forward.6} parent=11 // pred_fallthru
        _
      // Predicated region
      $region17: #{vgg_forward.6} parent=11 // pred_check
        %p121 = pneg %p77
      $region18: #{vgg_forward.6} parent=11 // pred_check_branch
        %123 = sbr.rel (%p121) target = $region20
      $region19: #{vgg_forward.6} parent=11 // pred_region
        _
      $region20: #{vgg_forward.6} parent=11 // pred_fallthru
        _
    $region12: #{vgg_forward.6} parent=5 // pred_fallthru
      _
    %p124 = scmp.lt.s32.totalorder %s9, 2
    // Predicated region
    $region21: #{vgg_forward.6} parent=5 // pred_check
      %p125 = pneg %p124
    $region22: #{vgg_forward.6} parent=5 // pred_check_branch
      %127 = sbr.rel (%p125) target = $region24
    $region23: #{vgg_forward.6} parent=5 // pred_region
      // Predicated region
      $region25: #{vgg_forward.6} parent=23 // pred_check
        %p128 = pneg %p29
      $region26: #{vgg_forward.6} parent=23 // pred_check_branch
        %130 = sbr.rel (%p128) target = $region28
      $region27: #{vgg_forward.6} parent=23 // pred_region
        %p131 = scmp.lt.s32.totalorder %s9, 1
        %s132 = scalar_select %p131, %s9, 1
        %s133 = smul.addr %s132, 4
        %s134 = smul.addr %s133, 4
        %s135 = scalar_lea.vmem %s0, %s134
      $region28: #{vgg_forward.6} parent=23 // pred_fallthru
        _
    $region24: #{vgg_forward.6} parent=5 // pred_fallthru
      _
    %p136 = scmp.le.s32.totalorder 1, %s9
    %p137 = scmp.lt.s32.totalorder %s9, 3
    %p138 = pnand %p136, %p137
    %p139 = pneg %p138
    // Predicated region
    $region29: #{vgg_forward.6} parent=5 // pred_check
      _
    $region30: #{vgg_forward.6} parent=5 // pred_check_branch
      %141 = sbr.rel (%p138) target = $region32
    $region31: #{vgg_forward.6} parent=5 // pred_region
      %s142 = ssub.s32 %s9, 1
      %p143 = scmp.lt.s32.totalorder %s14, 1
      %s144 = scalar_select %p143, %s14, 1
      %s145 = smul.addr %s144, 4
      %s146 = smul.addr %s145, 4
      %s147 = scalar_lea.vmem %s0, %s146
      %p148 = pneg %p35
      %p149 = pneg %p32
      %p150 = pneg %p56
      %p151 = pneg %p53
      %p152 = pneg %p77
      %p153 = pneg %p74
      %p154 = pneg %p103
      %p155 = pneg %p100
      %p156 = scmp.lt.s32.totalorder %s14, 1
      %s157 = scalar_select %p156, %s14, 1
      %s158 = smul.addr %s157, 2
      %s159 = smul.addr %s158, 2
      %s160 = scalar_lea.vmem %s3, %s159
      %p161 = scmp.lt.s32.totalorder %s14, 1
      %s162 = scalar_select %p161, %s14, 1
      %s163 = smul.addr %s162, 4
      %s164 = smul.addr %s163, 4
      %s165 = scalar_lea.vmem %s0, %s164
      %p166 = scmp.lt.s32.totalorder %s14, 1
      %s167 = scalar_select %p166, %s14, 1
      %s168 = smul.addr %s167, 2
      %s169 = smul.addr %s168, 2
      %s170 = scalar_lea.vmem %s3, %s169
      %vm171 = vcmask 521216
      %172 = vst.msk [vmem:[#allocation2] sm:$0x3f] %vm171, 0.0
      %173 = vst.msk [vmem:[#allocation2 + $0x8] sm:$0x3f] %vm171, 0.0
      %174 = vst.msk [vmem:[#allocation2 + $0x10] sm:$0x3f] %vm171, 0.0
      %175 = vst.msk [vmem:[#allocation2 + $0x18] sm:$0x3f] %vm171, 0.0
      %176 = vst.msk [vmem:[#allocation2 + $0x20] sm:$0x3f] %vm171, 0.0
      %177 = vst.msk [vmem:[#allocation2 + $0x28] sm:$0x3f] %vm171, 0.0
      %v178 = vld [vmem:[%s165] sm:$0xf]
      %v179 = vld [vmem:[%s165 + $0x4] sm:$0xf]
      %v180 = vld [vmem:[%s165 + $0x8] sm:$0xf]
      %v181 = vld [vmem:[%s165 + $0xc] sm:$0xf]
      %s182 = scalar_lea.vmem [#allocation2], 8
      %vm183 = vcmask 519168
      %184 = vst.msk [vmem:[%s182 + $0x1] sm:$0xf] %vm183, %v178
      %185 = vst.msk [vmem:[%s182 + $0x9] sm:$0xf] %vm183, %v179
      %186 = vst.msk [vmem:[%s182 + $0x11] sm:$0xf] %vm183, %v180
      %187 = vst.msk [vmem:[%s182 + $0x19] sm:$0xf] %vm183, %v181
      %v188 = vld [vmem:[#allocation2] sm:$0xf]
      %v189 = vld [vmem:[#allocation2 + $0x8] sm:$0xf]
      %v190 = vld [vmem:[#allocation2 + $0x10] sm:$0xf]
      %v191 = vld [vmem:[#allocation2 + $0x18] sm:$0xf]
      %v196 = vcombine.low %v188, %v189
      %v197 = vcombine.low %v190, %v191
      %vm200 = vcmask 523264
      %201 = vst.msk [vmem:[#allocation3] sm:$0xff] %vm200, %v196
      %202 = vst.msk [vmem:[#allocation3 + $0x28] sm:$0xff] %vm200, %v197
      %v203 = vld [vmem:[#allocation2 + $0x1] sm:$0xf]
      %v204 = vld [vmem:[#allocation2 + $0x9] sm:$0xf]
      %v205 = vld [vmem:[#allocation2 + $0x11] sm:$0xf]
      %v206 = vld [vmem:[#allocation2 + $0x19] sm:$0xf]
      %v211 = vcombine.low %v203, %v204
      %v212 = vcombine.low %v205, %v206
      %213 = vrot.lane.b32.xlu0 %v211, 64
      %v214 = vpop.permute.xlu0 %213
      %215 = vrot.lane.b32.xlu0 %v212, 64
      %v216 = vpop.permute.xlu0 %215
      %vm219 = vcmask 1048064
      %220 = vst.msk [vmem:[#allocation3] sm:$0xff] %vm219, %v214
      %221 = vst.msk [vmem:[#allocation3 + $0x28] sm:$0xff] %vm219, %v216
      %v222 = vld [vmem:[#allocation2 + $0x2] sm:$0xf]
      %v223 = vld [vmem:[#allocation2 + $0xa] sm:$0xf]
      %v224 = vld [vmem:[#allocation2 + $0x12] sm:$0xf]
      %v225 = vld [vmem:[#allocation2 + $0x1a] sm:$0xf]
      %v230 = vcombine.low %v222, %v223
      %v231 = vcombine.low %v224, %v225
      %234 = vst.msk [vmem:[#allocation3 + $0x8] sm:$0xff] %vm200, %v230
      %235 = vst.msk [vmem:[#allocation3 + $0x30] sm:$0xff] %vm200, %v231
      %v236 = vld [vmem:[%s182] sm:$0xf]
      %v237 = vld [vmem:[%s182 + $0x8] sm:$0xf]
      %v238 = vld [vmem:[%s182 + $0x10] sm:$0xf]
      %v239 = vld [vmem:[%s182 + $0x18] sm:$0xf]
      %v244 = vcombine.low %v236, %v237
      %v245 = vcombine.low %v238, %v239
      %246 = vrot.lane.b32.xlu0 %v244, 64
      %v247 = vpop.permute.xlu0 %246
      %248 = vrot.lane.b32.xlu0 %v245, 64
      %v249 = vpop.permute.xlu0 %248
      %252 = vst.msk [vmem:[#allocation3 + $0x8] sm:$0xff] %vm219, %v247
      %253 = vst.msk [vmem:[#allocation3 + $0x30] sm:$0xff] %vm219, %v249
      %v254 = vld [vmem:[%s182 + $0x1] sm:$0xf]
      %v255 = vld [vmem:[%s182 + $0x9] sm:$0xf]
      %v256 = vld [vmem:[%s182 + $0x11] sm:$0xf]
      %v257 = vld [vmem:[%s182 + $0x19] sm:$0xf]
      %v262 = vcombine.low %v254, %v255
      %v263 = vcombine.low %v256, %v257
      %266 = vst.msk [vmem:[#allocation3 + $0x10] sm:$0xff] %vm200, %v262
      %267 = vst.msk [vmem:[#allocation3 + $0x38] sm:$0xff] %vm200, %v263
      %v268 = vld [vmem:[%s182 + $0x2] sm:$0xf]
      %v269 = vld [vmem:[%s182 + $0xa] sm:$0xf]
      %v270 = vld [vmem:[%s182 + $0x12] sm:$0xf]
      %v271 = vld [vmem:[%s182 + $0x1a] sm:$0xf]
      %v276 = vcombine.low %v268, %v269
      %v277 = vcombine.low %v270, %v271
      %278 = vrot.lane.b32.xlu0 %v276, 64
      %v279 = vpop.permute.xlu0 %278
      %280 = vrot.lane.b32.xlu0 %v277, 64
      %v281 = vpop.permute.xlu0 %280
      %284 = vst.msk [vmem:[#allocation3 + $0x10] sm:$0xff] %vm219, %v279
      %285 = vst.msk [vmem:[#allocation3 + $0x38] sm:$0xff] %vm219, %v281
      %s286 = scalar_lea.vmem [#allocation2], 16
      %v287 = vld [vmem:[%s286] sm:$0xf]
      %v288 = vld [vmem:[%s286 + $0x8] sm:$0xf]
      %v289 = vld [vmem:[%s286 + $0x10] sm:$0xf]
      %v290 = vld [vmem:[%s286 + $0x18] sm:$0xf]
      %v295 = vcombine.low %v287, %v288
      %v296 = vcombine.low %v289, %v290
      %299 = vst.msk [vmem:[#allocation3 + $0x18] sm:$0xff] %vm200, %v295
      %300 = vst.msk [vmem:[#allocation3 + $0x40] sm:$0xff] %vm200, %v296
      %v301 = vld [vmem:[%s286 + $0x1] sm:$0xf]
      %v302 = vld [vmem:[%s286 + $0x9] sm:$0xf]
      %v303 = vld [vmem:[%s286 + $0x11] sm:$0xf]
      %v304 = vld [vmem:[%s286 + $0x19] sm:$0xf]
      %v309 = vcombine.low %v301, %v302
      %v310 = vcombine.low %v303, %v304
      %311 = vrot.lane.b32.xlu0 %v309, 64
      %v312 = vpop.permute.xlu0 %311
      %313 = vrot.lane.b32.xlu0 %v310, 64
      %v314 = vpop.permute.xlu0 %313
      %317 = vst.msk [vmem:[#allocation3 + $0x18] sm:$0xff] %vm219, %v312
      %318 = vst.msk [vmem:[#allocation3 + $0x40] sm:$0xff] %vm219, %v314
      %v319 = vld [vmem:[%s286 + $0x2] sm:$0xf]
      %v320 = vld [vmem:[%s286 + $0xa] sm:$0xf]
      %v321 = vld [vmem:[%s286 + $0x12] sm:$0xf]
      %v322 = vld [vmem:[%s286 + $0x1a] sm:$0xf]
      %v327 = vcombine.low %v319, %v320
      %v328 = vcombine.low %v321, %v322
      %331 = vst.msk [vmem:[#allocation3 + $0x20] sm:$0xff] %vm200, %v327
      %332 = vst.msk [vmem:[#allocation3 + $0x48] sm:$0xff] %vm200, %v328
      %v333 = vld [vmem:[#allocation3] sm:$0xff]
      %v334 = vld [vmem:[#allocation3 + $0x8] sm:$0xff]
      %v335 = vld [vmem:[#allocation3 + $0x10] sm:$0xff]
      %v336 = vld [vmem:[#allocation3 + $0x18] sm:$0xff]
      %v337 = vld [vmem:[#allocation3 + $0x20] sm:$0xff]
      %v338 = vld [vmem:[#allocation3 + $0x28] sm:$0xff]
      %v339 = vld [vmem:[#allocation3 + $0x30] sm:$0xff]
      %v340 = vld [vmem:[#allocation3 + $0x38] sm:$0xff]
      %v341 = vld [vmem:[#allocation3 + $0x40] sm:$0xff]
      %v342 = vld [vmem:[#allocation3 + $0x48] sm:$0xff]
      %v343 = vld [vmem:[%s1] sm:$0xff]
      %v344 = vld [vmem:[%s1 + $0x8] sm:$0xff]
      %v345 = vld [vmem:[%s1 + $0x10] sm:$0xff]
      %v346 = vld [vmem:[%s1 + $0x18] sm:$0xff]
      %v347 = vld [vmem:[%s1 + $0x20] sm:$0xff]
      %v348 = vld [vmem:[%s1 + $0x28] sm:$0xff]
      %v349 = vld [vmem:[%s1 + $0x30] sm:$0xff]
      %v350 = vld [vmem:[%s1 + $0x38] sm:$0xff]
      %v351 = vld [vmem:[%s1 + $0x40] sm:$0xff]
      %v352 = vld [vmem:[%s1 + $0x48] sm:$0xff]
      %v353 = vld [vmem:[%s1 + $0x50] sm:$0xff]
      %v354 = vld [vmem:[%s1 + $0x58] sm:$0xff]
      %v355 = vld [vmem:[%s1 + $0x60] sm:$0xff]
      %v356 = vld [vmem:[%s1 + $0x68] sm:$0xff]
      %v357 = vld [vmem:[%s1 + $0x70] sm:$0xff]
      %v358 = vld [vmem:[%s1 + $0x78] sm:$0xff]
      %v359 = vld [vmem:[%s1 + $0x80] sm:$0xff]
      %v360 = vld [vmem:[%s1 + $0x88] sm:$0xff]
      %v361 = vld [vmem:[%s1 + $0x90] sm:$0xff]
      %v362 = vld [vmem:[%s1 + $0x98] sm:$0xff]
      %v363 = vld [vmem:[%s1 + $0xa0] sm:$0xff]
      %v364 = vld [vmem:[%s1 + $0xa8] sm:$0xff]
      %v365 = vld [vmem:[%s1 + $0xb0] sm:$0xff]
      %v366 = vld [vmem:[%s1 + $0xb8] sm:$0xff]
      %v367 = vld [vmem:[%s1 + $0xc0] sm:$0xff]
      %v368 = vld [vmem:[%s1 + $0xc8] sm:$0xff]
      %v369 = vld [vmem:[%s1 + $0xd0] sm:$0xff]
      %v370 = vld [vmem:[%s1 + $0xd8] sm:$0xff]
      %v371 = vld [vmem:[%s1 + $0xe0] sm:$0xff]
      %v372 = vld [vmem:[%s1 + $0xe8] sm:$0xff]
      %v373 = vld [vmem:[%s1 + $0xf0] sm:$0xff]
      %v374 = vld [vmem:[%s1 + $0xf8] sm:$0xff]
      %v375 = vld [vmem:[%s1 + $0x100] sm:$0xff]
      %v376 = vld [vmem:[%s1 + $0x108] sm:$0xff]
      %v377 = vld [vmem:[%s1 + $0x110] sm:$0xff]
      %v378 = vld [vmem:[%s1 + $0x118] sm:$0xff]
      %v379 = vld [vmem:[%s1 + $0x120] sm:$0xff]
      %v380 = vld [vmem:[%s1 + $0x128] sm:$0xff]
      %v381 = vld [vmem:[%s1 + $0x130] sm:$0xff]
      %v382 = vld [vmem:[%s1 + $0x138] sm:$0xff]
      %v383 = vld [vmem:[%s1 + $0x140] sm:$0xff]
      %v384 = vld [vmem:[%s1 + $0x148] sm:$0xff]
      %v385 = vld [vmem:[%s1 + $0x150] sm:$0xff]
      %v386 = vld [vmem:[%s1 + $0x158] sm:$0xff]
      %v387 = vld [vmem:[%s1 + $0x160] sm:$0xff]
      %v388 = vld [vmem:[%s1 + $0x168] sm:$0xff]
      %v389 = vld [vmem:[%s1 + $0x170] sm:$0xff]
      %v390 = vld [vmem:[%s1 + $0x178] sm:$0xff]
      %v391 = vld [vmem:[%s1 + $0x180] sm:$0xff]
      %v392 = vld [vmem:[%s1 + $0x188] sm:$0xff]
      %v393 = vld [vmem:[%s1 + $0x190] sm:$0xff]
      %v394 = vld [vmem:[%s1 + $0x198] sm:$0xff]
      %v395 = vld [vmem:[%s1 + $0x1a0] sm:$0xff]
      %v396 = vld [vmem:[%s1 + $0x1a8] sm:$0xff]
      %v397 = vld [vmem:[%s1 + $0x1b0] sm:$0xff]
      %v398 = vld [vmem:[%s1 + $0x1b8] sm:$0xff]
      %v399 = vld [vmem:[%s1 + $0x1c0] sm:$0xff]
      %v400 = vld [vmem:[%s1 + $0x1c8] sm:$0xff]
      %v401 = vld [vmem:[%s1 + $0x1d0] sm:$0xff]
      %v402 = vld [vmem:[%s1 + $0x1d8] sm:$0xff]
      %v403 = vld [vmem:[%s1 + $0x1e0] sm:$0xff]
      %v404 = vld [vmem:[%s1 + $0x1e8] sm:$0xff]
      %v405 = vld [vmem:[%s1 + $0x1f0] sm:$0xff]
      %v406 = vld [vmem:[%s1 + $0x1f8] sm:$0xff]
      %v407 = vld [vmem:[%s1 + $0x200] sm:$0xff]
      %v408 = vld [vmem:[%s1 + $0x208] sm:$0xff]
      %v409 = vld [vmem:[%s1 + $0x210] sm:$0xff]
      %v410 = vld [vmem:[%s1 + $0x218] sm:$0xff]
      %v411 = vld [vmem:[%s1 + $0x220] sm:$0xff]
      %v412 = vld [vmem:[%s1 + $0x228] sm:$0xff]
      %v413 = vld [vmem:[%s1 + $0x230] sm:$0xff]
      %v414 = vld [vmem:[%s1 + $0x238] sm:$0xff]
      %v415 = vld [vmem:[%s2] sm:$0x1]
      %v417 = vlaneseq
      %v418 = vshrl.u32 %v417, 7
      %v419 = vsub.s32 0, %v418
      %v420 = vrot.slane %v415, %v419
      %v423 = vsel %vm200, %v337, 0
      %v426 = vsel %vm200, %v342, 0
      %428 = vmatprep.subr.mxu0 0.0
      %429 = vmatpush1.msra.mxu0 %v343
      %430 = vmatprep.subr.mxu0 0.0
      %431 = vmatpush1.msra.mxu0 %v344
      %432 = vmatprep.subr.mxu0 0.0
      %433 = vmatpush1.msra.mxu0 %v345
      %434 = vmatprep.subr.mxu0 0.0
      %435 = vmatpush1.msra.mxu0 %v346
      %436 = vmatprep.subr.mxu0 0.0
      %437 = vmatpush1.msra.mxu0 %v347
      %438 = vmatprep.subr.mxu0 0.0
      %439 = vmatpush1.msra.mxu0 %v348
      %440 = vmatprep.subr.mxu0 0.0
      %441 = vmatpush1.msra.mxu0 %v349
      %442 = vmatprep.subr.mxu0 0.0
      %443 = vmatpush1.msra.mxu0 %v350
      %444 = vmatprep.subr.mxu0 0.0
      %445 = vmatpush1.msra.mxu0 %v351
      %446 = vmatprep.subr.mxu0 0.0
      %447 = vmatpush1.msra.mxu0 %v352
      %448 = vmatprep.subr.mxu0 0.0
      %449 = vmatpush1.msra.mxu0 %v353
      %450 = vmatprep.subr.mxu0 0.0
      %451 = vmatpush1.msra.mxu0 %v354
      %452 = vmatprep.subr.mxu0 0.0
      %453 = vmatpush1.msra.mxu0 %v355
      %454 = vmatprep.subr.mxu0 0.0
      %455 = vmatpush1.msra.mxu0 %v356
      %456 = vmatprep.subr.mxu0 0.0
      %457 = vmatpush1.msra.mxu0 %v357
      %458 = vmatprep.subr.mxu0 0.0
      %459 = vmatpush1.msra.mxu0 %v358
      %460 = vmatprep.subr.mxu0 0.0
      %461 = vmatpush1.msra.mxu0 %v359
      %462 = vmatprep.subr.mxu0 0.0
      %463 = vmatpush1.msra.mxu0 %v360
      %464 = vmatprep.subr.mxu0 0.0
      %465 = vmatpush1.msra.mxu0 %v361
      %466 = vmatprep.subr.mxu0 0.0
      %467 = vmatpush1.msra.mxu0 %v362
      %468 = vmatprep.subr.mxu0 0.0
      %469 = vmatpush1.msra.mxu0 %v363
      %470 = vmatprep.subr.mxu0 0.0
      %471 = vmatpush1.msra.mxu0 %v364
      %472 = vmatprep.subr.mxu0 0.0
      %473 = vmatpush1.msra.mxu0 %v365
      %474 = vmatprep.subr.mxu0 0.0
      %475 = vmatpush1.msra.mxu0 %v366
      %476 = vmatprep.subr.mxu0 0.0
      %477 = vmatpush1.msra.mxu0 %v367
      %478 = vmatprep.subr.mxu0 0.0
      %479 = vmatpush1.msra.mxu0 %v368
      %480 = vmatprep.subr.mxu0 0.0
      %481 = vmatpush1.msra.mxu0 %v369
      %482 = vmatprep.subr.mxu0 0.0
      %483 = vmatpush1.msra.mxu0 %v370
      %484 = vmatprep.subr.mxu0 0.0
      %485 = vmatpush1.msra.mxu0 %v371
      %486 = vmatprep.subr.mxu0 0.0
      %487 = vmatpush1.msra.mxu0 %v372
      %488 = vmatprep.subr.mxu0 0.0
      %489 = vmatpush1.msra.mxu0 %v373
      %490 = vmatprep.subr.mxu0 0.0
      %491 = vmatpush1.msra.mxu0 %v374
      %492 = vmatprep.mubr.f32.mxu0 %v334
      %493 = vmatmul.mubr.f32.gmra.mrb[0].mxu0 %v333
      %v494 = vpop.f32.mrb[0].mxu0
      %v495 = vadd.f32 %v420, %v494
      %v496 = vpop.f32.mrb[0].mxu0
      %497 = vmatprep.mubr.f32.mxu0 %v339
      %498 = vmatmul.mubr.f32.gmra.mrb[0].mxu0 %v338
      %v499 = vpop.f32.mrb[0].mxu0
      %v500 = vadd.f32 %v420, %v499
      %v501 = vpop.f32.mrb[0].mxu0
      %502 = vdwg.mxu0
      %503 = vmatprep.subr.mxu0 0.0
      %504 = vmatpush1.msra.mxu0 %v375
      %505 = vmatprep.subr.mxu0 0.0
      %506 = vmatpush1.msra.mxu0 %v376
      %507 = vmatprep.subr.mxu0 0.0
      %508 = vmatpush1.msra.mxu0 %v377
      %509 = vmatprep.subr.mxu0 0.0
      %510 = vmatpush1.msra.mxu0 %v378
      %511 = vmatprep.subr.mxu0 0.0
      %512 = vmatpush1.msra.mxu0 %v379
      %513 = vmatprep.subr.mxu0 0.0
      %514 = vmatpush1.msra.mxu0 %v380
      %515 = vmatprep.subr.mxu0 0.0
      %516 = vmatpush1.msra.mxu0 %v381
      %517 = vmatprep.subr.mxu0 0.0
      %518 = vmatpush1.msra.mxu0 %v382
      %519 = vmatprep.subr.mxu0 0.0
      %520 = vmatpush1.msra.mxu0 %v383
      %521 = vmatprep.subr.mxu0 0.0
      %522 = vmatpush1.msra.mxu0 %v384
      %523 = vmatprep.subr.mxu0 0.0
      %524 = vmatpush1.msra.mxu0 %v385
      %525 = vmatprep.subr.mxu0 0.0
      %526 = vmatpush1.msra.mxu0 %v386
      %527 = vmatprep.subr.mxu0 0.0
      %528 = vmatpush1.msra.mxu0 %v387
      %529 = vmatprep.subr.mxu0 0.0
      %530 = vmatpush1.msra.mxu0 %v388
      %531 = vmatprep.subr.mxu0 0.0
      %532 = vmatpush1.msra.mxu0 %v389
      %533 = vmatprep.subr.mxu0 0.0
      %534 = vmatpush1.msra.mxu0 %v390
      %535 = vmatprep.subr.mxu0 0.0
      %536 = vmatpush1.msra.mxu0 %v391
      %537 = vmatprep.subr.mxu0 0.0
      %538 = vmatpush1.msra.mxu0 %v392
      %539 = vmatprep.subr.mxu0 0.0
      %540 = vmatpush1.msra.mxu0 %v393
      %541 = vmatprep.subr.mxu0 0.0
      %542 = vmatpush1.msra.mxu0 %v394
      %543 = vmatprep.subr.mxu0 0.0
      %544 = vmatpush1.msra.mxu0 %v395
      %545 = vmatprep.subr.mxu0 0.0
      %546 = vmatpush1.msra.mxu0 %v396
      %547 = vmatprep.subr.mxu0 0.0
      %548 = vmatpush1.msra.mxu0 %v397
      %549 = vmatprep.subr.mxu0 0.0
      %550 = vmatpush1.msra.mxu0 %v398
      %551 = vmatprep.subr.mxu0 0.0
      %552 = vmatpush1.msra.mxu0 %v399
      %553 = vmatprep.subr.mxu0 0.0
      %554 = vmatpush1.msra.mxu0 %v400
      %555 = vmatprep.subr.mxu0 0.0
      %556 = vmatpush1.msra.mxu0 %v401
      %557 = vmatprep.subr.mxu0 0.0
      %558 = vmatpush1.msra.mxu0 %v402
      %559 = vmatprep.subr.mxu0 0.0
      %560 = vmatpush1.msra.mxu0 %v403
      %561 = vmatprep.subr.mxu0 0.0
      %562 = vmatpush1.msra.mxu0 %v404
      %563 = vmatprep.subr.mxu0 0.0
      %564 = vmatpush1.msra.mxu0 %v405
      %565 = vmatprep.subr.mxu0 0.0
      %566 = vmatpush1.msra.mxu0 %v406
      %567 = vmatprep.mubr.f32.mxu0 %v336
      %568 = vmatmul.mubr.f32.gmra.mrb[0].mxu0 %v335
      %v569 = vpop.f32.mrb[0].mxu0
      %v570 = vadd.f32 %v495, %v569
      %v571 = vpop.f32.mrb[0].mxu0
      %572 = vmatprep.mubr.f32.mxu0 %v341
      %573 = vmatmul.mubr.f32.gmra.mrb[0].mxu0 %v340
      %v574 = vpop.f32.mrb[0].mxu0
      %v575 = vadd.f32 %v500, %v574
      %v576 = vpop.f32.mrb[0].mxu0
      %577 = vdwg.mxu0
      %578 = vmatprep.subr.mxu0 0.0
      %579 = vmatpush1.msra.mxu0 %v407
      %580 = vmatprep.subr.mxu0 0.0
      %581 = vmatpush1.msra.mxu0 %v408
      %582 = vmatprep.subr.mxu0 0.0
      %583 = vmatpush1.msra.mxu0 %v409
      %584 = vmatprep.subr.mxu0 0.0
      %585 = vmatpush1.msra.mxu0 %v410
      %586 = vmatprep.subr.mxu0 0.0
      %587 = vmatpush1.msra.mxu0 %v411
      %588 = vmatprep.subr.mxu0 0.0
      %589 = vmatpush1.msra.mxu0 %v412
      %590 = vmatprep.subr.mxu0 0.0
      %591 = vmatpush1.msra.mxu0 %v413
      %592 = vmatprep.subr.mxu0 0.0
      %593 = vmatpush1.msra.mxu0 %v414
      %594 = vmatprep.subr.mxu0 0.0
      %595 = vmatpush1.msra.mxu0 0.0
      %596 = vmatprep.subr.mxu0 0.0
      %597 = vmatpush1.msra.mxu0 0.0
      %598 = vmatprep.subr.mxu0 0.0
      %599 = vmatpush1.msra.mxu0 0.0
      %600 = vmatprep.subr.mxu0 0.0
      %601 = vmatpush1.msra.mxu0 0.0
      %602 = vmatprep.subr.mxu0 0.0
      %603 = vmatpush1.msra.mxu0 0.0
      %604 = vmatprep.subr.mxu0 0.0
      %605 = vmatpush1.msra.mxu0 0.0
      %606 = vmatprep.subr.mxu0 0.0
      %607 = vmatpush1.msra.mxu0 0.0
      %608 = vmatprep.subr.mxu0 0.0
      %609 = vmatpush1.msra.mxu0 0.0
      %610 = vmatprep.subr.mxu0 0.0
      %611 = vmatpush1.msra.mxu0 0.0
      %612 = vmatprep.subr.mxu0 0.0
      %613 = vmatpush1.msra.mxu0 0.0
      %614 = vmatprep.subr.mxu0 0.0
      %615 = vmatpush1.msra.mxu0 0.0
      %616 = vmatprep.subr.mxu0 0.0
      %617 = vmatpush1.msra.mxu0 0.0
      %618 = vmatprep.subr.mxu0 0.0
      %619 = vmatpush1.msra.mxu0 0.0
      %620 = vmatprep.subr.mxu0 0.0
      %621 = vmatpush1.msra.mxu0 0.0
      %622 = vmatprep.subr.mxu0 0.0
      %623 = vmatpush1.msra.mxu0 0.0
      %624 = vmatprep.subr.mxu0 0.0
      %625 = vmatpush1.msra.mxu0 0.0
      %626 = vmatprep.subr.mxu0 0.0
      %627 = vmatpush1.msra.mxu0 0.0
      %628 = vmatprep.subr.mxu0 0.0
      %629 = vmatpush1.msra.mxu0 0.0
      %630 = vmatprep.subr.mxu0 0.0
      %631 = vmatpush1.msra.mxu0 0.0
      %632 = vmatprep.subr.mxu0 0.0
      %633 = vmatpush1.msra.mxu0 0.0
      %634 = vmatprep.subr.mxu0 0.0
      %635 = vmatpush1.msra.mxu0 0.0
      %636 = vmatprep.subr.mxu0 0.0
      %637 = vmatpush1.msra.mxu0 0.0
      %638 = vmatprep.subr.mxu0 0.0
      %639 = vmatpush1.msra.mxu0 0.0
      %640 = vmatprep.subr.mxu0 0.0
      %641 = vmatpush1.msra.mxu0 0.0
      %642 = vmatprep.mubr.f32.mxu0 0.0
      %643 = vmatmul.mubr.f32.gmra.mrb[0].mxu0 %v423
      %v644 = vpop.f32.mrb[0].mxu0
      %v645 = vadd.f32 %v570, %v644
      %v646 = vpop.f32.mrb[0].mxu0
      %647 = vmatprep.mubr.f32.mxu0 0.0
      %648 = vmatmul.mubr.f32.gmra.mrb[0].mxu0 %v426
      %v649 = vpop.f32.mrb[0].mxu0
      %v650 = vadd.f32 %v575, %v649
      %v651 = vpop.f32.mrb[0].mxu0
      %652 = vdwg.mxu0
      %v653 = vmax.f32 %v645, 0.0
      %v654 = vmax.f32 %v650, 0.0
      %v657 = vcombine.high %v653, %v653
      %v659 = vunpack.c.l.s4 1983009808
      %v660 = vunpack.c.0.s8 %v659
      %v661 = vlaneseq
      %v662 = vshrl.u32 %v661, 7
      %v663 = vsub.s32 %v660, %v662
      %v664 = vrot.slane %v653, %v663
      %v666 = vunpack.c.l.s4 1983009808
      %v667 = vunpack.c.0.s8 %v666
      %v668 = vlaneseq
      %v669 = vshrl.u32 %v668, 7
      %v670 = vsub.s32 %v667, %v669
      %v671 = vrot.slane %v657, %v670
      %v672 = vcombine.high %v664, %v664
      %v673 = vcombine.high %v671, %v671
      %v674 = vcombine.high %v654, %v654
      %v676 = vunpack.c.l.s4 1983009808
      %v677 = vunpack.c.0.s8 %v676
      %v678 = vlaneseq
      %v679 = vshrl.u32 %v678, 7
      %v680 = vsub.s32 %v677, %v679
      %v681 = vrot.slane %v654, %v680
      %v683 = vunpack.c.l.s4 1983009808
      %v684 = vunpack.c.0.s8 %v683
      %v685 = vlaneseq
      %v686 = vshrl.u32 %v685, 7
      %v687 = vsub.s32 %v684, %v686
      %v688 = vrot.slane %v674, %v687
      %v689 = vcombine.high %v681, %v681
      %v690 = vcombine.high %v688, %v688
      %v699 = vrot.slane %v664, 7
      %v700 = vrot.slane %v699, 2
      %v701 = vrot.slane %v672, 7
      %v702 = vrot.slane %v701, 2
      %v703 = vrot.slane %v671, 7
      %v704 = vrot.slane %v703, 2
      %v705 = vrot.slane %v673, 7
      %v706 = vrot.slane %v705, 2
      %v707 = vrot.slane %v681, 7
      %v708 = vrot.slane %v707, 2
      %v709 = vrot.slane %v689, 7
      %v710 = vrot.slane %v709, 2
      %v711 = vrot.slane %v688, 7
      %v712 = vrot.slane %v711, 2
      %v713 = vrot.slane %v690, 7
      %v714 = vrot.slane %v713, 2
      %v723 = vmax.f32 %v664, %v700
      %v724 = vmax.f32 %v672, %v702
      %v725 = vmax.f32 %v671, %v704
      %v726 = vmax.f32 %v673, %v706
      %v727 = vmax.f32 %v681, %v708
      %v728 = vmax.f32 %v689, %v710
      %v729 = vmax.f32 %v688, %v712
      %v730 = vmax.f32 %v690, %v714
      %v731 = vmax.f32 %v723, %v725
      %v732 = vmax.f32 %v724, %v726
      %v733 = vmax.f32 %v727, %v729
      %v734 = vmax.f32 %v728, %v730
      %v739 = vlaneseq
      %v740 = vshrl.u32 %v739, 7
      %v741 = vsub.s32 0, %v740
      %v742 = vrot.slane %v731, %v741
      %v743 = vlaneseq
      %v744 = vshrl.u32 %v743, 7
      %v745 = vsub.s32 0, %v744
      %v746 = vrot.slane %v732, %v745
      %v747 = vlaneseq
      %v748 = vshrl.u32 %v747, 7
      %v749 = vsub.s32 0, %v748
      %v750 = vrot.slane %v733, %v749
      %v751 = vlaneseq
      %v752 = vshrl.u32 %v751, 7
      %v753 = vsub.s32 0, %v752
      %v754 = vrot.slane %v734, %v753
      %vm755 = vcmask 1041409
      %v756 = vsel %vm755, %v746, %v742
      %v757 = vsel %vm755, %v754, %v750
      %760 = vst [vmem:[%s170] sm:$0x3] %v756
      %761 = vst [vmem:[%s170 + $0x2] sm:$0x3] %v757
      %p762 = scmp.lt.s32.totalorder %s14, 1
      %s763 = scalar_select %p762, %s14, 1
      %s764 = smul.addr %s763, 2
      %s765 = smul.addr %s764, 2
      %s766 = scalar_lea.vmem %s3, %s765
      // Predicated region
      $region33: #{vgg_forward.6} parent=31 // pred_check
        %p767 = pneg %p100
      $region34: #{vgg_forward.6} parent=31 // pred_check_branch
        %769 = sbr.rel (%p767) target = $region36
      $region35: #{vgg_forward.6} parent=31 // pred_region
        _
      $region36: #{vgg_forward.6} parent=31 // pred_fallthru
        _
    $region32: #{vgg_forward.6} parent=5 // pred_fallthru
      _
    %p770 = scmp.le.s32.totalorder 2, %s9
    // Predicated region
    $region37: #{vgg_forward.6} parent=5 // pred_check
      %p771 = pneg %p770
    $region38: #{vgg_forward.6} parent=5 // pred_check_branch
      %773 = sbr.rel (%p771) target = $region40
    $region39: #{vgg_forward.6} parent=5 // pred_region
      %s774 = ssub.s32 %s9, 2
      // Predicated region
      $region41: #{vgg_forward.6} parent=39 // pred_check
        %p775 = pneg %p106
      $region42: #{vgg_forward.6} parent=39 // pred_check_branch
        %777 = sbr.rel (%p775) target = $region44
      $region43: #{vgg_forward.6} parent=39 // pred_region
        %p778 = scmp.lt.s32.totalorder %s15, 1
        %s779 = scalar_select %p778, %s15, 1
        %s780 = smul.addr %s779, 2
        %s781 = smul.addr %s780, 2
        %s782 = scalar_lea.vmem %s3, %s781
      $region44: #{vgg_forward.6} parent=39 // pred_fallthru
        _
    $region40: #{vgg_forward.6} parent=5 // pred_fallthru
      _
  $region6: #{vgg_forward.6} parent=0 // loop_footer
    %s13 = sadd.s32 1, %s9
  $region7: #{vgg_forward.6} parent=0 // loop_footer_branch
    %8 = sbr.rel target = $region3
  $region8: #{vgg_forward.6} parent=0 // loop_exit
    _

// kernel: vgg_forward.5
$region0: #{vgg_forward.5}
  #allocation0 [shape = 'u32[]', space=smem, size = 0x4, offset = 0x4, fixed_abs, tag = 'smem constant byte address 0x4 - core index']
  #allocation1 [shape = 'u32[144,128]{1,0:T(1,128)}', space=vmem, size = 0x12000, scoped, tag = 'internal scratch']
  #allocation2 [shape = 'f32[10,10,32]{2,1,0:T(8,128)}', space=vmem, size = 0x14000, scoped, tag = 'scratch operand']
  #allocation3 [shape = 'f32[64,288]{1,0:T(8,128)}', space=vmem, size = 0x18000, scoped, tag = 'scratch operand']
  %s0 = inlined_call_operand.vmem [shape: f32[2,8,8,32], index: 0, kind: input, shape index: {}]
  %s1 = inlined_call_operand.vmem [shape: f32[288,64], index: 1, kind: input, shape index: {}]
  %s2 = inlined_call_operand.vmem [shape: f32[1,64], index: 2, kind: input, shape index: {}]
  %s3 = inlined_call_operand.vmem [shape: f32[2,4,4,64], index: 3, kind: output, shape index: {}]
  %s4 = sld [smem:[#allocation0]]
  $region45: #{vgg_forward.5} parent=0
    _
  %s6 = ssub.s32 1, %s4
  %s7 = scalar_select 0, %s6, %s4
  loop: start=0, step=1, limit=4
  $region2: #{vgg_forward.5} parent=0 // loop_pre_header
    _
  $region3: #{vgg_forward.5} parent=0 // loop_header
    %s9 = sphi 0, %s13
    %p10 = scmp.ge.s32.totalorder %s9, 4
    %s19 = sphi 0, %s21
    %s22 = sphi 0, %s19
    %s23 = sphi 0, %s22
    %s39 = sphi 0, %s23
    %s43 = sphi 0, %s43
    %s45 = sphi 0, %s43
    %s46 = sphi 0, %s45
    %s60 = sphi 0, %s46
    %s64 = sphi 0, %s64
    %s66 = sphi 0, %s64
    %s67 = sphi 0, %s66
    %s81 = sphi 0, %s67
    %s87 = sphi 0, %s89
    %s90 = sphi 0, %s87
    %s91 = sphi 0, %s90
    %s107 = sphi 0, %s91
  $region4: #{vgg_forward.5} parent=0 // loop_header_branch
    %12 = sbr.rel (%p10) target = $region8
  $region5: #{vgg_forward.5} parent=0 // loop_body
    %s14 = ssub.s32 %s9, 1
    %s15 = ssub.s32 %s9, 2
    %s16 = sadd.s32 %s9, 1
    %s17 = ssub.s32 %s9, %s16
    %p18 = scmp.eq.s32.totalorder %s17, 0
    %s20 = sadd.s32 %s19, 1
    %s21 = scalar_select %p18, %s19, %s20
    %p24 = pneg %p18
    %p25 = scmp.eq.s32.totalorder %s9, 1
    %p26 = por %p24, %p25
    %p27 = scmp.ne.s32.totalorder %s19, %s22
    %p28 = scmp.eq.s32.totalorder %s9, 0
    %p29 = por %p27, %p28
    %p30 = scmp.ne.s32.totalorder %s19, %s22
    %p31 = scmp.eq.s32.totalorder %s14, 1
    %p32 = por %p30, %p31
    %p33 = scmp.ne.s32.totalorder %s22, %s23
    %p34 = scmp.eq.s32.totalorder %s14, 0
    %p35 = por %p33, %p34
    %p36 = scmp.ne.s32.totalorder %s22, %s23
    %p37 = scmp.eq.s32.totalorder %s15, 1
    %p38 = por %p36, %p37
    %p40 = scmp.ne.s32.totalorder %s23, %s39
    %p41 = scmp.eq.s32.totalorder %s15, 0
    %p42 = por %p40, %p41
    %s44 = sadd.s32 %s43, 1
    %p47 = scmp.eq.s32.totalorder %s9, 1
    %p48 = scmp.ne.s32.totalorder %s43, %s45
    %p49 = scmp.eq.s32.totalorder %s9, 0
    %p50 = por %p48, %p49
    %p51 = scmp.ne.s32.totalorder %s43, %s45
    %p52 = scmp.eq.s32.totalorder %s14, 1
    %p53 = por %p51, %p52
    %p54 = scmp.ne.s32.totalorder %s45, %s46
    %p55 = scmp.eq.s32.totalorder %s14, 0
    %p56 = por %p54, %p55
    %p57 = scmp.ne.s32.totalorder %s45, %s46
    %p58 = scmp.eq.s32.totalorder %s15, 1
    %p59 = por %p57, %p58
    %p61 = scmp.ne.s32.totalorder %s46, %s60
    %p62 = scmp.eq.s32.totalorder %s15, 0
    %p63 = por %p61, %p62
    %s65 = sadd.s32 %s64, 1
    %p68 = scmp.eq.s32.totalorder %s9, 1
    %p69 = scmp.ne.s32.totalorder %s64, %s66
    %p70 = scmp.eq.s32.totalorder %s9, 0
    %p71 = por %p69, %p70
    %p72 = scmp.ne.s32.totalorder %s64, %s66
    %p73 = scmp.eq.s32.totalorder %s14, 1
    %p74 = por %p72, %p73
    %p75 = scmp.ne.s32.totalorder %s66, %s67
    %p76 = scmp.eq.s32.totalorder %s14, 0
    %p77 = por %p75, %p76
    %p78 = scmp.ne.s32.totalorder %s66, %s67
    %p79 = scmp.eq.s32.totalorder %s15, 1
    %p80 = por %p78, %p79
    %p82 = scmp.ne.s32.totalorder %s67, %s81
    %p83 = scmp.eq.s32.totalorder %s15, 0
    %p84 = por %p82, %p83
    %s85 = ssub.s32 %s9, %s16
    %p86 = scmp.eq.s32.totalorder %s85, 0
    %s88 = sadd.s32 %s87, 1
    %s89 = scalar_select %p86, %s87, %s88
    %p92 = pneg %p86
    %p93 = scmp.eq.s32.totalorder %s9, 1
    %p94 = por %p92, %p93
    %p95 = scmp.ne.s32.totalorder %s87, %s90
    %p96 = scmp.eq.s32.totalorder %s9, 0
    %p97 = por %p95, %p96
    %p98 = scmp.ne.s32.totalorder %s87, %s90
    %p99 = scmp.eq.s32.totalorder %s14, 1
    %p100 = por %p98, %p99
    %p101 = scmp.ne.s32.totalorder %s90, %s91
    %p102 = scmp.eq.s32.totalorder %s14, 0
    %p103 = por %p101, %p102
    %p104 = scmp.ne.s32.totalorder %s90, %s91
    %p105 = scmp.eq.s32.totalorder %s15, 1
    %p106 = por %p104, %p105
    %p108 = scmp.ne.s32.totalorder %s91, %s107
    %p109 = scmp.eq.s32.totalorder %s15, 0
    %p110 = por %p108, %p109
    %p111 = scmp.le.s32.totalorder 1, %s9
    %p112 = scmp.lt.s32.totalorder %s9, 3
    %p113 = pnand %p111, %p112
    %p114 = pneg %p113
    // Predicated region
    $region9: #{vgg_forward.5} parent=5 // pred_check
      _
    $region10: #{vgg_forward.5} parent=5 // pred_check_branch
      %116 = sbr.rel (%p113) target = $region12
    $region11: #{vgg_forward.5} parent=5 // pred_region
      %s117 = ssub.s32 %s9, 1
      // Predicated region
      $region13: #{vgg_forward.5} parent=11 // pred_check
        %p118 = pneg %p56
      $region14: #{vgg_forward.5} parent=11 // pred_check_branch
        %120 = sbr.rel (%p118) target = $region16
      $region15: #{vgg_forward.5} parent=11 // pred_region
        _
      $region16: #{vgg_forward.5} parent=11 // pred_fallthru
        _
      // Predicated region
      $region17: #{vgg_forward.5} parent=11 // pred_check
        %p121 = pneg %p77
      $region18: #{vgg_forward.5} parent=11 // pred_check_branch
        %123 = sbr.rel (%p121) target = $region20
      $region19: #{vgg_forward.5} parent=11 // pred_region
        _
      $region20: #{vgg_forward.5} parent=11 // pred_fallthru
        _
    $region12: #{vgg_forward.5} parent=5 // pred_fallthru
      _
    %p124 = scmp.lt.s32.totalorder %s9, 2
    // Predicated region
    $region21: #{vgg_forward.5} parent=5 // pred_check
      %p125 = pneg %p124
    $region22: #{vgg_forward.5} parent=5 // pred_check_branch
      %127 = sbr.rel (%p125) target = $region24
    $region23: #{vgg_forward.5} parent=5 // pred_region
      // Predicated region
      $region25: #{vgg_forward.5} parent=23 // pred_check
        %p128 = pneg %p29
      $region26: #{vgg_forward.5} parent=23 // pred_check_branch
        %130 = sbr.rel (%p128) target = $region28
      $region27: #{vgg_forward.5} parent=23 // pred_region
        %p131 = scmp.lt.s32.totalorder %s9, 1
        %s132 = scalar_select %p131, %s9, 1
        %s133 = smul.addr %s132, 8
        %s134 = smul.addr %s133, 8
        %s135 = scalar_lea.vmem %s0, %s134
      $region28: #{vgg_forward.5} parent=23 // pred_fallthru
        _
    $region24: #{vgg_forward.5} parent=5 // pred_fallthru
      _
    %p136 = scmp.le.s32.totalorder 1, %s9
    %p137 = scmp.lt.s32.totalorder %s9, 3
    %p138 = pnand %p136, %p137
    %p139 = pneg %p138
    // Predicated region
    $region29: #{vgg_forward.5} parent=5 // pred_check
      _
    $region30: #{vgg_forward.5} parent=5 // pred_check_branch
      %141 = sbr.rel (%p138) target = $region32
    $region31: #{vgg_forward.5} parent=5 // pred_region
      %s142 = ssub.s32 %s9, 1
      %p143 = scmp.lt.s32.totalorder %s14, 1
      %s144 = scalar_select %p143, %s14, 1
      %s145 = smul.addr %s144, 8
      %s146 = smul.addr %s145, 8
      %s147 = scalar_lea.vmem %s0, %s146
      %p148 = pneg %p35
      %p149 = pneg %p32
      %p150 = pneg %p56
      %p151 = pneg %p53
      %p152 = pneg %p77
      %p153 = pneg %p74
      %p154 = pneg %p103
      %p155 = pneg %p100
      %p156 = scmp.lt.s32.totalorder %s14, 1
      %s157 = scalar_select %p156, %s14, 1
      %s158 = smul.addr %s157, 4
      %s159 = smul.addr %s158, 4
      %s160 = scalar_lea.vmem %s3, %s159
      %p161 = scmp.lt.s32.totalorder %s14, 1
      %s162 = scalar_select %p161, %s14, 1
      %s163 = smul.addr %s162, 8
      %s164 = smul.addr %s163, 8
      %s165 = scalar_lea.vmem %s0, %s164
      %p166 = scmp.lt.s32.totalorder %s14, 1
      %s167 = scalar_select %p166, %s14, 1
      %s168 = smul.addr %s167, 4
      %s169 = smul.addr %s168, 4
      %s170 = scalar_lea.vmem %s3, %s169
      %vm171 = vcmask 261120
      %172 = vst.msk [vmem:[#allocation2] sm:$0xff] %vm171, 0.0
      %vm173 = vcmask 254976
      %174 = vst.msk [vmem:[#allocation2 + $0x8] sm:$0x3] %vm173, 0.0
      %175 = vst.msk [vmem:[#allocation2 + $0x10] sm:$0xff] %vm171, 0.0
      %176 = vst.msk [vmem:[#allocation2 + $0x18] sm:$0x3] %vm173, 0.0
      %177 = vst.msk [vmem:[#allocation2 + $0x20] sm:$0xff] %vm171, 0.0
      %178 = vst.msk [vmem:[#allocation2 + $0x28] sm:$0x3] %vm173, 0.0
      %179 = vst.msk [vmem:[#allocation2 + $0x30] sm:$0xff] %vm171, 0.0
      %180 = vst.msk [vmem:[#allocation2 + $0x38] sm:$0x3] %vm173, 0.0
      %181 = vst.msk [vmem:[#allocation2 + $0x40] sm:$0xff] %vm171, 0.0
      %182 = vst.msk [vmem:[#allocation2 + $0x48] sm:$0x3] %vm173, 0.0
      %183 = vst.msk [vmem:[#allocation2 + $0x50] sm:$0xff] %vm171, 0.0
      %184 = vst.msk [vmem:[#allocation2 + $0x58] sm:$0x3] %vm173, 0.0
      %185 = vst.msk [vmem:[#allocation2 + $0x60] sm:$0xff] %vm171, 0.0
      %186 = vst.msk [vmem:[#allocation2 + $0x68] sm:$0x3] %vm173, 0.0
      %187 = vst.msk [vmem:[#allocation2 + $0x70] sm:$0xff] %vm171, 0.0
      %188 = vst.msk [vmem:[#allocation2 + $0x78] sm:$0x3] %vm173, 0.0
      %189 = vst.msk [vmem:[#allocation2 + $0x80] sm:$0xff] %vm171, 0.0
      %190 = vst.msk [vmem:[#allocation2 + $0x88] sm:$0x3] %vm173, 0.0
      %191 = vst.msk [vmem:[#allocation2 + $0x90] sm:$0xff] %vm171, 0.0
      %192 = vst.msk [vmem:[#allocation2 + $0x98] sm:$0x3] %vm173, 0.0
      %v193 = vld [vmem:[%s165] sm:$0xff]
      %v194 = vld [vmem:[%s165 + $0x8] sm:$0xff]
      %v195 = vld [vmem:[%s165 + $0x10] sm:$0xff]
      %v196 = vld [vmem:[%s165 + $0x18] sm:$0xff]
      %v197 = vld [vmem:[%s165 + $0x20] sm:$0xff]
      %v198 = vld [vmem:[%s165 + $0x28] sm:$0xff]
      %v199 = vld [vmem:[%s165 + $0x30] sm:$0xff]
      %v200 = vld [vmem:[%s165 + $0x38] sm:$0xff]
      %s201 = scalar_lea.vmem [#allocation2], 16
      %202 = vst.msk [vmem:[%s201 + $0x1] sm:$0xff] %vm171, %v193
      %203 = vst.msk [vmem:[%s201 + $0x11] sm:$0xff] %vm171, %v194
      %204 = vst.msk [vmem:[%s201 + $0x21] sm:$0xff] %vm171, %v195
      %205 = vst.msk [vmem:[%s201 + $0x31] sm:$0xff] %vm171, %v196
      %206 = vst.msk [vmem:[%s201 + $0x41] sm:$0xff] %vm171, %v197
      %207 = vst.msk [vmem:[%s201 + $0x51] sm:$0xff] %vm171, %v198
      %208 = vst.msk [vmem:[%s201 + $0x61] sm:$0xff] %vm171, %v199
      %209 = vst.msk [vmem:[%s201 + $0x71] sm:$0xff] %vm171, %v200
      %v210 = vld [vmem:[#allocation2] sm:$0xff]
      %v211 = vld [vmem:[#allocation2 + $0x10] sm:$0xff]
      %v212 = vld [vmem:[#allocation2 + $0x20] sm:$0xff]
      %v213 = vld [vmem:[#allocation2 + $0x30] sm:$0xff]
      %v214 = vld [vmem:[#allocation2 + $0x40] sm:$0xff]
      %v215 = vld [vmem:[#allocation2 + $0x50] sm:$0xff]
      %v216 = vld [vmem:[#allocation2 + $0x60] sm:$0xff]
      %v217 = vld [vmem:[#allocation2 + $0x70] sm:$0xff]
      %218 = vst.msk [vmem:[#allocation3] sm:$0xff] %vm171, %v210
      %219 = vst.msk [vmem:[#allocation3 + $0x18] sm:$0xff] %vm171, %v211
      %220 = vst.msk [vmem:[#allocation3 + $0x30] sm:$0xff] %vm171, %v212
      %221 = vst.msk [vmem:[#allocation3 + $0x48] sm:$0xff] %vm171, %v213
      %222 = vst.msk [vmem:[#allocation3 + $0x60] sm:$0xff] %vm171, %v214
      %223 = vst.msk [vmem:[#allocation3 + $0x78] sm:$0xff] %vm171, %v215
      %224 = vst.msk [vmem:[#allocation3 + $0x90] sm:$0xff] %vm171, %v216
      %225 = vst.msk [vmem:[#allocation3 + $0xa8] sm:$0xff] %vm171, %v217
      %v226 = vld [vmem:[#allocation2 + $0x1] sm:$0xff]
      %v227 = vld [vmem:[#allocation2 + $0x11] sm:$0xff]
      %v228 = vld [vmem:[#allocation2 + $0x21] sm:$0xff]
      %v229 = vld [vmem:[#allocation2 + $0x31] sm:$0xff]
      %v230 = vld [vmem:[#allocation2 + $0x41] sm:$0xff]
      %v231 = vld [vmem:[#allocation2 + $0x51] sm:$0xff]
      %v232 = vld [vmem:[#allocation2 + $0x61] sm:$0xff]
      %v233 = vld [vmem:[#allocation2 + $0x71] sm:$0xff]
      %242 = vrot.lane.b32.xlu0 %v226, 32
      %v243 = vpop.permute.xlu0 %242
      %244 = vrot.lane.b32.xlu0 %v227, 32
      %v245 = vpop.permute.xlu0 %244
      %246 = vrot.lane.b32.xlu0 %v228, 32
      %v247 = vpop.permute.xlu0 %246
      %248 = vrot.lane.b32.xlu0 %v229, 32
      %v249 = vpop.permute.xlu0 %248
      %250 = vrot.lane.b32.xlu0 %v230, 32
      %v251 = vpop.permute.xlu0 %250
      %252 = vrot.lane.b32.xlu0 %v231, 32
      %v253 = vpop.permute.xlu0 %252
      %254 = vrot.lane.b32.xlu0 %v232, 32
      %v255 = vpop.permute.xlu0 %254
      %256 = vrot.lane.b32.xlu0 %v233, 32
      %v257 = vpop.permute.xlu0 %256
      %vm266 = vcmask 523520
      %267 = vst.msk [vmem:[#allocation3] sm:$0xff] %vm266, %v243
      %268 = vst.msk [vmem:[#allocation3 + $0x18] sm:$0xff] %vm266, %v245
      %269 = vst.msk [vmem:[#allocation3 + $0x30] sm:$0xff] %vm266, %v247
      %270 = vst.msk [vmem:[#allocation3 + $0x48] sm:$0xff] %vm266, %v249
      %271 = vst.msk [vmem:[#allocation3 + $0x60] sm:$0xff] %vm266, %v251
      %272 = vst.msk [vmem:[#allocation3 + $0x78] sm:$0xff] %vm266, %v253
      %273 = vst.msk [vmem:[#allocation3 + $0x90] sm:$0xff] %vm266, %v255
      %274 = vst.msk [vmem:[#allocation3 + $0xa8] sm:$0xff] %vm266, %v257
      %v275 = vld [vmem:[#allocation2 + $0x2] sm:$0xff]
      %v276 = vld [vmem:[#allocation2 + $0x12] sm:$0xff]
      %v277 = vld [vmem:[#allocation2 + $0x22] sm:$0xff]
      %v278 = vld [vmem:[#allocation2 + $0x32] sm:$0xff]
      %v279 = vld [vmem:[#allocation2 + $0x42] sm:$0xff]
      %v280 = vld [vmem:[#allocation2 + $0x52] sm:$0xff]
      %v281 = vld [vmem:[#allocation2 + $0x62] sm:$0xff]
      %v282 = vld [vmem:[#allocation2 + $0x72] sm:$0xff]
      %291 = vrot.lane.b32.xlu0 %v275, 64
      %v292 = vpop.permute.xlu0 %291
      %293 = vrot.lane.b32.xlu0 %v276, 64
      %v294 = vpop.permute.xlu0 %293
      %295 = vrot.lane.b32.xlu0 %v277, 64
      %v296 = vpop.permute.xlu0 %295
      %297 = vrot.lane.b32.xlu0 %v278, 64
      %v298 = vpop.permute.xlu0 %297
      %299 = vrot.lane.b32.xlu0 %v279, 64
      %v300 = vpop.permute.xlu0 %299
      %301 = vrot.lane.b32.xlu0 %v280, 64
      %v302 = vpop.permute.xlu0 %301
      %303 = vrot.lane.b32.xlu0 %v281, 64
      %v304 = vpop.permute.xlu0 %303
      %305 = vrot.lane.b32.xlu0 %v282, 64
      %v306 = vpop.permute.xlu0 %305
      %vm315 = vcmask 785920
      %316 = vst.msk [vmem:[#allocation3] sm:$0xff] %vm315, %v292
      %317 = vst.msk [vmem:[#allocation3 + $0x18] sm:$0xff] %vm315, %v294
      %318 = vst.msk [vmem:[#allocation3 + $0x30] sm:$0xff] %vm315, %v296
      %319 = vst.msk [vmem:[#allocation3 + $0x48] sm:$0xff] %vm315, %v298
      %320 = vst.msk [vmem:[#allocation3 + $0x60] sm:$0xff] %vm315, %v300
      %321 = vst.msk [vmem:[#allocation3 + $0x78] sm:$0xff] %vm315, %v302
      %322 = vst.msk [vmem:[#allocation3 + $0x90] sm:$0xff] %vm315, %v304
      %323 = vst.msk [vmem:[#allocation3 + $0xa8] sm:$0xff] %vm315, %v306
      %v324 = vld [vmem:[%s201] sm:$0xff]
      %v325 = vld [vmem:[%s201 + $0x10] sm:$0xff]
      %v326 = vld [vmem:[%s201 + $0x20] sm:$0xff]
      %v327 = vld [vmem:[%s201 + $0x30] sm:$0xff]
      %v328 = vld [vmem:[%s201 + $0x40] sm:$0xff]
      %v329 = vld [vmem:[%s201 + $0x50] sm:$0xff]
      %v330 = vld [vmem:[%s201 + $0x60] sm:$0xff]
      %v331 = vld [vmem:[%s201 + $0x70] sm:$0xff]
      %340 = vrot.lane.b32.xlu0 %v324, 96
      %v341 = vpop.permute.xlu0 %340
      %342 = vrot.lane.b32.xlu0 %v325, 96
      %v343 = vpop.permute.xlu0 %342
      %344 = vrot.lane.b32.xlu0 %v326, 96
      %v345 = vpop.permute.xlu0 %344
      %346 = vrot.lane.b32.xlu0 %v327, 96
      %v347 = vpop.permute.xlu0 %346
      %348 = vrot.lane.b32.xlu0 %v328, 96
      %v349 = vpop.permute.xlu0 %348
      %350 = vrot.lane.b32.xlu0 %v329, 96
      %v351 = vpop.permute.xlu0 %350
      %352 = vrot.lane.b32.xlu0 %v330, 96
      %v353 = vpop.permute.xlu0 %352
      %354 = vrot.lane.b32.xlu0 %v331, 96
      %v355 = vpop.permute.xlu0 %354
      %vm364 = vcmask 1048320
      %365 = vst.msk [vmem:[#allocation3] sm:$0xff] %vm364, %v341
      %366 = vst.msk [vmem:[#allocation3 + $0x18] sm:$0xff] %vm364, %v343
      %367 = vst.msk [vmem:[#allocation3 + $0x30] sm:$0xff] %vm364, %v345
      %368 = vst.msk [vmem:[#allocation3 + $0x48] sm:$0xff] %vm364, %v347
      %369 = vst.msk [vmem:[#allocation3 + $0x60] sm:$0xff] %vm364, %v349
      %370 = vst.msk [vmem:[#allocation3 + $0x78] sm:$0xff] %vm364, %v351
      %371 = vst.msk [vmem:[#allocation3 + $0x90] sm:$0xff] %vm364, %v353
      %372 = vst.msk [vmem:[#allocation3 + $0xa8] sm:$0xff] %vm364, %v355
      %v373 = vld [vmem:[%s201 + $0x1] sm:$0xff]
      %v374 = vld [vmem:[%s201 + $0x11] sm:$0xff]
      %v375 = vld [vmem:[%s201 + $0x21] sm:$0xff]
      %v376 = vld [vmem:[%s201 + $0x31] sm:$0xff]
      %v377 = vld [vmem:[%s201 + $0x41] sm:$0xff]
      %v378 = vld [vmem:[%s201 + $0x51] sm:$0xff]
      %v379 = vld [vmem:[%s201 + $0x61] sm:$0xff]
      %v380 = vld [vmem:[%s201 + $0x71] sm:$0xff]
      %381 = vst.msk [vmem:[#allocation3 + $0x8] sm:$0xff] %vm171, %v373
      %382 = vst.msk [vmem:[#allocation3 + $0x20] sm:$0xff] %vm171, %v374
      %383 = vst.msk [vmem:[#allocation3 + $0x38] sm:$0xff] %vm171, %v375
      %384 = vst.msk [vmem:[#allocation3 + $0x50] sm:$0xff] %vm171, %v376
      %385 = vst.msk [vmem:[#allocation3 + $0x68] sm:$0xff] %vm171, %v377
      %386 = vst.msk [vmem:[#allocation3 + $0x80] sm:$0xff] %vm171, %v378
      %387 = vst.msk [vmem:[#allocation3 + $0x98] sm:$0xff] %vm171, %v379
      %388 = vst.msk [vmem:[#allocation3 + $0xb0] sm:$0xff] %vm171, %v380
      %v389 = vld [vmem:[%s201 + $0x2] sm:$0xff]
      %v390 = vld [vmem:[%s201 + $0x12] sm:$0xff]
      %v391 = vld [vmem:[%s201 + $0x22] sm:$0xff]
      %v392 = vld [vmem:[%s201 + $0x32] sm:$0xff]
      %v393 = vld [vmem:[%s201 + $0x42] sm:$0xff]
      %v394 = vld [vmem:[%s201 + $0x52] sm:$0xff]
      %v395 = vld [vmem:[%s201 + $0x62] sm:$0xff]
      %v396 = vld [vmem:[%s201 + $0x72] sm:$0xff]
      %405 = vrot.lane.b32.xlu0 %v389, 32
      %v406 = vpop.permute.xlu0 %405
      %407 = vrot.lane.b32.xlu0 %v390, 32
      %v408 = vpop.permute.xlu0 %407
      %409 = vrot.lane.b32.xlu0 %v391, 32
      %v410 = vpop.permute.xlu0 %409
      %411 = vrot.lane.b32.xlu0 %v392, 32
      %v412 = vpop.permute.xlu0 %411
      %413 = vrot.lane.b32.xlu0 %v393, 32
      %v414 = vpop.permute.xlu0 %413
      %415 = vrot.lane.b32.xlu0 %v394, 32
      %v416 = vpop.permute.xlu0 %415
      %417 = vrot.lane.b32.xlu0 %v395, 32
      %v418 = vpop.permute.xlu0 %417
      %419 = vrot.lane.b32.xlu0 %v396, 32
      %v420 = vpop.permute.xlu0 %419
      %429 = vst.msk [vmem:[#allocation3 + $0x8] sm:$0xff] %vm266, %v406
      %430 = vst.msk [vmem:[#allocation3 + $0x20] sm:$0xff] %vm266, %v408
      %431 = vst.msk [vmem:[#allocation3 + $0x38] sm:$0xff] %vm266, %v410
      %432 = vst.msk [vmem:[#allocation3 + $0x50] sm:$0xff] %vm266, %v412
      %433 = vst.msk [vmem:[#allocation3 + $0x68] sm:$0xff] %vm266, %v414
      %434 = vst.msk [vmem:[#allocation3 + $0x80] sm:$0xff] %vm266, %v416
      %435 = vst.msk [vmem:[#allocation3 + $0x98] sm:$0xff] %vm266, %v418
      %436 = vst.msk [vmem:[#allocation3 + $0xb0] sm:$0xff] %vm266, %v420
      %s437 = scalar_lea.vmem [#allocation2], 32
      %v438 = vld [vmem:[%s437] sm:$0xff]
      %v439 = vld [vmem:[%s437 + $0x10] sm:$0xff]
      %v440 = vld [vmem:[%s437 + $0x20] sm:$0xff]
      %v441 = vld [vmem:[%s437 + $0x30] sm:$0xff]
      %v442 = vld [vmem:[%s437 + $0x40] sm:$0xff]
      %v443 = vld [vmem:[%s437 + $0x50] sm:$0xff]
      %v444 = vld [vmem:[%s437 + $0x60] sm:$0xff]
      %v445 = vld [vmem:[%s437 + $0x70] sm:$0xff]
      %454 = vrot.lane.b32.xlu0 %v438, 64
      %v455 = vpop.permute.xlu0 %454
      %456 = vrot.lane.b32.xlu0 %v439, 64
      %v457 = vpop.permute.xlu0 %456
      %458 = vrot.lane.b32.xlu0 %v440, 64
      %v459 = vpop.permute.xlu0 %458
      %460 = vrot.lane.b32.xlu0 %v441, 64
      %v461 = vpop.permute.xlu0 %460
      %462 = vrot.lane.b32.xlu0 %v442, 64
      %v463 = vpop.permute.xlu0 %462
      %464 = vrot.lane.b32.xlu0 %v443, 64
      %v465 = vpop.permute.xlu0 %464
      %466 = vrot.lane.b32.xlu0 %v444, 64
      %v467 = vpop.permute.xlu0 %466
      %468 = vrot.lane.b32.xlu0 %v445, 64
      %v469 = vpop.permute.xlu0 %468
      %478 = vst.msk [vmem:[#allocation3 + $0x8] sm:$0xff] %vm315, %v455
      %479 = vst.msk [vmem:[#allocation3 + $0x20] sm:$0xff] %vm315, %v457
      %480 = vst.msk [vmem:[#allocation3 + $0x38] sm:$0xff] %vm315, %v459
      %481 = vst.msk [vmem:[#allocation3 + $0x50] sm:$0xff] %vm315, %v461
      %482 = vst.msk [vmem:[#allocation3 + $0x68] sm:$0xff] %vm315, %v463
      %483 = vst.msk [vmem:[#allocation3 + $0x80] sm:$0xff] %vm315, %v465
      %484 = vst.msk [vmem:[#allocation3 + $0x98] sm:$0xff] %vm315, %v467
      %485 = vst.msk [vmem:[#allocation3 + $0xb0] sm:$0xff] %vm315, %v469
      %v486 = vld [vmem:[%s437 + $0x1] sm:$0xff]
      %v487 = vld [vmem:[%s437 + $0x11] sm:$0xff]
      %v488 = vld [vmem:[%s437 + $0x21] sm:$0xff]
      %v489 = vld [vmem:[%s437 + $0x31] sm:$0xff]
      %v490 = vld [vmem:[%s437 + $0x41] sm:$0xff]
      %v491 = vld [vmem:[%s437 + $0x51] sm:$0xff]
      %v492 = vld [vmem:[%s437 + $0x61] sm:$0xff]
      %v493 = vld [vmem:[%s437 + $0x71] sm:$0xff]
      %502 = vrot.lane.b32.xlu0 %v486, 96
      %v503 = vpop.permute.xlu0 %502
      %504 = vrot.lane.b32.xlu0 %v487, 96
      %v505 = vpop.permute.xlu0 %504
      %506 = vrot.lane.b32.xlu0 %v488, 96
      %v507 = vpop.permute.xlu0 %506
      %508 = vrot.lane.b32.xlu0 %v489, 96
      %v509 = vpop.permute.xlu0 %508
      %510 = vrot.lane.b32.xlu0 %v490, 96
      %v511 = vpop.permute.xlu0 %510
      %512 = vrot.lane.b32.xlu0 %v491, 96
      %v513 = vpop.permute.xlu0 %512
      %514 = vrot.lane.b32.xlu0 %v492, 96
      %v515 = vpop.permute.xlu0 %514
      %516 = vrot.lane.b32.xlu0 %v493, 96
      %v517 = vpop.permute.xlu0 %516
      %526 = vst.msk [vmem:[#allocation3 + $0x8] sm:$0xff] %vm364, %v503
      %527 = vst.msk [vmem:[#allocation3 + $0x20] sm:$0xff] %vm364, %v505
      %528 = vst.msk [vmem:[#allocation3 + $0x38] sm:$0xff] %vm364, %v507
      %529 = vst.msk [vmem:[#allocation3 + $0x50] sm:$0xff] %vm364, %v509
      %530 = vst.msk [vmem:[#allocation3 + $0x68] sm:$0xff] %vm364, %v511
      %531 = vst.msk [vmem:[#allocation3 + $0x80] sm:$0xff] %vm364, %v513
      %532 = vst.msk [vmem:[#allocation3 + $0x98] sm:$0xff] %vm364, %v515
      %533 = vst.msk [vmem:[#allocation3 + $0xb0] sm:$0xff] %vm364, %v517
      %v534 = vld [vmem:[%s437 + $0x2] sm:$0xff]
      %v535 = vld [vmem:[%s437 + $0x12] sm:$0xff]
      %v536 = vld [vmem:[%s437 + $0x22] sm:$0xff]
      %v537 = vld [vmem:[%s437 + $0x32] sm:$0xff]
      %v538 = vld [vmem:[%s437 + $0x42] sm:$0xff]
      %v539 = vld [vmem:[%s437 + $0x52] sm:$0xff]
      %v540 = vld [vmem:[%s437 + $0x62] sm:$0xff]
      %v541 = vld [vmem:[%s437 + $0x72] sm:$0xff]
      %542 = vst.msk [vmem:[#allocation3 + $0x10] sm:$0xff] %vm171, %v534
      %543 = vst.msk [vmem:[#allocation3 + $0x28] sm:$0xff] %vm171, %v535
      %544 = vst.msk [vmem:[#allocation3 + $0x40] sm:$0xff] %vm171, %v536
      %545 = vst.msk [vmem:[#allocation3 + $0x58] sm:$0xff] %vm171, %v537
      %546 = vst.msk [vmem:[#allocation3 + $0x70] sm:$0xff] %vm171, %v538
      %547 = vst.msk [vmem:[#allocation3 + $0x88] sm:$0xff] %vm171, %v539
      %548 = vst.msk [vmem:[#allocation3 + $0xa0] sm:$0xff] %vm171, %v540
      %549 = vst.msk [vmem:[#allocation3 + $0xb8] sm:$0xff] %vm171, %v541
      %v550 = vld [vmem:[#allocation3] sm:$0xff]
      %v551 = vld [vmem:[#allocation3 + $0x8] sm:$0xff]
      %v552 = vld [vmem:[#allocation3 + $0x10] sm:$0xff]
      %v553 = vld [vmem:[#allocation3 + $0x18] sm:$0xff]
      %v554 = vld [vmem:[#allocation3 + $0x20] sm:$0xff]
      %v555 = vld [vmem:[#allocation3 + $0x28] sm:$0xff]
      %v556 = vld [vmem:[#allocation3 + $0x30] sm:$0xff]
      %v557 = vld [vmem:[#allocation3 + $0x38] sm:$0xff]
      %v558 = vld [vmem:[#allocation3 + $0x40] sm:$0xff]
      %v559 = vld [vmem:[#allocation3 + $0x48] sm:$0xff]
      %v560 = vld [vmem:[#allocation3 + $0x50] sm:$0xff]
      %v561 = vld [vmem:[#allocation3 + $0x58] sm:$0xff]
      %v562 = vld [vmem:[#allocation3 + $0x60] sm:$0xff]
      %v563 = vld [vmem:[#allocation3 + $0x68] sm:$0xff]
      %v564 = vld [vmem:[#allocation3 + $0x70] sm:$0xff]
      %v565 = vld [vmem:[#allocation3 + $0x78] sm:$0xff]
      %v566 = vld [vmem:[#allocation3 + $0x80] sm:$0xff]
      %v567 = vld [vmem:[#allocation3 + $0x88] sm:$0xff]
      %v568 = vld [vmem:[#allocation3 + $0x90] sm:$0xff]
      %v569 = vld [vmem:[#allocation3 + $0x98] sm:$0xff]
      %v570 = vld [vmem:[#allocation3 + $0xa0] sm:$0xff]
      %v571 = vld [vmem:[#allocation3 + $0xa8] sm:$0xff]
      %v572 = vld [vmem:[#allocation3 + $0xb0] sm:$0xff]
      %v573 = vld [vmem:[#allocation3 + $0xb8] sm:$0xff]
      %v574 = vld [vmem:[%s1] sm:$0xff]
      %v575 = vld [vmem:[%s1 + $0x8] sm:$0xff]
      %v576 = vld [vmem:[%s1 + $0x10] sm:$0xff]
      %v577 = vld [vmem:[%s1 + $0x18] sm:$0xff]
      %v578 = vld [vmem:[%s1 + $0x20] sm:$0xff]
      %v579 = vld [vmem:[%s1 + $0x28] sm:$0xff]
      %v580 = vld [vmem:[%s1 + $0x30] sm:$0xff]
      %v581 = vld [vmem:[%s1 + $0x38] sm:$0xff]
      %v582 = vld [vmem:[%s1 + $0x40] sm:$0xff]
      %v583 = vld [vmem:[%s1 + $0x48] sm:$0xff]
      %v584 = vld [vmem:[%s1 + $0x50] sm:$0xff]
      %v585 = vld [vmem:[%s1 + $0x58] sm:$0xff]
      %v586 = vld [vmem:[%s1 + $0x60] sm:$0xff]
      %v587 = vld [vmem:[%s1 + $0x68] sm:$0xff]
      %v588 = vld [vmem:[%s1 + $0x70] sm:$0xff]
      %v589 = vld [vmem:[%s1 + $0x78] sm:$0xff]
      %v590 = vld [vmem:[%s1 + $0x80] sm:$0xff]
      %v591 = vld [vmem:[%s1 + $0x88] sm:$0xff]
      %v592 = vld [vmem:[%s1 + $0x90] sm:$0xff]
      %v593 = vld [vmem:[%s1 + $0x98] sm:$0xff]
      %v594 = vld [vmem:[%s1 + $0xa0] sm:$0xff]
      %v595 = vld [vmem:[%s1 + $0xa8] sm:$0xff]
      %v596 = vld [vmem:[%s1 + $0xb0] sm:$0xff]
      %v597 = vld [vmem:[%s1 + $0xb8] sm:$0xff]
      %v598 = vld [vmem:[%s1 + $0xc0] sm:$0xff]
      %v599 = vld [vmem:[%s1 + $0xc8] sm:$0xff]
      %v600 = vld [vmem:[%s1 + $0xd0] sm:$0xff]
      %v601 = vld [vmem:[%s1 + $0xd8] sm:$0xff]
      %v602 = vld [vmem:[%s1 + $0xe0] sm:$0xff]
      %v603 = vld [vmem:[%s1 + $0xe8] sm:$0xff]
      %v604 = vld [vmem:[%s1 + $0xf0] sm:$0xff]
      %v605 = vld [vmem:[%s1 + $0xf8] sm:$0xff]
      %v606 = vld [vmem:[%s1 + $0x100] sm:$0xff]
      %v607 = vld [vmem:[%s1 + $0x108] sm:$0xff]
      %v608 = vld [vmem:[%s1 + $0x110] sm:$0xff]
      %v609 = vld [vmem:[%s1 + $0x118] sm:$0xff]
      %v610 = vld [vmem:[%s2] sm:$0x1]
      %v612 = vlaneseq
      %v613 = vshrl.u32 %v612, 7
      %v614 = vsub.s32 0, %v613
      %v615 = vrot.slane %v610, %v614
      %v618 = vsel %vm171, %v552, 0
      %v621 = vsel %vm171, %v555, 0
      %v624 = vsel %vm171, %v558, 0
      %v627 = vsel %vm171, %v561, 0
      %v630 = vsel %vm171, %v564, 0
      %v633 = vsel %vm171, %v567, 0
      %v636 = vsel %vm171, %v570, 0
      %v639 = vsel %vm171, %v573, 0
      %641 = vmatprep.subr.mxu0 0.0
      %642 = vmatpush1.msra.mxu0 %v574
      %643 = vmatprep.subr.mxu0 0.0
      %644 = vmatpush1.msra.mxu0 %v575
      %645 = vmatprep.subr.mxu0 0.0
      %646 = vmatpush1.msra.mxu0 %v576
      %647 = vmatprep.subr.mxu0 0.0
      %648 = vmatpush1.msra.mxu0 %v577
      %649 = vmatprep.subr.mxu0 0.0
      %650 = vmatpush1.msra.mxu0 %v578
      %651 = vmatprep.subr.mxu0 0.0
      %652 = vmatpush1.msra.mxu0 %v579
      %653 = vmatprep.subr.mxu0 0.0
      %654 = vmatpush1.msra.mxu0 %v580
      %655 = vmatprep.subr.mxu0 0.0
      %656 = vmatpush1.msra.mxu0 %v581
      %657 = vmatprep.subr.mxu0 0.0
      %658 = vmatpush1.msra.mxu0 %v582
      %659 = vmatprep.subr.mxu0 0.0
      %660 = vmatpush1.msra.mxu0 %v583
      %661 = vmatprep.subr.mxu0 0.0
      %662 = vmatpush1.msra.mxu0 %v584
      %663 = vmatprep.subr.mxu0 0.0
      %664 = vmatpush1.msra.mxu0 %v585
      %665 = vmatprep.subr.mxu0 0.0
      %666 = vmatpush1.msra.mxu0 %v586
      %667 = vmatprep.subr.mxu0 0.0
      %668 = vmatpush1.msra.mxu0 %v587
      %669 = vmatprep.subr.mxu0 0.0
      %670 = vmatpush1.msra.mxu0 %v588
      %671 = vmatprep.subr.mxu0 0.0
      %672 = vmatpush1.msra.mxu0 %v589
      %673 = vmatprep.subr.mxu0 0.0
      %674 = vmatpush1.msra.mxu0 %v590
      %675 = vmatprep.subr.mxu0 0.0
      %676 = vmatpush1.msra.mxu0 %v591
      %677 = vmatprep.subr.mxu0 0.0
      %678 = vmatpush1.msra.mxu0 %v592
      %679 = vmatprep.subr.mxu0 0.0
      %680 = vmatpush1.msra.mxu0 %v593
      %681 = vmatprep.subr.mxu0 0.0
      %682 = vmatpush1.msra.mxu0 %v594
      %683 = vmatprep.subr.mxu0 0.0
      %684 = vmatpush1.msra.mxu0 %v595
      %685 = vmatprep.subr.mxu0 0.0
      %686 = vmatpush1.msra.mxu0 %v596
      %687 = vmatprep.subr.mxu0 0.0
      %688 = vmatpush1.msra.mxu0 %v597
      %689 = vmatprep.subr.mxu0 0.0
      %690 = vmatpush1.msra.mxu0 %v598
      %691 = vmatprep.subr.mxu0 0.0
      %692 = vmatpush1.msra.mxu0 %v599
      %693 = vmatprep.subr.mxu0 0.0
      %694 = vmatpush1.msra.mxu0 %v600
      %695 = vmatprep.subr.mxu0 0.0
      %696 = vmatpush1.msra.mxu0 %v601
      %697 = vmatprep.subr.mxu0 0.0
      %698 = vmatpush1.msra.mxu0 %v602
      %699 = vmatprep.subr.mxu0 0.0
      %700 = vmatpush1.msra.mxu0 %v603
      %701 = vmatprep.subr.mxu0 0.0
      %702 = vmatpush1.msra.mxu0 %v604
      %703 = vmatprep.subr.mxu0 0.0
      %704 = vmatpush1.msra.mxu0 %v605
      %705 = vmatprep.mubr.f32.mxu0 %v551
      %706 = vmatmul.mubr.f32.gmra.mrb[0].mxu0 %v550
      %v707 = vpop.f32.mrb[0].mxu0
      %v708 = vadd.f32 %v615, %v707
      %v709 = vpop.f32.mrb[0].mxu0
      %710 = vmatprep.mubr.f32.mxu0 %v554
      %711 = vmatmul.mubr.f32.gmra.mrb[0].mxu0 %v553
      %v712 = vpop.f32.mrb[0].mxu0
      %v713 = vadd.f32 %v615, %v712
      %v714 = vpop.f32.mrb[0].mxu0
      %715 = vmatprep.mubr.f32.mxu0 %v557
      %716 = vmatmul.mubr.f32.gmra.mrb[0].mxu0 %v556
      %v717 = vpop.f32.mrb[0].mxu0
      %v718 = vadd.f32 %v615, %v717
      %v719 = vpop.f32.mrb[0].mxu0
      %720 = vmatprep.mubr.f32.mxu0 %v560
      %721 = vmatmul.mubr.f32.gmra.mrb[0].mxu0 %v559
      %v722 = vpop.f32.mrb[0].mxu0
      %v723 = vadd.f32 %v615, %v722
      %v724 = vpop.f32.mrb[0].mxu0
      %725 = vmatprep.mubr.f32.mxu0 %v563
      %726 = vmatmul.mubr.f32.gmra.mrb[0].mxu0 %v562
      %v727 = vpop.f32.mrb[0].mxu0
      %v728 = vadd.f32 %v615, %v727
      %v729 = vpop.f32.mrb[0].mxu0
      %730 = vmatprep.mubr.f32.mxu0 %v566
      %731 = vmatmul.mubr.f32.gmra.mrb[0].mxu0 %v565
      %v732 = vpop.f32.mrb[0].mxu0
      %v733 = vadd.f32 %v615, %v732
      %v734 = vpop.f32.mrb[0].mxu0
      %735 = vmatprep.mubr.f32.mxu0 %v569
      %736 = vmatmul.mubr.f32.gmra.mrb[0].mxu0 %v568
      %v737 = vpop.f32.mrb[0].mxu0
      %v738 = vadd.f32 %v615, %v737
      %v739 = vpop.f32.mrb[0].mxu0
      %740 = vmatprep.mubr.f32.mxu0 %v572
      %741 = vmatmul.mubr.f32.gmra.mrb[0].mxu0 %v571
      %v742 = vpop.f32.mrb[0].mxu0
      %v743 = vadd.f32 %v615, %v742
      %v744 = vpop.f32.mrb[0].mxu0
      %745 = vdwg.mxu0
      %746 = vmatprep.subr.mxu0 0.0
      %747 = vmatpush1.msra.mxu0 %v606
      %748 = vmatprep.subr.mxu0 0.0
      %749 = vmatpush1.msra.mxu0 %v607
      %750 = vmatprep.subr.mxu0 0.0
      %751 = vmatpush1.msra.mxu0 %v608
      %752 = vmatprep.subr.mxu0 0.0
      %753 = vmatpush1.msra.mxu0 %v609
      %754 = vmatprep.subr.mxu0 0.0
      %755 = vmatpush1.msra.mxu0 0.0
      %756 = vmatprep.subr.mxu0 0.0
      %757 = vmatpush1.msra.mxu0 0.0
      %758 = vmatprep.subr.mxu0 0.0
      %759 = vmatpush1.msra.mxu0 0.0
      %760 = vmatprep.subr.mxu0 0.0
      %761 = vmatpush1.msra.mxu0 0.0
      %762 = vmatprep.subr.mxu0 0.0
      %763 = vmatpush1.msra.mxu0 0.0
      %764 = vmatprep.subr.mxu0 0.0
      %765 = vmatpush1.msra.mxu0 0.0
      %766 = vmatprep.subr.mxu0 0.0
      %767 = vmatpush1.msra.mxu0 0.0
      %768 = vmatprep.subr.mxu0 0.0
      %769 = vmatpush1.msra.mxu0 0.0
      %770 = vmatprep.subr.mxu0 0.0
      %771 = vmatpush1.msra.mxu0 0.0
      %772 = vmatprep.subr.mxu0 0.0
      %773 = vmatpush1.msra.mxu0 0.0
      %774 = vmatprep.subr.mxu0 0.0
      %775 = vmatpush1.msra.mxu0 0.0
      %776 = vmatprep.subr.mxu0 0.0
      %777 = vmatpush1.msra.mxu0 0.0
      %778 = vmatprep.subr.mxu0 0.0
      %779 = vmatpush1.msra.mxu0 0.0
      %780 = vmatprep.subr.mxu0 0.0
      %781 = vmatpush1.msra.mxu0 0.0
      %782 = vmatprep.subr.mxu0 0.0
      %783 = vmatpush1.msra.mxu0 0.0
      %784 = vmatprep.subr.mxu0 0.0
      %785 = vmatpush1.msra.mxu0 0.0
      %786 = vmatprep.subr.mxu0 0.0
      %787 = vmatpush1.msra.mxu0 0.0
      %788 = vmatprep.subr.mxu0 0.0
      %789 = vmatpush1.msra.mxu0 0.0
      %790 = vmatprep.subr.mxu0 0.0
      %791 = vmatpush1.msra.mxu0 0.0
      %792 = vmatprep.subr.mxu0 0.0
      %793 = vmatpush1.msra.mxu0 0.0
      %794 = vmatprep.subr.mxu0 0.0
      %795 = vmatpush1.msra.mxu0 0.0
      %796 = vmatprep.subr.mxu0 0.0
      %797 = vmatpush1.msra.mxu0 0.0
      %798 = vmatprep.subr.mxu0 0.0
      %799 = vmatpush1.msra.mxu0 0.0
      %800 = vmatprep.subr.mxu0 0.0
      %801 = vmatpush1.msra.mxu0 0.0
      %802 = vmatprep.subr.mxu0 0.0
      %803 = vmatpush1.msra.mxu0 0.0
      %804 = vmatprep.subr.mxu0 0.0
      %805 = vmatpush1.msra.mxu0 0.0
      %806 = vmatprep.subr.mxu0 0.0
      %807 = vmatpush1.msra.mxu0 0.0
      %808 = vmatprep.subr.mxu0 0.0
      %809 = vmatpush1.msra.mxu0 0.0
      %810 = vmatprep.mubr.f32.mxu0 0.0
      %811 = vmatmul.mubr.f32.gmra.mrb[0].mxu0 %v618
      %v812 = vpop.f32.mrb[0].mxu0
      %v813 = vadd.f32 %v708, %v812
      %v814 = vpop.f32.mrb[0].mxu0
      %815 = vmatprep.mubr.f32.mxu0 0.0
      %816 = vmatmul.mubr.f32.gmra.mrb[0].mxu0 %v621
      %v817 = vpop.f32.mrb[0].mxu0
      %v818 = vadd.f32 %v713, %v817
      %v819 = vpop.f32.mrb[0].mxu0
      %820 = vmatprep.mubr.f32.mxu0 0.0
      %821 = vmatmul.mubr.f32.gmra.mrb[0].mxu0 %v624
      %v822 = vpop.f32.mrb[0].mxu0
      %v823 = vadd.f32 %v718, %v822
      %v824 = vpop.f32.mrb[0].mxu0
      %825 = vmatprep.mubr.f32.mxu0 0.0
      %826 = vmatmul.mubr.f32.gmra.mrb[0].mxu0 %v627
      %v827 = vpop.f32.mrb[0].mxu0
      %v828 = vadd.f32 %v723, %v827
      %v829 = vpop.f32.mrb[0].mxu0
      %830 = vmatprep.mubr.f32.mxu0 0.0
      %831 = vmatmul.mubr.f32.gmra.mrb[0].mxu0 %v630
      %v832 = vpop.f32.mrb[0].mxu0
      %v833 = vadd.f32 %v728, %v832
      %v834 = vpop.f32.mrb[0].mxu0
      %835 = vmatprep.mubr.f32.mxu0 0.0
      %836 = vmatmul.mubr.f32.gmra.mrb[0].mxu0 %v633
      %v837 = vpop.f32.mrb[0].mxu0
      %v838 = vadd.f32 %v733, %v837
      %v839 = vpop.f32.mrb[0].mxu0
      %840 = vmatprep.mubr.f32.mxu0 0.0
      %841 = vmatmul.mubr.f32.gmra.mrb[0].mxu0 %v636
      %v842 = vpop.f32.mrb[0].mxu0
      %v843 = vadd.f32 %v738, %v842
      %v844 = vpop.f32.mrb[0].mxu0
      %845 = vmatprep.mubr.f32.mxu0 0.0
      %846 = vmatmul.mubr.f32.gmra.mrb[0].mxu0 %v639
      %v847 = vpop.f32.mrb[0].mxu0
      %v848 = vadd.f32 %v743, %v847
      %v849 = vpop.f32.mrb[0].mxu0
      %850 = vdwg.mxu0
      %v851 = vmax.f32 %v813, 0.0
      %v852 = vmax.f32 %v818, 0.0
      %v853 = vmax.f32 %v823, 0.0
      %v854 = vmax.f32 %v828, 0.0
      %v855 = vmax.f32 %v833, 0.0
      %v856 = vmax.f32 %v838, 0.0
      %v857 = vmax.f32 %v843, 0.0
      %v858 = vmax.f32 %v848, 0.0
      %v867 = vcombine.high %v851, %v851
      %v869 = vunpack.c.l.s4 1983009808
      %v870 = vunpack.c.0.s8 %v869
      %v871 = vlaneseq
      %v872 = vshrl.u32 %v871, 7
      %v873 = vsub.s32 %v870, %v872
      %v874 = vrot.slane %v851, %v873
      %v876 = vunpack.c.l.s4 1983009808
      %v877 = vunpack.c.0.s8 %v876
      %v878 = vlaneseq
      %v879 = vshrl.u32 %v878, 7
      %v880 = vsub.s32 %v877, %v879
      %v881 = vrot.slane %v867, %v880
      %v882 = vcombine.high %v874, %v874
      %v883 = vcombine.high %v881, %v881
      %v884 = vcombine.high %v852, %v852
      %v886 = vunpack.c.l.s4 1983009808
      %v887 = vunpack.c.0.s8 %v886
      %v888 = vlaneseq
      %v889 = vshrl.u32 %v888, 7
      %v890 = vsub.s32 %v887, %v889
      %v891 = vrot.slane %v852, %v890
      %v893 = vunpack.c.l.s4 1983009808
      %v894 = vunpack.c.0.s8 %v893
      %v895 = vlaneseq
      %v896 = vshrl.u32 %v895, 7
      %v897 = vsub.s32 %v894, %v896
      %v898 = vrot.slane %v884, %v897
      %v899 = vcombine.high %v891, %v891
      %v900 = vcombine.high %v898, %v898
      %v901 = vcombine.high %v853, %v853
      %v903 = vunpack.c.l.s4 1983009808
      %v904 = vunpack.c.0.s8 %v903
      %v905 = vlaneseq
      %v906 = vshrl.u32 %v905, 7
      %v907 = vsub.s32 %v904, %v906
      %v908 = vrot.slane %v853, %v907
      %v910 = vunpack.c.l.s4 1983009808
      %v911 = vunpack.c.0.s8 %v910
      %v912 = vlaneseq
      %v913 = vshrl.u32 %v912, 7
      %v914 = vsub.s32 %v911, %v913
      %v915 = vrot.slane %v901, %v914
      %v916 = vcombine.high %v908, %v908
      %v917 = vcombine.high %v915, %v915
      %v918 = vcombine.high %v854, %v854
      %v920 = vunpack.c.l.s4 1983009808
      %v921 = vunpack.c.0.s8 %v920
      %v922 = vlaneseq
      %v923 = vshrl.u32 %v922, 7
      %v924 = vsub.s32 %v921, %v923
      %v925 = vrot.slane %v854, %v924
      %v927 = vunpack.c.l.s4 1983009808
      %v928 = vunpack.c.0.s8 %v927
      %v929 = vlaneseq
      %v930 = vshrl.u32 %v929, 7
      %v931 = vsub.s32 %v928, %v930
      %v932 = vrot.slane %v918, %v931
      %v933 = vcombine.high %v925, %v925
      %v934 = vcombine.high %v932, %v932
      %v935 = vcombine.high %v855, %v855
      %v937 = vunpack.c.l.s4 1983009808
      %v938 = vunpack.c.0.s8 %v937
      %v939 = vlaneseq
      %v940 = vshrl.u32 %v939, 7
      %v941 = vsub.s32 %v938, %v940
      %v942 = vrot.slane %v855, %v941
      %v944 = vunpack.c.l.s4 1983009808
      %v945 = vunpack.c.0.s8 %v944
      %v946 = vlaneseq
      %v947 = vshrl.u32 %v946, 7
      %v948 = vsub.s32 %v945, %v947
      %v949 = vrot.slane %v935, %v948
      %v950 = vcombine.high %v942, %v942
      %v951 = vcombine.high %v949, %v949
      %v952 = vcombine.high %v856, %v856
      %v954 = vunpack.c.l.s4 1983009808
      %v955 = vunpack.c.0.s8 %v954
      %v956 = vlaneseq
      %v957 = vshrl.u32 %v956, 7
      %v958 = vsub.s32 %v955, %v957
      %v959 = vrot.slane %v856, %v958
      %v961 = vunpack.c.l.s4 1983009808
      %v962 = vunpack.c.0.s8 %v961
      %v963 = vlaneseq
      %v964 = vshrl.u32 %v963, 7
      %v965 = vsub.s32 %v962, %v964
      %v966 = vrot.slane %v952, %v965
      %v967 = vcombine.high %v959, %v959
      %v968 = vcombine.high %v966, %v966
      %v969 = vcombine.high %v857, %v857
      %v971 = vunpack.c.l.s4 1983009808
      %v972 = vunpack.c.0.s8 %v971
      %v973 = vlaneseq
      %v974 = vshrl.u32 %v973, 7
      %v975 = vsub.s32 %v972, %v974
      %v976 = vrot.slane %v857, %v975
      %v978 = vunpack.c.l.s4 1983009808
      %v979 = vunpack.c.0.s8 %v978
      %v980 = vlaneseq
      %v981 = vshrl.u32 %v980, 7
      %v982 = vsub.s32 %v979, %v981
      %v983 = vrot.slane %v969, %v982
      %v984 = vcombine.high %v976, %v976
      %v985 = vcombine.high %v983, %v983
      %v986 = vcombine.high %v858, %v858
      %v988 = vunpack.c.l.s4 1983009808
      %v989 = vunpack.c.0.s8 %v988
      %v990 = vlaneseq
      %v991 = vshrl.u32 %v990, 7
      %v992 = vsub.s32 %v989, %v991
      %v993 = vrot.slane %v858, %v992
      %v995 = vunpack.c.l.s4 1983009808
      %v996 = vunpack.c.0.s8 %v995
      %v997 = vlaneseq
      %v998 = vshrl.u32 %v997, 7
      %v999 = vsub.s32 %v996, %v998
      %v1000 = vrot.slane %v986, %v999
      %v1001 = vcombine.high %v993, %v993
      %v1002 = vcombine.high %v1000, %v1000
      %v1035 = vrot.slane %v874, 7
      %v1036 = vrot.slane %v1035, 2
      %v1037 = vrot.slane %v882, 7
      %v1038 = vrot.slane %v1037, 2
      %v1039 = vrot.slane %v881, 7
      %v1040 = vrot.slane %v1039, 2
      %v1041 = vrot.slane %v883, 7
      %v1042 = vrot.slane %v1041, 2
      %v1043 = vrot.slane %v891, 7
      %v1044 = vrot.slane %v1043, 2
      %v1045 = vrot.slane %v899, 7
      %v1046 = vrot.slane %v1045, 2
      %v1047 = vrot.slane %v898, 7
      %v1048 = vrot.slane %v1047, 2
      %v1049 = vrot.slane %v900, 7
      %v1050 = vrot.slane %v1049, 2
      %v1051 = vrot.slane %v908, 7
      %v1052 = vrot.slane %v1051, 2
      %v1053 = vrot.slane %v916, 7
      %v1054 = vrot.slane %v1053, 2
      %v1055 = vrot.slane %v915, 7
      %v1056 = vrot.slane %v1055, 2
      %v1057 = vrot.slane %v917, 7
      %v1058 = vrot.slane %v1057, 2
      %v1059 = vrot.slane %v925, 7
      %v1060 = vrot.slane %v1059, 2
      %v1061 = vrot.slane %v933, 7
      %v1062 = vrot.slane %v1061, 2
      %v1063 = vrot.slane %v932, 7
      %v1064 = vrot.slane %v1063, 2
      %v1065 = vrot.slane %v934, 7
      %v1066 = vrot.slane %v1065, 2
      %v1067 = vrot.slane %v942, 7
      %v1068 = vrot.slane %v1067, 2
      %v1069 = vrot.slane %v950, 7
      %v1070 = vrot.slane %v1069, 2
      %v1071 = vrot.slane %v949, 7
      %v1072 = vrot.slane %v1071, 2
      %v1073 = vrot.slane %v951, 7
      %v1074 = vrot.slane %v1073, 2
      %v1075 = vrot.slane %v959, 7
      %v1076 = vrot.slane %v1075, 2
      %v1077 = vrot.slane %v967, 7
      %v1078 = vrot.slane %v1077, 2
      %v1079 = vrot.slane %v966, 7
      %v1080 = vrot.slane %v1079, 2
      %v1081 = vrot.slane %v968, 7
      %v1082 = vrot.slane %v1081, 2
      %v1083 = vrot.slane %v976, 7
      %v1084 = vrot.slane %v1083, 2
      %v1085 = vrot.slane %v984, 7
      %v1086 = vrot.slane %v1085, 2
      %v1087 = vrot.slane %v983, 7
      %v1088 = vrot.slane %v1087, 2
      %v1089 = vrot.slane %v985, 7
      %v1090 = vrot.slane %v1089, 2
      %v1091 = vrot.slane %v993, 7
      %v1092 = vrot.slane %v1091, 2
      %v1093 = vrot.slane %v1001, 7
      %v1094 = vrot.slane %v1093, 2
      %v1095 = vrot.slane %v1000, 7
      %v1096 = vrot.slane %v1095, 2
      %v1097 = vrot.slane %v1002, 7
      %v1098 = vrot.slane %v1097, 2
      %v1131 = vmax.f32 %v874, %v1036
      %v1132 = vmax.f32 %v882, %v1038
      %v1133 = vmax.f32 %v881, %v1040
      %v1134 = vmax.f32 %v883, %v1042
      %v1135 = vmax.f32 %v891, %v1044
      %v1136 = vmax.f32 %v899, %v1046
      %v1137 = vmax.f32 %v898, %v1048
      %v1138 = vmax.f32 %v900, %v1050
      %v1139 = vmax.f32 %v908, %v1052
      %v1140 = vmax.f32 %v916, %v1054
      %v1141 = vmax.f32 %v915, %v1056
      %v1142 = vmax.f32 %v917, %v1058
      %v1143 = vmax.f32 %v925, %v1060
      %v1144 = vmax.f32 %v933, %v1062
      %v1145 = vmax.f32 %v932, %v1064
      %v1146 = vmax.f32 %v934, %v1066
      %v1147 = vmax.f32 %v942, %v1068
      %v1148 = vmax.f32 %v950, %v1070
      %v1149 = vmax.f32 %v949, %v1072
      %v1150 = vmax.f32 %v951, %v1074
      %v1151 = vmax.f32 %v959, %v1076
      %v1152 = vmax.f32 %v967, %v1078
      %v1153 = vmax.f32 %v966, %v1080
      %v1154 = vmax.f32 %v968, %v1082
      %v1155 = vmax.f32 %v976, %v1084
      %v1156 = vmax.f32 %v984, %v1086
      %v1157 = vmax.f32 %v983, %v1088
      %v1158 = vmax.f32 %v985, %v1090
      %v1159 = vmax.f32 %v993, %v1092
      %v1160 = vmax.f32 %v1001, %v1094
      %v1161 = vmax.f32 %v1000, %v1096
      %v1162 = vmax.f32 %v1002, %v1098
      %v1163 = vmax.f32 %v1131, %v1135
      %v1164 = vmax.f32 %v1132, %v1136
      %v1165 = vmax.f32 %v1133, %v1137
      %v1166 = vmax.f32 %v1134, %v1138
      %v1167 = vmax.f32 %v1139, %v1143
      %v1168 = vmax.f32 %v1140, %v1144
      %v1169 = vmax.f32 %v1141, %v1145
      %v1170 = vmax.f32 %v1142, %v1146
      %v1171 = vmax.f32 %v1147, %v1151
      %v1172 = vmax.f32 %v1148, %v1152
      %v1173 = vmax.f32 %v1149, %v1153
      %v1174 = vmax.f32 %v1150, %v1154
      %v1175 = vmax.f32 %v1155, %v1159
      %v1176 = vmax.f32 %v1156, %v1160
      %v1177 = vmax.f32 %v1157, %v1161
      %v1178 = vmax.f32 %v1158, %v1162
      %v1195 = vlaneseq
      %v1196 = vshrl.u32 %v1195, 7
      %v1197 = vsub.s32 0, %v1196
      %v1198 = vrot.slane %v1163, %v1197
      %v1199 = vlaneseq
      %v1200 = vshrl.u32 %v1199, 7
      %v1201 = vsub.s32 0, %v1200
      %v1202 = vrot.slane %v1164, %v1201
      %v1203 = vlaneseq
      %v1204 = vshrl.u32 %v1203, 7
      %v1205 = vsub.s32 0, %v1204
      %v1206 = vrot.slane %v1165, %v1205
      %v1207 = vlaneseq
      %v1208 = vshrl.u32 %v1207, 7
      %v1209 = vsub.s32 0, %v1208
      %v1210 = vrot.slane %v1166, %v1209
      %v1211 = vlaneseq
      %v1212 = vshrl.u32 %v1211, 7
      %v1213 = vsub.s32 0, %v1212
      %v1214 = vrot.slane %v1167, %v1213
      %v1215 = vlaneseq
      %v1216 = vshrl.u32 %v1215, 7
      %v1217 = vsub.s32 0, %v1216
      %v1218 = vrot.slane %v1168, %v1217
      %v1219 = vlaneseq
      %v1220 = vshrl.u32 %v1219, 7
      %v1221 = vsub.s32 0, %v1220
      %v1222 = vrot.slane %v1169, %v1221
      %v1223 = vlaneseq
      %v1224 = vshrl.u32 %v1223, 7
      %v1225 = vsub.s32 0, %v1224
      %v1226 = vrot.slane %v1170, %v1225
      %v1227 = vlaneseq
      %v1228 = vshrl.u32 %v1227, 7
      %v1229 = vsub.s32 0, %v1228
      %v1230 = vrot.slane %v1171, %v1229
      %v1231 = vlaneseq
      %v1232 = vshrl.u32 %v1231, 7
      %v1233 = vsub.s32 0, %v1232
      %v1234 = vrot.slane %v1172, %v1233
      %v1235 = vlaneseq
      %v1236 = vshrl.u32 %v1235, 7
      %v1237 = vsub.s32 0, %v1236
      %v1238 = vrot.slane %v1173, %v1237
      %v1239 = vlaneseq
      %v1240 = vshrl.u32 %v1239, 7
      %v1241 = vsub.s32 0, %v1240
      %v1242 = vrot.slane %v1174, %v1241
      %v1243 = vlaneseq
      %v1244 = vshrl.u32 %v1243, 7
      %v1245 = vsub.s32 0, %v1244
      %v1246 = vrot.slane %v1175, %v1245
      %v1247 = vlaneseq
      %v1248 = vshrl.u32 %v1247, 7
      %v1249 = vsub.s32 0, %v1248
      %v1250 = vrot.slane %v1176, %v1249
      %v1251 = vlaneseq
      %v1252 = vshrl.u32 %v1251, 7
      %v1253 = vsub.s32 0, %v1252
      %v1254 = vrot.slane %v1177, %v1253
      %v1255 = vlaneseq
      %v1256 = vshrl.u32 %v1255, 7
      %v1257 = vsub.s32 0, %v1256
      %v1258 = vrot.slane %v1178, %v1257
      %vm1259 = vcmask 1041409
      %v1260 = vsel %vm1259, %v1202, %v1198
      %vm1261 = vcmask 1042434
      %v1262 = vsel %vm1261, %v1206, %v1260
      %vm1263 = vcmask 1043459
      %v1264 = vsel %vm1263, %v1210, %v1262
      %v1265 = vsel %vm1259, %v1218, %v1214
      %v1266 = vsel %vm1261, %v1222, %v1265
      %v1267 = vsel %vm1263, %v1226, %v1266
      %v1268 = vsel %vm1259, %v1234, %v1230
      %v1269 = vsel %vm1261, %v1238, %v1268
      %v1270 = vsel %vm1263, %v1242, %v1269
      %v1271 = vsel %vm1259, %v1250, %v1246
      %v1272 = vsel %vm1261, %v1254, %v1271
      %v1273 = vsel %vm1263, %v1258, %v1272
      %vm1278 = vcmask 519168
      %1279 = vst.msk [vmem:[%s170] sm:$0xf] %vm1278, %v1264
      %1280 = vst.msk [vmem:[%s170 + $0x4] sm:$0xf] %vm1278, %v1267
      %1281 = vst.msk [vmem:[%s170 + $0x8] sm:$0xf] %vm1278, %v1270
      %1282 = vst.msk [vmem:[%s170 + $0xc] sm:$0xf] %vm1278, %v1273
      %p1283 = scmp.lt.s32.totalorder %s14, 1
      %s1284 = scalar_select %p1283, %s14, 1
      %s1285 = smul.addr %s1284, 4
      %s1286 = smul.addr %s1285, 4
      %s1287 = scalar_lea.vmem %s3, %s1286
      // Predicated region
      $region33: #{vgg_forward.5} parent=31 // pred_check
        %p1288 = pneg %p100
      $region34: #{vgg_forward.5} parent=31 // pred_check_branch
        %1290 = sbr.rel (%p1288) target = $region36
      $region35: #{vgg_forward.5} parent=31 // pred_region
        _
      $region36: #{vgg_forward.5} parent=31 // pred_fallthru
        _
    $region32: #{vgg_forward.5} parent=5 // pred_fallthru
      _
    %p1291 = scmp.le.s32.totalorder 2, %s9
    // Predicated region
    $region37: #{vgg_forward.5} parent=5 // pred_check
      %p1292 = pneg %p1291
    $region38: #{vgg_forward.5} parent=5 // pred_check_branch
      %1294 = sbr.rel (%p1292) target = $region40
    $region39: #{vgg_forward.5} parent=5 // pred_region
      %s1295 = ssub.s32 %s9, 2
      // Predicated region
      $region41: #{vgg_forward.5} parent=39 // pred_check
        %p1296 = pneg %p106
      $region42: #{vgg_forward.5} parent=39 // pred_check_branch
        %1298 = sbr.rel (%p1296) target = $region44
      $region43: #{vgg_forward.5} parent=39 // pred_region
        %p1299 = scmp.lt.s32.totalorder %s15, 1
        %s1300 = scalar_select %p1299, %s15, 1
        %s1301 = smul.addr %s1300, 4
        %s1302 = smul.addr %s1301, 4
        %s1303 = scalar_lea.vmem %s3, %s1302
      $region44: #{vgg_forward.5} parent=39 // pred_fallthru
        _
    $region40: #{vgg_forward.5} parent=5 // pred_fallthru
      _
  $region6: #{vgg_forward.5} parent=0 // loop_footer
    %s13 = sadd.s32 1, %s9
  $region7: #{vgg_forward.5} parent=0 // loop_footer_branch
    %8 = sbr.rel target = $region3
  $region8: #{vgg_forward.5} parent=0 // loop_exit
    _

// kernel: vgg_forward.7
$region0: #{vgg_forward.7}
  #allocation0 [shape = 'u32[]', space=smem, size = 0x4, offset = 0x4, fixed_abs, tag = 'smem constant byte address 0x4 - core index']
  #allocation1 [shape = 'u32[144,128]{1,0:T(1,128)}', space=vmem, size = 0x12000, scoped, tag = 'internal scratch']
  %s0 = inlined_call_operand.vmem [shape: f32[2,512], index: 0, kind: input, shape index: {}]
  %s1 = inlined_call_operand.vmem [shape: f32[512,128], index: 1, kind: input, shape index: {}]
  %s2 = inlined_call_operand.vmem [shape: f32[1,128], index: 2, kind: input, shape index: {}]
  %s3 = inlined_call_operand.vmem [shape: f32[128,128], index: 3, kind: input, shape index: {}]
  %s4 = inlined_call_operand.vmem [shape: f32[1,128], index: 4, kind: input, shape index: {}]
  %s5 = inlined_call_operand.vmem [shape: f32[128,10], index: 5, kind: input, shape index: {}]
  %s6 = inlined_call_operand.vmem [shape: f32[1,10], index: 6, kind: input, shape index: {}]
  %s7 = inlined_call_operand.hbm [shape: f32[2,10], index: 7, kind: output, shape index: {}]
  %s8 = sld [smem:[#allocation0]]
  $region38: #{vgg_forward.7} parent=0
    _
  %s10 = ssub.s32 1, %s8
  %s11 = scalar_select 0, %s10, %s8
  $region1: #{vgg_forward.7} parent=0
    #allocation2 [shape = 'u8[1024]{0}', space=vmem, size = 0x400, scoped, tag = 'output window, operand 0, single buffered']
    #allocation3 [shape = 's32[1]{0}', space=sflag, size = 0x4, scoped, tag = 'scoped memory for vgg_forward.7']
    %12 = vsyncpa [#allocation3], 0
    // Predicated region
    $region2: #{vgg_forward.7} parent=1 // pred_check
      _
    $region3: #{vgg_forward.7} parent=1 // pred_check_branch
      %14 = sbr.rel (0) target = $region5
    $region4: #{vgg_forward.7} parent=1 // pred_region
      _
    $region5: #{vgg_forward.7} parent=1 // pred_fallthru
      _
    // Predicated region
    $region6: #{vgg_forward.7} parent=1 // pred_check
      _
    $region7: #{vgg_forward.7} parent=1 // pred_check_branch
      %16 = sbr.rel (0) target = $region9
    $region8: #{vgg_forward.7} parent=1 // pred_region
      _
    $region9: #{vgg_forward.7} parent=1 // pred_fallthru
      _
    // Predicated region
    $region10: #{vgg_forward.7} parent=1 // pred_check
      _
    $region11: #{vgg_forward.7} parent=1 // pred_check_branch
      %18 = sbr.rel (0) target = $region13
    $region12: #{vgg_forward.7} parent=1 // pred_region
      _
    $region13: #{vgg_forward.7} parent=1 // pred_fallthru
      _
    // Predicated region
    $region14: #{vgg_forward.7} parent=1 // pred_check
      _
    $region15: #{vgg_forward.7} parent=1 // pred_check_branch
      %20 = sbr.rel (0) target = $region17
    $region16: #{vgg_forward.7} parent=1 // pred_region
      _
    $region17: #{vgg_forward.7} parent=1 // pred_fallthru
      _
    // Predicated region
    $region18: #{vgg_forward.7} parent=1 // pred_check
      _
    $region19: #{vgg_forward.7} parent=1 // pred_check_branch
      %22 = sbr.rel (0) target = $region21
    $region20: #{vgg_forward.7} parent=1 // pred_region
      _
    $region21: #{vgg_forward.7} parent=1 // pred_fallthru
      _
    // Predicated region
    $region22: #{vgg_forward.7} parent=1 // pred_check
      _
    $region23: #{vgg_forward.7} parent=1 // pred_check_branch
      %24 = sbr.rel (0) target = $region25
    $region24: #{vgg_forward.7} parent=1 // pred_region
      _
    $region25: #{vgg_forward.7} parent=1 // pred_fallthru
      _
    // Predicated region
    $region26: #{vgg_forward.7} parent=1 // pred_check
      _
    $region27: #{vgg_forward.7} parent=1 // pred_check_branch
      %26 = sbr.rel (0) target = $region29
    $region28: #{vgg_forward.7} parent=1 // pred_region
      _
    $region29: #{vgg_forward.7} parent=1 // pred_fallthru
      _
    %v27 = vld [vmem:[%s0] sm:$0xff]
    %v28 = vld [vmem:[%s1] sm:$0xff]
    %v29 = vld [vmem:[%s1 + $0x8] sm:$0xff]
    %v30 = vld [vmem:[%s1 + $0x10] sm:$0xff]
    %v31 = vld [vmem:[%s1 + $0x18] sm:$0xff]
    %v32 = vld [vmem:[%s1 + $0x20] sm:$0xff]
    %v33 = vld [vmem:[%s1 + $0x28] sm:$0xff]
    %v34 = vld [vmem:[%s1 + $0x30] sm:$0xff]
    %v35 = vld [vmem:[%s1 + $0x38] sm:$0xff]
    %v36 = vld [vmem:[%s1 + $0x40] sm:$0xff]
    %v37 = vld [vmem:[%s1 + $0x48] sm:$0xff]
    %v38 = vld [vmem:[%s1 + $0x50] sm:$0xff]
    %v39 = vld [vmem:[%s1 + $0x58] sm:$0xff]
    %v40 = vld [vmem:[%s1 + $0x60] sm:$0xff]
    %v41 = vld [vmem:[%s1 + $0x68] sm:$0xff]
    %v42 = vld [vmem:[%s1 + $0x70] sm:$0xff]
    %v43 = vld [vmem:[%s1 + $0x78] sm:$0xff]
    %v44 = vld [vmem:[%s1 + $0x80] sm:$0xff]
    %v45 = vld [vmem:[%s1 + $0x88] sm:$0xff]
    %v46 = vld [vmem:[%s1 + $0x90] sm:$0xff]
    %v47 = vld [vmem:[%s1 + $0x98] sm:$0xff]
    %v48 = vld [vmem:[%s1 + $0xa0] sm:$0xff]
    %v49 = vld [vmem:[%s1 + $0xa8] sm:$0xff]
    %v50 = vld [vmem:[%s1 + $0xb0] sm:$0xff]
    %v51 = vld [vmem:[%s1 + $0xb8] sm:$0xff]
    %v52 = vld [vmem:[%s1 + $0xc0] sm:$0xff]
    %v53 = vld [vmem:[%s1 + $0xc8] sm:$0xff]
    %v54 = vld [vmem:[%s1 + $0xd0] sm:$0xff]
    %v55 = vld [vmem:[%s1 + $0xd8] sm:$0xff]
    %v56 = vld [vmem:[%s1 + $0xe0] sm:$0xff]
    %v57 = vld [vmem:[%s1 + $0xe8] sm:$0xff]
    %v58 = vld [vmem:[%s1 + $0xf0] sm:$0xff]
    %v59 = vld [vmem:[%s1 + $0xf8] sm:$0xff]
    %v60 = vld [vmem:[%s1 + $0x100] sm:$0xff]
    %v61 = vld [vmem:[%s1 + $0x108] sm:$0xff]
    %v62 = vld [vmem:[%s1 + $0x110] sm:$0xff]
    %v63 = vld [vmem:[%s1 + $0x118] sm:$0xff]
    %v64 = vld [vmem:[%s1 + $0x120] sm:$0xff]
    %v65 = vld [vmem:[%s1 + $0x128] sm:$0xff]
    %v66 = vld [vmem:[%s1 + $0x130] sm:$0xff]
    %v67 = vld [vmem:[%s1 + $0x138] sm:$0xff]
    %v68 = vld [vmem:[%s1 + $0x140] sm:$0xff]
    %v69 = vld [vmem:[%s1 + $0x148] sm:$0xff]
    %v70 = vld [vmem:[%s1 + $0x150] sm:$0xff]
    %v71 = vld [vmem:[%s1 + $0x158] sm:$0xff]
    %v72 = vld [vmem:[%s1 + $0x160] sm:$0xff]
    %v73 = vld [vmem:[%s1 + $0x168] sm:$0xff]
    %v74 = vld [vmem:[%s1 + $0x170] sm:$0xff]
    %v75 = vld [vmem:[%s1 + $0x178] sm:$0xff]
    %v76 = vld [vmem:[%s1 + $0x180] sm:$0xff]
    %v77 = vld [vmem:[%s1 + $0x188] sm:$0xff]
    %v78 = vld [vmem:[%s1 + $0x190] sm:$0xff]
    %v79 = vld [vmem:[%s1 + $0x198] sm:$0xff]
    %v80 = vld [vmem:[%s1 + $0x1a0] sm:$0xff]
    %v81 = vld [vmem:[%s1 + $0x1a8] sm:$0xff]
    %v82 = vld [vmem:[%s1 + $0x1b0] sm:$0xff]
    %v83 = vld [vmem:[%s1 + $0x1b8] sm:$0xff]
    %v84 = vld [vmem:[%s1 + $0x1c0] sm:$0xff]
    %v85 = vld [vmem:[%s1 + $0x1c8] sm:$0xff]
    %v86 = vld [vmem:[%s1 + $0x1d0] sm:$0xff]
    %v87 = vld [vmem:[%s1 + $0x1d8] sm:$0xff]
    %v88 = vld [vmem:[%s1 + $0x1e0] sm:$0xff]
    %v89 = vld [vmem:[%s1 + $0x1e8] sm:$0xff]
    %v90 = vld [vmem:[%s1 + $0x1f0] sm:$0xff]
    %v91 = vld [vmem:[%s1 + $0x1f8] sm:$0xff]
    %v92 = vld [vmem:[%s2] sm:$0x1]
    %v94 = vlaneseq
    %v95 = vshrl.u32 %v94, 7
    %v96 = vsub.s32 0, %v95
    %v97 = vrot.slane %v92, %v96
    %v100 = vcombine.high %v27, %v27
    %v102 = vunpack.c.l.s4 1983009808
    %v103 = vunpack.c.0.s8 %v102
    %v104 = vlaneseq
    %v105 = vshrl.u32 %v104, 7
    %v106 = vsub.s32 %v103, %v105
    %v107 = vrot.slane %v27, %v106
    %v109 = vunpack.c.l.s4 1983009808
    %v110 = vunpack.c.0.s8 %v109
    %v111 = vlaneseq
    %v112 = vshrl.u32 %v111, 7
    %v113 = vsub.s32 %v110, %v112
    %v114 = vrot.slane %v100, %v113
    %v115 = vcombine.high %v107, %v107
    %v116 = vcombine.high %v114, %v114
    %121 = vmatprep.subr.mxu0 0.0
    %122 = vmatpush1.msra.mxu0 %v28
    %123 = vmatprep.subr.mxu0 0.0
    %124 = vmatpush1.msra.mxu0 %v29
    %125 = vmatprep.subr.mxu0 0.0
    %126 = vmatpush1.msra.mxu0 %v30
    %127 = vmatprep.subr.mxu0 0.0
    %128 = vmatpush1.msra.mxu0 %v31
    %129 = vmatprep.subr.mxu0 0.0
    %130 = vmatpush1.msra.mxu0 %v32
    %131 = vmatprep.subr.mxu0 0.0
    %132 = vmatpush1.msra.mxu0 %v33
    %133 = vmatprep.subr.mxu0 0.0
    %134 = vmatpush1.msra.mxu0 %v34
    %135 = vmatprep.subr.mxu0 0.0
    %136 = vmatpush1.msra.mxu0 %v35
    %137 = vmatprep.subr.mxu0 0.0
    %138 = vmatpush1.msra.mxu0 %v36
    %139 = vmatprep.subr.mxu0 0.0
    %140 = vmatpush1.msra.mxu0 %v37
    %141 = vmatprep.subr.mxu0 0.0
    %142 = vmatpush1.msra.mxu0 %v38
    %143 = vmatprep.subr.mxu0 0.0
    %144 = vmatpush1.msra.mxu0 %v39
    %145 = vmatprep.subr.mxu0 0.0
    %146 = vmatpush1.msra.mxu0 %v40
    %147 = vmatprep.subr.mxu0 0.0
    %148 = vmatpush1.msra.mxu0 %v41
    %149 = vmatprep.subr.mxu0 0.0
    %150 = vmatpush1.msra.mxu0 %v42
    %151 = vmatprep.subr.mxu0 0.0
    %152 = vmatpush1.msra.mxu0 %v43
    %153 = vmatprep.subr.mxu0 0.0
    %154 = vmatpush1.msra.mxu0 %v44
    %155 = vmatprep.subr.mxu0 0.0
    %156 = vmatpush1.msra.mxu0 %v45
    %157 = vmatprep.subr.mxu0 0.0
    %158 = vmatpush1.msra.mxu0 %v46
    %159 = vmatprep.subr.mxu0 0.0
    %160 = vmatpush1.msra.mxu0 %v47
    %161 = vmatprep.subr.mxu0 0.0
    %162 = vmatpush1.msra.mxu0 %v48
    %163 = vmatprep.subr.mxu0 0.0
    %164 = vmatpush1.msra.mxu0 %v49
    %165 = vmatprep.subr.mxu0 0.0
    %166 = vmatpush1.msra.mxu0 %v50
    %167 = vmatprep.subr.mxu0 0.0
    %168 = vmatpush1.msra.mxu0 %v51
    %169 = vmatprep.subr.mxu0 0.0
    %170 = vmatpush1.msra.mxu0 %v52
    %171 = vmatprep.subr.mxu0 0.0
    %172 = vmatpush1.msra.mxu0 %v53
    %173 = vmatprep.subr.mxu0 0.0
    %174 = vmatpush1.msra.mxu0 %v54
    %175 = vmatprep.subr.mxu0 0.0
    %176 = vmatpush1.msra.mxu0 %v55
    %177 = vmatprep.subr.mxu0 0.0
    %178 = vmatpush1.msra.mxu0 %v56
    %179 = vmatprep.subr.mxu0 0.0
    %180 = vmatpush1.msra.mxu0 %v57
    %181 = vmatprep.subr.mxu0 0.0
    %182 = vmatpush1.msra.mxu0 %v58
    %183 = vmatprep.subr.mxu0 0.0
    %184 = vmatpush1.msra.mxu0 %v59
    %185 = vmatprep.mubr.f32.mxu0 %v115
    %186 = vmatmul.mubr.f32.gmra.mrb[0].mxu0 %v107
    %v187 = vpop.f32.mrb[0].mxu0
    %v188 = vadd.f32 %v97, %v187
    %v189 = vpop.f32.mrb[0].mxu0
    %190 = vdwg.mxu0
    %191 = vmatprep.subr.mxu0 0.0
    %192 = vmatpush1.msra.mxu0 %v60
    %193 = vmatprep.subr.mxu0 0.0
    %194 = vmatpush1.msra.mxu0 %v61
    %195 = vmatprep.subr.mxu0 0.0
    %196 = vmatpush1.msra.mxu0 %v62
    %197 = vmatprep.subr.mxu0 0.0
    %198 = vmatpush1.msra.mxu0 %v63
    %199 = vmatprep.subr.mxu0 0.0
    %200 = vmatpush1.msra.mxu0 %v64
    %201 = vmatprep.subr.mxu0 0.0
    %202 = vmatpush1.msra.mxu0 %v65
    %203 = vmatprep.subr.mxu0 0.0
    %204 = vmatpush1.msra.mxu0 %v66
    %205 = vmatprep.subr.mxu0 0.0
    %206 = vmatpush1.msra.mxu0 %v67
    %207 = vmatprep.subr.mxu0 0.0
    %208 = vmatpush1.msra.mxu0 %v68
    %209 = vmatprep.subr.mxu0 0.0
    %210 = vmatpush1.msra.mxu0 %v69
    %211 = vmatprep.subr.mxu0 0.0
    %212 = vmatpush1.msra.mxu0 %v70
    %213 = vmatprep.subr.mxu0 0.0
    %214 = vmatpush1.msra.mxu0 %v71
    %215 = vmatprep.subr.mxu0 0.0
    %216 = vmatpush1.msra.mxu0 %v72
    %217 = vmatprep.subr.mxu0 0.0
    %218 = vmatpush1.msra.mxu0 %v73
    %219 = vmatprep.subr.mxu0 0.0
    %220 = vmatpush1.msra.mxu0 %v74
    %221 = vmatprep.subr.mxu0 0.0
    %222 = vmatpush1.msra.mxu0 %v75
    %223 = vmatprep.subr.mxu0 0.0
    %224 = vmatpush1.msra.mxu0 %v76
    %225 = vmatprep.subr.mxu0 0.0
    %226 = vmatpush1.msra.mxu0 %v77
    %227 = vmatprep.subr.mxu0 0.0
    %228 = vmatpush1.msra.mxu0 %v78
    %229 = vmatprep.subr.mxu0 0.0
    %230 = vmatpush1.msra.mxu0 %v79
    %231 = vmatprep.subr.mxu0 0.0
    %232 = vmatpush1.msra.mxu0 %v80
    %233 = vmatprep.subr.mxu0 0.0
    %234 = vmatpush1.msra.mxu0 %v81
    %235 = vmatprep.subr.mxu0 0.0
    %236 = vmatpush1.msra.mxu0 %v82
    %237 = vmatprep.subr.mxu0 0.0
    %238 = vmatpush1.msra.mxu0 %v83
    %239 = vmatprep.subr.mxu0 0.0
    %240 = vmatpush1.msra.mxu0 %v84
    %241 = vmatprep.subr.mxu0 0.0
    %242 = vmatpush1.msra.mxu0 %v85
    %243 = vmatprep.subr.mxu0 0.0
    %244 = vmatpush1.msra.mxu0 %v86
    %245 = vmatprep.subr.mxu0 0.0
    %246 = vmatpush1.msra.mxu0 %v87
    %247 = vmatprep.subr.mxu0 0.0
    %248 = vmatpush1.msra.mxu0 %v88
    %249 = vmatprep.subr.mxu0 0.0
    %250 = vmatpush1.msra.mxu0 %v89
    %251 = vmatprep.subr.mxu0 0.0
    %252 = vmatpush1.msra.mxu0 %v90
    %253 = vmatprep.subr.mxu0 0.0
    %254 = vmatpush1.msra.mxu0 %v91
    %255 = vmatprep.mubr.f32.mxu0 %v116
    %256 = vmatmul.mubr.f32.gmra.mrb[0].mxu0 %v114
    %v257 = vpop.f32.mrb[0].mxu0
    %v258 = vadd.f32 %v188, %v257
    %v259 = vpop.f32.mrb[0].mxu0
    %260 = vdwg.mxu0
    %v261 = vmax.f32 %v258, 0.0
    %v262 = vld [vmem:[%s3] sm:$0xff]
    %v263 = vld [vmem:[%s3 + $0x8] sm:$0xff]
    %v264 = vld [vmem:[%s3 + $0x10] sm:$0xff]
    %v265 = vld [vmem:[%s3 + $0x18] sm:$0xff]
    %v266 = vld [vmem:[%s3 + $0x20] sm:$0xff]
    %v267 = vld [vmem:[%s3 + $0x28] sm:$0xff]
    %v268 = vld [vmem:[%s3 + $0x30] sm:$0xff]
    %v269 = vld [vmem:[%s3 + $0x38] sm:$0xff]
    %v270 = vld [vmem:[%s3 + $0x40] sm:$0xff]
    %v271 = vld [vmem:[%s3 + $0x48] sm:$0xff]
    %v272 = vld [vmem:[%s3 + $0x50] sm:$0xff]
    %v273 = vld [vmem:[%s3 + $0x58] sm:$0xff]
    %v274 = vld [vmem:[%s3 + $0x60] sm:$0xff]
    %v275 = vld [vmem:[%s3 + $0x68] sm:$0xff]
    %v276 = vld [vmem:[%s3 + $0x70] sm:$0xff]
    %v277 = vld [vmem:[%s3 + $0x78] sm:$0xff]
    %v278 = vld [vmem:[%s4] sm:$0x1]
    %v280 = vlaneseq
    %v281 = vshrl.u32 %v280, 7
    %v282 = vsub.s32 0, %v281
    %v283 = vrot.slane %v278, %v282
    %285 = vmatprep.subr.mxu0 0.0
    %286 = vmatpush1.msra.mxu0 %v262
    %287 = vmatprep.subr.mxu0 0.0
    %288 = vmatpush1.msra.mxu0 %v263
    %289 = vmatprep.subr.mxu0 0.0
    %290 = vmatpush1.msra.mxu0 %v264
    %291 = vmatprep.subr.mxu0 0.0
    %292 = vmatpush1.msra.mxu0 %v265
    %293 = vmatprep.subr.mxu0 0.0
    %294 = vmatpush1.msra.mxu0 %v266
    %295 = vmatprep.subr.mxu0 0.0
    %296 = vmatpush1.msra.mxu0 %v267
    %297 = vmatprep.subr.mxu0 0.0
    %298 = vmatpush1.msra.mxu0 %v268
    %299 = vmatprep.subr.mxu0 0.0
    %300 = vmatpush1.msra.mxu0 %v269
    %301 = vmatprep.subr.mxu0 0.0
    %302 = vmatpush1.msra.mxu0 %v270
    %303 = vmatprep.subr.mxu0 0.0
    %304 = vmatpush1.msra.mxu0 %v271
    %305 = vmatprep.subr.mxu0 0.0
    %306 = vmatpush1.msra.mxu0 %v272
    %307 = vmatprep.subr.mxu0 0.0
    %308 = vmatpush1.msra.mxu0 %v273
    %309 = vmatprep.subr.mxu0 0.0
    %310 = vmatpush1.msra.mxu0 %v274
    %311 = vmatprep.subr.mxu0 0.0
    %312 = vmatpush1.msra.mxu0 %v275
    %313 = vmatprep.subr.mxu0 0.0
    %314 = vmatpush1.msra.mxu0 %v276
    %315 = vmatprep.subr.mxu0 0.0
    %316 = vmatpush1.msra.mxu0 %v277
    %317 = vmatprep.subr.mxu0 0.0
    %318 = vmatpush1.msra.mxu0 0.0
    %319 = vmatprep.subr.mxu0 0.0
    %320 = vmatpush1.msra.mxu0 0.0
    %321 = vmatprep.subr.mxu0 0.0
    %322 = vmatpush1.msra.mxu0 0.0
    %323 = vmatprep.subr.mxu0 0.0
    %324 = vmatpush1.msra.mxu0 0.0
    %325 = vmatprep.subr.mxu0 0.0
    %326 = vmatpush1.msra.mxu0 0.0
    %327 = vmatprep.subr.mxu0 0.0
    %328 = vmatpush1.msra.mxu0 0.0
    %329 = vmatprep.subr.mxu0 0.0
    %330 = vmatpush1.msra.mxu0 0.0
    %331 = vmatprep.subr.mxu0 0.0
    %332 = vmatpush1.msra.mxu0 0.0
    %333 = vmatprep.subr.mxu0 0.0
    %334 = vmatpush1.msra.mxu0 0.0
    %335 = vmatprep.subr.mxu0 0.0
    %336 = vmatpush1.msra.mxu0 0.0
    %337 = vmatprep.subr.mxu0 0.0
    %338 = vmatpush1.msra.mxu0 0.0
    %339 = vmatprep.subr.mxu0 0.0
    %340 = vmatpush1.msra.mxu0 0.0
    %341 = vmatprep.subr.mxu0 0.0
    %342 = vmatpush1.msra.mxu0 0.0
    %343 = vmatprep.subr.mxu0 0.0
    %344 = vmatpush1.msra.mxu0 0.0
    %345 = vmatprep.subr.mxu0 0.0
    %346 = vmatpush1.msra.mxu0 0.0
    %347 = vmatprep.subr.mxu0 0.0
    %348 = vmatpush1.msra.mxu0 0.0
    %349 = vmatprep.mubr.f32.mxu0 0.0
    %350 = vmatmul.mubr.f32.gmra.mrb[0].mxu0 %v261
    %v351 = vpop.f32.mrb[0].mxu0
    %v352 = vadd.f32 %v283, %v351
    %v353 = vpop.f32.mrb[0].mxu0
    %354 = vdwg.mxu0
    %v355 = vmax.f32 %v352, 0.0
    %v356 = vld [vmem:[%s5] sm:$0xff]
    %v357 = vld [vmem:[%s5 + $0x8] sm:$0xff]
    %v358 = vld [vmem:[%s5 + $0x10] sm:$0xff]
    %v359 = vld [vmem:[%s5 + $0x18] sm:$0xff]
    %v360 = vld [vmem:[%s5 + $0x20] sm:$0xff]
    %v361 = vld [vmem:[%s5 + $0x28] sm:$0xff]
    %v362 = vld [vmem:[%s5 + $0x30] sm:$0xff]
    %v363 = vld [vmem:[%s5 + $0x38] sm:$0xff]
    %v364 = vld [vmem:[%s5 + $0x40] sm:$0xff]
    %v365 = vld [vmem:[%s5 + $0x48] sm:$0xff]
    %v366 = vld [vmem:[%s5 + $0x50] sm:$0xff]
    %v367 = vld [vmem:[%s5 + $0x58] sm:$0xff]
    %v368 = vld [vmem:[%s5 + $0x60] sm:$0xff]
    %v369 = vld [vmem:[%s5 + $0x68] sm:$0xff]
    %v370 = vld [vmem:[%s5 + $0x70] sm:$0xff]
    %v371 = vld [vmem:[%s5 + $0x78] sm:$0xff]
    %v372 = vld [vmem:[%s6] sm:$0x1]
    %v374 = vlaneseq
    %v375 = vshrl.u32 %v374, 7
    %v376 = vsub.s32 0, %v375
    %v377 = vrot.slane %v372, %v376
    %379 = vmatprep.subr.mxu0 0.0
    %380 = vmatpush1.msra.mxu0 %v356
    %381 = vmatprep.subr.mxu0 0.0
    %382 = vmatpush1.msra.mxu0 %v357
    %383 = vmatprep.subr.mxu0 0.0
    %384 = vmatpush1.msra.mxu0 %v358
    %385 = vmatprep.subr.mxu0 0.0
    %386 = vmatpush1.msra.mxu0 %v359
    %387 = vmatprep.subr.mxu0 0.0
    %388 = vmatpush1.msra.mxu0 %v360
    %389 = vmatprep.subr.mxu0 0.0
    %390 = vmatpush1.msra.mxu0 %v361
    %391 = vmatprep.subr.mxu0 0.0
    %392 = vmatpush1.msra.mxu0 %v362
    %393 = vmatprep.subr.mxu0 0.0
    %394 = vmatpush1.msra.mxu0 %v363
    %395 = vmatprep.subr.mxu0 0.0
    %396 = vmatpush1.msra.mxu0 %v364
    %397 = vmatprep.subr.mxu0 0.0
    %398 = vmatpush1.msra.mxu0 %v365
    %399 = vmatprep.subr.mxu0 0.0
    %400 = vmatpush1.msra.mxu0 %v366
    %401 = vmatprep.subr.mxu0 0.0
    %402 = vmatpush1.msra.mxu0 %v367
    %403 = vmatprep.subr.mxu0 0.0
    %404 = vmatpush1.msra.mxu0 %v368
    %405 = vmatprep.subr.mxu0 0.0
    %406 = vmatpush1.msra.mxu0 %v369
    %407 = vmatprep.subr.mxu0 0.0
    %408 = vmatpush1.msra.mxu0 %v370
    %409 = vmatprep.subr.mxu0 0.0
    %410 = vmatpush1.msra.mxu0 %v371
    %411 = vmatprep.subr.mxu0 0.0
    %412 = vmatpush1.msra.mxu0 0.0
    %413 = vmatprep.subr.mxu0 0.0
    %414 = vmatpush1.msra.mxu0 0.0
    %415 = vmatprep.subr.mxu0 0.0
    %416 = vmatpush1.msra.mxu0 0.0
    %417 = vmatprep.subr.mxu0 0.0
    %418 = vmatpush1.msra.mxu0 0.0
    %419 = vmatprep.subr.mxu0 0.0
    %420 = vmatpush1.msra.mxu0 0.0
    %421 = vmatprep.subr.mxu0 0.0
    %422 = vmatpush1.msra.mxu0 0.0
    %423 = vmatprep.subr.mxu0 0.0
    %424 = vmatpush1.msra.mxu0 0.0
    %425 = vmatprep.subr.mxu0 0.0
    %426 = vmatpush1.msra.mxu0 0.0
    %427 = vmatprep.subr.mxu0 0.0
    %428 = vmatpush1.msra.mxu0 0.0
    %429 = vmatprep.subr.mxu0 0.0
    %430 = vmatpush1.msra.mxu0 0.0
    %431 = vmatprep.subr.mxu0 0.0
    %432 = vmatpush1.msra.mxu0 0.0
    %433 = vmatprep.subr.mxu0 0.0
    %434 = vmatpush1.msra.mxu0 0.0
    %435 = vmatprep.subr.mxu0 0.0
    %436 = vmatpush1.msra.mxu0 0.0
    %437 = vmatprep.subr.mxu0 0.0
    %438 = vmatpush1.msra.mxu0 0.0
    %439 = vmatprep.subr.mxu0 0.0
    %440 = vmatpush1.msra.mxu0 0.0
    %441 = vmatprep.subr.mxu0 0.0
    %442 = vmatpush1.msra.mxu0 0.0
    %443 = vmatprep.mubr.f32.mxu0 0.0
    %444 = vmatmul.mubr.f32.gmra.mrb[0].mxu0 %v355
    %v445 = vpop.f32.mrb[0].mxu0
    %v446 = vadd.f32 %v377, %v445
    %v447 = vpop.f32.mrb[0].mxu0
    %448 = vdwg.mxu0
    %vm449 = vcmask 74752
    %450 = vst.msk [vmem:[#allocation2] sm:$0x3] %vm449, %v446
    // Predicated region
    $region30: #{vgg_forward.7} parent=1 // pred_check
      _
    $region31: #{vgg_forward.7} parent=1 // pred_check_branch
      %452 = sbr.rel (0) target = $region33
    $region32: #{vgg_forward.7} parent=1 // pred_region
      %s454 = ssub.s32 32, 32
      %455 = vsyncadd [#allocation3], %s454
      %s457 = sshll.u32 [#allocation2], 4
      %s458 = int_to_ptr.vmem [resolvable:$true] %s457
      %460 = dma.vmem_to_hbm [thread:$0]  %s458, 32, %s7, [#allocation3]
    $region33: #{vgg_forward.7} parent=1 // pred_fallthru
      _
    // Predicated region
    $region34: #{vgg_forward.7} parent=1 // pred_check
      _
    $region35: #{vgg_forward.7} parent=1 // pred_check_branch
      %462 = sbr.rel (0) target = $region37
    $region36: #{vgg_forward.7} parent=1 // pred_region
      %463 = dma.done [#allocation3], 32
    $region37: #{vgg_forward.7} parent=1 // pred_fallthru
      _
    %464 = vsyncpa [#allocation3], 1

// kernel: vgg_forward.4
$region0: #{vgg_forward.4}
  #allocation0 [shape = 'u32[]', space=smem, size = 0x4, offset = 0x4, fixed_abs, tag = 'smem constant byte address 0x4 - core index']
  #allocation1 [shape = 'u32[144,128]{1,0:T(1,128)}', space=vmem, size = 0x12000, scoped, tag = 'internal scratch']
  #allocation2 [shape = 'f32[18,18,3]{2,1,0:T(8,128)}', space=vmem, size = 0x36000, scoped, tag = 'scratch operand']
  #allocation3 [shape = 'f32[256,27]{1,0:T(8,128)}', space=vmem, size = 0x20000, scoped, tag = 'scratch operand']
  %s0 = inlined_call_operand.vmem [shape: f32[2,16,16,3], index: 0, kind: input, shape index: {}]
  %s1 = inlined_call_operand.vmem [shape: f32[27,32], index: 1, kind: input, shape index: {}]
  %s2 = inlined_call_operand.vmem [shape: f32[1,32], index: 2, kind: input, shape index: {}]
  %s3 = inlined_call_operand.vmem [shape: f32[2,8,8,32], index: 3, kind: output, shape index: {}]
  %s4 = sld [smem:[#allocation0]]
  $region45: #{vgg_forward.4} parent=0
    _
  %s6 = ssub.s32 1, %s4
  %s7 = scalar_select 0, %s6, %s4
  loop: start=0, step=1, limit=4
  $region2: #{vgg_forward.4} parent=0 // loop_pre_header
    _
  $region3: #{vgg_forward.4} parent=0 // loop_header
    %s9 = sphi 0, %s13
    %p10 = scmp.ge.s32.totalorder %s9, 4
    %s19 = sphi 0, %s21
    %s22 = sphi 0, %s19
    %s23 = sphi 0, %s22
    %s39 = sphi 0, %s23
    %s43 = sphi 0, %s43
    %s45 = sphi 0, %s43
    %s46 = sphi 0, %s45
    %s60 = sphi 0, %s46
    %s64 = sphi 0, %s64
    %s66 = sphi 0, %s64
    %s67 = sphi 0, %s66
    %s81 = sphi 0, %s67
    %s87 = sphi 0, %s89
    %s90 = sphi 0, %s87
    %s91 = sphi 0, %s90
    %s107 = sphi 0, %s91
  $region4: #{vgg_forward.4} parent=0 // loop_header_branch
    %12 = sbr.rel (%p10) target = $region8
  $region5: #{vgg_forward.4} parent=0 // loop_body
    %s14 = ssub.s32 %s9, 1
    %s15 = ssub.s32 %s9, 2
    %s16 = sadd.s32 %s9, 1
    %s17 = ssub.s32 %s9, %s16
    %p18 = scmp.eq.s32.totalorder %s17, 0
    %s20 = sadd.s32 %s19, 1
    %s21 = scalar_select %p18, %s19, %s20
    %p24 = pneg %p18
    %p25 = scmp.eq.s32.totalorder %s9, 1
    %p26 = por %p24, %p25
    %p27 = scmp.ne.s32.totalorder %s19, %s22
    %p28 = scmp.eq.s32.totalorder %s9, 0
    %p29 = por %p27, %p28
    %p30 = scmp.ne.s32.totalorder %s19, %s22
    %p31 = scmp.eq.s32.totalorder %s14, 1
    %p32 = por %p30, %p31
    %p33 = scmp.ne.s32.totalorder %s22, %s23
    %p34 = scmp.eq.s32.totalorder %s14, 0
    %p35 = por %p33, %p34
    %p36 = scmp.ne.s32.totalorder %s22, %s23
    %p37 = scmp.eq.s32.totalorder %s15, 1
    %p38 = por %p36, %p37
    %p40 = scmp.ne.s32.totalorder %s23, %s39
    %p41 = scmp.eq.s32.totalorder %s15, 0
    %p42 = por %p40, %p41
    %s44 = sadd.s32 %s43, 1
    %p47 = scmp.eq.s32.totalorder %s9, 1
    %p48 = scmp.ne.s32.totalorder %s43, %s45
    %p49 = scmp.eq.s32.totalorder %s9, 0
    %p50 = por %p48, %p49
    %p51 = scmp.ne.s32.totalorder %s43, %s45
    %p52 = scmp.eq.s32.totalorder %s14, 1
    %p53 = por %p51, %p52
    %p54 = scmp.ne.s32.totalorder %s45, %s46
    %p55 = scmp.eq.s32.totalorder %s14, 0
    %p56 = por %p54, %p55
    %p57 = scmp.ne.s32.totalorder %s45, %s46
    %p58 = scmp.eq.s32.totalorder %s15, 1
    %p59 = por %p57, %p58
    %p61 = scmp.ne.s32.totalorder %s46, %s60
    %p62 = scmp.eq.s32.totalorder %s15, 0
    %p63 = por %p61, %p62
    %s65 = sadd.s32 %s64, 1
    %p68 = scmp.eq.s32.totalorder %s9, 1
    %p69 = scmp.ne.s32.totalorder %s64, %s66
    %p70 = scmp.eq.s32.totalorder %s9, 0
    %p71 = por %p69, %p70
    %p72 = scmp.ne.s32.totalorder %s64, %s66
    %p73 = scmp.eq.s32.totalorder %s14, 1
    %p74 = por %p72, %p73
    %p75 = scmp.ne.s32.totalorder %s66, %s67
    %p76 = scmp.eq.s32.totalorder %s14, 0
    %p77 = por %p75, %p76
    %p78 = scmp.ne.s32.totalorder %s66, %s67
    %p79 = scmp.eq.s32.totalorder %s15, 1
    %p80 = por %p78, %p79
    %p82 = scmp.ne.s32.totalorder %s67, %s81
    %p83 = scmp.eq.s32.totalorder %s15, 0
    %p84 = por %p82, %p83
    %s85 = ssub.s32 %s9, %s16
    %p86 = scmp.eq.s32.totalorder %s85, 0
    %s88 = sadd.s32 %s87, 1
    %s89 = scalar_select %p86, %s87, %s88
    %p92 = pneg %p86
    %p93 = scmp.eq.s32.totalorder %s9, 1
    %p94 = por %p92, %p93
    %p95 = scmp.ne.s32.totalorder %s87, %s90
    %p96 = scmp.eq.s32.totalorder %s9, 0
    %p97 = por %p95, %p96
    %p98 = scmp.ne.s32.totalorder %s87, %s90
    %p99 = scmp.eq.s32.totalorder %s14, 1
    %p100 = por %p98, %p99
    %p101 = scmp.ne.s32.totalorder %s90, %s91
    %p102 = scmp.eq.s32.totalorder %s14, 0
    %p103 = por %p101, %p102
    %p104 = scmp.ne.s32.totalorder %s90, %s91
    %p105 = scmp.eq.s32.totalorder %s15, 1
    %p106 = por %p104, %p105
    %p108 = scmp.ne.s32.totalorder %s91, %s107
    %p109 = scmp.eq.s32.totalorder %s15, 0
    %p110 = por %p108, %p109
    %p111 = scmp.le.s32.totalorder 1, %s9
    %p112 = scmp.lt.s32.totalorder %s9, 3
    %p113 = pnand %p111, %p112
    %p114 = pneg %p113
    // Predicated region
    $region9: #{vgg_forward.4} parent=5 // pred_check
      _
    $region10: #{vgg_forward.4} parent=5 // pred_check_branch
      %116 = sbr.rel (%p113) target = $region12
    $region11: #{vgg_forward.4} parent=5 // pred_region
      %s117 = ssub.s32 %s9, 1
      // Predicated region
      $region13: #{vgg_forward.4} parent=11 // pred_check
        %p118 = pneg %p56
      $region14: #{vgg_forward.4} parent=11 // pred_check_branch
        %120 = sbr.rel (%p118) target = $region16
      $region15: #{vgg_forward.4} parent=11 // pred_region
        _
      $region16: #{vgg_forward.4} parent=11 // pred_fallthru
        _
      // Predicated region
      $region17: #{vgg_forward.4} parent=11 // pred_check
        %p121 = pneg %p77
      $region18: #{vgg_forward.4} parent=11 // pred_check_branch
        %123 = sbr.rel (%p121) target = $region20
      $region19: #{vgg_forward.4} parent=11 // pred_region
        _
      $region20: #{vgg_forward.4} parent=11 // pred_fallthru
        _
    $region12: #{vgg_forward.4} parent=5 // pred_fallthru
      _
    %p124 = scmp.lt.s32.totalorder %s9, 2
    // Predicated region
    $region21: #{vgg_forward.4} parent=5 // pred_check
      %p125 = pneg %p124
    $region22: #{vgg_forward.4} parent=5 // pred_check_branch
      %127 = sbr.rel (%p125) target = $region24
    $region23: #{vgg_forward.4} parent=5 // pred_region
      // Predicated region
      $region25: #{vgg_forward.4} parent=23 // pred_check
        %p128 = pneg %p29
      $region26: #{vgg_forward.4} parent=23 // pred_check_branch
        %130 = sbr.rel (%p128) target = $region28
      $region27: #{vgg_forward.4} parent=23 // pred_region
        %p131 = scmp.lt.s32.totalorder %s9, 1
        %s132 = scalar_select %p131, %s9, 1
        %s133 = smul.addr %s132, 32
        %s134 = smul.addr %s133, 8
        %s135 = scalar_lea.vmem %s0, %s134
      $region28: #{vgg_forward.4} parent=23 // pred_fallthru
        _
    $region24: #{vgg_forward.4} parent=5 // pred_fallthru
      _
    %p136 = scmp.le.s32.totalorder 1, %s9
    %p137 = scmp.lt.s32.totalorder %s9, 3
    %p138 = pnand %p136, %p137
    %p139 = pneg %p138
    // Predicated region
    $region29: #{vgg_forward.4} parent=5 // pred_check
      _
    $region30: #{vgg_forward.4} parent=5 // pred_check_branch
      %141 = sbr.rel (%p138) target = $region32
    $region31: #{vgg_forward.4} parent=5 // pred_region
      %s142 = ssub.s32 %s9, 1
      %p143 = scmp.lt.s32.totalorder %s14, 1
      %s144 = scalar_select %p143, %s14, 1
      %s145 = smul.addr %s144, 32
      %s146 = smul.addr %s145, 8
      %s147 = scalar_lea.vmem %s0, %s146
      %p148 = pneg %p35
      %p149 = pneg %p32
      %p150 = pneg %p56
      %p151 = pneg %p53
      %p152 = pneg %p77
      %p153 = pneg %p74
      %p154 = pneg %p103
      %p155 = pneg %p100
      %p156 = scmp.lt.s32.totalorder %s14, 1
      %s157 = scalar_select %p156, %s14, 1
      %s158 = smul.addr %s157, 8
      %s159 = smul.addr %s158, 8
      %s160 = scalar_lea.vmem %s3, %s159
      %p161 = scmp.lt.s32.totalorder %s14, 1
      %s162 = scalar_select %p161, %s14, 1
      %s163 = smul.addr %s162, 32
      %s164 = smul.addr %s163, 8
      %s165 = scalar_lea.vmem %s0, %s164
      %p166 = scmp.lt.s32.totalorder %s14, 1
      %s167 = scalar_select %p166, %s14, 1
      %s168 = smul.addr %s167, 8
      %s169 = smul.addr %s168, 8
      %s170 = scalar_lea.vmem %s3, %s169
      %vm171 = vcmask 23552
      %172 = vst.msk [vmem:[#allocation2] sm:$0xff] %vm171, 0.0
      %173 = vst.msk [vmem:[#allocation2 + $0x8] sm:$0xff] %vm171, 0.0
      %vm174 = vcmask 17408
      %175 = vst.msk [vmem:[#allocation2 + $0x10] sm:$0x3] %vm174, 0.0
      %176 = vst.msk [vmem:[#allocation2 + $0x18] sm:$0xff] %vm171, 0.0
      %177 = vst.msk [vmem:[#allocation2 + $0x20] sm:$0xff] %vm171, 0.0
      %178 = vst.msk [vmem:[#allocation2 + $0x28] sm:$0x3] %vm174, 0.0
      %179 = vst.msk [vmem:[#allocation2 + $0x30] sm:$0xff] %vm171, 0.0
      %180 = vst.msk [vmem:[#allocation2 + $0x38] sm:$0xff] %vm171, 0.0
      %181 = vst.msk [vmem:[#allocation2 + $0x40] sm:$0x3] %vm174, 0.0
      %182 = vst.msk [vmem:[#allocation2 + $0x48] sm:$0xff] %vm171, 0.0
      %183 = vst.msk [vmem:[#allocation2 + $0x50] sm:$0xff] %vm171, 0.0
      %184 = vst.msk [vmem:[#allocation2 + $0x58] sm:$0x3] %vm174, 0.0
      %185 = vst.msk [vmem:[#allocation2 + $0x60] sm:$0xff] %vm171, 0.0
      %186 = vst.msk [vmem:[#allocation2 + $0x68] sm:$0xff] %vm171, 0.0
      %187 = vst.msk [vmem:[#allocation2 + $0x70] sm:$0x3] %vm174, 0.0
      %188 = vst.msk [vmem:[#allocation2 + $0x78] sm:$0xff] %vm171, 0.0
      %189 = vst.msk [vmem:[#allocation2 + $0x80] sm:$0xff] %vm171, 0.0
      %190 = vst.msk [vmem:[#allocation2 + $0x88] sm:$0x3] %vm174, 0.0
      %191 = vst.msk [vmem:[#allocation2 + $0x90] sm:$0xff] %vm171, 0.0
      %192 = vst.msk [vmem:[#allocation2 + $0x98] sm:$0xff] %vm171, 0.0
      %193 = vst.msk [vmem:[#allocation2 + $0xa0] sm:$0x3] %vm174, 0.0
      %194 = vst.msk [vmem:[#allocation2 + $0xa8] sm:$0xff] %vm171, 0.0
      %195 = vst.msk [vmem:[#allocation2 + $0xb0] sm:$0xff] %vm171, 0.0
      %196 = vst.msk [vmem:[#allocation2 + $0xb8] sm:$0x3] %vm174, 0.0
      %197 = vst.msk [vmem:[#allocation2 + $0xc0] sm:$0xff] %vm171, 0.0
      %198 = vst.msk [vmem:[#allocation2 + $0xc8] sm:$0xff] %vm171, 0.0
      %199 = vst.msk [vmem:[#allocation2 + $0xd0] sm:$0x3] %vm174, 0.0
      %200 = vst.msk [vmem:[#allocation2 + $0xd8] sm:$0xff] %vm171, 0.0
      %201 = vst.msk [vmem:[#allocation2 + $0xe0] sm:$0xff] %vm171, 0.0
      %202 = vst.msk [vmem:[#allocation2 + $0xe8] sm:$0x3] %vm174, 0.0
      %203 = vst.msk [vmem:[#allocation2 + $0xf0] sm:$0xff] %vm171, 0.0
      %204 = vst.msk [vmem:[#allocation2 + $0xf8] sm:$0xff] %vm171, 0.0
      %205 = vst.msk [vmem:[#allocation2 + $0x100] sm:$0x3] %vm174, 0.0
      %206 = vst.msk [vmem:[#allocation2 + $0x108] sm:$0xff] %vm171, 0.0
      %207 = vst.msk [vmem:[#allocation2 + $0x110] sm:$0xff] %vm171, 0.0
      %208 = vst.msk [vmem:[#allocation2 + $0x118] sm:$0x3] %vm174, 0.0
      %209 = vst.msk [vmem:[#allocation2 + $0x120] sm:$0xff] %vm171, 0.0
      %210 = vst.msk [vmem:[#allocation2 + $0x128] sm:$0xff] %vm171, 0.0
      %211 = vst.msk [vmem:[#allocation2 + $0x130] sm:$0x3] %vm174, 0.0
      %212 = vst.msk [vmem:[#allocation2 + $0x138] sm:$0xff] %vm171, 0.0
      %213 = vst.msk [vmem:[#allocation2 + $0x140] sm:$0xff] %vm171, 0.0
      %214 = vst.msk [vmem:[#allocation2 + $0x148] sm:$0x3] %vm174, 0.0
      %215 = vst.msk [vmem:[#allocation2 + $0x150] sm:$0xff] %vm171, 0.0
      %216 = vst.msk [vmem:[#allocation2 + $0x158] sm:$0xff] %vm171, 0.0
      %217 = vst.msk [vmem:[#allocation2 + $0x160] sm:$0x3] %vm174, 0.0
      %218 = vst.msk [vmem:[#allocation2 + $0x168] sm:$0xff] %vm171, 0.0
      %219 = vst.msk [vmem:[#allocation2 + $0x170] sm:$0xff] %vm171, 0.0
      %220 = vst.msk [vmem:[#allocation2 + $0x178] sm:$0x3] %vm174, 0.0
      %221 = vst.msk [vmem:[#allocation2 + $0x180] sm:$0xff] %vm171, 0.0
      %222 = vst.msk [vmem:[#allocation2 + $0x188] sm:$0xff] %vm171, 0.0
      %223 = vst.msk [vmem:[#allocation2 + $0x190] sm:$0x3] %vm174, 0.0
      %224 = vst.msk [vmem:[#allocation2 + $0x198] sm:$0xff] %vm171, 0.0
      %225 = vst.msk [vmem:[#allocation2 + $0x1a0] sm:$0xff] %vm171, 0.0
      %226 = vst.msk [vmem:[#allocation2 + $0x1a8] sm:$0x3] %vm174, 0.0
      %v227 = vld [vmem:[%s165] sm:$0xff]
      %v228 = vld [vmem:[%s165 + $0x8] sm:$0xff]
      %v229 = vld [vmem:[%s165 + $0x10] sm:$0xff]
      %v230 = vld [vmem:[%s165 + $0x18] sm:$0xff]
      %v231 = vld [vmem:[%s165 + $0x20] sm:$0xff]
      %v232 = vld [vmem:[%s165 + $0x28] sm:$0xff]
      %v233 = vld [vmem:[%s165 + $0x30] sm:$0xff]
      %v234 = vld [vmem:[%s165 + $0x38] sm:$0xff]
      %v235 = vld [vmem:[%s165 + $0x40] sm:$0xff]
      %v236 = vld [vmem:[%s165 + $0x48] sm:$0xff]
      %v237 = vld [vmem:[%s165 + $0x50] sm:$0xff]
      %v238 = vld [vmem:[%s165 + $0x58] sm:$0xff]
      %v239 = vld [vmem:[%s165 + $0x60] sm:$0xff]
      %v240 = vld [vmem:[%s165 + $0x68] sm:$0xff]
      %v241 = vld [vmem:[%s165 + $0x70] sm:$0xff]
      %v242 = vld [vmem:[%s165 + $0x78] sm:$0xff]
      %v243 = vld [vmem:[%s165 + $0x80] sm:$0xff]
      %v244 = vld [vmem:[%s165 + $0x88] sm:$0xff]
      %v245 = vld [vmem:[%s165 + $0x90] sm:$0xff]
      %v246 = vld [vmem:[%s165 + $0x98] sm:$0xff]
      %v247 = vld [vmem:[%s165 + $0xa0] sm:$0xff]
      %v248 = vld [vmem:[%s165 + $0xa8] sm:$0xff]
      %v249 = vld [vmem:[%s165 + $0xb0] sm:$0xff]
      %v250 = vld [vmem:[%s165 + $0xb8] sm:$0xff]
      %v251 = vld [vmem:[%s165 + $0xc0] sm:$0xff]
      %v252 = vld [vmem:[%s165 + $0xc8] sm:$0xff]
      %v253 = vld [vmem:[%s165 + $0xd0] sm:$0xff]
      %v254 = vld [vmem:[%s165 + $0xd8] sm:$0xff]
      %v255 = vld [vmem:[%s165 + $0xe0] sm:$0xff]
      %v256 = vld [vmem:[%s165 + $0xe8] sm:$0xff]
      %v257 = vld [vmem:[%s165 + $0xf0] sm:$0xff]
      %v258 = vld [vmem:[%s165 + $0xf8] sm:$0xff]
      %s259 = scalar_lea.vmem [#allocation2], 24
      %260 = vst.msk [vmem:[%s259 + $0x1] sm:$0xff] %vm171, %v227
      %261 = vst.msk [vmem:[%s259 + $0x9] sm:$0xff] %vm171, %v228
      %262 = vst.msk [vmem:[%s259 + $0x19] sm:$0xff] %vm171, %v229
      %263 = vst.msk [vmem:[%s259 + $0x21] sm:$0xff] %vm171, %v230
      %264 = vst.msk [vmem:[%s259 + $0x31] sm:$0xff] %vm171, %v231
      %265 = vst.msk [vmem:[%s259 + $0x39] sm:$0xff] %vm171, %v232
      %266 = vst.msk [vmem:[%s259 + $0x49] sm:$0xff] %vm171, %v233
      %267 = vst.msk [vmem:[%s259 + $0x51] sm:$0xff] %vm171, %v234
      %268 = vst.msk [vmem:[%s259 + $0x61] sm:$0xff] %vm171, %v235
      %269 = vst.msk [vmem:[%s259 + $0x69] sm:$0xff] %vm171, %v236
      %270 = vst.msk [vmem:[%s259 + $0x79] sm:$0xff] %vm171, %v237
      %271 = vst.msk [vmem:[%s259 + $0x81] sm:$0xff] %vm171, %v238
      %272 = vst.msk [vmem:[%s259 + $0x91] sm:$0xff] %vm171, %v239
      %273 = vst.msk [vmem:[%s259 + $0x99] sm:$0xff] %vm171, %v240
      %274 = vst.msk [vmem:[%s259 + $0xa9] sm:$0xff] %vm171, %v241
      %275 = vst.msk [vmem:[%s259 + $0xb1] sm:$0xff] %vm171, %v242
      %276 = vst.msk [vmem:[%s259 + $0xc1] sm:$0xff] %vm171, %v243
      %277 = vst.msk [vmem:[%s259 + $0xc9] sm:$0xff] %vm171, %v244
      %278 = vst.msk [vmem:[%s259 + $0xd9] sm:$0xff] %vm171, %v245
      %279 = vst.msk [vmem:[%s259 + $0xe1] sm:$0xff] %vm171, %v246
      %280 = vst.msk [vmem:[%s259 + $0xf1] sm:$0xff] %vm171, %v247
      %281 = vst.msk [vmem:[%s259 + $0xf9] sm:$0xff] %vm171, %v248
      %282 = vst.msk [vmem:[%s259 + $0x109] sm:$0xff] %vm171, %v249
      %283 = vst.msk [vmem:[%s259 + $0x111] sm:$0xff] %vm171, %v250
      %284 = vst.msk [vmem:[%s259 + $0x121] sm:$0xff] %vm171, %v251
      %285 = vst.msk [vmem:[%s259 + $0x129] sm:$0xff] %vm171, %v252
      %286 = vst.msk [vmem:[%s259 + $0x139] sm:$0xff] %vm171, %v253
      %287 = vst.msk [vmem:[%s259 + $0x141] sm:$0xff] %vm171, %v254
      %288 = vst.msk [vmem:[%s259 + $0x151] sm:$0xff] %vm171, %v255
      %289 = vst.msk [vmem:[%s259 + $0x159] sm:$0xff] %vm171, %v256
      %290 = vst.msk [vmem:[%s259 + $0x169] sm:$0xff] %vm171, %v257
      %291 = vst.msk [vmem:[%s259 + $0x171] sm:$0xff] %vm171, %v258
      %v292 = vld [vmem:[#allocation2] sm:$0xff]
      %v293 = vld [vmem:[#allocation2 + $0x8] sm:$0xff]
      %v294 = vld [vmem:[#allocation2 + $0x18] sm:$0xff]
      %v295 = vld [vmem:[#allocation2 + $0x20] sm:$0xff]
      %v296 = vld [vmem:[#allocation2 + $0x30] sm:$0xff]
      %v297 = vld [vmem:[#allocation2 + $0x38] sm:$0xff]
      %v298 = vld [vmem:[#allocation2 + $0x48] sm:$0xff]
      %v299 = vld [vmem:[#allocation2 + $0x50] sm:$0xff]
      %v300 = vld [vmem:[#allocation2 + $0x60] sm:$0xff]
      %v301 = vld [vmem:[#allocation2 + $0x68] sm:$0xff]
      %v302 = vld [vmem:[#allocation2 + $0x78] sm:$0xff]
      %v303 = vld [vmem:[#allocation2 + $0x80] sm:$0xff]
      %v304 = vld [vmem:[#allocation2 + $0x90] sm:$0xff]
      %v305 = vld [vmem:[#allocation2 + $0x98] sm:$0xff]
      %v306 = vld [vmem:[#allocation2 + $0xa8] sm:$0xff]
      %v307 = vld [vmem:[#allocation2 + $0xb0] sm:$0xff]
      %v308 = vld [vmem:[#allocation2 + $0xc0] sm:$0xff]
      %v309 = vld [vmem:[#allocation2 + $0xc8] sm:$0xff]
      %v310 = vld [vmem:[#allocation2 + $0xd8] sm:$0xff]
      %v311 = vld [vmem:[#allocation2 + $0xe0] sm:$0xff]
      %v312 = vld [vmem:[#allocation2 + $0xf0] sm:$0xff]
      %v313 = vld [vmem:[#allocation2 + $0xf8] sm:$0xff]
      %v314 = vld [vmem:[#allocation2 + $0x108] sm:$0xff]
      %v315 = vld [vmem:[#allocation2 + $0x110] sm:$0xff]
      %v316 = vld [vmem:[#allocation2 + $0x120] sm:$0xff]
      %v317 = vld [vmem:[#allocation2 + $0x128] sm:$0xff]
      %v318 = vld [vmem:[#allocation2 + $0x138] sm:$0xff]
      %v319 = vld [vmem:[#allocation2 + $0x140] sm:$0xff]
      %v320 = vld [vmem:[#allocation2 + $0x150] sm:$0xff]
      %v321 = vld [vmem:[#allocation2 + $0x158] sm:$0xff]
      %v322 = vld [vmem:[#allocation2 + $0x168] sm:$0xff]
      %v323 = vld [vmem:[#allocation2 + $0x170] sm:$0xff]
      %324 = vst.msk [vmem:[#allocation3] sm:$0xff] %vm171, %v292
      %325 = vst.msk [vmem:[#allocation3 + $0x8] sm:$0xff] %vm171, %v293
      %326 = vst.msk [vmem:[#allocation3 + $0x10] sm:$0xff] %vm171, %v294
      %327 = vst.msk [vmem:[#allocation3 + $0x18] sm:$0xff] %vm171, %v295
      %328 = vst.msk [vmem:[#allocation3 + $0x20] sm:$0xff] %vm171, %v296
      %329 = vst.msk [vmem:[#allocation3 + $0x28] sm:$0xff] %vm171, %v297
      %330 = vst.msk [vmem:[#allocation3 + $0x30] sm:$0xff] %vm171, %v298
      %331 = vst.msk [vmem:[#allocation3 + $0x38] sm:$0xff] %vm171, %v299
      %332 = vst.msk [vmem:[#allocation3 + $0x40] sm:$0xff] %vm171, %v300
      %333 = vst.msk [vmem:[#allocation3 + $0x48] sm:$0xff] %vm171, %v301
      %334 = vst.msk [vmem:[#allocation3 + $0x50] sm:$0xff] %vm171, %v302
      %335 = vst.msk [vmem:[#allocation3 + $0x58] sm:$0xff] %vm171, %v303
      %336 = vst.msk [vmem:[#allocation3 + $0x60] sm:$0xff] %vm171, %v304
      %337 = vst.msk [vmem:[#allocation3 + $0x68] sm:$0xff] %vm171, %v305
      %338 = vst.msk [vmem:[#allocation3 + $0x70] sm:$0xff] %vm171, %v306
      %339 = vst.msk [vmem:[#allocation3 + $0x78] sm:$0xff] %vm171, %v307
      %340 = vst.msk [vmem:[#allocation3 + $0x80] sm:$0xff] %vm171, %v308
      %341 = vst.msk [vmem:[#allocation3 + $0x88] sm:$0xff] %vm171, %v309
      %342 = vst.msk [vmem:[#allocation3 + $0x90] sm:$0xff] %vm171, %v310
      %343 = vst.msk [vmem:[#allocation3 + $0x98] sm:$0xff] %vm171, %v311
      %344 = vst.msk [vmem:[#allocation3 + $0xa0] sm:$0xff] %vm171, %v312
      %345 = vst.msk [vmem:[#allocation3 + $0xa8] sm:$0xff] %vm171, %v313
      %346 = vst.msk [vmem:[#allocation3 + $0xb0] sm:$0xff] %vm171, %v314
      %347 = vst.msk [vmem:[#allocation3 + $0xb8] sm:$0xff] %vm171, %v315
      %348 = vst.msk [vmem:[#allocation3 + $0xc0] sm:$0xff] %vm171, %v316
      %349 = vst.msk [vmem:[#allocation3 + $0xc8] sm:$0xff] %vm171, %v317
      %350 = vst.msk [vmem:[#allocation3 + $0xd0] sm:$0xff] %vm171, %v318
      %351 = vst.msk [vmem:[#allocation3 + $0xd8] sm:$0xff] %vm171, %v319
      %352 = vst.msk [vmem:[#allocation3 + $0xe0] sm:$0xff] %vm171, %v320
      %353 = vst.msk [vmem:[#allocation3 + $0xe8] sm:$0xff] %vm171, %v321
      %354 = vst.msk [vmem:[#allocation3 + $0xf0] sm:$0xff] %vm171, %v322
      %355 = vst.msk [vmem:[#allocation3 + $0xf8] sm:$0xff] %vm171, %v323
      %v356 = vld [vmem:[#allocation2 + $0x1] sm:$0xff]
      %v357 = vld [vmem:[#allocation2 + $0x9] sm:$0xff]
      %v358 = vld [vmem:[#allocation2 + $0x19] sm:$0xff]
      %v359 = vld [vmem:[#allocation2 + $0x21] sm:$0xff]
      %v360 = vld [vmem:[#allocation2 + $0x31] sm:$0xff]
      %v361 = vld [vmem:[#allocation2 + $0x39] sm:$0xff]
      %v362 = vld [vmem:[#allocation2 + $0x49] sm:$0xff]
      %v363 = vld [vmem:[#allocation2 + $0x51] sm:$0xff]
      %v364 = vld [vmem:[#allocation2 + $0x61] sm:$0xff]
      %v365 = vld [vmem:[#allocation2 + $0x69] sm:$0xff]
      %v366 = vld [vmem:[#allocation2 + $0x79] sm:$0xff]
      %v367 = vld [vmem:[#allocation2 + $0x81] sm:$0xff]
      %v368 = vld [vmem:[#allocation2 + $0x91] sm:$0xff]
      %v369 = vld [vmem:[#allocation2 + $0x99] sm:$0xff]
      %v370 = vld [vmem:[#allocation2 + $0xa9] sm:$0xff]
      %v371 = vld [vmem:[#allocation2 + $0xb1] sm:$0xff]
      %v372 = vld [vmem:[#allocation2 + $0xc1] sm:$0xff]
      %v373 = vld [vmem:[#allocation2 + $0xc9] sm:$0xff]
      %v374 = vld [vmem:[#allocation2 + $0xd9] sm:$0xff]
      %v375 = vld [vmem:[#allocation2 + $0xe1] sm:$0xff]
      %v376 = vld [vmem:[#allocation2 + $0xf1] sm:$0xff]
      %v377 = vld [vmem:[#allocation2 + $0xf9] sm:$0xff]
      %v378 = vld [vmem:[#allocation2 + $0x109] sm:$0xff]
      %v379 = vld [vmem:[#allocation2 + $0x111] sm:$0xff]
      %v380 = vld [vmem:[#allocation2 + $0x121] sm:$0xff]
      %v381 = vld [vmem:[#allocation2 + $0x129] sm:$0xff]
      %v382 = vld [vmem:[#allocation2 + $0x139] sm:$0xff]
      %v383 = vld [vmem:[#allocation2 + $0x141] sm:$0xff]
      %v384 = vld [vmem:[#allocation2 + $0x151] sm:$0xff]
      %v385 = vld [vmem:[#allocation2 + $0x159] sm:$0xff]
      %v386 = vld [vmem:[#allocation2 + $0x169] sm:$0xff]
      %v387 = vld [vmem:[#allocation2 + $0x171] sm:$0xff]
      %420 = vrot.lane.b32.xlu0 %v356, 3
      %v421 = vpop.permute.xlu0 %420
      %422 = vrot.lane.b32.xlu0 %v357, 3
      %v423 = vpop.permute.xlu0 %422
      %424 = vrot.lane.b32.xlu0 %v358, 3
      %v425 = vpop.permute.xlu0 %424
      %426 = vrot.lane.b32.xlu0 %v359, 3
      %v427 = vpop.permute.xlu0 %426
      %428 = vrot.lane.b32.xlu0 %v360, 3
      %v429 = vpop.permute.xlu0 %428
      %430 = vrot.lane.b32.xlu0 %v361, 3
      %v431 = vpop.permute.xlu0 %430
      %432 = vrot.lane.b32.xlu0 %v362, 3
      %v433 = vpop.permute.xlu0 %432
      %434 = vrot.lane.b32.xlu0 %v363, 3
      %v435 = vpop.permute.xlu0 %434
      %436 = vrot.lane.b32.xlu0 %v364, 3
      %v437 = vpop.permute.xlu0 %436
      %438 = vrot.lane.b32.xlu0 %v365, 3
      %v439 = vpop.permute.xlu0 %438
      %440 = vrot.lane.b32.xlu0 %v366, 3
      %v441 = vpop.permute.xlu0 %440
      %442 = vrot.lane.b32.xlu0 %v367, 3
      %v443 = vpop.permute.xlu0 %442
      %444 = vrot.lane.b32.xlu0 %v368, 3
      %v445 = vpop.permute.xlu0 %444
      %446 = vrot.lane.b32.xlu0 %v369, 3
      %v447 = vpop.permute.xlu0 %446
      %448 = vrot.lane.b32.xlu0 %v370, 3
      %v449 = vpop.permute.xlu0 %448
      %450 = vrot.lane.b32.xlu0 %v371, 3
      %v451 = vpop.permute.xlu0 %450
      %452 = vrot.lane.b32.xlu0 %v372, 3
      %v453 = vpop.permute.xlu0 %452
      %454 = vrot.lane.b32.xlu0 %v373, 3
      %v455 = vpop.permute.xlu0 %454
      %456 = vrot.lane.b32.xlu0 %v374, 3
      %v457 = vpop.permute.xlu0 %456
      %458 = vrot.lane.b32.xlu0 %v375, 3
      %v459 = vpop.permute.xlu0 %458
      %460 = vrot.lane.b32.xlu0 %v376, 3
      %v461 = vpop.permute.xlu0 %460
      %462 = vrot.lane.b32.xlu0 %v377, 3
      %v463 = vpop.permute.xlu0 %462
      %464 = vrot.lane.b32.xlu0 %v378, 3
      %v465 = vpop.permute.xlu0 %464
      %466 = vrot.lane.b32.xlu0 %v379, 3
      %v467 = vpop.permute.xlu0 %466
      %468 = vrot.lane.b32.xlu0 %v380, 3
      %v469 = vpop.permute.xlu0 %468
      %470 = vrot.lane.b32.xlu0 %v381, 3
      %v471 = vpop.permute.xlu0 %470
      %472 = vrot.lane.b32.xlu0 %v382, 3
      %v473 = vpop.permute.xlu0 %472
      %474 = vrot.lane.b32.xlu0 %v383, 3
      %v475 = vpop.permute.xlu0 %474
      %476 = vrot.lane.b32.xlu0 %v384, 3
      %v477 = vpop.permute.xlu0 %476
      %478 = vrot.lane.b32.xlu0 %v385, 3
      %v479 = vpop.permute.xlu0 %478
      %480 = vrot.lane.b32.xlu0 %v386, 3
      %v481 = vpop.permute.xlu0 %480
      %482 = vrot.lane.b32.xlu0 %v387, 3
      %v483 = vpop.permute.xlu0 %482
      %vm516 = vcmask 48152
      %517 = vst.msk [vmem:[#allocation3] sm:$0xff] %vm516, %v421
      %518 = vst.msk [vmem:[#allocation3 + $0x8] sm:$0xff] %vm516, %v423
      %519 = vst.msk [vmem:[#allocation3 + $0x10] sm:$0xff] %vm516, %v425
      %520 = vst.msk [vmem:[#allocation3 + $0x18] sm:$0xff] %vm516, %v427
      %521 = vst.msk [vmem:[#allocation3 + $0x20] sm:$0xff] %vm516, %v429
      %522 = vst.msk [vmem:[#allocation3 + $0x28] sm:$0xff] %vm516, %v431
      %523 = vst.msk [vmem:[#allocation3 + $0x30] sm:$0xff] %vm516, %v433
      %524 = vst.msk [vmem:[#allocation3 + $0x38] sm:$0xff] %vm516, %v435
      %525 = vst.msk [vmem:[#allocation3 + $0x40] sm:$0xff] %vm516, %v437
      %526 = vst.msk [vmem:[#allocation3 + $0x48] sm:$0xff] %vm516, %v439
      %527 = vst.msk [vmem:[#allocation3 + $0x50] sm:$0xff] %vm516, %v441
      %528 = vst.msk [vmem:[#allocation3 + $0x58] sm:$0xff] %vm516, %v443
      %529 = vst.msk [vmem:[#allocation3 + $0x60] sm:$0xff] %vm516, %v445
      %530 = vst.msk [vmem:[#allocation3 + $0x68] sm:$0xff] %vm516, %v447
      %531 = vst.msk [vmem:[#allocation3 + $0x70] sm:$0xff] %vm516, %v449
      %532 = vst.msk [vmem:[#allocation3 + $0x78] sm:$0xff] %vm516, %v451
      %533 = vst.msk [vmem:[#allocation3 + $0x80] sm:$0xff] %vm516, %v453
      %534 = vst.msk [vmem:[#allocation3 + $0x88] sm:$0xff] %vm516, %v455
      %535 = vst.msk [vmem:[#allocation3 + $0x90] sm:$0xff] %vm516, %v457
      %536 = vst.msk [vmem:[#allocation3 + $0x98] sm:$0xff] %vm516, %v459
      %537 = vst.msk [vmem:[#allocation3 + $0xa0] sm:$0xff] %vm516, %v461
      %538 = vst.msk [vmem:[#allocation3 + $0xa8] sm:$0xff] %vm516, %v463
      %539 = vst.msk [vmem:[#allocation3 + $0xb0] sm:$0xff] %vm516, %v465
      %540 = vst.msk [vmem:[#allocation3 + $0xb8] sm:$0xff] %vm516, %v467
      %541 = vst.msk [vmem:[#allocation3 + $0xc0] sm:$0xff] %vm516, %v469
      %542 = vst.msk [vmem:[#allocation3 + $0xc8] sm:$0xff] %vm516, %v471
      %543 = vst.msk [vmem:[#allocation3 + $0xd0] sm:$0xff] %vm516, %v473
      %544 = vst.msk [vmem:[#allocation3 + $0xd8] sm:$0xff] %vm516, %v475
      %545 = vst.msk [vmem:[#allocation3 + $0xe0] sm:$0xff] %vm516, %v477
      %546 = vst.msk [vmem:[#allocation3 + $0xe8] sm:$0xff] %vm516, %v479
      %547 = vst.msk [vmem:[#allocation3 + $0xf0] sm:$0xff] %vm516, %v481
      %548 = vst.msk [vmem:[#allocation3 + $0xf8] sm:$0xff] %vm516, %v483
      %v549 = vld [vmem:[#allocation2 + $0x2] sm:$0xff]
      %v550 = vld [vmem:[#allocation2 + $0xa] sm:$0xff]
      %v551 = vld [vmem:[#allocation2 + $0x1a] sm:$0xff]
      %v552 = vld [vmem:[#allocation2 + $0x22] sm:$0xff]
      %v553 = vld [vmem:[#allocation2 + $0x32] sm:$0xff]
      %v554 = vld [vmem:[#allocation2 + $0x3a] sm:$0xff]
      %v555 = vld [vmem:[#allocation2 + $0x4a] sm:$0xff]
      %v556 = vld [vmem:[#allocation2 + $0x52] sm:$0xff]
      %v557 = vld [vmem:[#allocation2 + $0x62] sm:$0xff]
      %v558 = vld [vmem:[#allocation2 + $0x6a] sm:$0xff]
      %v559 = vld [vmem:[#allocation2 + $0x7a] sm:$0xff]
      %v560 = vld [vmem:[#allocation2 + $0x82] sm:$0xff]
      %v561 = vld [vmem:[#allocation2 + $0x92] sm:$0xff]
      %v562 = vld [vmem:[#allocation2 + $0x9a] sm:$0xff]
      %v563 = vld [vmem:[#allocation2 + $0xaa] sm:$0xff]
      %v564 = vld [vmem:[#allocation2 + $0xb2] sm:$0xff]
      %v565 = vld [vmem:[#allocation2 + $0xc2] sm:$0xff]
      %v566 = vld [vmem:[#allocation2 + $0xca] sm:$0xff]
      %v567 = vld [vmem:[#allocation2 + $0xda] sm:$0xff]
      %v568 = vld [vmem:[#allocation2 + $0xe2] sm:$0xff]
      %v569 = vld [vmem:[#allocation2 + $0xf2] sm:$0xff]
      %v570 = vld [vmem:[#allocation2 + $0xfa] sm:$0xff]
      %v571 = vld [vmem:[#allocation2 + $0x10a] sm:$0xff]
      %v572 = vld [vmem:[#allocation2 + $0x112] sm:$0xff]
      %v573 = vld [vmem:[#allocation2 + $0x122] sm:$0xff]
      %v574 = vld [vmem:[#allocation2 + $0x12a] sm:$0xff]
      %v575 = vld [vmem:[#allocation2 + $0x13a] sm:$0xff]
      %v576 = vld [vmem:[#allocation2 + $0x142] sm:$0xff]
      %v577 = vld [vmem:[#allocation2 + $0x152] sm:$0xff]
      %v578 = vld [vmem:[#allocation2 + $0x15a] sm:$0xff]
      %v579 = vld [vmem:[#allocation2 + $0x16a] sm:$0xff]
      %v580 = vld [vmem:[#allocation2 + $0x172] sm:$0xff]
      %613 = vrot.lane.b32.xlu0 %v549, 6
      %v614 = vpop.permute.xlu0 %613
      %615 = vrot.lane.b32.xlu0 %v550, 6
      %v616 = vpop.permute.xlu0 %615
      %617 = vrot.lane.b32.xlu0 %v551, 6
      %v618 = vpop.permute.xlu0 %617
      %619 = vrot.lane.b32.xlu0 %v552, 6
      %v620 = vpop.permute.xlu0 %619
      %621 = vrot.lane.b32.xlu0 %v553, 6
      %v622 = vpop.permute.xlu0 %621
      %623 = vrot.lane.b32.xlu0 %v554, 6
      %v624 = vpop.permute.xlu0 %623
      %625 = vrot.lane.b32.xlu0 %v555, 6
      %v626 = vpop.permute.xlu0 %625
      %627 = vrot.lane.b32.xlu0 %v556, 6
      %v628 = vpop.permute.xlu0 %627
      %629 = vrot.lane.b32.xlu0 %v557, 6
      %v630 = vpop.permute.xlu0 %629
      %631 = vrot.lane.b32.xlu0 %v558, 6
      %v632 = vpop.permute.xlu0 %631
      %633 = vrot.lane.b32.xlu0 %v559, 6
      %v634 = vpop.permute.xlu0 %633
      %635 = vrot.lane.b32.xlu0 %v560, 6
      %v636 = vpop.permute.xlu0 %635
      %637 = vrot.lane.b32.xlu0 %v561, 6
      %v638 = vpop.permute.xlu0 %637
      %639 = vrot.lane.b32.xlu0 %v562, 6
      %v640 = vpop.permute.xlu0 %639
      %641 = vrot.lane.b32.xlu0 %v563, 6
      %v642 = vpop.permute.xlu0 %641
      %643 = vrot.lane.b32.xlu0 %v564, 6
      %v644 = vpop.permute.xlu0 %643
      %645 = vrot.lane.b32.xlu0 %v565, 6
      %v646 = vpop.permute.xlu0 %645
      %647 = vrot.lane.b32.xlu0 %v566, 6
      %v648 = vpop.permute.xlu0 %647
      %649 = vrot.lane.b32.xlu0 %v567, 6
      %v650 = vpop.permute.xlu0 %649
      %651 = vrot.lane.b32.xlu0 %v568, 6
      %v652 = vpop.permute.xlu0 %651
      %653 = vrot.lane.b32.xlu0 %v569, 6
      %v654 = vpop.permute.xlu0 %653
      %655 = vrot.lane.b32.xlu0 %v570, 6
      %v656 = vpop.permute.xlu0 %655
      %657 = vrot.lane.b32.xlu0 %v571, 6
      %v658 = vpop.permute.xlu0 %657
      %659 = vrot.lane.b32.xlu0 %v572, 6
      %v660 = vpop.permute.xlu0 %659
      %661 = vrot.lane.b32.xlu0 %v573, 6
      %v662 = vpop.permute.xlu0 %661
      %663 = vrot.lane.b32.xlu0 %v574, 6
      %v664 = vpop.permute.xlu0 %663
      %665 = vrot.lane.b32.xlu0 %v575, 6
      %v666 = vpop.permute.xlu0 %665
      %667 = vrot.lane.b32.xlu0 %v576, 6
      %v668 = vpop.permute.xlu0 %667
      %669 = vrot.lane.b32.xlu0 %v577, 6
      %v670 = vpop.permute.xlu0 %669
      %671 = vrot.lane.b32.xlu0 %v578, 6
      %v672 = vpop.permute.xlu0 %671
      %673 = vrot.lane.b32.xlu0 %v579, 6
      %v674 = vpop.permute.xlu0 %673
      %675 = vrot.lane.b32.xlu0 %v580, 6
      %v676 = vpop.permute.xlu0 %675
      %vm709 = vcmask 72752
      %710 = vst.msk [vmem:[#allocation3] sm:$0xff] %vm709, %v614
      %711 = vst.msk [vmem:[#allocation3 + $0x8] sm:$0xff] %vm709, %v616
      %712 = vst.msk [vmem:[#allocation3 + $0x10] sm:$0xff] %vm709, %v618
      %713 = vst.msk [vmem:[#allocation3 + $0x18] sm:$0xff] %vm709, %v620
      %714 = vst.msk [vmem:[#allocation3 + $0x20] sm:$0xff] %vm709, %v622
      %715 = vst.msk [vmem:[#allocation3 + $0x28] sm:$0xff] %vm709, %v624
      %716 = vst.msk [vmem:[#allocation3 + $0x30] sm:$0xff] %vm709, %v626
      %717 = vst.msk [vmem:[#allocation3 + $0x38] sm:$0xff] %vm709, %v628
      %718 = vst.msk [vmem:[#allocation3 + $0x40] sm:$0xff] %vm709, %v630
      %719 = vst.msk [vmem:[#allocation3 + $0x48] sm:$0xff] %vm709, %v632
      %720 = vst.msk [vmem:[#allocation3 + $0x50] sm:$0xff] %vm709, %v634
      %721 = vst.msk [vmem:[#allocation3 + $0x58] sm:$0xff] %vm709, %v636
      %722 = vst.msk [vmem:[#allocation3 + $0x60] sm:$0xff] %vm709, %v638
      %723 = vst.msk [vmem:[#allocation3 + $0x68] sm:$0xff] %vm709, %v640
      %724 = vst.msk [vmem:[#allocation3 + $0x70] sm:$0xff] %vm709, %v642
      %725 = vst.msk [vmem:[#allocation3 + $0x78] sm:$0xff] %vm709, %v644
      %726 = vst.msk [vmem:[#allocation3 + $0x80] sm:$0xff] %vm709, %v646
      %727 = vst.msk [vmem:[#allocation3 + $0x88] sm:$0xff] %vm709, %v648
      %728 = vst.msk [vmem:[#allocation3 + $0x90] sm:$0xff] %vm709, %v650
      %729 = vst.msk [vmem:[#allocation3 + $0x98] sm:$0xff] %vm709, %v652
      %730 = vst.msk [vmem:[#allocation3 + $0xa0] sm:$0xff] %vm709, %v654
      %731 = vst.msk [vmem:[#allocation3 + $0xa8] sm:$0xff] %vm709, %v656
      %732 = vst.msk [vmem:[#allocation3 + $0xb0] sm:$0xff] %vm709, %v658
      %733 = vst.msk [vmem:[#allocation3 + $0xb8] sm:$0xff] %vm709, %v660
      %734 = vst.msk [vmem:[#allocation3 + $0xc0] sm:$0xff] %vm709, %v662
      %735 = vst.msk [vmem:[#allocation3 + $0xc8] sm:$0xff] %vm709, %v664
      %736 = vst.msk [vmem:[#allocation3 + $0xd0] sm:$0xff] %vm709, %v666
      %737 = vst.msk [vmem:[#allocation3 + $0xd8] sm:$0xff] %vm709, %v668
      %738 = vst.msk [vmem:[#allocation3 + $0xe0] sm:$0xff] %vm709, %v670
      %739 = vst.msk [vmem:[#allocation3 + $0xe8] sm:$0xff] %vm709, %v672
      %740 = vst.msk [vmem:[#allocation3 + $0xf0] sm:$0xff] %vm709, %v674
      %741 = vst.msk [vmem:[#allocation3 + $0xf8] sm:$0xff] %vm709, %v676
      %v742 = vld [vmem:[%s259] sm:$0xff]
      %v743 = vld [vmem:[%s259 + $0x8] sm:$0xff]
      %v744 = vld [vmem:[%s259 + $0x18] sm:$0xff]
      %v745 = vld [vmem:[%s259 + $0x20] sm:$0xff]
      %v746 = vld [vmem:[%s259 + $0x30] sm:$0xff]
      %v747 = vld [vmem:[%s259 + $0x38] sm:$0xff]
      %v748 = vld [vmem:[%s259 + $0x48] sm:$0xff]
      %v749 = vld [vmem:[%s259 + $0x50] sm:$0xff]
      %v750 = vld [vmem:[%s259 + $0x60] sm:$0xff]
      %v751 = vld [vmem:[%s259 + $0x68] sm:$0xff]
      %v752 = vld [vmem:[%s259 + $0x78] sm:$0xff]
      %v753 = vld [vmem:[%s259 + $0x80] sm:$0xff]
      %v754 = vld [vmem:[%s259 + $0x90] sm:$0xff]
      %v755 = vld [vmem:[%s259 + $0x98] sm:$0xff]
      %v756 = vld [vmem:[%s259 + $0xa8] sm:$0xff]
      %v757 = vld [vmem:[%s259 + $0xb0] sm:$0xff]
      %v758 = vld [vmem:[%s259 + $0xc0] sm:$0xff]
      %v759 = vld [vmem:[%s259 + $0xc8] sm:$0xff]
      %v760 = vld [vmem:[%s259 + $0xd8] sm:$0xff]
      %v761 = vld [vmem:[%s259 + $0xe0] sm:$0xff]
      %v762 = vld [vmem:[%s259 + $0xf0] sm:$0xff]
      %v763 = vld [vmem:[%s259 + $0xf8] sm:$0xff]
      %v764 = vld [vmem:[%s259 + $0x108] sm:$0xff]
      %v765 = vld [vmem:[%s259 + $0x110] sm:$0xff]
      %v766 = vld [vmem:[%s259 + $0x120] sm:$0xff]
      %v767 = vld [vmem:[%s259 + $0x128] sm:$0xff]
      %v768 = vld [vmem:[%s259 + $0x138] sm:$0xff]
      %v769 = vld [vmem:[%s259 + $0x140] sm:$0xff]
      %v770 = vld [vmem:[%s259 + $0x150] sm:$0xff]
      %v771 = vld [vmem:[%s259 + $0x158] sm:$0xff]
      %v772 = vld [vmem:[%s259 + $0x168] sm:$0xff]
      %v773 = vld [vmem:[%s259 + $0x170] sm:$0xff]
      %806 = vrot.lane.b32.xlu0 %v742, 9
      %v807 = vpop.permute.xlu0 %806
      %808 = vrot.lane.b32.xlu0 %v743, 9
      %v809 = vpop.permute.xlu0 %808
      %810 = vrot.lane.b32.xlu0 %v744, 9
      %v811 = vpop.permute.xlu0 %810
      %812 = vrot.lane.b32.xlu0 %v745, 9
      %v813 = vpop.permute.xlu0 %812
      %814 = vrot.lane.b32.xlu0 %v746, 9
      %v815 = vpop.permute.xlu0 %814
      %816 = vrot.lane.b32.xlu0 %v747, 9
      %v817 = vpop.permute.xlu0 %816
      %818 = vrot.lane.b32.xlu0 %v748, 9
      %v819 = vpop.permute.xlu0 %818
      %820 = vrot.lane.b32.xlu0 %v749, 9
      %v821 = vpop.permute.xlu0 %820
      %822 = vrot.lane.b32.xlu0 %v750, 9
      %v823 = vpop.permute.xlu0 %822
      %824 = vrot.lane.b32.xlu0 %v751, 9
      %v825 = vpop.permute.xlu0 %824
      %826 = vrot.lane.b32.xlu0 %v752, 9
      %v827 = vpop.permute.xlu0 %826
      %828 = vrot.lane.b32.xlu0 %v753, 9
      %v829 = vpop.permute.xlu0 %828
      %830 = vrot.lane.b32.xlu0 %v754, 9
      %v831 = vpop.permute.xlu0 %830
      %832 = vrot.lane.b32.xlu0 %v755, 9
      %v833 = vpop.permute.xlu0 %832
      %834 = vrot.lane.b32.xlu0 %v756, 9
      %v835 = vpop.permute.xlu0 %834
      %836 = vrot.lane.b32.xlu0 %v757, 9
      %v837 = vpop.permute.xlu0 %836
      %838 = vrot.lane.b32.xlu0 %v758, 9
      %v839 = vpop.permute.xlu0 %838
      %840 = vrot.lane.b32.xlu0 %v759, 9
      %v841 = vpop.permute.xlu0 %840
      %842 = vrot.lane.b32.xlu0 %v760, 9
      %v843 = vpop.permute.xlu0 %842
      %844 = vrot.lane.b32.xlu0 %v761, 9
      %v845 = vpop.permute.xlu0 %844
      %846 = vrot.lane.b32.xlu0 %v762, 9
      %v847 = vpop.permute.xlu0 %846
      %848 = vrot.lane.b32.xlu0 %v763, 9
      %v849 = vpop.permute.xlu0 %848
      %850 = vrot.lane.b32.xlu0 %v764, 9
      %v851 = vpop.permute.xlu0 %850
      %852 = vrot.lane.b32.xlu0 %v765, 9
      %v853 = vpop.permute.xlu0 %852
      %854 = vrot.lane.b32.xlu0 %v766, 9
      %v855 = vpop.permute.xlu0 %854
      %856 = vrot.lane.b32.xlu0 %v767, 9
      %v857 = vpop.permute.xlu0 %856
      %858 = vrot.lane.b32.xlu0 %v768, 9
      %v859 = vpop.permute.xlu0 %858
      %860 = vrot.lane.b32.xlu0 %v769, 9
      %v861 = vpop.permute.xlu0 %860
      %862 = vrot.lane.b32.xlu0 %v770, 9
      %v863 = vpop.permute.xlu0 %862
      %864 = vrot.lane.b32.xlu0 %v771, 9
      %v865 = vpop.permute.xlu0 %864
      %866 = vrot.lane.b32.xlu0 %v772, 9
      %v867 = vpop.permute.xlu0 %866
      %868 = vrot.lane.b32.xlu0 %v773, 9
      %v869 = vpop.permute.xlu0 %868
      %vm902 = vcmask 97352
      %903 = vst.msk [vmem:[#allocation3] sm:$0xff] %vm902, %v807
      %904 = vst.msk [vmem:[#allocation3 + $0x8] sm:$0xff] %vm902, %v809
      %905 = vst.msk [vmem:[#allocation3 + $0x10] sm:$0xff] %vm902, %v811
      %906 = vst.msk [vmem:[#allocation3 + $0x18] sm:$0xff] %vm902, %v813
      %907 = vst.msk [vmem:[#allocation3 + $0x20] sm:$0xff] %vm902, %v815
      %908 = vst.msk [vmem:[#allocation3 + $0x28] sm:$0xff] %vm902, %v817
      %909 = vst.msk [vmem:[#allocation3 + $0x30] sm:$0xff] %vm902, %v819
      %910 = vst.msk [vmem:[#allocation3 + $0x38] sm:$0xff] %vm902, %v821
      %911 = vst.msk [vmem:[#allocation3 + $0x40] sm:$0xff] %vm902, %v823
      %912 = vst.msk [vmem:[#allocation3 + $0x48] sm:$0xff] %vm902, %v825
      %913 = vst.msk [vmem:[#allocation3 + $0x50] sm:$0xff] %vm902, %v827
      %914 = vst.msk [vmem:[#allocation3 + $0x58] sm:$0xff] %vm902, %v829
      %915 = vst.msk [vmem:[#allocation3 + $0x60] sm:$0xff] %vm902, %v831
      %916 = vst.msk [vmem:[#allocation3 + $0x68] sm:$0xff] %vm902, %v833
      %917 = vst.msk [vmem:[#allocation3 + $0x70] sm:$0xff] %vm902, %v835
      %918 = vst.msk [vmem:[#allocation3 + $0x78] sm:$0xff] %vm902, %v837
      %919 = vst.msk [vmem:[#allocation3 + $0x80] sm:$0xff] %vm902, %v839
      %920 = vst.msk [vmem:[#allocation3 + $0x88] sm:$0xff] %vm902, %v841
      %921 = vst.msk [vmem:[#allocation3 + $0x90] sm:$0xff] %vm902, %v843
      %922 = vst.msk [vmem:[#allocation3 + $0x98] sm:$0xff] %vm902, %v845
      %923 = vst.msk [vmem:[#allocation3 + $0xa0] sm:$0xff] %vm902, %v847
      %924 = vst.msk [vmem:[#allocation3 + $0xa8] sm:$0xff] %vm902, %v849
      %925 = vst.msk [vmem:[#allocation3 + $0xb0] sm:$0xff] %vm902, %v851
      %926 = vst.msk [vmem:[#allocation3 + $0xb8] sm:$0xff] %vm902, %v853
      %927 = vst.msk [vmem:[#allocation3 + $0xc0] sm:$0xff] %vm902, %v855
      %928 = vst.msk [vmem:[#allocation3 + $0xc8] sm:$0xff] %vm902, %v857
      %929 = vst.msk [vmem:[#allocation3 + $0xd0] sm:$0xff] %vm902, %v859
      %930 = vst.msk [vmem:[#allocation3 + $0xd8] sm:$0xff] %vm902, %v861
      %931 = vst.msk [vmem:[#allocation3 + $0xe0] sm:$0xff] %vm902, %v863
      %932 = vst.msk [vmem:[#allocation3 + $0xe8] sm:$0xff] %vm902, %v865
      %933 = vst.msk [vmem:[#allocation3 + $0xf0] sm:$0xff] %vm902, %v867
      %934 = vst.msk [vmem:[#allocation3 + $0xf8] sm:$0xff] %vm902, %v869
      %v935 = vld [vmem:[%s259 + $0x1] sm:$0xff]
      %v936 = vld [vmem:[%s259 + $0x9] sm:$0xff]
      %v937 = vld [vmem:[%s259 + $0x19] sm:$0xff]
      %v938 = vld [vmem:[%s259 + $0x21] sm:$0xff]
      %v939 = vld [vmem:[%s259 + $0x31] sm:$0xff]
      %v940 = vld [vmem:[%s259 + $0x39] sm:$0xff]
      %v941 = vld [vmem:[%s259 + $0x49] sm:$0xff]
      %v942 = vld [vmem:[%s259 + $0x51] sm:$0xff]
      %v943 = vld [vmem:[%s259 + $0x61] sm:$0xff]
      %v944 = vld [vmem:[%s259 + $0x69] sm:$0xff]
      %v945 = vld [vmem:[%s259 + $0x79] sm:$0xff]
      %v946 = vld [vmem:[%s259 + $0x81] sm:$0xff]
      %v947 = vld [vmem:[%s259 + $0x91] sm:$0xff]
      %v948 = vld [vmem:[%s259 + $0x99] sm:$0xff]
      %v949 = vld [vmem:[%s259 + $0xa9] sm:$0xff]
      %v950 = vld [vmem:[%s259 + $0xb1] sm:$0xff]
      %v951 = vld [vmem:[%s259 + $0xc1] sm:$0xff]
      %v952 = vld [vmem:[%s259 + $0xc9] sm:$0xff]
      %v953 = vld [vmem:[%s259 + $0xd9] sm:$0xff]
      %v954 = vld [vmem:[%s259 + $0xe1] sm:$0xff]
      %v955 = vld [vmem:[%s259 + $0xf1] sm:$0xff]
      %v956 = vld [vmem:[%s259 + $0xf9] sm:$0xff]
      %v957 = vld [vmem:[%s259 + $0x109] sm:$0xff]
      %v958 = vld [vmem:[%s259 + $0x111] sm:$0xff]
      %v959 = vld [vmem:[%s259 + $0x121] sm:$0xff]
      %v960 = vld [vmem:[%s259 + $0x129] sm:$0xff]
      %v961 = vld [vmem:[%s259 + $0x139] sm:$0xff]
      %v962 = vld [vmem:[%s259 + $0x141] sm:$0xff]
      %v963 = vld [vmem:[%s259 + $0x151] sm:$0xff]
      %v964 = vld [vmem:[%s259 + $0x159] sm:$0xff]
      %v965 = vld [vmem:[%s259 + $0x169] sm:$0xff]
      %v966 = vld [vmem:[%s259 + $0x171] sm:$0xff]
      %999 = vrot.lane.b32.xlu0 %v935, 12
      %v1000 = vpop.permute.xlu0 %999
      %1001 = vrot.lane.b32.xlu0 %v936, 12
      %v1002 = vpop.permute.xlu0 %1001
      %1003 = vrot.lane.b32.xlu0 %v937, 12
      %v1004 = vpop.permute.xlu0 %1003
      %1005 = vrot.lane.b32.xlu0 %v938, 12
      %v1006 = vpop.permute.xlu0 %1005
      %1007 = vrot.lane.b32.xlu0 %v939, 12
      %v1008 = vpop.permute.xlu0 %1007
      %1009 = vrot.lane.b32.xlu0 %v940, 12
      %v1010 = vpop.permute.xlu0 %1009
      %1011 = vrot.lane.b32.xlu0 %v941, 12
      %v1012 = vpop.permute.xlu0 %1011
      %1013 = vrot.lane.b32.xlu0 %v942, 12
      %v1014 = vpop.permute.xlu0 %1013
      %1015 = vrot.lane.b32.xlu0 %v943, 12
      %v1016 = vpop.permute.xlu0 %1015
      %1017 = vrot.lane.b32.xlu0 %v944, 12
      %v1018 = vpop.permute.xlu0 %1017
      %1019 = vrot.lane.b32.xlu0 %v945, 12
      %v1020 = vpop.permute.xlu0 %1019
      %1021 = vrot.lane.b32.xlu0 %v946, 12
      %v1022 = vpop.permute.xlu0 %1021
      %1023 = vrot.lane.b32.xlu0 %v947, 12
      %v1024 = vpop.permute.xlu0 %1023
      %1025 = vrot.lane.b32.xlu0 %v948, 12
      %v1026 = vpop.permute.xlu0 %1025
      %1027 = vrot.lane.b32.xlu0 %v949, 12
      %v1028 = vpop.permute.xlu0 %1027
      %1029 = vrot.lane.b32.xlu0 %v950, 12
      %v1030 = vpop.permute.xlu0 %1029
      %1031 = vrot.lane.b32.xlu0 %v951, 12
      %v1032 = vpop.permute.xlu0 %1031
      %1033 = vrot.lane.b32.xlu0 %v952, 12
      %v1034 = vpop.permute.xlu0 %1033
      %1035 = vrot.lane.b32.xlu0 %v953, 12
      %v1036 = vpop.permute.xlu0 %1035
      %1037 = vrot.lane.b32.xlu0 %v954, 12
      %v1038 = vpop.permute.xlu0 %1037
      %1039 = vrot.lane.b32.xlu0 %v955, 12
      %v1040 = vpop.permute.xlu0 %1039
      %1041 = vrot.lane.b32.xlu0 %v956, 12
      %v1042 = vpop.permute.xlu0 %1041
      %1043 = vrot.lane.b32.xlu0 %v957, 12
      %v1044 = vpop.permute.xlu0 %1043
      %1045 = vrot.lane.b32.xlu0 %v958, 12
      %v1046 = vpop.permute.xlu0 %1045
      %1047 = vrot.lane.b32.xlu0 %v959, 12
      %v1048 = vpop.permute.xlu0 %1047
      %1049 = vrot.lane.b32.xlu0 %v960, 12
      %v1050 = vpop.permute.xlu0 %1049
      %1051 = vrot.lane.b32.xlu0 %v961, 12
      %v1052 = vpop.permute.xlu0 %1051
      %1053 = vrot.lane.b32.xlu0 %v962, 12
      %v1054 = vpop.permute.xlu0 %1053
      %1055 = vrot.lane.b32.xlu0 %v963, 12
      %v1056 = vpop.permute.xlu0 %1055
      %1057 = vrot.lane.b32.xlu0 %v964, 12
      %v1058 = vpop.permute.xlu0 %1057
      %1059 = vrot.lane.b32.xlu0 %v965, 12
      %v1060 = vpop.permute.xlu0 %1059
      %1061 = vrot.lane.b32.xlu0 %v966, 12
      %v1062 = vpop.permute.xlu0 %1061
      %vm1095 = vcmask 121952
      %1096 = vst.msk [vmem:[#allocation3] sm:$0xff] %vm1095, %v1000
      %1097 = vst.msk [vmem:[#allocation3 + $0x8] sm:$0xff] %vm1095, %v1002
      %1098 = vst.msk [vmem:[#allocation3 + $0x10] sm:$0xff] %vm1095, %v1004
      %1099 = vst.msk [vmem:[#allocation3 + $0x18] sm:$0xff] %vm1095, %v1006
      %1100 = vst.msk [vmem:[#allocation3 + $0x20] sm:$0xff] %vm1095, %v1008
      %1101 = vst.msk [vmem:[#allocation3 + $0x28] sm:$0xff] %vm1095, %v1010
      %1102 = vst.msk [vmem:[#allocation3 + $0x30] sm:$0xff] %vm1095, %v1012
      %1103 = vst.msk [vmem:[#allocation3 + $0x38] sm:$0xff] %vm1095, %v1014
      %1104 = vst.msk [vmem:[#allocation3 + $0x40] sm:$0xff] %vm1095, %v1016
      %1105 = vst.msk [vmem:[#allocation3 + $0x48] sm:$0xff] %vm1095, %v1018
      %1106 = vst.msk [vmem:[#allocation3 + $0x50] sm:$0xff] %vm1095, %v1020
      %1107 = vst.msk [vmem:[#allocation3 + $0x58] sm:$0xff] %vm1095, %v1022
      %1108 = vst.msk [vmem:[#allocation3 + $0x60] sm:$0xff] %vm1095, %v1024
      %1109 = vst.msk [vmem:[#allocation3 + $0x68] sm:$0xff] %vm1095, %v1026
      %1110 = vst.msk [vmem:[#allocation3 + $0x70] sm:$0xff] %vm1095, %v1028
      %1111 = vst.msk [vmem:[#allocation3 + $0x78] sm:$0xff] %vm1095, %v1030
      %1112 = vst.msk [vmem:[#allocation3 + $0x80] sm:$0xff] %vm1095, %v1032
      %1113 = vst.msk [vmem:[#allocation3 + $0x88] sm:$0xff] %vm1095, %v1034
      %1114 = vst.msk [vmem:[#allocation3 + $0x90] sm:$0xff] %vm1095, %v1036
      %1115 = vst.msk [vmem:[#allocation3 + $0x98] sm:$0xff] %vm1095, %v1038
      %1116 = vst.msk [vmem:[#allocation3 + $0xa0] sm:$0xff] %vm1095, %v1040
      %1117 = vst.msk [vmem:[#allocation3 + $0xa8] sm:$0xff] %vm1095, %v1042
      %1118 = vst.msk [vmem:[#allocation3 + $0xb0] sm:$0xff] %vm1095, %v1044
      %1119 = vst.msk [vmem:[#allocation3 + $0xb8] sm:$0xff] %vm1095, %v1046
      %1120 = vst.msk [vmem:[#allocation3 + $0xc0] sm:$0xff] %vm1095, %v1048
      %1121 = vst.msk [vmem:[#allocation3 + $0xc8] sm:$0xff] %vm1095, %v1050
      %1122 = vst.msk [vmem:[#allocation3 + $0xd0] sm:$0xff] %vm1095, %v1052
      %1123 = vst.msk [vmem:[#allocation3 + $0xd8] sm:$0xff] %vm1095, %v1054
      %1124 = vst.msk [vmem:[#allocation3 + $0xe0] sm:$0xff] %vm1095, %v1056
      %1125 = vst.msk [vmem:[#allocation3 + $0xe8] sm:$0xff] %vm1095, %v1058
      %1126 = vst.msk [vmem:[#allocation3 + $0xf0] sm:$0xff] %vm1095, %v1060
      %1127 = vst.msk [vmem:[#allocation3 + $0xf8] sm:$0xff] %vm1095, %v1062
      %v1128 = vld [vmem:[%s259 + $0x2] sm:$0xff]
      %v1129 = vld [vmem:[%s259 + $0xa] sm:$0xff]
      %v1130 = vld [vmem:[%s259 + $0x1a] sm:$0xff]
      %v1131 = vld [vmem:[%s259 + $0x22] sm:$0xff]
      %v1132 = vld [vmem:[%s259 + $0x32] sm:$0xff]
      %v1133 = vld [vmem:[%s259 + $0x3a] sm:$0xff]
      %v1134 = vld [vmem:[%s259 + $0x4a] sm:$0xff]
      %v1135 = vld [vmem:[%s259 + $0x52] sm:$0xff]
      %v1136 = vld [vmem:[%s259 + $0x62] sm:$0xff]
      %v1137 = vld [vmem:[%s259 + $0x6a] sm:$0xff]
      %v1138 = vld [vmem:[%s259 + $0x7a] sm:$0xff]
      %v1139 = vld [vmem:[%s259 + $0x82] sm:$0xff]
      %v1140 = vld [vmem:[%s259 + $0x92] sm:$0xff]
      %v1141 = vld [vmem:[%s259 + $0x9a] sm:$0xff]
      %v1142 = vld [vmem:[%s259 + $0xaa] sm:$0xff]
      %v1143 = vld [vmem:[%s259 + $0xb2] sm:$0xff]
      %v1144 = vld [vmem:[%s259 + $0xc2] sm:$0xff]
      %v1145 = vld [vmem:[%s259 + $0xca] sm:$0xff]
      %v1146 = vld [vmem:[%s259 + $0xda] sm:$0xff]
      %v1147 = vld [vmem:[%s259 + $0xe2] sm:$0xff]
      %v1148 = vld [vmem:[%s259 + $0xf2] sm:$0xff]
      %v1149 = vld [vmem:[%s259 + $0xfa] sm:$0xff]
      %v1150 = vld [vmem:[%s259 + $0x10a] sm:$0xff]
      %v1151 = vld [vmem:[%s259 + $0x112] sm:$0xff]
      %v1152 = vld [vmem:[%s259 + $0x122] sm:$0xff]
      %v1153 = vld [vmem:[%s259 + $0x12a] sm:$0xff]
      %v1154 = vld [vmem:[%s259 + $0x13a] sm:$0xff]
      %v1155 = vld [vmem:[%s259 + $0x142] sm:$0xff]
      %v1156 = vld [vmem:[%s259 + $0x152] sm:$0xff]
      %v1157 = vld [vmem:[%s259 + $0x15a] sm:$0xff]
      %v1158 = vld [vmem:[%s259 + $0x16a] sm:$0xff]
      %v1159 = vld [vmem:[%s259 + $0x172] sm:$0xff]
      %1192 = vrot.lane.b32.xlu0 %v1128, 15
      %v1193 = vpop.permute.xlu0 %1192
      %1194 = vrot.lane.b32.xlu0 %v1129, 15
      %v1195 = vpop.permute.xlu0 %1194
      %1196 = vrot.lane.b32.xlu0 %v1130, 15
      %v1197 = vpop.permute.xlu0 %1196
      %1198 = vrot.lane.b32.xlu0 %v1131, 15
      %v1199 = vpop.permute.xlu0 %1198
      %1200 = vrot.lane.b32.xlu0 %v1132, 15
      %v1201 = vpop.permute.xlu0 %1200
      %1202 = vrot.lane.b32.xlu0 %v1133, 15
      %v1203 = vpop.permute.xlu0 %1202
      %1204 = vrot.lane.b32.xlu0 %v1134, 15
      %v1205 = vpop.permute.xlu0 %1204
      %1206 = vrot.lane.b32.xlu0 %v1135, 15
      %v1207 = vpop.permute.xlu0 %1206
      %1208 = vrot.lane.b32.xlu0 %v1136, 15
      %v1209 = vpop.permute.xlu0 %1208
      %1210 = vrot.lane.b32.xlu0 %v1137, 15
      %v1211 = vpop.permute.xlu0 %1210
      %1212 = vrot.lane.b32.xlu0 %v1138, 15
      %v1213 = vpop.permute.xlu0 %1212
      %1214 = vrot.lane.b32.xlu0 %v1139, 15
      %v1215 = vpop.permute.xlu0 %1214
      %1216 = vrot.lane.b32.xlu0 %v1140, 15
      %v1217 = vpop.permute.xlu0 %1216
      %1218 = vrot.lane.b32.xlu0 %v1141, 15
      %v1219 = vpop.permute.xlu0 %1218
      %1220 = vrot.lane.b32.xlu0 %v1142, 15
      %v1221 = vpop.permute.xlu0 %1220
      %1222 = vrot.lane.b32.xlu0 %v1143, 15
      %v1223 = vpop.permute.xlu0 %1222
      %1224 = vrot.lane.b32.xlu0 %v1144, 15
      %v1225 = vpop.permute.xlu0 %1224
      %1226 = vrot.lane.b32.xlu0 %v1145, 15
      %v1227 = vpop.permute.xlu0 %1226
      %1228 = vrot.lane.b32.xlu0 %v1146, 15
      %v1229 = vpop.permute.xlu0 %1228
      %1230 = vrot.lane.b32.xlu0 %v1147, 15
      %v1231 = vpop.permute.xlu0 %1230
      %1232 = vrot.lane.b32.xlu0 %v1148, 15
      %v1233 = vpop.permute.xlu0 %1232
      %1234 = vrot.lane.b32.xlu0 %v1149, 15
      %v1235 = vpop.permute.xlu0 %1234
      %1236 = vrot.lane.b32.xlu0 %v1150, 15
      %v1237 = vpop.permute.xlu0 %1236
      %1238 = vrot.lane.b32.xlu0 %v1151, 15
      %v1239 = vpop.permute.xlu0 %1238
      %1240 = vrot.lane.b32.xlu0 %v1152, 15
      %v1241 = vpop.permute.xlu0 %1240
      %1242 = vrot.lane.b32.xlu0 %v1153, 15
      %v1243 = vpop.permute.xlu0 %1242
      %1244 = vrot.lane.b32.xlu0 %v1154, 15
      %v1245 = vpop.permute.xlu0 %1244
      %1246 = vrot.lane.b32.xlu0 %v1155, 15
      %v1247 = vpop.permute.xlu0 %1246
      %1248 = vrot.lane.b32.xlu0 %v1156, 15
      %v1249 = vpop.permute.xlu0 %1248
      %1250 = vrot.lane.b32.xlu0 %v1157, 15
      %v1251 = vpop.permute.xlu0 %1250
      %1252 = vrot.lane.b32.xlu0 %v1158, 15
      %v1253 = vpop.permute.xlu0 %1252
      %1254 = vrot.lane.b32.xlu0 %v1159, 15
      %v1255 = vpop.permute.xlu0 %1254
      %vm1288 = vcmask 146552
      %1289 = vst.msk [vmem:[#allocation3] sm:$0xff] %vm1288, %v1193
      %1290 = vst.msk [vmem:[#allocation3 + $0x8] sm:$0xff] %vm1288, %v1195
      %1291 = vst.msk [vmem:[#allocation3 + $0x10] sm:$0xff] %vm1288, %v1197
      %1292 = vst.msk [vmem:[#allocation3 + $0x18] sm:$0xff] %vm1288, %v1199
      %1293 = vst.msk [vmem:[#allocation3 + $0x20] sm:$0xff] %vm1288, %v1201
      %1294 = vst.msk [vmem:[#allocation3 + $0x28] sm:$0xff] %vm1288, %v1203
      %1295 = vst.msk [vmem:[#allocation3 + $0x30] sm:$0xff] %vm1288, %v1205
      %1296 = vst.msk [vmem:[#allocation3 + $0x38] sm:$0xff] %vm1288, %v1207
      %1297 = vst.msk [vmem:[#allocation3 + $0x40] sm:$0xff] %vm1288, %v1209
      %1298 = vst.msk [vmem:[#allocation3 + $0x48] sm:$0xff] %vm1288, %v1211
      %1299 = vst.msk [vmem:[#allocation3 + $0x50] sm:$0xff] %vm1288, %v1213
      %1300 = vst.msk [vmem:[#allocation3 + $0x58] sm:$0xff] %vm1288, %v1215
      %1301 = vst.msk [vmem:[#allocation3 + $0x60] sm:$0xff] %vm1288, %v1217
      %1302 = vst.msk [vmem:[#allocation3 + $0x68] sm:$0xff] %vm1288, %v1219
      %1303 = vst.msk [vmem:[#allocation3 + $0x70] sm:$0xff] %vm1288, %v1221
      %1304 = vst.msk [vmem:[#allocation3 + $0x78] sm:$0xff] %vm1288, %v1223
      %1305 = vst.msk [vmem:[#allocation3 + $0x80] sm:$0xff] %vm1288, %v1225
      %1306 = vst.msk [vmem:[#allocation3 + $0x88] sm:$0xff] %vm1288, %v1227
      %1307 = vst.msk [vmem:[#allocation3 + $0x90] sm:$0xff] %vm1288, %v1229
      %1308 = vst.msk [vmem:[#allocation3 + $0x98] sm:$0xff] %vm1288, %v1231
      %1309 = vst.msk [vmem:[#allocation3 + $0xa0] sm:$0xff] %vm1288, %v1233
      %1310 = vst.msk [vmem:[#allocation3 + $0xa8] sm:$0xff] %vm1288, %v1235
      %1311 = vst.msk [vmem:[#allocation3 + $0xb0] sm:$0xff] %vm1288, %v1237
      %1312 = vst.msk [vmem:[#allocation3 + $0xb8] sm:$0xff] %vm1288, %v1239
      %1313 = vst.msk [vmem:[#allocation3 + $0xc0] sm:$0xff] %vm1288, %v1241
      %1314 = vst.msk [vmem:[#allocation3 + $0xc8] sm:$0xff] %vm1288, %v1243
      %1315 = vst.msk [vmem:[#allocation3 + $0xd0] sm:$0xff] %vm1288, %v1245
      %1316 = vst.msk [vmem:[#allocation3 + $0xd8] sm:$0xff] %vm1288, %v1247
      %1317 = vst.msk [vmem:[#allocation3 + $0xe0] sm:$0xff] %vm1288, %v1249
      %1318 = vst.msk [vmem:[#allocation3 + $0xe8] sm:$0xff] %vm1288, %v1251
      %1319 = vst.msk [vmem:[#allocation3 + $0xf0] sm:$0xff] %vm1288, %v1253
      %1320 = vst.msk [vmem:[#allocation3 + $0xf8] sm:$0xff] %vm1288, %v1255
      %s1321 = scalar_lea.vmem [#allocation2], 48
      %v1322 = vld [vmem:[%s1321] sm:$0xff]
      %v1323 = vld [vmem:[%s1321 + $0x8] sm:$0xff]
      %v1324 = vld [vmem:[%s1321 + $0x18] sm:$0xff]
      %v1325 = vld [vmem:[%s1321 + $0x20] sm:$0xff]
      %v1326 = vld [vmem:[%s1321 + $0x30] sm:$0xff]
      %v1327 = vld [vmem:[%s1321 + $0x38] sm:$0xff]
      %v1328 = vld [vmem:[%s1321 + $0x48] sm:$0xff]
      %v1329 = vld [vmem:[%s1321 + $0x50] sm:$0xff]
      %v1330 = vld [vmem:[%s1321 + $0x60] sm:$0xff]
      %v1331 = vld [vmem:[%s1321 + $0x68] sm:$0xff]
      %v1332 = vld [vmem:[%s1321 + $0x78] sm:$0xff]
      %v1333 = vld [vmem:[%s1321 + $0x80] sm:$0xff]
      %v1334 = vld [vmem:[%s1321 + $0x90] sm:$0xff]
      %v1335 = vld [vmem:[%s1321 + $0x98] sm:$0xff]
      %v1336 = vld [vmem:[%s1321 + $0xa8] sm:$0xff]
      %v1337 = vld [vmem:[%s1321 + $0xb0] sm:$0xff]
      %v1338 = vld [vmem:[%s1321 + $0xc0] sm:$0xff]
      %v1339 = vld [vmem:[%s1321 + $0xc8] sm:$0xff]
      %v1340 = vld [vmem:[%s1321 + $0xd8] sm:$0xff]
      %v1341 = vld [vmem:[%s1321 + $0xe0] sm:$0xff]
      %v1342 = vld [vmem:[%s1321 + $0xf0] sm:$0xff]
      %v1343 = vld [vmem:[%s1321 + $0xf8] sm:$0xff]
      %v1344 = vld [vmem:[%s1321 + $0x108] sm:$0xff]
      %v1345 = vld [vmem:[%s1321 + $0x110] sm:$0xff]
      %v1346 = vld [vmem:[%s1321 + $0x120] sm:$0xff]
      %v1347 = vld [vmem:[%s1321 + $0x128] sm:$0xff]
      %v1348 = vld [vmem:[%s1321 + $0x138] sm:$0xff]
      %v1349 = vld [vmem:[%s1321 + $0x140] sm:$0xff]
      %v1350 = vld [vmem:[%s1321 + $0x150] sm:$0xff]
      %v1351 = vld [vmem:[%s1321 + $0x158] sm:$0xff]
      %v1352 = vld [vmem:[%s1321 + $0x168] sm:$0xff]
      %v1353 = vld [vmem:[%s1321 + $0x170] sm:$0xff]
      %1386 = vrot.lane.b32.xlu0 %v1322, 18
      %v1387 = vpop.permute.xlu0 %1386
      %1388 = vrot.lane.b32.xlu0 %v1323, 18
      %v1389 = vpop.permute.xlu0 %1388
      %1390 = vrot.lane.b32.xlu0 %v1324, 18
      %v1391 = vpop.permute.xlu0 %1390
      %1392 = vrot.lane.b32.xlu0 %v1325, 18
      %v1393 = vpop.permute.xlu0 %1392
      %1394 = vrot.lane.b32.xlu0 %v1326, 18
      %v1395 = vpop.permute.xlu0 %1394
      %1396 = vrot.lane.b32.xlu0 %v1327, 18
      %v1397 = vpop.permute.xlu0 %1396
      %1398 = vrot.lane.b32.xlu0 %v1328, 18
      %v1399 = vpop.permute.xlu0 %1398
      %1400 = vrot.lane.b32.xlu0 %v1329, 18
      %v1401 = vpop.permute.xlu0 %1400
      %1402 = vrot.lane.b32.xlu0 %v1330, 18
      %v1403 = vpop.permute.xlu0 %1402
      %1404 = vrot.lane.b32.xlu0 %v1331, 18
      %v1405 = vpop.permute.xlu0 %1404
      %1406 = vrot.lane.b32.xlu0 %v1332, 18
      %v1407 = vpop.permute.xlu0 %1406
      %1408 = vrot.lane.b32.xlu0 %v1333, 18
      %v1409 = vpop.permute.xlu0 %1408
      %1410 = vrot.lane.b32.xlu0 %v1334, 18
      %v1411 = vpop.permute.xlu0 %1410
      %1412 = vrot.lane.b32.xlu0 %v1335, 18
      %v1413 = vpop.permute.xlu0 %1412
      %1414 = vrot.lane.b32.xlu0 %v1336, 18
      %v1415 = vpop.permute.xlu0 %1414
      %1416 = vrot.lane.b32.xlu0 %v1337, 18
      %v1417 = vpop.permute.xlu0 %1416
      %1418 = vrot.lane.b32.xlu0 %v1338, 18
      %v1419 = vpop.permute.xlu0 %1418
      %1420 = vrot.lane.b32.xlu0 %v1339, 18
      %v1421 = vpop.permute.xlu0 %1420
      %1422 = vrot.lane.b32.xlu0 %v1340, 18
      %v1423 = vpop.permute.xlu0 %1422
      %1424 = vrot.lane.b32.xlu0 %v1341, 18
      %v1425 = vpop.permute.xlu0 %1424
      %1426 = vrot.lane.b32.xlu0 %v1342, 18
      %v1427 = vpop.permute.xlu0 %1426
      %1428 = vrot.lane.b32.xlu0 %v1343, 18
      %v1429 = vpop.permute.xlu0 %1428
      %1430 = vrot.lane.b32.xlu0 %v1344, 18
      %v1431 = vpop.permute.xlu0 %1430
      %1432 = vrot.lane.b32.xlu0 %v1345, 18
      %v1433 = vpop.permute.xlu0 %1432
      %1434 = vrot.lane.b32.xlu0 %v1346, 18
      %v1435 = vpop.permute.xlu0 %1434
      %1436 = vrot.lane.b32.xlu0 %v1347, 18
      %v1437 = vpop.permute.xlu0 %1436
      %1438 = vrot.lane.b32.xlu0 %v1348, 18
      %v1439 = vpop.permute.xlu0 %1438
      %1440 = vrot.lane.b32.xlu0 %v1349, 18
      %v1441 = vpop.permute.xlu0 %1440
      %1442 = vrot.lane.b32.xlu0 %v1350, 18
      %v1443 = vpop.permute.xlu0 %1442
      %1444 = vrot.lane.b32.xlu0 %v1351, 18
      %v1445 = vpop.permute.xlu0 %1444
      %1446 = vrot.lane.b32.xlu0 %v1352, 18
      %v1447 = vpop.permute.xlu0 %1446
      %1448 = vrot.lane.b32.xlu0 %v1353, 18
      %v1449 = vpop.permute.xlu0 %1448
      %vm1482 = vcmask 171152
      %1483 = vst.msk [vmem:[#allocation3] sm:$0xff] %vm1482, %v1387
      %1484 = vst.msk [vmem:[#allocation3 + $0x8] sm:$0xff] %vm1482, %v1389
      %1485 = vst.msk [vmem:[#allocation3 + $0x10] sm:$0xff] %vm1482, %v1391
      %1486 = vst.msk [vmem:[#allocation3 + $0x18] sm:$0xff] %vm1482, %v1393
      %1487 = vst.msk [vmem:[#allocation3 + $0x20] sm:$0xff] %vm1482, %v1395
      %1488 = vst.msk [vmem:[#allocation3 + $0x28] sm:$0xff] %vm1482, %v1397
      %1489 = vst.msk [vmem:[#allocation3 + $0x30] sm:$0xff] %vm1482, %v1399
      %1490 = vst.msk [vmem:[#allocation3 + $0x38] sm:$0xff] %vm1482, %v1401
      %1491 = vst.msk [vmem:[#allocation3 + $0x40] sm:$0xff] %vm1482, %v1403
      %1492 = vst.msk [vmem:[#allocation3 + $0x48] sm:$0xff] %vm1482, %v1405
      %1493 = vst.msk [vmem:[#allocation3 + $0x50] sm:$0xff] %vm1482, %v1407
      %1494 = vst.msk [vmem:[#allocation3 + $0x58] sm:$0xff] %vm1482, %v1409
      %1495 = vst.msk [vmem:[#allocation3 + $0x60] sm:$0xff] %vm1482, %v1411
      %1496 = vst.msk [vmem:[#allocation3 + $0x68] sm:$0xff] %vm1482, %v1413
      %1497 = vst.msk [vmem:[#allocation3 + $0x70] sm:$0xff] %vm1482, %v1415
      %1498 = vst.msk [vmem:[#allocation3 + $0x78] sm:$0xff] %vm1482, %v1417
      %1499 = vst.msk [vmem:[#allocation3 + $0x80] sm:$0xff] %vm1482, %v1419
      %1500 = vst.msk [vmem:[#allocation3 + $0x88] sm:$0xff] %vm1482, %v1421
      %1501 = vst.msk [vmem:[#allocation3 + $0x90] sm:$0xff] %vm1482, %v1423
      %1502 = vst.msk [vmem:[#allocation3 + $0x98] sm:$0xff] %vm1482, %v1425
      %1503 = vst.msk [vmem:[#allocation3 + $0xa0] sm:$0xff] %vm1482, %v1427
      %1504 = vst.msk [vmem:[#allocation3 + $0xa8] sm:$0xff] %vm1482, %v1429
      %1505 = vst.msk [vmem:[#allocation3 + $0xb0] sm:$0xff] %vm1482, %v1431
      %1506 = vst.msk [vmem:[#allocation3 + $0xb8] sm:$0xff] %vm1482, %v1433
      %1507 = vst.msk [vmem:[#allocation3 + $0xc0] sm:$0xff] %vm1482, %v1435
      %1508 = vst.msk [vmem:[#allocation3 + $0xc8] sm:$0xff] %vm1482, %v1437
      %1509 = vst.msk [vmem:[#allocation3 + $0xd0] sm:$0xff] %vm1482, %v1439
      %1510 = vst.msk [vmem:[#allocation3 + $0xd8] sm:$0xff] %vm1482, %v1441
      %1511 = vst.msk [vmem:[#allocation3 + $0xe0] sm:$0xff] %vm1482, %v1443
      %1512 = vst.msk [vmem:[#allocation3 + $0xe8] sm:$0xff] %vm1482, %v1445
      %1513 = vst.msk [vmem:[#allocation3 + $0xf0] sm:$0xff] %vm1482, %v1447
      %1514 = vst.msk [vmem:[#allocation3 + $0xf8] sm:$0xff] %vm1482, %v1449
      %v1515 = vld [vmem:[%s1321 + $0x1] sm:$0xff]
      %v1516 = vld [vmem:[%s1321 + $0x9] sm:$0xff]
      %v1517 = vld [vmem:[%s1321 + $0x19] sm:$0xff]
      %v1518 = vld [vmem:[%s1321 + $0x21] sm:$0xff]
      %v1519 = vld [vmem:[%s1321 + $0x31] sm:$0xff]
      %v1520 = vld [vmem:[%s1321 + $0x39] sm:$0xff]
      %v1521 = vld [vmem:[%s1321 + $0x49] sm:$0xff]
      %v1522 = vld [vmem:[%s1321 + $0x51] sm:$0xff]
      %v1523 = vld [vmem:[%s1321 + $0x61] sm:$0xff]
      %v1524 = vld [vmem:[%s1321 + $0x69] sm:$0xff]
      %v1525 = vld [vmem:[%s1321 + $0x79] sm:$0xff]
      %v1526 = vld [vmem:[%s1321 + $0x81] sm:$0xff]
      %v1527 = vld [vmem:[%s1321 + $0x91] sm:$0xff]
      %v1528 = vld [vmem:[%s1321 + $0x99] sm:$0xff]
      %v1529 = vld [vmem:[%s1321 + $0xa9] sm:$0xff]
      %v1530 = vld [vmem:[%s1321 + $0xb1] sm:$0xff]
      %v1531 = vld [vmem:[%s1321 + $0xc1] sm:$0xff]
      %v1532 = vld [vmem:[%s1321 + $0xc9] sm:$0xff]
      %v1533 = vld [vmem:[%s1321 + $0xd9] sm:$0xff]
      %v1534 = vld [vmem:[%s1321 + $0xe1] sm:$0xff]
      %v1535 = vld [vmem:[%s1321 + $0xf1] sm:$0xff]
      %v1536 = vld [vmem:[%s1321 + $0xf9] sm:$0xff]
      %v1537 = vld [vmem:[%s1321 + $0x109] sm:$0xff]
      %v1538 = vld [vmem:[%s1321 + $0x111] sm:$0xff]
      %v1539 = vld [vmem:[%s1321 + $0x121] sm:$0xff]
      %v1540 = vld [vmem:[%s1321 + $0x129] sm:$0xff]
      %v1541 = vld [vmem:[%s1321 + $0x139] sm:$0xff]
      %v1542 = vld [vmem:[%s1321 + $0x141] sm:$0xff]
      %v1543 = vld [vmem:[%s1321 + $0x151] sm:$0xff]
      %v1544 = vld [vmem:[%s1321 + $0x159] sm:$0xff]
      %v1545 = vld [vmem:[%s1321 + $0x169] sm:$0xff]
      %v1546 = vld [vmem:[%s1321 + $0x171] sm:$0xff]
      %1579 = vrot.lane.b32.xlu0 %v1515, 21
      %v1580 = vpop.permute.xlu0 %1579
      %1581 = vrot.lane.b32.xlu0 %v1516, 21
      %v1582 = vpop.permute.xlu0 %1581
      %1583 = vrot.lane.b32.xlu0 %v1517, 21
      %v1584 = vpop.permute.xlu0 %1583
      %1585 = vrot.lane.b32.xlu0 %v1518, 21
      %v1586 = vpop.permute.xlu0 %1585
      %1587 = vrot.lane.b32.xlu0 %v1519, 21
      %v1588 = vpop.permute.xlu0 %1587
      %1589 = vrot.lane.b32.xlu0 %v1520, 21
      %v1590 = vpop.permute.xlu0 %1589
      %1591 = vrot.lane.b32.xlu0 %v1521, 21
      %v1592 = vpop.permute.xlu0 %1591
      %1593 = vrot.lane.b32.xlu0 %v1522, 21
      %v1594 = vpop.permute.xlu0 %1593
      %1595 = vrot.lane.b32.xlu0 %v1523, 21
      %v1596 = vpop.permute.xlu0 %1595
      %1597 = vrot.lane.b32.xlu0 %v1524, 21
      %v1598 = vpop.permute.xlu0 %1597
      %1599 = vrot.lane.b32.xlu0 %v1525, 21
      %v1600 = vpop.permute.xlu0 %1599
      %1601 = vrot.lane.b32.xlu0 %v1526, 21
      %v1602 = vpop.permute.xlu0 %1601
      %1603 = vrot.lane.b32.xlu0 %v1527, 21
      %v1604 = vpop.permute.xlu0 %1603
      %1605 = vrot.lane.b32.xlu0 %v1528, 21
      %v1606 = vpop.permute.xlu0 %1605
      %1607 = vrot.lane.b32.xlu0 %v1529, 21
      %v1608 = vpop.permute.xlu0 %1607
      %1609 = vrot.lane.b32.xlu0 %v1530, 21
      %v1610 = vpop.permute.xlu0 %1609
      %1611 = vrot.lane.b32.xlu0 %v1531, 21
      %v1612 = vpop.permute.xlu0 %1611
      %1613 = vrot.lane.b32.xlu0 %v1532, 21
      %v1614 = vpop.permute.xlu0 %1613
      %1615 = vrot.lane.b32.xlu0 %v1533, 21
      %v1616 = vpop.permute.xlu0 %1615
      %1617 = vrot.lane.b32.xlu0 %v1534, 21
      %v1618 = vpop.permute.xlu0 %1617
      %1619 = vrot.lane.b32.xlu0 %v1535, 21
      %v1620 = vpop.permute.xlu0 %1619
      %1621 = vrot.lane.b32.xlu0 %v1536, 21
      %v1622 = vpop.permute.xlu0 %1621
      %1623 = vrot.lane.b32.xlu0 %v1537, 21
      %v1624 = vpop.permute.xlu0 %1623
      %1625 = vrot.lane.b32.xlu0 %v1538, 21
      %v1626 = vpop.permute.xlu0 %1625
      %1627 = vrot.lane.b32.xlu0 %v1539, 21
      %v1628 = vpop.permute.xlu0 %1627
      %1629 = vrot.lane.b32.xlu0 %v1540, 21
      %v1630 = vpop.permute.xlu0 %1629
      %1631 = vrot.lane.b32.xlu0 %v1541, 21
      %v1632 = vpop.permute.xlu0 %1631
      %1633 = vrot.lane.b32.xlu0 %v1542, 21
      %v1634 = vpop.permute.xlu0 %1633
      %1635 = vrot.lane.b32.xlu0 %v1543, 21
      %v1636 = vpop.permute.xlu0 %1635
      %1637 = vrot.lane.b32.xlu0 %v1544, 21
      %v1638 = vpop.permute.xlu0 %1637
      %1639 = vrot.lane.b32.xlu0 %v1545, 21
      %v1640 = vpop.permute.xlu0 %1639
      %1641 = vrot.lane.b32.xlu0 %v1546, 21
      %v1642 = vpop.permute.xlu0 %1641
      %vm1675 = vcmask 195752
      %1676 = vst.msk [vmem:[#allocation3] sm:$0xff] %vm1675, %v1580
      %1677 = vst.msk [vmem:[#allocation3 + $0x8] sm:$0xff] %vm1675, %v1582
      %1678 = vst.msk [vmem:[#allocation3 + $0x10] sm:$0xff] %vm1675, %v1584
      %1679 = vst.msk [vmem:[#allocation3 + $0x18] sm:$0xff] %vm1675, %v1586
      %1680 = vst.msk [vmem:[#allocation3 + $0x20] sm:$0xff] %vm1675, %v1588
      %1681 = vst.msk [vmem:[#allocation3 + $0x28] sm:$0xff] %vm1675, %v1590
      %1682 = vst.msk [vmem:[#allocation3 + $0x30] sm:$0xff] %vm1675, %v1592
      %1683 = vst.msk [vmem:[#allocation3 + $0x38] sm:$0xff] %vm1675, %v1594
      %1684 = vst.msk [vmem:[#allocation3 + $0x40] sm:$0xff] %vm1675, %v1596
      %1685 = vst.msk [vmem:[#allocation3 + $0x48] sm:$0xff] %vm1675, %v1598
      %1686 = vst.msk [vmem:[#allocation3 + $0x50] sm:$0xff] %vm1675, %v1600
      %1687 = vst.msk [vmem:[#allocation3 + $0x58] sm:$0xff] %vm1675, %v1602
      %1688 = vst.msk [vmem:[#allocation3 + $0x60] sm:$0xff] %vm1675, %v1604
      %1689 = vst.msk [vmem:[#allocation3 + $0x68] sm:$0xff] %vm1675, %v1606
      %1690 = vst.msk [vmem:[#allocation3 + $0x70] sm:$0xff] %vm1675, %v1608
      %1691 = vst.msk [vmem:[#allocation3 + $0x78] sm:$0xff] %vm1675, %v1610
      %1692 = vst.msk [vmem:[#allocation3 + $0x80] sm:$0xff] %vm1675, %v1612
      %1693 = vst.msk [vmem:[#allocation3 + $0x88] sm:$0xff] %vm1675, %v1614
      %1694 = vst.msk [vmem:[#allocation3 + $0x90] sm:$0xff] %vm1675, %v1616
      %1695 = vst.msk [vmem:[#allocation3 + $0x98] sm:$0xff] %vm1675, %v1618
      %1696 = vst.msk [vmem:[#allocation3 + $0xa0] sm:$0xff] %vm1675, %v1620
      %1697 = vst.msk [vmem:[#allocation3 + $0xa8] sm:$0xff] %vm1675, %v1622
      %1698 = vst.msk [vmem:[#allocation3 + $0xb0] sm:$0xff] %vm1675, %v1624
      %1699 = vst.msk [vmem:[#allocation3 + $0xb8] sm:$0xff] %vm1675, %v1626
      %1700 = vst.msk [vmem:[#allocation3 + $0xc0] sm:$0xff] %vm1675, %v1628
      %1701 = vst.msk [vmem:[#allocation3 + $0xc8] sm:$0xff] %vm1675, %v1630
      %1702 = vst.msk [vmem:[#allocation3 + $0xd0] sm:$0xff] %vm1675, %v1632
      %1703 = vst.msk [vmem:[#allocation3 + $0xd8] sm:$0xff] %vm1675, %v1634
      %1704 = vst.msk [vmem:[#allocation3 + $0xe0] sm:$0xff] %vm1675, %v1636
      %1705 = vst.msk [vmem:[#allocation3 + $0xe8] sm:$0xff] %vm1675, %v1638
      %1706 = vst.msk [vmem:[#allocation3 + $0xf0] sm:$0xff] %vm1675, %v1640
      %1707 = vst.msk [vmem:[#allocation3 + $0xf8] sm:$0xff] %vm1675, %v1642
      %v1708 = vld [vmem:[%s1321 + $0x2] sm:$0xff]
      %v1709 = vld [vmem:[%s1321 + $0xa] sm:$0xff]
      %v1710 = vld [vmem:[%s1321 + $0x1a] sm:$0xff]
      %v1711 = vld [vmem:[%s1321 + $0x22] sm:$0xff]
      %v1712 = vld [vmem:[%s1321 + $0x32] sm:$0xff]
      %v1713 = vld [vmem:[%s1321 + $0x3a] sm:$0xff]
      %v1714 = vld [vmem:[%s1321 + $0x4a] sm:$0xff]
      %v1715 = vld [vmem:[%s1321 + $0x52] sm:$0xff]
      %v1716 = vld [vmem:[%s1321 + $0x62] sm:$0xff]
      %v1717 = vld [vmem:[%s1321 + $0x6a] sm:$0xff]
      %v1718 = vld [vmem:[%s1321 + $0x7a] sm:$0xff]
      %v1719 = vld [vmem:[%s1321 + $0x82] sm:$0xff]
      %v1720 = vld [vmem:[%s1321 + $0x92] sm:$0xff]
      %v1721 = vld [vmem:[%s1321 + $0x9a] sm:$0xff]
      %v1722 = vld [vmem:[%s1321 + $0xaa] sm:$0xff]
      %v1723 = vld [vmem:[%s1321 + $0xb2] sm:$0xff]
      %v1724 = vld [vmem:[%s1321 + $0xc2] sm:$0xff]
      %v1725 = vld [vmem:[%s1321 + $0xca] sm:$0xff]
      %v1726 = vld [vmem:[%s1321 + $0xda] sm:$0xff]
      %v1727 = vld [vmem:[%s1321 + $0xe2] sm:$0xff]
      %v1728 = vld [vmem:[%s1321 + $0xf2] sm:$0xff]
      %v1729 = vld [vmem:[%s1321 + $0xfa] sm:$0xff]
      %v1730 = vld [vmem:[%s1321 + $0x10a] sm:$0xff]
      %v1731 = vld [vmem:[%s1321 + $0x112] sm:$0xff]
      %v1732 = vld [vmem:[%s1321 + $0x122] sm:$0xff]
      %v1733 = vld [vmem:[%s1321 + $0x12a] sm:$0xff]
      %v1734 = vld [vmem:[%s1321 + $0x13a] sm:$0xff]
      %v1735 = vld [vmem:[%s1321 + $0x142] sm:$0xff]
      %v1736 = vld [vmem:[%s1321 + $0x152] sm:$0xff]
      %v1737 = vld [vmem:[%s1321 + $0x15a] sm:$0xff]
      %v1738 = vld [vmem:[%s1321 + $0x16a] sm:$0xff]
      %v1739 = vld [vmem:[%s1321 + $0x172] sm:$0xff]
      %1772 = vrot.lane.b32.xlu0 %v1708, 24
      %v1773 = vpop.permute.xlu0 %1772
      %1774 = vrot.lane.b32.xlu0 %v1709, 24
      %v1775 = vpop.permute.xlu0 %1774
      %1776 = vrot.lane.b32.xlu0 %v1710, 24
      %v1777 = vpop.permute.xlu0 %1776
      %1778 = vrot.lane.b32.xlu0 %v1711, 24
      %v1779 = vpop.permute.xlu0 %1778
      %1780 = vrot.lane.b32.xlu0 %v1712, 24
      %v1781 = vpop.permute.xlu0 %1780
      %1782 = vrot.lane.b32.xlu0 %v1713, 24
      %v1783 = vpop.permute.xlu0 %1782
      %1784 = vrot.lane.b32.xlu0 %v1714, 24
      %v1785 = vpop.permute.xlu0 %1784
      %1786 = vrot.lane.b32.xlu0 %v1715, 24
      %v1787 = vpop.permute.xlu0 %1786
      %1788 = vrot.lane.b32.xlu0 %v1716, 24
      %v1789 = vpop.permute.xlu0 %1788
      %1790 = vrot.lane.b32.xlu0 %v1717, 24
      %v1791 = vpop.permute.xlu0 %1790
      %1792 = vrot.lane.b32.xlu0 %v1718, 24
      %v1793 = vpop.permute.xlu0 %1792
      %1794 = vrot.lane.b32.xlu0 %v1719, 24
      %v1795 = vpop.permute.xlu0 %1794
      %1796 = vrot.lane.b32.xlu0 %v1720, 24
      %v1797 = vpop.permute.xlu0 %1796
      %1798 = vrot.lane.b32.xlu0 %v1721, 24
      %v1799 = vpop.permute.xlu0 %1798
      %1800 = vrot.lane.b32.xlu0 %v1722, 24
      %v1801 = vpop.permute.xlu0 %1800
      %1802 = vrot.lane.b32.xlu0 %v1723, 24
      %v1803 = vpop.permute.xlu0 %1802
      %1804 = vrot.lane.b32.xlu0 %v1724, 24
      %v1805 = vpop.permute.xlu0 %1804
      %1806 = vrot.lane.b32.xlu0 %v1725, 24
      %v1807 = vpop.permute.xlu0 %1806
      %1808 = vrot.lane.b32.xlu0 %v1726, 24
      %v1809 = vpop.permute.xlu0 %1808
      %1810 = vrot.lane.b32.xlu0 %v1727, 24
      %v1811 = vpop.permute.xlu0 %1810
      %1812 = vrot.lane.b32.xlu0 %v1728, 24
      %v1813 = vpop.permute.xlu0 %1812
      %1814 = vrot.lane.b32.xlu0 %v1729, 24
      %v1815 = vpop.permute.xlu0 %1814
      %1816 = vrot.lane.b32.xlu0 %v1730, 24
      %v1817 = vpop.permute.xlu0 %1816
      %1818 = vrot.lane.b32.xlu0 %v1731, 24
      %v1819 = vpop.permute.xlu0 %1818
      %1820 = vrot.lane.b32.xlu0 %v1732, 24
      %v1821 = vpop.permute.xlu0 %1820
      %1822 = vrot.lane.b32.xlu0 %v1733, 24
      %v1823 = vpop.permute.xlu0 %1822
      %1824 = vrot.lane.b32.xlu0 %v1734, 24
      %v1825 = vpop.permute.xlu0 %1824
      %1826 = vrot.lane.b32.xlu0 %v1735, 24
      %v1827 = vpop.permute.xlu0 %1826
      %1828 = vrot.lane.b32.xlu0 %v1736, 24
      %v1829 = vpop.permute.xlu0 %1828
      %1830 = vrot.lane.b32.xlu0 %v1737, 24
      %v1831 = vpop.permute.xlu0 %1830
      %1832 = vrot.lane.b32.xlu0 %v1738, 24
      %v1833 = vpop.permute.xlu0 %1832
      %1834 = vrot.lane.b32.xlu0 %v1739, 24
      %v1835 = vpop.permute.xlu0 %1834
      %vm1868 = vcmask 220352
      %1869 = vst.msk [vmem:[#allocation3] sm:$0xff] %vm1868, %v1773
      %1870 = vst.msk [vmem:[#allocation3 + $0x8] sm:$0xff] %vm1868, %v1775
      %1871 = vst.msk [vmem:[#allocation3 + $0x10] sm:$0xff] %vm1868, %v1777
      %1872 = vst.msk [vmem:[#allocation3 + $0x18] sm:$0xff] %vm1868, %v1779
      %1873 = vst.msk [vmem:[#allocation3 + $0x20] sm:$0xff] %vm1868, %v1781
      %1874 = vst.msk [vmem:[#allocation3 + $0x28] sm:$0xff] %vm1868, %v1783
      %1875 = vst.msk [vmem:[#allocation3 + $0x30] sm:$0xff] %vm1868, %v1785
      %1876 = vst.msk [vmem:[#allocation3 + $0x38] sm:$0xff] %vm1868, %v1787
      %1877 = vst.msk [vmem:[#allocation3 + $0x40] sm:$0xff] %vm1868, %v1789
      %1878 = vst.msk [vmem:[#allocation3 + $0x48] sm:$0xff] %vm1868, %v1791
      %1879 = vst.msk [vmem:[#allocation3 + $0x50] sm:$0xff] %vm1868, %v1793
      %1880 = vst.msk [vmem:[#allocation3 + $0x58] sm:$0xff] %vm1868, %v1795
      %1881 = vst.msk [vmem:[#allocation3 + $0x60] sm:$0xff] %vm1868, %v1797
      %1882 = vst.msk [vmem:[#allocation3 + $0x68] sm:$0xff] %vm1868, %v1799
      %1883 = vst.msk [vmem:[#allocation3 + $0x70] sm:$0xff] %vm1868, %v1801
      %1884 = vst.msk [vmem:[#allocation3 + $0x78] sm:$0xff] %vm1868, %v1803
      %1885 = vst.msk [vmem:[#allocation3 + $0x80] sm:$0xff] %vm1868, %v1805
      %1886 = vst.msk [vmem:[#allocation3 + $0x88] sm:$0xff] %vm1868, %v1807
      %1887 = vst.msk [vmem:[#allocation3 + $0x90] sm:$0xff] %vm1868, %v1809
      %1888 = vst.msk [vmem:[#allocation3 + $0x98] sm:$0xff] %vm1868, %v1811
      %1889 = vst.msk [vmem:[#allocation3 + $0xa0] sm:$0xff] %vm1868, %v1813
      %1890 = vst.msk [vmem:[#allocation3 + $0xa8] sm:$0xff] %vm1868, %v1815
      %1891 = vst.msk [vmem:[#allocation3 + $0xb0] sm:$0xff] %vm1868, %v1817
      %1892 = vst.msk [vmem:[#allocation3 + $0xb8] sm:$0xff] %vm1868, %v1819
      %1893 = vst.msk [vmem:[#allocation3 + $0xc0] sm:$0xff] %vm1868, %v1821
      %1894 = vst.msk [vmem:[#allocation3 + $0xc8] sm:$0xff] %vm1868, %v1823
      %1895 = vst.msk [vmem:[#allocation3 + $0xd0] sm:$0xff] %vm1868, %v1825
      %1896 = vst.msk [vmem:[#allocation3 + $0xd8] sm:$0xff] %vm1868, %v1827
      %1897 = vst.msk [vmem:[#allocation3 + $0xe0] sm:$0xff] %vm1868, %v1829
      %1898 = vst.msk [vmem:[#allocation3 + $0xe8] sm:$0xff] %vm1868, %v1831
      %1899 = vst.msk [vmem:[#allocation3 + $0xf0] sm:$0xff] %vm1868, %v1833
      %1900 = vst.msk [vmem:[#allocation3 + $0xf8] sm:$0xff] %vm1868, %v1835
      %v1901 = vld [vmem:[#allocation3] sm:$0xff]
      %v1902 = vld [vmem:[#allocation3 + $0x8] sm:$0xff]
      %v1903 = vld [vmem:[#allocation3 + $0x10] sm:$0xff]
      %v1904 = vld [vmem:[#allocation3 + $0x18] sm:$0xff]
      %v1905 = vld [vmem:[#allocation3 + $0x20] sm:$0xff]
      %v1906 = vld [vmem:[#allocation3 + $0x28] sm:$0xff]
      %v1907 = vld [vmem:[#allocation3 + $0x30] sm:$0xff]
      %v1908 = vld [vmem:[#allocation3 + $0x38] sm:$0xff]
      %v1909 = vld [vmem:[#allocation3 + $0x40] sm:$0xff]
      %v1910 = vld [vmem:[#allocation3 + $0x48] sm:$0xff]
      %v1911 = vld [vmem:[#allocation3 + $0x50] sm:$0xff]
      %v1912 = vld [vmem:[#allocation3 + $0x58] sm:$0xff]
      %v1913 = vld [vmem:[#allocation3 + $0x60] sm:$0xff]
      %v1914 = vld [vmem:[#allocation3 + $0x68] sm:$0xff]
      %v1915 = vld [vmem:[#allocation3 + $0x70] sm:$0xff]
      %v1916 = vld [vmem:[#allocation3 + $0x78] sm:$0xff]
      %v1917 = vld [vmem:[#allocation3 + $0x80] sm:$0xff]
      %v1918 = vld [vmem:[#allocation3 + $0x88] sm:$0xff]
      %v1919 = vld [vmem:[#allocation3 + $0x90] sm:$0xff]
      %v1920 = vld [vmem:[#allocation3 + $0x98] sm:$0xff]
      %v1921 = vld [vmem:[#allocation3 + $0xa0] sm:$0xff]
      %v1922 = vld [vmem:[#allocation3 + $0xa8] sm:$0xff]
      %v1923 = vld [vmem:[#allocation3 + $0xb0] sm:$0xff]
      %v1924 = vld [vmem:[#allocation3 + $0xb8] sm:$0xff]
      %v1925 = vld [vmem:[#allocation3 + $0xc0] sm:$0xff]
      %v1926 = vld [vmem:[#allocation3 + $0xc8] sm:$0xff]
      %v1927 = vld [vmem:[#allocation3 + $0xd0] sm:$0xff]
      %v1928 = vld [vmem:[#allocation3 + $0xd8] sm:$0xff]
      %v1929 = vld [vmem:[#allocation3 + $0xe0] sm:$0xff]
      %v1930 = vld [vmem:[#allocation3 + $0xe8] sm:$0xff]
      %v1931 = vld [vmem:[#allocation3 + $0xf0] sm:$0xff]
      %v1932 = vld [vmem:[#allocation3 + $0xf8] sm:$0xff]
      %v1933 = vld [vmem:[%s1] sm:$0xff]
      %v1934 = vld [vmem:[%s1 + $0x8] sm:$0xff]
      %v1935 = vld [vmem:[%s1 + $0x10] sm:$0xff]
      %v1936 = vld [vmem:[%s1 + $0x18] sm:$0x7]
      %v1937 = vld [vmem:[%s2] sm:$0x1]
      %v1939 = vlaneseq
      %v1940 = vshrl.u32 %v1939, 7
      %v1941 = vsub.s32 0, %v1940
      %v1942 = vrot.slane %v1937, %v1941
      %vm1944 = vcmask 220160
      %v1946 = vsel %vm1944, %v1901, 0
      %v1949 = vsel %vm1944, %v1902, 0
      %v1952 = vsel %vm1944, %v1903, 0
      %v1955 = vsel %vm1944, %v1904, 0
      %v1958 = vsel %vm1944, %v1905, 0
      %v1961 = vsel %vm1944, %v1906, 0
      %v1964 = vsel %vm1944, %v1907, 0
      %v1967 = vsel %vm1944, %v1908, 0
      %v1970 = vsel %vm1944, %v1909, 0
      %v1973 = vsel %vm1944, %v1910, 0
      %v1976 = vsel %vm1944, %v1911, 0
      %v1979 = vsel %vm1944, %v1912, 0
      %v1982 = vsel %vm1944, %v1913, 0
      %v1985 = vsel %vm1944, %v1914, 0
      %v1988 = vsel %vm1944, %v1915, 0
      %v1991 = vsel %vm1944, %v1916, 0
      %v1994 = vsel %vm1944, %v1917, 0
      %v1997 = vsel %vm1944, %v1918, 0
      %v2000 = vsel %vm1944, %v1919, 0
      %v2003 = vsel %vm1944, %v1920, 0
      %v2006 = vsel %vm1944, %v1921, 0
      %v2009 = vsel %vm1944, %v1922, 0
      %v2012 = vsel %vm1944, %v1923, 0
      %v2015 = vsel %vm1944, %v1924, 0
      %v2018 = vsel %vm1944, %v1925, 0
      %v2021 = vsel %vm1944, %v1926, 0
      %v2024 = vsel %vm1944, %v1927, 0
      %v2027 = vsel %vm1944, %v1928, 0
      %v2030 = vsel %vm1944, %v1929, 0
      %v2033 = vsel %vm1944, %v1930, 0
      %v2036 = vsel %vm1944, %v1931, 0
      %v2039 = vsel %vm1944, %v1932, 0
      %vm2041 = vcmask 1042432
      %v2043 = vsel %vm2041, %v1936, 0
      %2045 = vmatprep.subr.mxu0 0.0
      %2046 = vmatpush1.msra.mxu0 %v1933
      %2047 = vmatprep.subr.mxu0 0.0
      %2048 = vmatpush1.msra.mxu0 %v1934
      %2049 = vmatprep.subr.mxu0 0.0
      %2050 = vmatpush1.msra.mxu0 %v1935
      %2051 = vmatprep.subr.mxu0 0.0
      %2052 = vmatpush1.msra.mxu0 %v2043
      %2053 = vmatprep.subr.mxu0 0.0
      %2054 = vmatpush1.msra.mxu0 0.0
      %2055 = vmatprep.subr.mxu0 0.0
      %2056 = vmatpush1.msra.mxu0 0.0
      %2057 = vmatprep.subr.mxu0 0.0
      %2058 = vmatpush1.msra.mxu0 0.0
      %2059 = vmatprep.subr.mxu0 0.0
      %2060 = vmatpush1.msra.mxu0 0.0
      %2061 = vmatprep.subr.mxu0 0.0
      %2062 = vmatpush1.msra.mxu0 0.0
      %2063 = vmatprep.subr.mxu0 0.0
      %2064 = vmatpush1.msra.mxu0 0.0
      %2065 = vmatprep.subr.mxu0 0.0
      %2066 = vmatpush1.msra.mxu0 0.0
      %2067 = vmatprep.subr.mxu0 0.0
      %2068 = vmatpush1.msra.mxu0 0.0
      %2069 = vmatprep.subr.mxu0 0.0
      %2070 = vmatpush1.msra.mxu0 0.0
      %2071 = vmatprep.subr.mxu0 0.0
      %2072 = vmatpush1.msra.mxu0 0.0
      %2073 = vmatprep.subr.mxu0 0.0
      %2074 = vmatpush1.msra.mxu0 0.0
      %2075 = vmatprep.subr.mxu0 0.0
      %2076 = vmatpush1.msra.mxu0 0.0
      %2077 = vmatprep.subr.mxu0 0.0
      %2078 = vmatpush1.msra.mxu0 0.0
      %2079 = vmatprep.subr.mxu0 0.0
      %2080 = vmatpush1.msra.mxu0 0.0
      %2081 = vmatprep.subr.mxu0 0.0
      %2082 = vmatpush1.msra.mxu0 0.0
      %2083 = vmatprep.subr.mxu0 0.0
      %2084 = vmatpush1.msra.mxu0 0.0
      %2085 = vmatprep.subr.mxu0 0.0
      %2086 = vmatpush1.msra.mxu0 0.0
      %2087 = vmatprep.subr.mxu0 0.0
      %2088 = vmatpush1.msra.mxu0 0.0
      %2089 = vmatprep.subr.mxu0 0.0
      %2090 = vmatpush1.msra.mxu0 0.0
      %2091 = vmatprep.subr.mxu0 0.0
      %2092 = vmatpush1.msra.mxu0 0.0
      %2093 = vmatprep.subr.mxu0 0.0
      %2094 = vmatpush1.msra.mxu0 0.0
      %2095 = vmatprep.subr.mxu0 0.0
      %2096 = vmatpush1.msra.mxu0 0.0
      %2097 = vmatprep.subr.mxu0 0.0
      %2098 = vmatpush1.msra.mxu0 0.0
      %2099 = vmatprep.subr.mxu0 0.0
      %2100 = vmatpush1.msra.mxu0 0.0
      %2101 = vmatprep.subr.mxu0 0.0
      %2102 = vmatpush1.msra.mxu0 0.0
      %2103 = vmatprep.subr.mxu0 0.0
      %2104 = vmatpush1.msra.mxu0 0.0
      %2105 = vmatprep.subr.mxu0 0.0
      %2106 = vmatpush1.msra.mxu0 0.0
      %2107 = vmatprep.subr.mxu0 0.0
      %2108 = vmatpush1.msra.mxu0 0.0
      %2109 = vmatprep.mubr.f32.mxu0 0.0
      %2110 = vmatmul.mubr.f32.gmra.mrb[0].mxu0 %v1946
      %v2111 = vpop.f32.mrb[0].mxu0
      %v2112 = vadd.f32 %v1942, %v2111
      %v2113 = vpop.f32.mrb[0].mxu0
      %2114 = vmatprep.mubr.f32.mxu0 0.0
      %2115 = vmatmul.mubr.f32.gmra.mrb[0].mxu0 %v1949
      %v2116 = vpop.f32.mrb[0].mxu0
      %v2117 = vadd.f32 %v1942, %v2116
      %v2118 = vpop.f32.mrb[0].mxu0
      %2119 = vmatprep.mubr.f32.mxu0 0.0
      %2120 = vmatmul.mubr.f32.gmra.mrb[0].mxu0 %v1952
      %v2121 = vpop.f32.mrb[0].mxu0
      %v2122 = vadd.f32 %v1942, %v2121
      %v2123 = vpop.f32.mrb[0].mxu0
      %2124 = vmatprep.mubr.f32.mxu0 0.0
      %2125 = vmatmul.mubr.f32.gmra.mrb[0].mxu0 %v1955
      %v2126 = vpop.f32.mrb[0].mxu0
      %v2127 = vadd.f32 %v1942, %v2126
      %v2128 = vpop.f32.mrb[0].mxu0
      %2129 = vmatprep.mubr.f32.mxu0 0.0
      %2130 = vmatmul.mubr.f32.gmra.mrb[0].mxu0 %v1958
      %v2131 = vpop.f32.mrb[0].mxu0
      %v2132 = vadd.f32 %v1942, %v2131
      %v2133 = vpop.f32.mrb[0].mxu0
      %2134 = vmatprep.mubr.f32.mxu0 0.0
      %2135 = vmatmul.mubr.f32.gmra.mrb[0].mxu0 %v1961
      %v2136 = vpop.f32.mrb[0].mxu0
      %v2137 = vadd.f32 %v1942, %v2136
      %v2138 = vpop.f32.mrb[0].mxu0
      %2139 = vmatprep.mubr.f32.mxu0 0.0
      %2140 = vmatmul.mubr.f32.gmra.mrb[0].mxu0 %v1964
      %v2141 = vpop.f32.mrb[0].mxu0
      %v2142 = vadd.f32 %v1942, %v2141
      %v2143 = vpop.f32.mrb[0].mxu0
      %2144 = vmatprep.mubr.f32.mxu0 0.0
      %2145 = vmatmul.mubr.f32.gmra.mrb[0].mxu0 %v1967
      %v2146 = vpop.f32.mrb[0].mxu0
      %v2147 = vadd.f32 %v1942, %v2146
      %v2148 = vpop.f32.mrb[0].mxu0
      %2149 = vmatprep.mubr.f32.mxu0 0.0
      %2150 = vmatmul.mubr.f32.gmra.mrb[0].mxu0 %v1970
      %v2151 = vpop.f32.mrb[0].mxu0
      %v2152 = vadd.f32 %v1942, %v2151
      %v2153 = vpop.f32.mrb[0].mxu0
      %2154 = vmatprep.mubr.f32.mxu0 0.0
      %2155 = vmatmul.mubr.f32.gmra.mrb[0].mxu0 %v1973
      %v2156 = vpop.f32.mrb[0].mxu0
      %v2157 = vadd.f32 %v1942, %v2156
      %v2158 = vpop.f32.mrb[0].mxu0
      %2159 = vmatprep.mubr.f32.mxu0 0.0
      %2160 = vmatmul.mubr.f32.gmra.mrb[0].mxu0 %v1976
      %v2161 = vpop.f32.mrb[0].mxu0
      %v2162 = vadd.f32 %v1942, %v2161
      %v2163 = vpop.f32.mrb[0].mxu0
      %2164 = vmatprep.mubr.f32.mxu0 0.0
      %2165 = vmatmul.mubr.f32.gmra.mrb[0].mxu0 %v1979
      %v2166 = vpop.f32.mrb[0].mxu0
      %v2167 = vadd.f32 %v1942, %v2166
      %v2168 = vpop.f32.mrb[0].mxu0
      %2169 = vmatprep.mubr.f32.mxu0 0.0
      %2170 = vmatmul.mubr.f32.gmra.mrb[0].mxu0 %v1982
      %v2171 = vpop.f32.mrb[0].mxu0
      %v2172 = vadd.f32 %v1942, %v2171
      %v2173 = vpop.f32.mrb[0].mxu0
      %2174 = vmatprep.mubr.f32.mxu0 0.0
      %2175 = vmatmul.mubr.f32.gmra.mrb[0].mxu0 %v1985
      %v2176 = vpop.f32.mrb[0].mxu0
      %v2177 = vadd.f32 %v1942, %v2176
      %v2178 = vpop.f32.mrb[0].mxu0
      %2179 = vmatprep.mubr.f32.mxu0 0.0
      %2180 = vmatmul.mubr.f32.gmra.mrb[0].mxu0 %v1988
      %v2181 = vpop.f32.mrb[0].mxu0
      %v2182 = vadd.f32 %v1942, %v2181
      %v2183 = vpop.f32.mrb[0].mxu0
      %2184 = vmatprep.mubr.f32.mxu0 0.0
      %2185 = vmatmul.mubr.f32.gmra.mrb[0].mxu0 %v1991
      %v2186 = vpop.f32.mrb[0].mxu0
      %v2187 = vadd.f32 %v1942, %v2186
      %v2188 = vpop.f32.mrb[0].mxu0
      %2189 = vmatprep.mubr.f32.mxu0 0.0
      %2190 = vmatmul.mubr.f32.gmra.mrb[0].mxu0 %v1994
      %v2191 = vpop.f32.mrb[0].mxu0
      %v2192 = vadd.f32 %v1942, %v2191
      %v2193 = vpop.f32.mrb[0].mxu0
      %2194 = vmatprep.mubr.f32.mxu0 0.0
      %2195 = vmatmul.mubr.f32.gmra.mrb[0].mxu0 %v1997
      %v2196 = vpop.f32.mrb[0].mxu0
      %v2197 = vadd.f32 %v1942, %v2196
      %v2198 = vpop.f32.mrb[0].mxu0
      %2199 = vmatprep.mubr.f32.mxu0 0.0
      %2200 = vmatmul.mubr.f32.gmra.mrb[0].mxu0 %v2000
      %v2201 = vpop.f32.mrb[0].mxu0
      %v2202 = vadd.f32 %v1942, %v2201
      %v2203 = vpop.f32.mrb[0].mxu0
      %2204 = vmatprep.mubr.f32.mxu0 0.0
      %2205 = vmatmul.mubr.f32.gmra.mrb[0].mxu0 %v2003
      %v2206 = vpop.f32.mrb[0].mxu0
      %v2207 = vadd.f32 %v1942, %v2206
      %v2208 = vpop.f32.mrb[0].mxu0
      %2209 = vmatprep.mubr.f32.mxu0 0.0
      %2210 = vmatmul.mubr.f32.gmra.mrb[0].mxu0 %v2006
      %v2211 = vpop.f32.mrb[0].mxu0
      %v2212 = vadd.f32 %v1942, %v2211
      %v2213 = vpop.f32.mrb[0].mxu0
      %2214 = vmatprep.mubr.f32.mxu0 0.0
      %2215 = vmatmul.mubr.f32.gmra.mrb[0].mxu0 %v2009
      %v2216 = vpop.f32.mrb[0].mxu0
      %v2217 = vadd.f32 %v1942, %v2216
      %v2218 = vpop.f32.mrb[0].mxu0
      %2219 = vmatprep.mubr.f32.mxu0 0.0
      %2220 = vmatmul.mubr.f32.gmra.mrb[0].mxu0 %v2012
      %v2221 = vpop.f32.mrb[0].mxu0
      %v2222 = vadd.f32 %v1942, %v2221
      %v2223 = vpop.f32.mrb[0].mxu0
      %2224 = vmatprep.mubr.f32.mxu0 0.0
      %2225 = vmatmul.mubr.f32.gmra.mrb[0].mxu0 %v2015
      %v2226 = vpop.f32.mrb[0].mxu0
      %v2227 = vadd.f32 %v1942, %v2226
      %v2228 = vpop.f32.mrb[0].mxu0
      %2229 = vmatprep.mubr.f32.mxu0 0.0
      %2230 = vmatmul.mubr.f32.gmra.mrb[0].mxu0 %v2018
      %v2231 = vpop.f32.mrb[0].mxu0
      %v2232 = vadd.f32 %v1942, %v2231
      %v2233 = vpop.f32.mrb[0].mxu0
      %2234 = vmatprep.mubr.f32.mxu0 0.0
      %2235 = vmatmul.mubr.f32.gmra.mrb[0].mxu0 %v2021
      %v2236 = vpop.f32.mrb[0].mxu0
      %v2237 = vadd.f32 %v1942, %v2236
      %v2238 = vpop.f32.mrb[0].mxu0
      %2239 = vmatprep.mubr.f32.mxu0 0.0
      %2240 = vmatmul.mubr.f32.gmra.mrb[0].mxu0 %v2024
      %v2241 = vpop.f32.mrb[0].mxu0
      %v2242 = vadd.f32 %v1942, %v2241
      %v2243 = vpop.f32.mrb[0].mxu0
      %2244 = vmatprep.mubr.f32.mxu0 0.0
      %2245 = vmatmul.mubr.f32.gmra.mrb[0].mxu0 %v2027
      %v2246 = vpop.f32.mrb[0].mxu0
      %v2247 = vadd.f32 %v1942, %v2246
      %v2248 = vpop.f32.mrb[0].mxu0
      %2249 = vmatprep.mubr.f32.mxu0 0.0
      %2250 = vmatmul.mubr.f32.gmra.mrb[0].mxu0 %v2030
      %v2251 = vpop.f32.mrb[0].mxu0
      %v2252 = vadd.f32 %v1942, %v2251
      %v2253 = vpop.f32.mrb[0].mxu0
      %2254 = vmatprep.mubr.f32.mxu0 0.0
      %2255 = vmatmul.mubr.f32.gmra.mrb[0].mxu0 %v2033
      %v2256 = vpop.f32.mrb[0].mxu0
      %v2257 = vadd.f32 %v1942, %v2256
      %v2258 = vpop.f32.mrb[0].mxu0
      %2259 = vmatprep.mubr.f32.mxu0 0.0
      %2260 = vmatmul.mubr.f32.gmra.mrb[0].mxu0 %v2036
      %v2261 = vpop.f32.mrb[0].mxu0
      %v2262 = vadd.f32 %v1942, %v2261
      %v2263 = vpop.f32.mrb[0].mxu0
      %2264 = vmatprep.mubr.f32.mxu0 0.0
      %2265 = vmatmul.mubr.f32.gmra.mrb[0].mxu0 %v2039
      %v2266 = vpop.f32.mrb[0].mxu0
      %v2267 = vadd.f32 %v1942, %v2266
      %v2268 = vpop.f32.mrb[0].mxu0
      %2269 = vdwg.mxu0
      %v2270 = vmax.f32 %v2112, 0.0
      %v2271 = vmax.f32 %v2117, 0.0
      %v2272 = vmax.f32 %v2122, 0.0
      %v2273 = vmax.f32 %v2127, 0.0
      %v2274 = vmax.f32 %v2132, 0.0
      %v2275 = vmax.f32 %v2137, 0.0
      %v2276 = vmax.f32 %v2142, 0.0
      %v2277 = vmax.f32 %v2147, 0.0
      %v2278 = vmax.f32 %v2152, 0.0
      %v2279 = vmax.f32 %v2157, 0.0
      %v2280 = vmax.f32 %v2162, 0.0
      %v2281 = vmax.f32 %v2167, 0.0
      %v2282 = vmax.f32 %v2172, 0.0
      %v2283 = vmax.f32 %v2177, 0.0
      %v2284 = vmax.f32 %v2182, 0.0
      %v2285 = vmax.f32 %v2187, 0.0
      %v2286 = vmax.f32 %v2192, 0.0
      %v2287 = vmax.f32 %v2197, 0.0
      %v2288 = vmax.f32 %v2202, 0.0
      %v2289 = vmax.f32 %v2207, 0.0
      %v2290 = vmax.f32 %v2212, 0.0
      %v2291 = vmax.f32 %v2217, 0.0
      %v2292 = vmax.f32 %v2222, 0.0
      %v2293 = vmax.f32 %v2227, 0.0
      %v2294 = vmax.f32 %v2232, 0.0
      %v2295 = vmax.f32 %v2237, 0.0
      %v2296 = vmax.f32 %v2242, 0.0
      %v2297 = vmax.f32 %v2247, 0.0
      %v2298 = vmax.f32 %v2252, 0.0
      %v2299 = vmax.f32 %v2257, 0.0
      %v2300 = vmax.f32 %v2262, 0.0
      %v2301 = vmax.f32 %v2267, 0.0
      %v2334 = vcombine.high %v2270, %v2270
      %v2336 = vunpack.c.l.s4 1983009808
      %v2337 = vunpack.c.0.s8 %v2336
      %v2338 = vlaneseq
      %v2339 = vshrl.u32 %v2338, 7
      %v2340 = vsub.s32 %v2337, %v2339
      %v2341 = vrot.slane %v2270, %v2340
      %v2343 = vunpack.c.l.s4 1983009808
      %v2344 = vunpack.c.0.s8 %v2343
      %v2345 = vlaneseq
      %v2346 = vshrl.u32 %v2345, 7
      %v2347 = vsub.s32 %v2344, %v2346
      %v2348 = vrot.slane %v2334, %v2347
      %v2349 = vcombine.high %v2341, %v2341
      %v2350 = vcombine.high %v2348, %v2348
      %v2351 = vcombine.high %v2271, %v2271
      %v2353 = vunpack.c.l.s4 1983009808
      %v2354 = vunpack.c.0.s8 %v2353
      %v2355 = vlaneseq
      %v2356 = vshrl.u32 %v2355, 7
      %v2357 = vsub.s32 %v2354, %v2356
      %v2358 = vrot.slane %v2271, %v2357
      %v2360 = vunpack.c.l.s4 1983009808
      %v2361 = vunpack.c.0.s8 %v2360
      %v2362 = vlaneseq
      %v2363 = vshrl.u32 %v2362, 7
      %v2364 = vsub.s32 %v2361, %v2363
      %v2365 = vrot.slane %v2351, %v2364
      %v2366 = vcombine.high %v2358, %v2358
      %v2367 = vcombine.high %v2365, %v2365
      %v2368 = vcombine.high %v2272, %v2272
      %v2370 = vunpack.c.l.s4 1983009808
      %v2371 = vunpack.c.0.s8 %v2370
      %v2372 = vlaneseq
      %v2373 = vshrl.u32 %v2372, 7
      %v2374 = vsub.s32 %v2371, %v2373
      %v2375 = vrot.slane %v2272, %v2374
      %v2377 = vunpack.c.l.s4 1983009808
      %v2378 = vunpack.c.0.s8 %v2377
      %v2379 = vlaneseq
      %v2380 = vshrl.u32 %v2379, 7
      %v2381 = vsub.s32 %v2378, %v2380
      %v2382 = vrot.slane %v2368, %v2381
      %v2383 = vcombine.high %v2375, %v2375
      %v2384 = vcombine.high %v2382, %v2382
      %v2385 = vcombine.high %v2273, %v2273
      %v2387 = vunpack.c.l.s4 1983009808
      %v2388 = vunpack.c.0.s8 %v2387
      %v2389 = vlaneseq
      %v2390 = vshrl.u32 %v2389, 7
      %v2391 = vsub.s32 %v2388, %v2390
      %v2392 = vrot.slane %v2273, %v2391
      %v2394 = vunpack.c.l.s4 1983009808
      %v2395 = vunpack.c.0.s8 %v2394
      %v2396 = vlaneseq
      %v2397 = vshrl.u32 %v2396, 7
      %v2398 = vsub.s32 %v2395, %v2397
      %v2399 = vrot.slane %v2385, %v2398
      %v2400 = vcombine.high %v2392, %v2392
      %v2401 = vcombine.high %v2399, %v2399
      %v2402 = vcombine.high %v2274, %v2274
      %v2404 = vunpack.c.l.s4 1983009808
      %v2405 = vunpack.c.0.s8 %v2404
      %v2406 = vlaneseq
      %v2407 = vshrl.u32 %v2406, 7
      %v2408 = vsub.s32 %v2405, %v2407
      %v2409 = vrot.slane %v2274, %v2408
      %v2411 = vunpack.c.l.s4 1983009808
      %v2412 = vunpack.c.0.s8 %v2411
      %v2413 = vlaneseq
      %v2414 = vshrl.u32 %v2413, 7
      %v2415 = vsub.s32 %v2412, %v2414
      %v2416 = vrot.slane %v2402, %v2415
      %v2417 = vcombine.high %v2409, %v2409
      %v2418 = vcombine.high %v2416, %v2416
      %v2419 = vcombine.high %v2275, %v2275
      %v2421 = vunpack.c.l.s4 1983009808
      %v2422 = vunpack.c.0.s8 %v2421
      %v2423 = vlaneseq
      %v2424 = vshrl.u32 %v2423, 7
      %v2425 = vsub.s32 %v2422, %v2424
      %v2426 = vrot.slane %v2275, %v2425
      %v2428 = vunpack.c.l.s4 1983009808
      %v2429 = vunpack.c.0.s8 %v2428
      %v2430 = vlaneseq
      %v2431 = vshrl.u32 %v2430, 7
      %v2432 = vsub.s32 %v2429, %v2431
      %v2433 = vrot.slane %v2419, %v2432
      %v2434 = vcombine.high %v2426, %v2426
      %v2435 = vcombine.high %v2433, %v2433
      %v2436 = vcombine.high %v2276, %v2276
      %v2438 = vunpack.c.l.s4 1983009808
      %v2439 = vunpack.c.0.s8 %v2438
      %v2440 = vlaneseq
      %v2441 = vshrl.u32 %v2440, 7
      %v2442 = vsub.s32 %v2439, %v2441
      %v2443 = vrot.slane %v2276, %v2442
      %v2445 = vunpack.c.l.s4 1983009808
      %v2446 = vunpack.c.0.s8 %v2445
      %v2447 = vlaneseq
      %v2448 = vshrl.u32 %v2447, 7
      %v2449 = vsub.s32 %v2446, %v2448
      %v2450 = vrot.slane %v2436, %v2449
      %v2451 = vcombine.high %v2443, %v2443
      %v2452 = vcombine.high %v2450, %v2450
      %v2453 = vcombine.high %v2277, %v2277
      %v2455 = vunpack.c.l.s4 1983009808
      %v2456 = vunpack.c.0.s8 %v2455
      %v2457 = vlaneseq
      %v2458 = vshrl.u32 %v2457, 7
      %v2459 = vsub.s32 %v2456, %v2458
      %v2460 = vrot.slane %v2277, %v2459
      %v2462 = vunpack.c.l.s4 1983009808
      %v2463 = vunpack.c.0.s8 %v2462
      %v2464 = vlaneseq
      %v2465 = vshrl.u32 %v2464, 7
      %v2466 = vsub.s32 %v2463, %v2465
      %v2467 = vrot.slane %v2453, %v2466
      %v2468 = vcombine.high %v2460, %v2460
      %v2469 = vcombine.high %v2467, %v2467
      %v2470 = vcombine.high %v2278, %v2278
      %v2472 = vunpack.c.l.s4 1983009808
      %v2473 = vunpack.c.0.s8 %v2472
      %v2474 = vlaneseq
      %v2475 = vshrl.u32 %v2474, 7
      %v2476 = vsub.s32 %v2473, %v2475
      %v2477 = vrot.slane %v2278, %v2476
      %v2479 = vunpack.c.l.s4 1983009808
      %v2480 = vunpack.c.0.s8 %v2479
      %v2481 = vlaneseq
      %v2482 = vshrl.u32 %v2481, 7
      %v2483 = vsub.s32 %v2480, %v2482
      %v2484 = vrot.slane %v2470, %v2483
      %v2485 = vcombine.high %v2477, %v2477
      %v2486 = vcombine.high %v2484, %v2484
      %v2487 = vcombine.high %v2279, %v2279
      %v2489 = vunpack.c.l.s4 1983009808
      %v2490 = vunpack.c.0.s8 %v2489
      %v2491 = vlaneseq
      %v2492 = vshrl.u32 %v2491, 7
      %v2493 = vsub.s32 %v2490, %v2492
      %v2494 = vrot.slane %v2279, %v2493
      %v2496 = vunpack.c.l.s4 1983009808
      %v2497 = vunpack.c.0.s8 %v2496
      %v2498 = vlaneseq
      %v2499 = vshrl.u32 %v2498, 7
      %v2500 = vsub.s32 %v2497, %v2499
      %v2501 = vrot.slane %v2487, %v2500
      %v2502 = vcombine.high %v2494, %v2494
      %v2503 = vcombine.high %v2501, %v2501
      %v2504 = vcombine.high %v2280, %v2280
      %v2506 = vunpack.c.l.s4 1983009808
      %v2507 = vunpack.c.0.s8 %v2506
      %v2508 = vlaneseq
      %v2509 = vshrl.u32 %v2508, 7
      %v2510 = vsub.s32 %v2507, %v2509
      %v2511 = vrot.slane %v2280, %v2510
      %v2513 = vunpack.c.l.s4 1983009808
      %v2514 = vunpack.c.0.s8 %v2513
      %v2515 = vlaneseq
      %v2516 = vshrl.u32 %v2515, 7
      %v2517 = vsub.s32 %v2514, %v2516
      %v2518 = vrot.slane %v2504, %v2517
      %v2519 = vcombine.high %v2511, %v2511
      %v2520 = vcombine.high %v2518, %v2518
      %v2521 = vcombine.high %v2281, %v2281
      %v2523 = vunpack.c.l.s4 1983009808
      %v2524 = vunpack.c.0.s8 %v2523
      %v2525 = vlaneseq
      %v2526 = vshrl.u32 %v2525, 7
      %v2527 = vsub.s32 %v2524, %v2526
      %v2528 = vrot.slane %v2281, %v2527
      %v2530 = vunpack.c.l.s4 1983009808
      %v2531 = vunpack.c.0.s8 %v2530
      %v2532 = vlaneseq
      %v2533 = vshrl.u32 %v2532, 7
      %v2534 = vsub.s32 %v2531, %v2533
      %v2535 = vrot.slane %v2521, %v2534
      %v2536 = vcombine.high %v2528, %v2528
      %v2537 = vcombine.high %v2535, %v2535
      %v2538 = vcombine.high %v2282, %v2282
      %v2540 = vunpack.c.l.s4 1983009808
      %v2541 = vunpack.c.0.s8 %v2540
      %v2542 = vlaneseq
      %v2543 = vshrl.u32 %v2542, 7
      %v2544 = vsub.s32 %v2541, %v2543
      %v2545 = vrot.slane %v2282, %v2544
      %v2547 = vunpack.c.l.s4 1983009808
      %v2548 = vunpack.c.0.s8 %v2547
      %v2549 = vlaneseq
      %v2550 = vshrl.u32 %v2549, 7
      %v2551 = vsub.s32 %v2548, %v2550
      %v2552 = vrot.slane %v2538, %v2551
      %v2553 = vcombine.high %v2545, %v2545
      %v2554 = vcombine.high %v2552, %v2552
      %v2555 = vcombine.high %v2283, %v2283
      %v2557 = vunpack.c.l.s4 1983009808
      %v2558 = vunpack.c.0.s8 %v2557
      %v2559 = vlaneseq
      %v2560 = vshrl.u32 %v2559, 7
      %v2561 = vsub.s32 %v2558, %v2560
      %v2562 = vrot.slane %v2283, %v2561
      %v2564 = vunpack.c.l.s4 1983009808
      %v2565 = vunpack.c.0.s8 %v2564
      %v2566 = vlaneseq
      %v2567 = vshrl.u32 %v2566, 7
      %v2568 = vsub.s32 %v2565, %v2567
      %v2569 = vrot.slane %v2555, %v2568
      %v2570 = vcombine.high %v2562, %v2562
      %v2571 = vcombine.high %v2569, %v2569
      %v2572 = vcombine.high %v2284, %v2284
      %v2574 = vunpack.c.l.s4 1983009808
      %v2575 = vunpack.c.0.s8 %v2574
      %v2576 = vlaneseq
      %v2577 = vshrl.u32 %v2576, 7
      %v2578 = vsub.s32 %v2575, %v2577
      %v2579 = vrot.slane %v2284, %v2578
      %v2581 = vunpack.c.l.s4 1983009808
      %v2582 = vunpack.c.0.s8 %v2581
      %v2583 = vlaneseq
      %v2584 = vshrl.u32 %v2583, 7
      %v2585 = vsub.s32 %v2582, %v2584
      %v2586 = vrot.slane %v2572, %v2585
      %v2587 = vcombine.high %v2579, %v2579
      %v2588 = vcombine.high %v2586, %v2586
      %v2589 = vcombine.high %v2285, %v2285
      %v2591 = vunpack.c.l.s4 1983009808
      %v2592 = vunpack.c.0.s8 %v2591
      %v2593 = vlaneseq
      %v2594 = vshrl.u32 %v2593, 7
      %v2595 = vsub.s32 %v2592, %v2594
      %v2596 = vrot.slane %v2285, %v2595
      %v2598 = vunpack.c.l.s4 1983009808
      %v2599 = vunpack.c.0.s8 %v2598
      %v2600 = vlaneseq
      %v2601 = vshrl.u32 %v2600, 7
      %v2602 = vsub.s32 %v2599, %v2601
      %v2603 = vrot.slane %v2589, %v2602
      %v2604 = vcombine.high %v2596, %v2596
      %v2605 = vcombine.high %v2603, %v2603
      %v2606 = vcombine.high %v2286, %v2286
      %v2608 = vunpack.c.l.s4 1983009808
      %v2609 = vunpack.c.0.s8 %v2608
      %v2610 = vlaneseq
      %v2611 = vshrl.u32 %v2610, 7
      %v2612 = vsub.s32 %v2609, %v2611
      %v2613 = vrot.slane %v2286, %v2612
      %v2615 = vunpack.c.l.s4 1983009808
      %v2616 = vunpack.c.0.s8 %v2615
      %v2617 = vlaneseq
      %v2618 = vshrl.u32 %v2617, 7
      %v2619 = vsub.s32 %v2616, %v2618
      %v2620 = vrot.slane %v2606, %v2619
      %v2621 = vcombine.high %v2613, %v2613
      %v2622 = vcombine.high %v2620, %v2620
      %v2623 = vcombine.high %v2287, %v2287
      %v2625 = vunpack.c.l.s4 1983009808
      %v2626 = vunpack.c.0.s8 %v2625
      %v2627 = vlaneseq
      %v2628 = vshrl.u32 %v2627, 7
      %v2629 = vsub.s32 %v2626, %v2628
      %v2630 = vrot.slane %v2287, %v2629
      %v2632 = vunpack.c.l.s4 1983009808
      %v2633 = vunpack.c.0.s8 %v2632
      %v2634 = vlaneseq
      %v2635 = vshrl.u32 %v2634, 7
      %v2636 = vsub.s32 %v2633, %v2635
      %v2637 = vrot.slane %v2623, %v2636
      %v2638 = vcombine.high %v2630, %v2630
      %v2639 = vcombine.high %v2637, %v2637
      %v2640 = vcombine.high %v2288, %v2288
      %v2642 = vunpack.c.l.s4 1983009808
      %v2643 = vunpack.c.0.s8 %v2642
      %v2644 = vlaneseq
      %v2645 = vshrl.u32 %v2644, 7
      %v2646 = vsub.s32 %v2643, %v2645
      %v2647 = vrot.slane %v2288, %v2646
      %v2649 = vunpack.c.l.s4 1983009808
      %v2650 = vunpack.c.0.s8 %v2649
      %v2651 = vlaneseq
      %v2652 = vshrl.u32 %v2651, 7
      %v2653 = vsub.s32 %v2650, %v2652
      %v2654 = vrot.slane %v2640, %v2653
      %v2655 = vcombine.high %v2647, %v2647
      %v2656 = vcombine.high %v2654, %v2654
      %v2657 = vcombine.high %v2289, %v2289
      %v2659 = vunpack.c.l.s4 1983009808
      %v2660 = vunpack.c.0.s8 %v2659
      %v2661 = vlaneseq
      %v2662 = vshrl.u32 %v2661, 7
      %v2663 = vsub.s32 %v2660, %v2662
      %v2664 = vrot.slane %v2289, %v2663
      %v2666 = vunpack.c.l.s4 1983009808
      %v2667 = vunpack.c.0.s8 %v2666
      %v2668 = vlaneseq
      %v2669 = vshrl.u32 %v2668, 7
      %v2670 = vsub.s32 %v2667, %v2669
      %v2671 = vrot.slane %v2657, %v2670
      %v2672 = vcombine.high %v2664, %v2664
      %v2673 = vcombine.high %v2671, %v2671
      %v2674 = vcombine.high %v2290, %v2290
      %v2676 = vunpack.c.l.s4 1983009808
      %v2677 = vunpack.c.0.s8 %v2676
      %v2678 = vlaneseq
      %v2679 = vshrl.u32 %v2678, 7
      %v2680 = vsub.s32 %v2677, %v2679
      %v2681 = vrot.slane %v2290, %v2680
      %v2683 = vunpack.c.l.s4 1983009808
      %v2684 = vunpack.c.0.s8 %v2683
      %v2685 = vlaneseq
      %v2686 = vshrl.u32 %v2685, 7
      %v2687 = vsub.s32 %v2684, %v2686
      %v2688 = vrot.slane %v2674, %v2687
      %v2689 = vcombine.high %v2681, %v2681
      %v2690 = vcombine.high %v2688, %v2688
      %v2691 = vcombine.high %v2291, %v2291
      %v2693 = vunpack.c.l.s4 1983009808
      %v2694 = vunpack.c.0.s8 %v2693
      %v2695 = vlaneseq
      %v2696 = vshrl.u32 %v2695, 7
      %v2697 = vsub.s32 %v2694, %v2696
      %v2698 = vrot.slane %v2291, %v2697
      %v2700 = vunpack.c.l.s4 1983009808
      %v2701 = vunpack.c.0.s8 %v2700
      %v2702 = vlaneseq
      %v2703 = vshrl.u32 %v2702, 7
      %v2704 = vsub.s32 %v2701, %v2703
      %v2705 = vrot.slane %v2691, %v2704
      %v2706 = vcombine.high %v2698, %v2698
      %v2707 = vcombine.high %v2705, %v2705
      %v2708 = vcombine.high %v2292, %v2292
      %v2710 = vunpack.c.l.s4 1983009808
      %v2711 = vunpack.c.0.s8 %v2710
      %v2712 = vlaneseq
      %v2713 = vshrl.u32 %v2712, 7
      %v2714 = vsub.s32 %v2711, %v2713
      %v2715 = vrot.slane %v2292, %v2714
      %v2717 = vunpack.c.l.s4 1983009808
      %v2718 = vunpack.c.0.s8 %v2717
      %v2719 = vlaneseq
      %v2720 = vshrl.u32 %v2719, 7
      %v2721 = vsub.s32 %v2718, %v2720
      %v2722 = vrot.slane %v2708, %v2721
      %v2723 = vcombine.high %v2715, %v2715
      %v2724 = vcombine.high %v2722, %v2722
      %v2725 = vcombine.high %v2293, %v2293
      %v2727 = vunpack.c.l.s4 1983009808
      %v2728 = vunpack.c.0.s8 %v2727
      %v2729 = vlaneseq
      %v2730 = vshrl.u32 %v2729, 7
      %v2731 = vsub.s32 %v2728, %v2730
      %v2732 = vrot.slane %v2293, %v2731
      %v2734 = vunpack.c.l.s4 1983009808
      %v2735 = vunpack.c.0.s8 %v2734
      %v2736 = vlaneseq
      %v2737 = vshrl.u32 %v2736, 7
      %v2738 = vsub.s32 %v2735, %v2737
      %v2739 = vrot.slane %v2725, %v2738
      %v2740 = vcombine.high %v2732, %v2732
      %v2741 = vcombine.high %v2739, %v2739
      %v2742 = vcombine.high %v2294, %v2294
      %v2744 = vunpack.c.l.s4 1983009808
      %v2745 = vunpack.c.0.s8 %v2744
      %v2746 = vlaneseq
      %v2747 = vshrl.u32 %v2746, 7
      %v2748 = vsub.s32 %v2745, %v2747
      %v2749 = vrot.slane %v2294, %v2748
      %v2751 = vunpack.c.l.s4 1983009808
      %v2752 = vunpack.c.0.s8 %v2751
      %v2753 = vlaneseq
      %v2754 = vshrl.u32 %v2753, 7
      %v2755 = vsub.s32 %v2752, %v2754
      %v2756 = vrot.slane %v2742, %v2755
      %v2757 = vcombine.high %v2749, %v2749
      %v2758 = vcombine.high %v2756, %v2756
      %v2759 = vcombine.high %v2295, %v2295
      %v2761 = vunpack.c.l.s4 1983009808
      %v2762 = vunpack.c.0.s8 %v2761
      %v2763 = vlaneseq
      %v2764 = vshrl.u32 %v2763, 7
      %v2765 = vsub.s32 %v2762, %v2764
      %v2766 = vrot.slane %v2295, %v2765
      %v2768 = vunpack.c.l.s4 1983009808
      %v2769 = vunpack.c.0.s8 %v2768
      %v2770 = vlaneseq
      %v2771 = vshrl.u32 %v2770, 7
      %v2772 = vsub.s32 %v2769, %v2771
      %v2773 = vrot.slane %v2759, %v2772
      %v2774 = vcombine.high %v2766, %v2766
      %v2775 = vcombine.high %v2773, %v2773
      %v2776 = vcombine.high %v2296, %v2296
      %v2778 = vunpack.c.l.s4 1983009808
      %v2779 = vunpack.c.0.s8 %v2778
      %v2780 = vlaneseq
      %v2781 = vshrl.u32 %v2780, 7
      %v2782 = vsub.s32 %v2779, %v2781
      %v2783 = vrot.slane %v2296, %v2782
      %v2785 = vunpack.c.l.s4 1983009808
      %v2786 = vunpack.c.0.s8 %v2785
      %v2787 = vlaneseq
      %v2788 = vshrl.u32 %v2787, 7
      %v2789 = vsub.s32 %v2786, %v2788
      %v2790 = vrot.slane %v2776, %v2789
      %v2791 = vcombine.high %v2783, %v2783
      %v2792 = vcombine.high %v2790, %v2790
      %v2793 = vcombine.high %v2297, %v2297
      %v2795 = vunpack.c.l.s4 1983009808
      %v2796 = vunpack.c.0.s8 %v2795
      %v2797 = vlaneseq
      %v2798 = vshrl.u32 %v2797, 7
      %v2799 = vsub.s32 %v2796, %v2798
      %v2800 = vrot.slane %v2297, %v2799
      %v2802 = vunpack.c.l.s4 1983009808
      %v2803 = vunpack.c.0.s8 %v2802
      %v2804 = vlaneseq
      %v2805 = vshrl.u32 %v2804, 7
      %v2806 = vsub.s32 %v2803, %v2805
      %v2807 = vrot.slane %v2793, %v2806
      %v2808 = vcombine.high %v2800, %v2800
      %v2809 = vcombine.high %v2807, %v2807
      %v2810 = vcombine.high %v2298, %v2298
      %v2812 = vunpack.c.l.s4 1983009808
      %v2813 = vunpack.c.0.s8 %v2812
      %v2814 = vlaneseq
      %v2815 = vshrl.u32 %v2814, 7
      %v2816 = vsub.s32 %v2813, %v2815
      %v2817 = vrot.slane %v2298, %v2816
      %v2819 = vunpack.c.l.s4 1983009808
      %v2820 = vunpack.c.0.s8 %v2819
      %v2821 = vlaneseq
      %v2822 = vshrl.u32 %v2821, 7
      %v2823 = vsub.s32 %v2820, %v2822
      %v2824 = vrot.slane %v2810, %v2823
      %v2825 = vcombine.high %v2817, %v2817
      %v2826 = vcombine.high %v2824, %v2824
      %v2827 = vcombine.high %v2299, %v2299
      %v2829 = vunpack.c.l.s4 1983009808
      %v2830 = vunpack.c.0.s8 %v2829
      %v2831 = vlaneseq
      %v2832 = vshrl.u32 %v2831, 7
      %v2833 = vsub.s32 %v2830, %v2832
      %v2834 = vrot.slane %v2299, %v2833
      %v2836 = vunpack.c.l.s4 1983009808
      %v2837 = vunpack.c.0.s8 %v2836
      %v2838 = vlaneseq
      %v2839 = vshrl.u32 %v2838, 7
      %v2840 = vsub.s32 %v2837, %v2839
      %v2841 = vrot.slane %v2827, %v2840
      %v2842 = vcombine.high %v2834, %v2834
      %v2843 = vcombine.high %v2841, %v2841
      %v2844 = vcombine.high %v2300, %v2300
      %v2846 = vunpack.c.l.s4 1983009808
      %v2847 = vunpack.c.0.s8 %v2846
      %v2848 = vlaneseq
      %v2849 = vshrl.u32 %v2848, 7
      %v2850 = vsub.s32 %v2847, %v2849
      %v2851 = vrot.slane %v2300, %v2850
      %v2853 = vunpack.c.l.s4 1983009808
      %v2854 = vunpack.c.0.s8 %v2853
      %v2855 = vlaneseq
      %v2856 = vshrl.u32 %v2855, 7
      %v2857 = vsub.s32 %v2854, %v2856
      %v2858 = vrot.slane %v2844, %v2857
      %v2859 = vcombine.high %v2851, %v2851
      %v2860 = vcombine.high %v2858, %v2858
      %v2861 = vcombine.high %v2301, %v2301
      %v2863 = vunpack.c.l.s4 1983009808
      %v2864 = vunpack.c.0.s8 %v2863
      %v2865 = vlaneseq
      %v2866 = vshrl.u32 %v2865, 7
      %v2867 = vsub.s32 %v2864, %v2866
      %v2868 = vrot.slane %v2301, %v2867
      %v2870 = vunpack.c.l.s4 1983009808
      %v2871 = vunpack.c.0.s8 %v2870
      %v2872 = vlaneseq
      %v2873 = vshrl.u32 %v2872, 7
      %v2874 = vsub.s32 %v2871, %v2873
      %v2875 = vrot.slane %v2861, %v2874
      %v2876 = vcombine.high %v2868, %v2868
      %v2877 = vcombine.high %v2875, %v2875
      %v3006 = vrot.slane %v2341, 7
      %v3007 = vrot.slane %v3006, 2
      %v3008 = vrot.slane %v2349, 7
      %v3009 = vrot.slane %v3008, 2
      %v3010 = vrot.slane %v2348, 7
      %v3011 = vrot.slane %v3010, 2
      %v3012 = vrot.slane %v2350, 7
      %v3013 = vrot.slane %v3012, 2
      %v3014 = vrot.slane %v2358, 7
      %v3015 = vrot.slane %v3014, 2
      %v3016 = vrot.slane %v2366, 7
      %v3017 = vrot.slane %v3016, 2
      %v3018 = vrot.slane %v2365, 7
      %v3019 = vrot.slane %v3018, 2
      %v3020 = vrot.slane %v2367, 7
      %v3021 = vrot.slane %v3020, 2
      %v3022 = vrot.slane %v2375, 7
      %v3023 = vrot.slane %v3022, 2
      %v3024 = vrot.slane %v2383, 7
      %v3025 = vrot.slane %v3024, 2
      %v3026 = vrot.slane %v2382, 7
      %v3027 = vrot.slane %v3026, 2
      %v3028 = vrot.slane %v2384, 7
      %v3029 = vrot.slane %v3028, 2
      %v3030 = vrot.slane %v2392, 7
      %v3031 = vrot.slane %v3030, 2
      %v3032 = vrot.slane %v2400, 7
      %v3033 = vrot.slane %v3032, 2
      %v3034 = vrot.slane %v2399, 7
      %v3035 = vrot.slane %v3034, 2
      %v3036 = vrot.slane %v2401, 7
      %v3037 = vrot.slane %v3036, 2
      %v3038 = vrot.slane %v2409, 7
      %v3039 = vrot.slane %v3038, 2
      %v3040 = vrot.slane %v2417, 7
      %v3041 = vrot.slane %v3040, 2
      %v3042 = vrot.slane %v2416, 7
      %v3043 = vrot.slane %v3042, 2
      %v3044 = vrot.slane %v2418, 7
      %v3045 = vrot.slane %v3044, 2
      %v3046 = vrot.slane %v2426, 7
      %v3047 = vrot.slane %v3046, 2
      %v3048 = vrot.slane %v2434, 7
      %v3049 = vrot.slane %v3048, 2
      %v3050 = vrot.slane %v2433, 7
      %v3051 = vrot.slane %v3050, 2
      %v3052 = vrot.slane %v2435, 7
      %v3053 = vrot.slane %v3052, 2
      %v3054 = vrot.slane %v2443, 7
      %v3055 = vrot.slane %v3054, 2
      %v3056 = vrot.slane %v2451, 7
      %v3057 = vrot.slane %v3056, 2
      %v3058 = vrot.slane %v2450, 7
      %v3059 = vrot.slane %v3058, 2
      %v3060 = vrot.slane %v2452, 7
      %v3061 = vrot.slane %v3060, 2
      %v3062 = vrot.slane %v2460, 7
      %v3063 = vrot.slane %v3062, 2
      %v3064 = vrot.slane %v2468, 7
      %v3065 = vrot.slane %v3064, 2
      %v3066 = vrot.slane %v2467, 7
      %v3067 = vrot.slane %v3066, 2
      %v3068 = vrot.slane %v2469, 7
      %v3069 = vrot.slane %v3068, 2
      %v3070 = vrot.slane %v2477, 7
      %v3071 = vrot.slane %v3070, 2
      %v3072 = vrot.slane %v2485, 7
      %v3073 = vrot.slane %v3072, 2
      %v3074 = vrot.slane %v2484, 7
      %v3075 = vrot.slane %v3074, 2
      %v3076 = vrot.slane %v2486, 7
      %v3077 = vrot.slane %v3076, 2
      %v3078 = vrot.slane %v2494, 7
      %v3079 = vrot.slane %v3078, 2
      %v3080 = vrot.slane %v2502, 7
      %v3081 = vrot.slane %v3080, 2
      %v3082 = vrot.slane %v2501, 7
      %v3083 = vrot.slane %v3082, 2
      %v3084 = vrot.slane %v2503, 7
      %v3085 = vrot.slane %v3084, 2
      %v3086 = vrot.slane %v2511, 7
      %v3087 = vrot.slane %v3086, 2
      %v3088 = vrot.slane %v2519, 7
      %v3089 = vrot.slane %v3088, 2
      %v3090 = vrot.slane %v2518, 7
      %v3091 = vrot.slane %v3090, 2
      %v3092 = vrot.slane %v2520, 7
      %v3093 = vrot.slane %v3092, 2
      %v3094 = vrot.slane %v2528, 7
      %v3095 = vrot.slane %v3094, 2
      %v3096 = vrot.slane %v2536, 7
      %v3097 = vrot.slane %v3096, 2
      %v3098 = vrot.slane %v2535, 7
      %v3099 = vrot.slane %v3098, 2
      %v3100 = vrot.slane %v2537, 7
      %v3101 = vrot.slane %v3100, 2
      %v3102 = vrot.slane %v2545, 7
      %v3103 = vrot.slane %v3102, 2
      %v3104 = vrot.slane %v2553, 7
      %v3105 = vrot.slane %v3104, 2
      %v3106 = vrot.slane %v2552, 7
      %v3107 = vrot.slane %v3106, 2
      %v3108 = vrot.slane %v2554, 7
      %v3109 = vrot.slane %v3108, 2
      %v3110 = vrot.slane %v2562, 7
      %v3111 = vrot.slane %v3110, 2
      %v3112 = vrot.slane %v2570, 7
      %v3113 = vrot.slane %v3112, 2
      %v3114 = vrot.slane %v2569, 7
      %v3115 = vrot.slane %v3114, 2
      %v3116 = vrot.slane %v2571, 7
      %v3117 = vrot.slane %v3116, 2
      %v3118 = vrot.slane %v2579, 7
      %v3119 = vrot.slane %v3118, 2
      %v3120 = vrot.slane %v2587, 7
      %v3121 = vrot.slane %v3120, 2
      %v3122 = vrot.slane %v2586, 7
      %v3123 = vrot.slane %v3122, 2
      %v3124 = vrot.slane %v2588, 7
      %v3125 = vrot.slane %v3124, 2
      %v3126 = vrot.slane %v2596, 7
      %v3127 = vrot.slane %v3126, 2
      %v3128 = vrot.slane %v2604, 7
      %v3129 = vrot.slane %v3128, 2
      %v3130 = vrot.slane %v2603, 7
      %v3131 = vrot.slane %v3130, 2
      %v3132 = vrot.slane %v2605, 7
      %v3133 = vrot.slane %v3132, 2
      %v3134 = vrot.slane %v2613, 7
      %v3135 = vrot.slane %v3134, 2
      %v3136 = vrot.slane %v2621, 7
      %v3137 = vrot.slane %v3136, 2
      %v3138 = vrot.slane %v2620, 7
      %v3139 = vrot.slane %v3138, 2
      %v3140 = vrot.slane %v2622, 7
      %v3141 = vrot.slane %v3140, 2
      %v3142 = vrot.slane %v2630, 7
      %v3143 = vrot.slane %v3142, 2
      %v3144 = vrot.slane %v2638, 7
      %v3145 = vrot.slane %v3144, 2
      %v3146 = vrot.slane %v2637, 7
      %v3147 = vrot.slane %v3146, 2
      %v3148 = vrot.slane %v2639, 7
      %v3149 = vrot.slane %v3148, 2
      %v3150 = vrot.slane %v2647, 7
      %v3151 = vrot.slane %v3150, 2
      %v3152 = vrot.slane %v2655, 7
      %v3153 = vrot.slane %v3152, 2
      %v3154 = vrot.slane %v2654, 7
      %v3155 = vrot.slane %v3154, 2
      %v3156 = vrot.slane %v2656, 7
      %v3157 = vrot.slane %v3156, 2
      %v3158 = vrot.slane %v2664, 7
      %v3159 = vrot.slane %v3158, 2
      %v3160 = vrot.slane %v2672, 7
      %v3161 = vrot.slane %v3160, 2
      %v3162 = vrot.slane %v2671, 7
      %v3163 = vrot.slane %v3162, 2
      %v3164 = vrot.slane %v2673, 7
      %v3165 = vrot.slane %v3164, 2
      %v3166 = vrot.slane %v2681, 7
      %v3167 = vrot.slane %v3166, 2
      %v3168 = vrot.slane %v2689, 7
      %v3169 = vrot.slane %v3168, 2
      %v3170 = vrot.slane %v2688, 7
      %v3171 = vrot.slane %v3170, 2
      %v3172 = vrot.slane %v2690, 7
      %v3173 = vrot.slane %v3172, 2
      %v3174 = vrot.slane %v2698, 7
      %v3175 = vrot.slane %v3174, 2
      %v3176 = vrot.slane %v2706, 7
      %v3177 = vrot.slane %v3176, 2
      %v3178 = vrot.slane %v2705, 7
      %v3179 = vrot.slane %v3178, 2
      %v3180 = vrot.slane %v2707, 7
      %v3181 = vrot.slane %v3180, 2
      %v3182 = vrot.slane %v2715, 7
      %v3183 = vrot.slane %v3182, 2
      %v3184 = vrot.slane %v2723, 7
      %v3185 = vrot.slane %v3184, 2
      %v3186 = vrot.slane %v2722, 7
      %v3187 = vrot.slane %v3186, 2
      %v3188 = vrot.slane %v2724, 7
      %v3189 = vrot.slane %v3188, 2
      %v3190 = vrot.slane %v2732, 7
      %v3191 = vrot.slane %v3190, 2
      %v3192 = vrot.slane %v2740, 7
      %v3193 = vrot.slane %v3192, 2
      %v3194 = vrot.slane %v2739, 7
      %v3195 = vrot.slane %v3194, 2
      %v3196 = vrot.slane %v2741, 7
      %v3197 = vrot.slane %v3196, 2
      %v3198 = vrot.slane %v2749, 7
      %v3199 = vrot.slane %v3198, 2
      %v3200 = vrot.slane %v2757, 7
      %v3201 = vrot.slane %v3200, 2
      %v3202 = vrot.slane %v2756, 7
      %v3203 = vrot.slane %v3202, 2
      %v3204 = vrot.slane %v2758, 7
      %v3205 = vrot.slane %v3204, 2
      %v3206 = vrot.slane %v2766, 7
      %v3207 = vrot.slane %v3206, 2
      %v3208 = vrot.slane %v2774, 7
      %v3209 = vrot.slane %v3208, 2
      %v3210 = vrot.slane %v2773, 7
      %v3211 = vrot.slane %v3210, 2
      %v3212 = vrot.slane %v2775, 7
      %v3213 = vrot.slane %v3212, 2
      %v3214 = vrot.slane %v2783, 7
      %v3215 = vrot.slane %v3214, 2
      %v3216 = vrot.slane %v2791, 7
      %v3217 = vrot.slane %v3216, 2
      %v3218 = vrot.slane %v2790, 7
      %v3219 = vrot.slane %v3218, 2
      %v3220 = vrot.slane %v2792, 7
      %v3221 = vrot.slane %v3220, 2
      %v3222 = vrot.slane %v2800, 7
      %v3223 = vrot.slane %v3222, 2
      %v3224 = vrot.slane %v2808, 7
      %v3225 = vrot.slane %v3224, 2
      %v3226 = vrot.slane %v2807, 7
      %v3227 = vrot.slane %v3226, 2
      %v3228 = vrot.slane %v2809, 7
      %v3229 = vrot.slane %v3228, 2
      %v3230 = vrot.slane %v2817, 7
      %v3231 = vrot.slane %v3230, 2
      %v3232 = vrot.slane %v2825, 7
      %v3233 = vrot.slane %v3232, 2
      %v3234 = vrot.slane %v2824, 7
      %v3235 = vrot.slane %v3234, 2
      %v3236 = vrot.slane %v2826, 7
      %v3237 = vrot.slane %v3236, 2
      %v3238 = vrot.slane %v2834, 7
      %v3239 = vrot.slane %v3238, 2
      %v3240 = vrot.slane %v2842, 7
      %v3241 = vrot.slane %v3240, 2
      %v3242 = vrot.slane %v2841, 7
      %v3243 = vrot.slane %v3242, 2
      %v3244 = vrot.slane %v2843, 7
      %v3245 = vrot.slane %v3244, 2
      %v3246 = vrot.slane %v2851, 7
      %v3247 = vrot.slane %v3246, 2
      %v3248 = vrot.slane %v2859, 7
      %v3249 = vrot.slane %v3248, 2
      %v3250 = vrot.slane %v2858, 7
      %v3251 = vrot.slane %v3250, 2
      %v3252 = vrot.slane %v2860, 7
      %v3253 = vrot.slane %v3252, 2
      %v3254 = vrot.slane %v2868, 7
      %v3255 = vrot.slane %v3254, 2
      %v3256 = vrot.slane %v2876, 7
      %v3257 = vrot.slane %v3256, 2
      %v3258 = vrot.slane %v2875, 7
      %v3259 = vrot.slane %v3258, 2
      %v3260 = vrot.slane %v2877, 7
      %v3261 = vrot.slane %v3260, 2
      %v3390 = vmax.f32 %v2341, %v3007
      %v3391 = vmax.f32 %v2349, %v3009
      %v3392 = vmax.f32 %v2348, %v3011
      %v3393 = vmax.f32 %v2350, %v3013
      %v3394 = vmax.f32 %v2358, %v3015
      %v3395 = vmax.f32 %v2366, %v3017
      %v3396 = vmax.f32 %v2365, %v3019
      %v3397 = vmax.f32 %v2367, %v3021
      %v3398 = vmax.f32 %v2375, %v3023
      %v3399 = vmax.f32 %v2383, %v3025
      %v3400 = vmax.f32 %v2382, %v3027
      %v3401 = vmax.f32 %v2384, %v3029
      %v3402 = vmax.f32 %v2392, %v3031
      %v3403 = vmax.f32 %v2400, %v3033
      %v3404 = vmax.f32 %v2399, %v3035
      %v3405 = vmax.f32 %v2401, %v3037
      %v3406 = vmax.f32 %v2409, %v3039
      %v3407 = vmax.f32 %v2417, %v3041
      %v3408 = vmax.f32 %v2416, %v3043
      %v3409 = vmax.f32 %v2418, %v3045
      %v3410 = vmax.f32 %v2426, %v3047
      %v3411 = vmax.f32 %v2434, %v3049
      %v3412 = vmax.f32 %v2433, %v3051
      %v3413 = vmax.f32 %v2435, %v3053
      %v3414 = vmax.f32 %v2443, %v3055
      %v3415 = vmax.f32 %v2451, %v3057
      %v3416 = vmax.f32 %v2450, %v3059
      %v3417 = vmax.f32 %v2452, %v3061
      %v3418 = vmax.f32 %v2460, %v3063
      %v3419 = vmax.f32 %v2468, %v3065
      %v3420 = vmax.f32 %v2467, %v3067
      %v3421 = vmax.f32 %v2469, %v3069
      %v3422 = vmax.f32 %v2477, %v3071
      %v3423 = vmax.f32 %v2485, %v3073
      %v3424 = vmax.f32 %v2484, %v3075
      %v3425 = vmax.f32 %v2486, %v3077
      %v3426 = vmax.f32 %v2494, %v3079
      %v3427 = vmax.f32 %v2502, %v3081
      %v3428 = vmax.f32 %v2501, %v3083
      %v3429 = vmax.f32 %v2503, %v3085
      %v3430 = vmax.f32 %v2511, %v3087
      %v3431 = vmax.f32 %v2519, %v3089
      %v3432 = vmax.f32 %v2518, %v3091
      %v3433 = vmax.f32 %v2520, %v3093
      %v3434 = vmax.f32 %v2528, %v3095
      %v3435 = vmax.f32 %v2536, %v3097
      %v3436 = vmax.f32 %v2535, %v3099
      %v3437 = vmax.f32 %v2537, %v3101
      %v3438 = vmax.f32 %v2545, %v3103
      %v3439 = vmax.f32 %v2553, %v3105
      %v3440 = vmax.f32 %v2552, %v3107
      %v3441 = vmax.f32 %v2554, %v3109
      %v3442 = vmax.f32 %v2562, %v3111
      %v3443 = vmax.f32 %v2570, %v3113
      %v3444 = vmax.f32 %v2569, %v3115
      %v3445 = vmax.f32 %v2571, %v3117
      %v3446 = vmax.f32 %v2579, %v3119
      %v3447 = vmax.f32 %v2587, %v3121
      %v3448 = vmax.f32 %v2586, %v3123
      %v3449 = vmax.f32 %v2588, %v3125
      %v3450 = vmax.f32 %v2596, %v3127
      %v3451 = vmax.f32 %v2604, %v3129
      %v3452 = vmax.f32 %v2603, %v3131
      %v3453 = vmax.f32 %v2605, %v3133
      %v3454 = vmax.f32 %v2613, %v3135
      %v3455 = vmax.f32 %v2621, %v3137
      %v3456 = vmax.f32 %v2620, %v3139
      %v3457 = vmax.f32 %v2622, %v3141
      %v3458 = vmax.f32 %v2630, %v3143
      %v3459 = vmax.f32 %v2638, %v3145
      %v3460 = vmax.f32 %v2637, %v3147
      %v3461 = vmax.f32 %v2639, %v3149
      %v3462 = vmax.f32 %v2647, %v3151
      %v3463 = vmax.f32 %v2655, %v3153
      %v3464 = vmax.f32 %v2654, %v3155
      %v3465 = vmax.f32 %v2656, %v3157
      %v3466 = vmax.f32 %v2664, %v3159
      %v3467 = vmax.f32 %v2672, %v3161
      %v3468 = vmax.f32 %v2671, %v3163
      %v3469 = vmax.f32 %v2673, %v3165
      %v3470 = vmax.f32 %v2681, %v3167
      %v3471 = vmax.f32 %v2689, %v3169
      %v3472 = vmax.f32 %v2688, %v3171
      %v3473 = vmax.f32 %v2690, %v3173
      %v3474 = vmax.f32 %v2698, %v3175
      %v3475 = vmax.f32 %v2706, %v3177
      %v3476 = vmax.f32 %v2705, %v3179
      %v3477 = vmax.f32 %v2707, %v3181
      %v3478 = vmax.f32 %v2715, %v3183
      %v3479 = vmax.f32 %v2723, %v3185
      %v3480 = vmax.f32 %v2722, %v3187
      %v3481 = vmax.f32 %v2724, %v3189
      %v3482 = vmax.f32 %v2732, %v3191
      %v3483 = vmax.f32 %v2740, %v3193
      %v3484 = vmax.f32 %v2739, %v3195
      %v3485 = vmax.f32 %v2741, %v3197
      %v3486 = vmax.f32 %v2749, %v3199
      %v3487 = vmax.f32 %v2757, %v3201
      %v3488 = vmax.f32 %v2756, %v3203
      %v3489 = vmax.f32 %v2758, %v3205
      %v3490 = vmax.f32 %v2766, %v3207
      %v3491 = vmax.f32 %v2774, %v3209
      %v3492 = vmax.f32 %v2773, %v3211
      %v3493 = vmax.f32 %v2775, %v3213
      %v3494 = vmax.f32 %v2783, %v3215
      %v3495 = vmax.f32 %v2791, %v3217
      %v3496 = vmax.f32 %v2790, %v3219
      %v3497 = vmax.f32 %v2792, %v3221
      %v3498 = vmax.f32 %v2800, %v3223
      %v3499 = vmax.f32 %v2808, %v3225
      %v3500 = vmax.f32 %v2807, %v3227
      %v3501 = vmax.f32 %v2809, %v3229
      %v3502 = vmax.f32 %v2817, %v3231
      %v3503 = vmax.f32 %v2825, %v3233
      %v3504 = vmax.f32 %v2824, %v3235
      %v3505 = vmax.f32 %v2826, %v3237
      %v3506 = vmax.f32 %v2834, %v3239
      %v3507 = vmax.f32 %v2842, %v3241
      %v3508 = vmax.f32 %v2841, %v3243
      %v3509 = vmax.f32 %v2843, %v3245
      %v3510 = vmax.f32 %v2851, %v3247
      %v3511 = vmax.f32 %v2859, %v3249
      %v3512 = vmax.f32 %v2858, %v3251
      %v3513 = vmax.f32 %v2860, %v3253
      %v3514 = vmax.f32 %v2868, %v3255
      %v3515 = vmax.f32 %v2876, %v3257
      %v3516 = vmax.f32 %v2875, %v3259
      %v3517 = vmax.f32 %v2877, %v3261
      %v3518 = vmax.f32 %v3390, %v3398
      %v3519 = vmax.f32 %v3391, %v3399
      %v3520 = vmax.f32 %v3392, %v3400
      %v3521 = vmax.f32 %v3393, %v3401
      %v3522 = vmax.f32 %v3394, %v3402
      %v3523 = vmax.f32 %v3395, %v3403
      %v3524 = vmax.f32 %v3396, %v3404
      %v3525 = vmax.f32 %v3397, %v3405
      %v3526 = vmax.f32 %v3406, %v3414
      %v3527 = vmax.f32 %v3407, %v3415
      %v3528 = vmax.f32 %v3408, %v3416
      %v3529 = vmax.f32 %v3409, %v3417
      %v3530 = vmax.f32 %v3410, %v3418
      %v3531 = vmax.f32 %v3411, %v3419
      %v3532 = vmax.f32 %v3412, %v3420
      %v3533 = vmax.f32 %v3413, %v3421
      %v3534 = vmax.f32 %v3422, %v3430
      %v3535 = vmax.f32 %v3423, %v3431
      %v3536 = vmax.f32 %v3424, %v3432
      %v3537 = vmax.f32 %v3425, %v3433
      %v3538 = vmax.f32 %v3426, %v3434
      %v3539 = vmax.f32 %v3427, %v3435
      %v3540 = vmax.f32 %v3428, %v3436
      %v3541 = vmax.f32 %v3429, %v3437
      %v3542 = vmax.f32 %v3438, %v3446
      %v3543 = vmax.f32 %v3439, %v3447
      %v3544 = vmax.f32 %v3440, %v3448
      %v3545 = vmax.f32 %v3441, %v3449
      %v3546 = vmax.f32 %v3442, %v3450
      %v3547 = vmax.f32 %v3443, %v3451
      %v3548 = vmax.f32 %v3444, %v3452
      %v3549 = vmax.f32 %v3445, %v3453
      %v3550 = vmax.f32 %v3454, %v3462
      %v3551 = vmax.f32 %v3455, %v3463
      %v3552 = vmax.f32 %v3456, %v3464
      %v3553 = vmax.f32 %v3457, %v3465
      %v3554 = vmax.f32 %v3458, %v3466
      %v3555 = vmax.f32 %v3459, %v3467
      %v3556 = vmax.f32 %v3460, %v3468
      %v3557 = vmax.f32 %v3461, %v3469
      %v3558 = vmax.f32 %v3470, %v3478
      %v3559 = vmax.f32 %v3471, %v3479
      %v3560 = vmax.f32 %v3472, %v3480
      %v3561 = vmax.f32 %v3473, %v3481
      %v3562 = vmax.f32 %v3474, %v3482
      %v3563 = vmax.f32 %v3475, %v3483
      %v3564 = vmax.f32 %v3476, %v3484
      %v3565 = vmax.f32 %v3477, %v3485
      %v3566 = vmax.f32 %v3486, %v3494
      %v3567 = vmax.f32 %v3487, %v3495
      %v3568 = vmax.f32 %v3488, %v3496
      %v3569 = vmax.f32 %v3489, %v3497
      %v3570 = vmax.f32 %v3490, %v3498
      %v3571 = vmax.f32 %v3491, %v3499
      %v3572 = vmax.f32 %v3492, %v3500
      %v3573 = vmax.f32 %v3493, %v3501
      %v3574 = vmax.f32 %v3502, %v3510
      %v3575 = vmax.f32 %v3503, %v3511
      %v3576 = vmax.f32 %v3504, %v3512
      %v3577 = vmax.f32 %v3505, %v3513
      %v3578 = vmax.f32 %v3506, %v3514
      %v3579 = vmax.f32 %v3507, %v3515
      %v3580 = vmax.f32 %v3508, %v3516
      %v3581 = vmax.f32 %v3509, %v3517
      %v3646 = vlaneseq
      %v3647 = vshrl.u32 %v3646, 7
      %v3648 = vsub.s32 0, %v3647
      %v3649 = vrot.slane %v3518, %v3648
      %v3650 = vlaneseq
      %v3651 = vshrl.u32 %v3650, 7
      %v3652 = vsub.s32 0, %v3651
      %v3653 = vrot.slane %v3519, %v3652
      %v3654 = vlaneseq
      %v3655 = vshrl.u32 %v3654, 7
      %v3656 = vsub.s32 0, %v3655
      %v3657 = vrot.slane %v3520, %v3656
      %v3658 = vlaneseq
      %v3659 = vshrl.u32 %v3658, 7
      %v3660 = vsub.s32 0, %v3659
      %v3661 = vrot.slane %v3521, %v3660
      %v3662 = vlaneseq
      %v3663 = vshrl.u32 %v3662, 7
      %v3664 = vsub.s32 0, %v3663
      %v3665 = vrot.slane %v3522, %v3664
      %v3666 = vlaneseq
      %v3667 = vshrl.u32 %v3666, 7
      %v3668 = vsub.s32 0, %v3667
      %v3669 = vrot.slane %v3523, %v3668
      %v3670 = vlaneseq
      %v3671 = vshrl.u32 %v3670, 7
      %v3672 = vsub.s32 0, %v3671
      %v3673 = vrot.slane %v3524, %v3672
      %v3674 = vlaneseq
      %v3675 = vshrl.u32 %v3674, 7
      %v3676 = vsub.s32 0, %v3675
      %v3677 = vrot.slane %v3525, %v3676
      %v3678 = vlaneseq
      %v3679 = vshrl.u32 %v3678, 7
      %v3680 = vsub.s32 0, %v3679
      %v3681 = vrot.slane %v3526, %v3680
      %v3682 = vlaneseq
      %v3683 = vshrl.u32 %v3682, 7
      %v3684 = vsub.s32 0, %v3683
      %v3685 = vrot.slane %v3527, %v3684
      %v3686 = vlaneseq
      %v3687 = vshrl.u32 %v3686, 7
      %v3688 = vsub.s32 0, %v3687
      %v3689 = vrot.slane %v3528, %v3688
      %v3690 = vlaneseq
      %v3691 = vshrl.u32 %v3690, 7
      %v3692 = vsub.s32 0, %v3691
      %v3693 = vrot.slane %v3529, %v3692
      %v3694 = vlaneseq
      %v3695 = vshrl.u32 %v3694, 7
      %v3696 = vsub.s32 0, %v3695
      %v3697 = vrot.slane %v3530, %v3696
      %v3698 = vlaneseq
      %v3699 = vshrl.u32 %v3698, 7
      %v3700 = vsub.s32 0, %v3699
      %v3701 = vrot.slane %v3531, %v3700
      %v3702 = vlaneseq
      %v3703 = vshrl.u32 %v3702, 7
      %v3704 = vsub.s32 0, %v3703
      %v3705 = vrot.slane %v3532, %v3704
      %v3706 = vlaneseq
      %v3707 = vshrl.u32 %v3706, 7
      %v3708 = vsub.s32 0, %v3707
      %v3709 = vrot.slane %v3533, %v3708
      %v3710 = vlaneseq
      %v3711 = vshrl.u32 %v3710, 7
      %v3712 = vsub.s32 0, %v3711
      %v3713 = vrot.slane %v3534, %v3712
      %v3714 = vlaneseq
      %v3715 = vshrl.u32 %v3714, 7
      %v3716 = vsub.s32 0, %v3715
      %v3717 = vrot.slane %v3535, %v3716
      %v3718 = vlaneseq
      %v3719 = vshrl.u32 %v3718, 7
      %v3720 = vsub.s32 0, %v3719
      %v3721 = vrot.slane %v3536, %v3720
      %v3722 = vlaneseq
      %v3723 = vshrl.u32 %v3722, 7
      %v3724 = vsub.s32 0, %v3723
      %v3725 = vrot.slane %v3537, %v3724
      %v3726 = vlaneseq
      %v3727 = vshrl.u32 %v3726, 7
      %v3728 = vsub.s32 0, %v3727
      %v3729 = vrot.slane %v3538, %v3728
      %v3730 = vlaneseq
      %v3731 = vshrl.u32 %v3730, 7
      %v3732 = vsub.s32 0, %v3731
      %v3733 = vrot.slane %v3539, %v3732
      %v3734 = vlaneseq
      %v3735 = vshrl.u32 %v3734, 7
      %v3736 = vsub.s32 0, %v3735
      %v3737 = vrot.slane %v3540, %v3736
      %v3738 = vlaneseq
      %v3739 = vshrl.u32 %v3738, 7
      %v3740 = vsub.s32 0, %v3739
      %v3741 = vrot.slane %v3541, %v3740
      %v3742 = vlaneseq
      %v3743 = vshrl.u32 %v3742, 7
      %v3744 = vsub.s32 0, %v3743
      %v3745 = vrot.slane %v3542, %v3744
      %v3746 = vlaneseq
      %v3747 = vshrl.u32 %v3746, 7
      %v3748 = vsub.s32 0, %v3747
      %v3749 = vrot.slane %v3543, %v3748
      %v3750 = vlaneseq
      %v3751 = vshrl.u32 %v3750, 7
      %v3752 = vsub.s32 0, %v3751
      %v3753 = vrot.slane %v3544, %v3752
      %v3754 = vlaneseq
      %v3755 = vshrl.u32 %v3754, 7
      %v3756 = vsub.s32 0, %v3755
      %v3757 = vrot.slane %v3545, %v3756
      %v3758 = vlaneseq
      %v3759 = vshrl.u32 %v3758, 7
      %v3760 = vsub.s32 0, %v3759
      %v3761 = vrot.slane %v3546, %v3760
      %v3762 = vlaneseq
      %v3763 = vshrl.u32 %v3762, 7
      %v3764 = vsub.s32 0, %v3763
      %v3765 = vrot.slane %v3547, %v3764
      %v3766 = vlaneseq
      %v3767 = vshrl.u32 %v3766, 7
      %v3768 = vsub.s32 0, %v3767
      %v3769 = vrot.slane %v3548, %v3768
      %v3770 = vlaneseq
      %v3771 = vshrl.u32 %v3770, 7
      %v3772 = vsub.s32 0, %v3771
      %v3773 = vrot.slane %v3549, %v3772
      %v3774 = vlaneseq
      %v3775 = vshrl.u32 %v3774, 7
      %v3776 = vsub.s32 0, %v3775
      %v3777 = vrot.slane %v3550, %v3776
      %v3778 = vlaneseq
      %v3779 = vshrl.u32 %v3778, 7
      %v3780 = vsub.s32 0, %v3779
      %v3781 = vrot.slane %v3551, %v3780
      %v3782 = vlaneseq
      %v3783 = vshrl.u32 %v3782, 7
      %v3784 = vsub.s32 0, %v3783
      %v3785 = vrot.slane %v3552, %v3784
      %v3786 = vlaneseq
      %v3787 = vshrl.u32 %v3786, 7
      %v3788 = vsub.s32 0, %v3787
      %v3789 = vrot.slane %v3553, %v3788
      %v3790 = vlaneseq
      %v3791 = vshrl.u32 %v3790, 7
      %v3792 = vsub.s32 0, %v3791
      %v3793 = vrot.slane %v3554, %v3792
      %v3794 = vlaneseq
      %v3795 = vshrl.u32 %v3794, 7
      %v3796 = vsub.s32 0, %v3795
      %v3797 = vrot.slane %v3555, %v3796
      %v3798 = vlaneseq
      %v3799 = vshrl.u32 %v3798, 7
      %v3800 = vsub.s32 0, %v3799
      %v3801 = vrot.slane %v3556, %v3800
      %v3802 = vlaneseq
      %v3803 = vshrl.u32 %v3802, 7
      %v3804 = vsub.s32 0, %v3803
      %v3805 = vrot.slane %v3557, %v3804
      %v3806 = vlaneseq
      %v3807 = vshrl.u32 %v3806, 7
      %v3808 = vsub.s32 0, %v3807
      %v3809 = vrot.slane %v3558, %v3808
      %v3810 = vlaneseq
      %v3811 = vshrl.u32 %v3810, 7
      %v3812 = vsub.s32 0, %v3811
      %v3813 = vrot.slane %v3559, %v3812
      %v3814 = vlaneseq
      %v3815 = vshrl.u32 %v3814, 7
      %v3816 = vsub.s32 0, %v3815
      %v3817 = vrot.slane %v3560, %v3816
      %v3818 = vlaneseq
      %v3819 = vshrl.u32 %v3818, 7
      %v3820 = vsub.s32 0, %v3819
      %v3821 = vrot.slane %v3561, %v3820
      %v3822 = vlaneseq
      %v3823 = vshrl.u32 %v3822, 7
      %v3824 = vsub.s32 0, %v3823
      %v3825 = vrot.slane %v3562, %v3824
      %v3826 = vlaneseq
      %v3827 = vshrl.u32 %v3826, 7
      %v3828 = vsub.s32 0, %v3827
      %v3829 = vrot.slane %v3563, %v3828
      %v3830 = vlaneseq
      %v3831 = vshrl.u32 %v3830, 7
      %v3832 = vsub.s32 0, %v3831
      %v3833 = vrot.slane %v3564, %v3832
      %v3834 = vlaneseq
      %v3835 = vshrl.u32 %v3834, 7
      %v3836 = vsub.s32 0, %v3835
      %v3837 = vrot.slane %v3565, %v3836
      %v3838 = vlaneseq
      %v3839 = vshrl.u32 %v3838, 7
      %v3840 = vsub.s32 0, %v3839
      %v3841 = vrot.slane %v3566, %v3840
      %v3842 = vlaneseq
      %v3843 = vshrl.u32 %v3842, 7
      %v3844 = vsub.s32 0, %v3843
      %v3845 = vrot.slane %v3567, %v3844
      %v3846 = vlaneseq
      %v3847 = vshrl.u32 %v3846, 7
      %v3848 = vsub.s32 0, %v3847
      %v3849 = vrot.slane %v3568, %v3848
      %v3850 = vlaneseq
      %v3851 = vshrl.u32 %v3850, 7
      %v3852 = vsub.s32 0, %v3851
      %v3853 = vrot.slane %v3569, %v3852
      %v3854 = vlaneseq
      %v3855 = vshrl.u32 %v3854, 7
      %v3856 = vsub.s32 0, %v3855
      %v3857 = vrot.slane %v3570, %v3856
      %v3858 = vlaneseq
      %v3859 = vshrl.u32 %v3858, 7
      %v3860 = vsub.s32 0, %v3859
      %v3861 = vrot.slane %v3571, %v3860
      %v3862 = vlaneseq
      %v3863 = vshrl.u32 %v3862, 7
      %v3864 = vsub.s32 0, %v3863
      %v3865 = vrot.slane %v3572, %v3864
      %v3866 = vlaneseq
      %v3867 = vshrl.u32 %v3866, 7
      %v3868 = vsub.s32 0, %v3867
      %v3869 = vrot.slane %v3573, %v3868
      %v3870 = vlaneseq
      %v3871 = vshrl.u32 %v3870, 7
      %v3872 = vsub.s32 0, %v3871
      %v3873 = vrot.slane %v3574, %v3872
      %v3874 = vlaneseq
      %v3875 = vshrl.u32 %v3874, 7
      %v3876 = vsub.s32 0, %v3875
      %v3877 = vrot.slane %v3575, %v3876
      %v3878 = vlaneseq
      %v3879 = vshrl.u32 %v3878, 7
      %v3880 = vsub.s32 0, %v3879
      %v3881 = vrot.slane %v3576, %v3880
      %v3882 = vlaneseq
      %v3883 = vshrl.u32 %v3882, 7
      %v3884 = vsub.s32 0, %v3883
      %v3885 = vrot.slane %v3577, %v3884
      %v3886 = vlaneseq
      %v3887 = vshrl.u32 %v3886, 7
      %v3888 = vsub.s32 0, %v3887
      %v3889 = vrot.slane %v3578, %v3888
      %v3890 = vlaneseq
      %v3891 = vshrl.u32 %v3890, 7
      %v3892 = vsub.s32 0, %v3891
      %v3893 = vrot.slane %v3579, %v3892
      %v3894 = vlaneseq
      %v3895 = vshrl.u32 %v3894, 7
      %v3896 = vsub.s32 0, %v3895
      %v3897 = vrot.slane %v3580, %v3896
      %v3898 = vlaneseq
      %v3899 = vshrl.u32 %v3898, 7
      %v3900 = vsub.s32 0, %v3899
      %v3901 = vrot.slane %v3581, %v3900
      %vm3902 = vcmask 1041409
      %v3903 = vsel %vm3902, %v3653, %v3649
      %vm3904 = vcmask 1042434
      %v3905 = vsel %vm3904, %v3657, %v3903
      %vm3906 = vcmask 1043459
      %v3907 = vsel %vm3906, %v3661, %v3905
      %vm3908 = vcmask 1044484
      %v3909 = vsel %vm3908, %v3665, %v3907
      %vm3910 = vcmask 1045509
      %v3911 = vsel %vm3910, %v3669, %v3909
      %vm3912 = vcmask 1046534
      %v3913 = vsel %vm3912, %v3673, %v3911
      %vm3914 = vcmask 1047559
      %v3915 = vsel %vm3914, %v3677, %v3913
      %v3916 = vsel %vm3902, %v3685, %v3681
      %v3917 = vsel %vm3904, %v3689, %v3916
      %v3918 = vsel %vm3906, %v3693, %v3917
      %v3919 = vsel %vm3908, %v3697, %v3918
      %v3920 = vsel %vm3910, %v3701, %v3919
      %v3921 = vsel %vm3912, %v3705, %v3920
      %v3922 = vsel %vm3914, %v3709, %v3921
      %v3923 = vsel %vm3902, %v3717, %v3713
      %v3924 = vsel %vm3904, %v3721, %v3923
      %v3925 = vsel %vm3906, %v3725, %v3924
      %v3926 = vsel %vm3908, %v3729, %v3925
      %v3927 = vsel %vm3910, %v3733, %v3926
      %v3928 = vsel %vm3912, %v3737, %v3927
      %v3929 = vsel %vm3914, %v3741, %v3928
      %v3930 = vsel %vm3902, %v3749, %v3745
      %v3931 = vsel %vm3904, %v3753, %v3930
      %v3932 = vsel %vm3906, %v3757, %v3931
      %v3933 = vsel %vm3908, %v3761, %v3932
      %v3934 = vsel %vm3910, %v3765, %v3933
      %v3935 = vsel %vm3912, %v3769, %v3934
      %v3936 = vsel %vm3914, %v3773, %v3935
      %v3937 = vsel %vm3902, %v3781, %v3777
      %v3938 = vsel %vm3904, %v3785, %v3937
      %v3939 = vsel %vm3906, %v3789, %v3938
      %v3940 = vsel %vm3908, %v3793, %v3939
      %v3941 = vsel %vm3910, %v3797, %v3940
      %v3942 = vsel %vm3912, %v3801, %v3941
      %v3943 = vsel %vm3914, %v3805, %v3942
      %v3944 = vsel %vm3902, %v3813, %v3809
      %v3945 = vsel %vm3904, %v3817, %v3944
      %v3946 = vsel %vm3906, %v3821, %v3945
      %v3947 = vsel %vm3908, %v3825, %v3946
      %v3948 = vsel %vm3910, %v3829, %v3947
      %v3949 = vsel %vm3912, %v3833, %v3948
      %v3950 = vsel %vm3914, %v3837, %v3949
      %v3951 = vsel %vm3902, %v3845, %v3841
      %v3952 = vsel %vm3904, %v3849, %v3951
      %v3953 = vsel %vm3906, %v3853, %v3952
      %v3954 = vsel %vm3908, %v3857, %v3953
      %v3955 = vsel %vm3910, %v3861, %v3954
      %v3956 = vsel %vm3912, %v3865, %v3955
      %v3957 = vsel %vm3914, %v3869, %v3956
      %v3958 = vsel %vm3902, %v3877, %v3873
      %v3959 = vsel %vm3904, %v3881, %v3958
      %v3960 = vsel %vm3906, %v3885, %v3959
      %v3961 = vsel %vm3908, %v3889, %v3960
      %v3962 = vsel %vm3910, %v3893, %v3961
      %v3963 = vsel %vm3912, %v3897, %v3962
      %v3964 = vsel %vm3914, %v3901, %v3963
      %vm3973 = vcmask 261120
      %3974 = vst.msk [vmem:[%s170] sm:$0xff] %vm3973, %v3915
      %3975 = vst.msk [vmem:[%s170 + $0x8] sm:$0xff] %vm3973, %v3922
      %3976 = vst.msk [vmem:[%s170 + $0x10] sm:$0xff] %vm3973, %v3929
      %3977 = vst.msk [vmem:[%s170 + $0x18] sm:$0xff] %vm3973, %v3936
      %3978 = vst.msk [vmem:[%s170 + $0x20] sm:$0xff] %vm3973, %v3943
      %3979 = vst.msk [vmem:[%s170 + $0x28] sm:$0xff] %vm3973, %v3950
      %3980 = vst.msk [vmem:[%s170 + $0x30] sm:$0xff] %vm3973, %v3957
      %3981 = vst.msk [vmem:[%s170 + $0x38] sm:$0xff] %vm3973, %v3964
      %p3982 = scmp.lt.s32.totalorder %s14, 1
      %s3983 = scalar_select %p3982, %s14, 1
      %s3984 = smul.addr %s3983, 8
      %s3985 = smul.addr %s3984, 8
      %s3986 = scalar_lea.vmem %s3, %s3985
      // Predicated region
      $region33: #{vgg_forward.4} parent=31 // pred_check
        %p3987 = pneg %p100
      $region34: #{vgg_forward.4} parent=31 // pred_check_branch
        %3989 = sbr.rel (%p3987) target = $region36
      $region35: #{vgg_forward.4} parent=31 // pred_region
        _
      $region36: #{vgg_forward.4} parent=31 // pred_fallthru
        _
    $region32: #{vgg_forward.4} parent=5 // pred_fallthru
      _
    %p3990 = scmp.le.s32.totalorder 2, %s9
    // Predicated region
    $region37: #{vgg_forward.4} parent=5 // pred_check
      %p3991 = pneg %p3990
    $region38: #{vgg_forward.4} parent=5 // pred_check_branch
      %3993 = sbr.rel (%p3991) target = $region40
    $region39: #{vgg_forward.4} parent=5 // pred_region
      %s3994 = ssub.s32 %s9, 2
      // Predicated region
      $region41: #{vgg_forward.4} parent=39 // pred_check
        %p3995 = pneg %p106
      $region42: #{vgg_forward.4} parent=39 // pred_check_branch
        %3997 = sbr.rel (%p3995) target = $region44
      $region43: #{vgg_forward.4} parent=39 // pred_region
        %p3998 = scmp.lt.s32.totalorder %s15, 1
        %s3999 = scalar_select %p3998, %s15, 1
        %s4000 = smul.addr %s3999, 8
        %s4001 = smul.addr %s4000, 8
        %s4002 = scalar_lea.vmem %s3, %s4001
      $region44: #{vgg_forward.4} parent=39 // pred_fallthru
        _
    $region40: #{vgg_forward.4} parent=5 // pred_fallthru
      _
  $region6: #{vgg_forward.4} parent=0 // loop_footer
    %s13 = sadd.s32 1, %s9
  $region7: #{vgg_forward.4} parent=0 // loop_footer_branch
    %8 = sbr.rel target = $region3
  $region8: #{vgg_forward.4} parent=0 // loop_exit
    _

</llo_original>
